<compile_context>
chip_gen: v6e
topology: v6e:2x2x1
jax: 0.10.0
libtpu: 0.0.40
codegen_flags: <defaults>
</compile_context>

<pallas_src>
import math

import jax
import jax.numpy as jnp
from jax import lax
from jax.experimental import pallas as pl
from jax.experimental.pallas import tpu as pltpu

# ----------------------- scaled-down "bert-base" config -----------------------
VOCAB = 1024          # stands in for 30522
HIDDEN = 256          # stands in for 768
NUM_LAYERS = 2        # stands in for 12
NUM_HEADS = 4
HEAD_DIM = HIDDEN // NUM_HEADS
INTERMEDIATE = 512    # stands in for 3072
MAX_POS = 64
LN_EPS = 1e-12

B = 2                 # batch
S_ENC = 16            # encoder sequence length
T_DEC = 8             # decoder sequence length

F32 = jnp.float32
BF16 = jnp.bfloat16


def _ln(x, g, b):
    """LayerNorm over the last axis (x, g, b are f32 values)."""
    mu = jnp.mean(x, axis=-1, keepdims=True)
    var = jnp.mean(jnp.square(x - mu), axis=-1, keepdims=True)
    return (x - mu) * lax.rsqrt(var + LN_EPS) * g + b


# ---------------------------- BlockSpec helpers --------------------------------
def _inv_spec(shape):
    """Grid-invariant full-array block (same block for every layer step)."""
    n = len(shape)
    # TODO(synk): pipeline_mode=pl.Buffered(1) would drop the useless second buffer
    # for grid-invariant operands; left at the default for compile safety.
    return pl.BlockSpec(tuple(shape), lambda l, n=n: (0,) * n)


def _layer_spec(shape):
    """Layer-stacked weight: leading layer axis squeezed out, indexed by grid step."""
    rest = tuple(shape[1:])
    nrest = len(rest)
    return pl.BlockSpec((None,) + rest, lambda l, n=nrest: (l,) + (0,) * n)


# ------------------- fused BERT encoder stack (single pallas_call) -------------
def _make_encoder_kernel(batch, seq):
    scale = 1.0 / math.sqrt(HEAD_DIM)

    def kernel(x_ref, embg_ref, embb_ref,
               wqkv_ref, bqkv_ref, wo_ref, bo_ref, ln1g_ref, ln1b_ref,
               w1_ref, b1_ref, w2_ref, b2_ref, ln2g_ref, ln2b_ref,
               o_ref, xs_ref, ctx_ref):
        layer = pl.program_id(0)

        # --- layer-0 prologue: embedding LayerNorm fused into this call ---
        @pl.when(layer == 0)
        def _():
            xs_ref[...] = _ln(x_ref[...], embg_ref[...], embb_ref[...])

        xf = xs_ref[...]                               # f32 [M, H] residual stream
        x = xf.astype(BF16)

        # --- fused QKV projection: one [M,H] x [H,3H] matmul ---
        qkv = jnp.dot(x, wqkv_ref[...], preferred_element_type=F32) + bqkv_ref[...]
        q = (qkv[:, 0:HIDDEN] * scale).astype(BF16)    # scale folded into q
        k = qkv[:, HIDDEN:2 * HIDDEN].astype(BF16)
        v = qkv[:, 2 * HIDDEN:3 * HIDDEN].astype(BF16)

        # --- per-example attention ([S,S] scores, no block-diagonal mask) ---
        # Each head's context is written to its lane slice of ctx_ref so the output
        # projection below is a single K=HIDDEN matmul.
        # TODO(synk): odd-head q/k/v slices start at a 64-lane offset; processing
        # heads in 128-lane pairs via a batched dot would remove that relayout.
        for b in range(batch):
            r0 = b * seq
            for h in range(NUM_HEADS):
                lo = h * HEAD_DIM
                qh = q[r0:r0 + seq, lo:lo + HEAD_DIM]
                kh = k[r0:r0 + seq, lo:lo + HEAD_DIM]
                vh = v[r0:r0 + seq, lo:lo + HEAD_DIM]
                s = lax.dot_general(qh, kh, (((1,), (1,)), ((), ())),
                                    preferred_element_type=F32)       # [S, S]
                s = s - jnp.max(s, axis=-1, keepdims=True)
                p = jnp.exp(s)
                p = p * pl.reciprocal(jnp.sum(p, axis=-1, keepdims=True), approx=True)
                ctx_h = jnp.dot(p.astype(BF16), vh, preferred_element_type=F32)
                ctx_ref[r0:r0 + seq, lo:lo + HEAD_DIM] = ctx_h

        # --- single output projection (K=HIDDEN) + residual + LayerNorm 1 ---
        attn_out = jnp.dot(ctx_ref[...].astype(BF16), wo_ref[...],
                           preferred_element_type=F32) + bo_ref[...]
        h1 = _ln(attn_out + xf, ln1g_ref[...], ln1b_ref[...])

        # --- FFN: w1 -> gelu -> w2, fused ---
        hdn = jnp.dot(h1.astype(BF16), w1_ref[...], preferred_element_type=F32) + b1_ref[...]
        # TODO(synk): HF BERT uses exact erf-GELU; tanh-approx GELU used here.
        hdn = jax.nn.gelu(hdn, approximate=True)
        ffn = jnp.dot(hdn.astype(BF16), w2_ref[...], preferred_element_type=F32) + b2_ref[...]

        # --- residual + LayerNorm 2; carry f32 activation to the next layer ---
        out = _ln(ffn + h1, ln2g_ref[...], ln2b_ref[...])
        xs_ref[...] = out
        o_ref[...] = out.astype(o_ref.dtype)

    return kernel


def encoder_stack(x_emb, p, batch, seq):
    M = batch * seq
    operands = (x_emb, p["emb_ln_g"], p["emb_ln_b"],
                p["enc_wqkv"], p["enc_bqkv"], p["enc_wo"], p["enc_bo"],
                p["enc_ln1_g"], p["enc_ln1_b"],
                p["enc_w1"], p["enc_b1"], p["enc_w2"], p["enc_b2"],
                p["enc_ln2_g"], p["enc_ln2_b"])
    in_specs = [_inv_spec(operands[0].shape),
                _inv_spec(operands[1].shape),
                _inv_spec(operands[2].shape)]
    in_specs += [_layer_spec(op.shape) for op in operands[3:]]
    # TODO(synk): at this toy scale every matmul fits one core; for v7x dual-core use,
    # split a genuinely parallel axis (e.g. FFN INTERMEDIATE / output N) over a
    # "parallel" grid dimension. At real BERT-base scale, per-layer weight blocks
    # stay double-buffered (as here) instead of making the whole stack VMEM-resident.
    return pl.pallas_call(
        _make_encoder_kernel(batch, seq),
        out_shape=jax.ShapeDtypeStruct((M, HIDDEN), BF16),
        grid=(NUM_LAYERS,),
        in_specs=in_specs,
        out_specs=pl.BlockSpec((M, HIDDEN), lambda l: (0, 0)),
        scratch_shapes=[pltpu.VMEM((M, HIDDEN), F32),   # activation carry
                        pltpu.VMEM((M, HIDDEN), F32)],  # attention context buffer
        compiler_params=pltpu.CompilerParams(dimension_semantics=("arbitrary",)),
    )(*operands)


# --------------------- fused LSTM + vocab-projection kernel --------------------
def _make_lstm_fc_kernel(T, batch):
    H = HIDDEN

    def kernel(x_ref, wih_ref, whh_ref, b_ref, h0_ref, c0_ref, wfc_ref, bfc_ref,
               o_ref, hbuf_ref):
        # Hoisted input projection: one [T*B, H] x [H, 4H] matmul (+ bias) before the loop.
        gx = jnp.dot(x_ref[...], wih_ref[...], preferred_element_type=F32) + b_ref[...]
        h = h0_ref[...].astype(F32)        # [B, H]
        c = c0_ref[...].astype(F32)
        whh = whh_ref[...]
        for t in range(T):                 # short fixed trip count -> fully unrolled
            gates = gx[t * batch:(t + 1) * batch, :] + jnp.dot(
                h.astype(BF16), whh, preferred_element_type=F32)        # [B, 4H]
            # PyTorch gate order: i, f, g, o
            i_g = jax.nn.sigmoid(gates[:, 0 * H:1 * H])
            f_g = jax.nn.sigmoid(gates[:, 1 * H:2 * H])
            g_g = jnp.tanh(gates[:, 2 * H:3 * H])
            o_g = jax.nn.sigmoid(gates[:, 3 * H:4 * H])
            c = f_g * c + i_g * g_g
            h = o_g * jnp.tanh(c)
            hbuf_ref[t * batch:(t + 1) * batch, :] = h      # stash h_t; no fc in the loop
        # Hoisted vocab projection: one [T*B, H] x [H, V] matmul, lane-dense (16,1024) store.
        # TODO(synk): on v7x the vocab N could be split over a "parallel" grid axis for
        # the second TensorCore; skipped here because it would replay the recurrence.
        o_ref[...] = (jnp.dot(hbuf_ref[...].astype(BF16), wfc_ref[...],
                              preferred_element_type=F32) + bfc_ref[...]).astype(o_ref.dtype)

    return kernel


def lstm_fc(x_tm, w_ih, w_hh, bias, h0, c0, fc_w, fc_b, T, batch):
    V = fc_w.shape[1]
    M = T * batch
    operands = (x_tm, w_ih, w_hh, bias, h0, c0, fc_w, fc_b)
    in_specs = [pl.BlockSpec(op.shape, lambda i, n=op.ndim: (0,) * n) for op in operands]
    return pl.pallas_call(
        _make_lstm_fc_kernel(T, batch),
        out_shape=jax.ShapeDtypeStruct((M, V), F32),
        grid=(1,),
        in_specs=in_specs,
        out_specs=pl.BlockSpec((M, V), lambda i: (0, 0)),
        scratch_shapes=[pltpu.VMEM((M, HIDDEN), F32)],      # per-step hidden states
        compiler_params=pltpu.CompilerParams(dimension_semantics=("arbitrary",)),
    )(*operands)


# -------------------------------- model glue ----------------------------------
def bert_encoder(params, input_ids):
    Bq, S = input_ids.shape
    # Embedding gathers are glue, done in plain JAX.
    emb = (jnp.take(params["word_emb"], input_ids, axis=0)
           + params["pos_emb"][:S][None, :, :]
           + params["type_emb"][0][None, None, :])
    x = emb.reshape(Bq * S, HIDDEN)                                # f32 [B*S, H]
    return encoder_stack(x, params, Bq, S)                         # bf16 [B*S, H]


def seq2seq_forward(params, input_ids, decoder_input):
    Bq, S = input_ids.shape
    T = decoder_input.shape[1]
    enc2d = bert_encoder(params, input_ids)                        # [B*S, H]
    enc = enc2d.reshape(Bq, S, HIDDEN)
    # TODO(synk): the reference passes `encoder_output` directly as nn.LSTM's hx,
    # which raises in PyTorch (hx must be an (h0, c0) tuple); closest runnable
    # interpretation used here: condition the LSTM with h0 = c0 = encoder CLS vector.
    h0 = enc[:, 0, :]
    c0 = h0
    x_tm = jnp.transpose(decoder_input, (1, 0, 2)).reshape(T * Bq, HIDDEN).astype(BF16)
    logits_tm = lstm_fc(x_tm, params["lstm_w_ih"], params["lstm_w_hh"],
                        params["lstm_b"], h0, c0,
                        params["fc_w"], params["fc_b"], T, Bq)     # [T*B, V] f32
    return jnp.transpose(logits_tm.reshape(T, Bq, VOCAB), (1, 0, 2))   # [B, T, V]


# --------------------------- deterministic parameters --------------------------
def init_params(key):
    keys = iter(jax.random.split(key, 64))

    def w(shape, scale=0.02, dtype=BF16):
        return (scale * jax.random.normal(next(keys), shape, dtype=F32)).astype(dtype)

    def zeros(*shape):
        return jnp.zeros(shape, F32)

    def ones(*shape):
        return jnp.ones(shape, F32)

    L = NUM_LAYERS
    return dict(
        word_emb=w((VOCAB, HIDDEN), dtype=F32),
        pos_emb=w((MAX_POS, HIDDEN), dtype=F32),
        type_emb=w((2, HIDDEN), dtype=F32),
        emb_ln_g=ones(1, HIDDEN), emb_ln_b=zeros(1, HIDDEN),
        # layer-stacked encoder weights (leading layer axis -> single fused pallas_call)
        enc_wqkv=w((L, HIDDEN, 3 * HIDDEN)), enc_bqkv=zeros(L, 1, 3 * HIDDEN),
        enc_wo=w((L, HIDDEN, HIDDEN)), enc_bo=zeros(L, 1, HIDDEN),
        enc_ln1_g=ones(L, 1, HIDDEN), enc_ln1_b=zeros(L, 1, HIDDEN),
        enc_w1=w((L, HIDDEN, INTERMEDIATE)), enc_b1=zeros(L, 1, INTERMEDIATE),
        enc_w2=w((L, INTERMEDIATE, HIDDEN)), enc_b2=zeros(L, 1, HIDDEN),
        enc_ln2_g=ones(L, 1, HIDDEN), enc_ln2_b=zeros(L, 1, HIDDEN),
        lstm_w_ih=w((HIDDEN, 4 * HIDDEN)),   # transposed vs torch weight_ih_l0
        lstm_w_hh=w((HIDDEN, 4 * HIDDEN)),   # transposed vs torch weight_hh_l0
        lstm_b=zeros(1, 4 * HIDDEN),         # b_ih + b_hh
        fc_w=w((HIDDEN, VOCAB)),             # transposed vs torch nn.Linear weight
        fc_b=zeros(1, VOCAB),
    )


if __name__ == "__main__":
    key = jax.random.PRNGKey(0)
    k_ids, k_dec = jax.random.split(key)
    input_ids = jax.random.randint(k_ids, (B, S_ENC), 0, VOCAB)
    decoder_input = jax.random.normal(k_dec, (B, T_DEC, HIDDEN), dtype=F32)

    params = init_params(jax.random.PRNGKey(42))

    fwd = jax.jit(seq2seq_forward)
    out = fwd(params, input_ids, decoder_input)
    out = jax.block_until_ready(out)
    assert out.shape == (B, T_DEC, VOCAB), out.shape
    assert out.dtype == jnp.float32
    assert bool(jnp.all(jnp.isfinite(out)))
    print("KERNEL_OK")
</pallas_src>

<mosaic_0001>
module attributes {stable_mosaic.version = 11 : i64} {
  func.func @kernel(%arg0: i32, %arg1: memref<32x256xf32, #tpu.memory_space<vmem>>, %arg2: memref<1x256xf32, #tpu.memory_space<vmem>>, %arg3: memref<1x256xf32, #tpu.memory_space<vmem>>, %arg4: memref<1x256x768xbf16, #tpu.memory_space<vmem>>, %arg5: memref<1x1x768xf32, #tpu.memory_space<vmem>>, %arg6: memref<1x256x256xbf16, #tpu.memory_space<vmem>>, %arg7: memref<1x1x256xf32, #tpu.memory_space<vmem>>, %arg8: memref<1x1x256xf32, #tpu.memory_space<vmem>>, %arg9: memref<1x1x256xf32, #tpu.memory_space<vmem>>, %arg10: memref<1x256x512xbf16, #tpu.memory_space<vmem>>, %arg11: memref<1x1x512xf32, #tpu.memory_space<vmem>>, %arg12: memref<1x512x256xbf16, #tpu.memory_space<vmem>>, %arg13: memref<1x1x256xf32, #tpu.memory_space<vmem>>, %arg14: memref<1x1x256xf32, #tpu.memory_space<vmem>>, %arg15: memref<1x1x256xf32, #tpu.memory_space<vmem>>, %arg16: memref<32x256xbf16, #tpu.memory_space<vmem>>, %arg17: memref<32x256xf32, #tpu.memory_space<vmem>>, %arg18: memref<32x256xf32, #tpu.memory_space<vmem>>) attributes {dimension_semantics = [#tpu.dimension_semantics<arbitrary>], iteration_bounds = array<i64: 2>, scalar_prefetch = 0 : i64, scratch_operands = 2 : i64, tpu.core_type = #tpu.core_type<tc>, window_params = [{pipeline_mode = #tpu.pipeline_mode<synchronous>, transform_indices = @transform_0, window_bounds = array<i64: 32, 256>}, {pipeline_mode = #tpu.pipeline_mode<synchronous>, transform_indices = @transform_1, window_bounds = array<i64: 1, 256>}, {pipeline_mode = #tpu.pipeline_mode<synchronous>, transform_indices = @transform_2, window_bounds = array<i64: 1, 256>}, {transform_indices = @transform_3, window_bounds = array<i64: 1, 256, 768>}, {transform_indices = @transform_4, window_bounds = array<i64: 1, 1, 768>}, {transform_indices = @transform_5, window_bounds = array<i64: 1, 256, 256>}, {transform_indices = @transform_6, window_bounds = array<i64: 1, 1, 256>}, {transform_indices = @transform_7, window_bounds = array<i64: 1, 1, 256>}, {transform_indices = @transform_8, window_bounds = array<i64: 1, 1, 256>}, {transform_indices = @transform_9, window_bounds = array<i64: 1, 256, 512>}, {transform_indices = @transform_10, window_bounds = array<i64: 1, 1, 512>}, {transform_indices = @transform_11, window_bounds = array<i64: 1, 512, 256>}, {transform_indices = @transform_12, window_bounds = array<i64: 1, 1, 256>}, {transform_indices = @transform_13, window_bounds = array<i64: 1, 1, 256>}, {transform_indices = @transform_14, window_bounds = array<i64: 1, 1, 256>}, {pipeline_mode = #tpu.pipeline_mode<synchronous>, transform_indices = @transform_15, window_bounds = array<i64: 32, 256>}]} {
    %c0_i32 = arith.constant 0 : i32
    %0 = arith.cmpi eq, %arg0, %c0_i32 : i32
    %1 = arith.extui %0 : i1 to i32
    %c0_i32_0 = arith.constant 0 : i32
    %2 = arith.cmpi ne, %1, %c0_i32_0 : i32
    scf.if %2 {
      %c0_106 = arith.constant 0 : index
      %c0_107 = arith.constant 0 : index
      %251 = vector.load %arg1[%c0_106, %c0_107] : memref<32x256xf32, #tpu.memory_space<vmem>>, vector<32x256xf32>
      %c0_108 = arith.constant 0 : index
      %c0_109 = arith.constant 0 : index
      %252 = vector.load %arg2[%c0_108, %c0_109] : memref<1x256xf32, #tpu.memory_space<vmem>>, vector<1x256xf32>
      %c0_110 = arith.constant 0 : index
      %c0_111 = arith.constant 0 : index
      %253 = vector.load %arg3[%c0_110, %c0_111] : memref<1x256xf32, #tpu.memory_space<vmem>>, vector<1x256xf32>
      %cst_112 = arith.constant dense<0.000000e+00> : vector<32xf32>
      %254 = vector.multi_reduction <add>, %251, %cst_112 [1] : vector<32x256xf32> to vector<32xf32>
      %255 = vector.shape_cast %254 : vector<32xf32> to vector<32x1xf32>
      %cst_113 = arith.constant 2.560000e+02 : f32
      %256 = vector.broadcast %cst_113 : f32 to vector<32x1xf32>
      %257 = arith.divf %255, %256 : vector<32x1xf32>
      %258 = vector.broadcast %257 : vector<32x1xf32> to vector<32x256xf32>
      %259 = arith.subf %251, %258 : vector<32x256xf32>
      %260 = arith.mulf %259, %259 : vector<32x256xf32>
      %cst_114 = arith.constant dense<0.000000e+00> : vector<32xf32>
      %261 = vector.multi_reduction <add>, %260, %cst_114 [1] : vector<32x256xf32> to vector<32xf32>
      %262 = vector.shape_cast %261 : vector<32xf32> to vector<32x1xf32>
      %cst_115 = arith.constant 2.560000e+02 : f32
      %263 = vector.broadcast %cst_115 : f32 to vector<32x1xf32>
      %264 = arith.divf %262, %263 : vector<32x1xf32>
      %265 = vector.broadcast %257 : vector<32x1xf32> to vector<32x256xf32>
      %266 = arith.subf %251, %265 : vector<32x256xf32>
      %cst_116 = arith.constant 9.99999996E-13 : f32
      %267 = vector.broadcast %cst_116 : f32 to vector<32x1xf32>
      %268 = arith.addf %264, %267 : vector<32x1xf32>
      %269 = math.rsqrt %268 : vector<32x1xf32>
      %270 = vector.broadcast %269 : vector<32x1xf32> to vector<32x256xf32>
      %271 = arith.mulf %266, %270 : vector<32x256xf32>
      %272 = vector.broadcast %252 : vector<1x256xf32> to vector<32x256xf32>
      %273 = arith.mulf %271, %272 : vector<32x256xf32>
      %274 = vector.broadcast %253 : vector<1x256xf32> to vector<32x256xf32>
      %275 = arith.addf %273, %274 : vector<32x256xf32>
      %c0_117 = arith.constant 0 : index
      %c0_118 = arith.constant 0 : index
      %276 = vector.load %arg17[%c0_117, %c0_118] : memref<32x256xf32, #tpu.memory_space<vmem>>, vector<32x256xf32>
      tpu.vector_store %arg17[%c0_117, %c0_118], %275 {strides = array<i32>} : memref<32x256xf32, #tpu.memory_space<vmem>>, vector<32x256xf32>,
    } else {
    }
    %c0 = arith.constant 0 : index
    %c0_1 = arith.constant 0 : index
    %3 = vector.load %arg17[%c0, %c0_1] : memref<32x256xf32, #tpu.memory_space<vmem>>, vector<32x256xf32>
    %4 = arith.truncf %3 : vector<32x256xf32> to vector<32x256xbf16>
    %c0_2 = arith.constant 0 : index
    %c0_3 = arith.constant 0 : index
    %c0_4 = arith.constant 0 : index
    %5 = vector.load %arg4[%c0_2, %c0_3, %c0_4] : memref<1x256x768xbf16, #tpu.memory_space<vmem>>, vector<1x256x768xbf16>
    %6 = vector.shape_cast %5 : vector<1x256x768xbf16> to vector<256x768xbf16>
    %cst = arith.constant dense<0.000000e+00> : vector<32x768xf32>
    %7 = tpu.matmul %4, %6, %cst {dimension_numbers = #tpu.dot_dimension_numbers<[1], [0], [0], [1], [0, 0, 1, 1], [], []>} : vector<32x256xbf16>, vector<256x768xbf16>, vector<32x768xf32> -> vector<32x768xf32>
    %c0_5 = arith.constant 0 : index
    %c0_6 = arith.constant 0 : index
    %c0_7 = arith.constant 0 : index
    %8 = vector.load %arg5[%c0_5, %c0_6, %c0_7] : memref<1x1x768xf32, #tpu.memory_space<vmem>>, vector<1x1x768xf32>
    %9 = vector.shape_cast %8 : vector<1x1x768xf32> to vector<1x768xf32>
    %10 = vector.broadcast %9 : vector<1x768xf32> to vector<32x768xf32>
    %11 = arith.addf %7, %10 : vector<32x768xf32>
    %12 = vector.extract_strided_slice %11 {offsets = [0, 0], sizes = [32, 256], strides = [1, 1]} : vector<32x768xf32> to vector<32x256xf32>
    %cst_8 = arith.constant 1.250000e-01 : f32
    %13 = vector.broadcast %cst_8 : f32 to vector<32x256xf32>
    %14 = arith.mulf %12, %13 : vector<32x256xf32>
    %15 = arith.truncf %14 : vector<32x256xf32> to vector<32x256xbf16>
    %16 = vector.extract_strided_slice %11 {offsets = [0, 256], sizes = [32, 256], strides = [1, 1]} : vector<32x768xf32> to vector<32x256xf32>
    %17 = arith.truncf %16 : vector<32x256xf32> to vector<32x256xbf16>
    %18 = vector.extract_strided_slice %11 {offsets = [0, 512], sizes = [32, 256], strides = [1, 1]} : vector<32x768xf32> to vector<32x256xf32>
    %19 = arith.truncf %18 : vector<32x256xf32> to vector<32x256xbf16>
    %20 = vector.extract_strided_slice %15 {offsets = [0, 0], sizes = [16, 64], strides = [1, 1]} : vector<32x256xbf16> to vector<16x64xbf16>
    %21 = vector.extract_strided_slice %17 {offsets = [0, 0], sizes = [16, 64], strides = [1, 1]} : vector<32x256xbf16> to vector<16x64xbf16>
    %22 = vector.extract_strided_slice %19 {offsets = [0, 0], sizes = [16, 64], strides = [1, 1]} : vector<32x256xbf16> to vector<16x64xbf16>
    %cst_9 = arith.constant dense<0.000000e+00> : vector<16x16xf32>
    %23 = tpu.matmul %20, %21, %cst_9 {dimension_numbers = #tpu.dot_dimension_numbers<[1], [1], [0], [0], [0, 0, 1, 0], [], []>} : vector<16x64xbf16>, vector<16x64xbf16>, vector<16x16xf32> -> vector<16x16xf32>
    %cst_10 = arith.constant dense<0xFF800000> : vector<16xf32>
    %24 = vector.multi_reduction <maximumf>, %23, %cst_10 [1] : vector<16x16xf32> to vector<16xf32>
    %25 = vector.shape_cast %24 : vector<16xf32> to vector<16x1xf32>
    %26 = vector.broadcast %25 : vector<16x1xf32> to vector<16x16xf32>
    %27 = arith.subf %23, %26 : vector<16x16xf32>
    %28 = math.exp %27 : vector<16x16xf32>
    %cst_11 = arith.constant dense<0.000000e+00> : vector<16xf32>
    %29 = vector.multi_reduction <add>, %28, %cst_11 [1] : vector<16x16xf32> to vector<16xf32>
    %30 = vector.shape_cast %29 : vector<16xf32> to vector<16x1xf32>
    %31 = tpu.reciprocal %30 {approx = true} : vector<16x1xf32> -> vector<16x1xf32>
    %32 = vector.broadcast %31 : vector<16x1xf32> to vector<16x16xf32>
    %33 = arith.mulf %28, %32 : vector<16x16xf32>
    %34 = arith.truncf %33 : vector<16x16xf32> to vector<16x16xbf16>
    %cst_12 = arith.constant dense<0.000000e+00> : vector<16x64xf32>
    %35 = tpu.matmul %34, %22, %cst_12 {dimension_numbers = #tpu.dot_dimension_numbers<[1], [0], [0], [1], [0, 0, 1, 1], [], []>} : vector<16x16xbf16>, vector<16x64xbf16>, vector<16x64xf32> -> vector<16x64xf32>
    %c0_13 = arith.constant 0 : index
    %c0_14 = arith.constant 0 : index
    %36 = vector.load %arg18[%c0_13, %c0_14] : memref<32x256xf32, #tpu.memory_space<vmem>>, vector<16x64xf32>
    tpu.vector_store %arg18[%c0_13, %c0_14], %35 {strides = array<i32>} : memref<32x256xf32, #tpu.memory_space<vmem>>, vector<16x64xf32>,
    %37 = vector.extract_strided_slice %15 {offsets = [0, 64], sizes = [16, 64], strides = [1, 1]} : vector<32x256xbf16> to vector<16x64xbf16>
    %38 = vector.extract_strided_slice %17 {offsets = [0, 64], sizes = [16, 64], strides = [1, 1]} : vector<32x256xbf16> to vector<16x64xbf16>
    %39 = vector.extract_strided_slice %19 {offsets = [0, 64], sizes = [16, 64], strides = [1, 1]} : vector<32x256xbf16> to vector<16x64xbf16>
    %cst_15 = arith.constant dense<0.000000e+00> : vector<16x16xf32>
    %40 = tpu.matmul %37, %38, %cst_15 {dimension_numbers = #tpu.dot_dimension_numbers<[1], [1], [0], [0], [0, 0, 1, 0], [], []>} : vector<16x64xbf16>, vector<16x64xbf16>, vector<16x16xf32> -> vector<16x16xf32>
    %cst_16 = arith.constant dense<0xFF800000> : vector<16xf32>
    %41 = vector.multi_reduction <maximumf>, %40, %cst_16 [1] : vector<16x16xf32> to vector<16xf32>
    %42 = vector.shape_cast %41 : vector<16xf32> to vector<16x1xf32>
    %43 = vector.broadcast %42 : vector<16x1xf32> to vector<16x16xf32>
    %44 = arith.subf %40, %43 : vector<16x16xf32>
    %45 = math.exp %44 : vector<16x16xf32>
    %cst_17 = arith.constant dense<0.000000e+00> : vector<16xf32>
    %46 = vector.multi_reduction <add>, %45, %cst_17 [1] : vector<16x16xf32> to vector<16xf32>
    %47 = vector.shape_cast %46 : vector<16xf32> to vector<16x1xf32>
    %48 = tpu.reciprocal %47 {approx = true} : vector<16x1xf32> -> vector<16x1xf32>
    %49 = vector.broadcast %48 : vector<16x1xf32> to vector<16x16xf32>
    %50 = arith.mulf %45, %49 : vector<16x16xf32>
    %51 = arith.truncf %50 : vector<16x16xf32> to vector<16x16xbf16>
    %cst_18 = arith.constant dense<0.000000e+00> : vector<16x64xf32>
    %52 = tpu.matmul %51, %39, %cst_18 {dimension_numbers = #tpu.dot_dimension_numbers<[1], [0], [0], [1], [0, 0, 1, 1], [], []>} : vector<16x16xbf16>, vector<16x64xbf16>, vector<16x64xf32> -> vector<16x64xf32>
    %c0_19 = arith.constant 0 : index
    %c64 = arith.constant 64 : index
    %53 = vector.load %arg18[%c0_19, %c64] : memref<32x256xf32, #tpu.memory_space<vmem>>, vector<16x64xf32>
    tpu.vector_store %arg18[%c0_19, %c64], %52 {strides = array<i32>} : memref<32x256xf32, #tpu.memory_space<vmem>>, vector<16x64xf32>,
    %54 = vector.extract_strided_slice %15 {offsets = [0, 128], sizes = [16, 64], strides = [1, 1]} : vector<32x256xbf16> to vector<16x64xbf16>
    %55 = vector.extract_strided_slice %17 {offsets = [0, 128], sizes = [16, 64], strides = [1, 1]} : vector<32x256xbf16> to vector<16x64xbf16>
    %56 = vector.extract_strided_slice %19 {offsets = [0, 128], sizes = [16, 64], strides = [1, 1]} : vector<32x256xbf16> to vector<16x64xbf16>
    %cst_20 = arith.constant dense<0.000000e+00> : vector<16x16xf32>
    %57 = tpu.matmul %54, %55, %cst_20 {dimension_numbers = #tpu.dot_dimension_numbers<[1], [1], [0], [0], [0, 0, 1, 0], [], []>} : vector<16x64xbf16>, vector<16x64xbf16>, vector<16x16xf32> -> vector<16x16xf32>
    %cst_21 = arith.constant dense<0xFF800000> : vector<16xf32>
    %58 = vector.multi_reduction <maximumf>, %57, %cst_21 [1] : vector<16x16xf32> to vector<16xf32>
    %59 = vector.shape_cast %58 : vector<16xf32> to vector<16x1xf32>
    %60 = vector.broadcast %59 : vector<16x1xf32> to vector<16x16xf32>
    %61 = arith.subf %57, %60 : vector<16x16xf32>
    %62 = math.exp %61 : vector<16x16xf32>
    %cst_22 = arith.constant dense<0.000000e+00> : vector<16xf32>
    %63 = vector.multi_reduction <add>, %62, %cst_22 [1] : vector<16x16xf32> to vector<16xf32>
    %64 = vector.shape_cast %63 : vector<16xf32> to vector<16x1xf32>
    %65 = tpu.reciprocal %64 {approx = true} : vector<16x1xf32> -> vector<16x1xf32>
    %66 = vector.broadcast %65 : vector<16x1xf32> to vector<16x16xf32>
    %67 = arith.mulf %62, %66 : vector<16x16xf32>
    %68 = arith.truncf %67 : vector<16x16xf32> to vector<16x16xbf16>
    %cst_23 = arith.constant dense<0.000000e+00> : vector<16x64xf32>
    %69 = tpu.matmul %68, %56, %cst_23 {dimension_numbers = #tpu.dot_dimension_numbers<[1], [0], [0], [1], [0, 0, 1, 1], [], []>} : vector<16x16xbf16>, vector<16x64xbf16>, vector<16x64xf32> -> vector<16x64xf32>
    %c0_24 = arith.constant 0 : index
    %c128 = arith.constant 128 : index
    %70 = vector.load %arg18[%c0_24, %c128] : memref<32x256xf32, #tpu.memory_space<vmem>>, vector<16x64xf32>
    tpu.vector_store %arg18[%c0_24, %c128], %69 {strides = array<i32>} : memref<32x256xf32, #tpu.memory_space<vmem>>, vector<16x64xf32>,
    %71 = vector.extract_strided_slice %15 {offsets = [0, 192], sizes = [16, 64], strides = [1, 1]} : vector<32x256xbf16> to vector<16x64xbf16>
    %72 = vector.extract_strided_slice %17 {offsets = [0, 192], sizes = [16, 64], strides = [1, 1]} : vector<32x256xbf16> to vector<16x64xbf16>
    %73 = vector.extract_strided_slice %19 {offsets = [0, 192], sizes = [16, 64], strides = [1, 1]} : vector<32x256xbf16> to vector<16x64xbf16>
    %cst_25 = arith.constant dense<0.000000e+00> : vector<16x16xf32>
    %74 = tpu.matmul %71, %72, %cst_25 {dimension_numbers = #tpu.dot_dimension_numbers<[1], [1], [0], [0], [0, 0, 1, 0], [], []>} : vector<16x64xbf16>, vector<16x64xbf16>, vector<16x16xf32> -> vector<16x16xf32>
    %cst_26 = arith.constant dense<0xFF800000> : vector<16xf32>
    %75 = vector.multi_reduction <maximumf>, %74, %cst_26 [1] : vector<16x16xf32> to vector<16xf32>
    %76 = vector.shape_cast %75 : vector<16xf32> to vector<16x1xf32>
    %77 = vector.broadcast %76 : vector<16x1xf32> to vector<16x16xf32>
    %78 = arith.subf %74, %77 : vector<16x16xf32>
    %79 = math.exp %78 : vector<16x16xf32>
    %cst_27 = arith.constant dense<0.000000e+00> : vector<16xf32>
    %80 = vector.multi_reduction <add>, %79, %cst_27 [1] : vector<16x16xf32> to vector<16xf32>
    %81 = vector.shape_cast %80 : vector<16xf32> to vector<16x1xf32>
    %82 = tpu.reciprocal %81 {approx = true} : vector<16x1xf32> -> vector<16x1xf32>
    %83 = vector.broadcast %82 : vector<16x1xf32> to vector<16x16xf32>
    %84 = arith.mulf %79, %83 : vector<16x16xf32>
    %85 = arith.truncf %84 : vector<16x16xf32> to vector<16x16xbf16>
    %cst_28 = arith.constant dense<0.000000e+00> : vector<16x64xf32>
    %86 = tpu.matmul %85, %73, %cst_28 {dimension_numbers = #tpu.dot_dimension_numbers<[1], [0], [0], [1], [0, 0, 1, 1], [], []>} : vector<16x16xbf16>, vector<16x64xbf16>, vector<16x64xf32> -> vector<16x64xf32>
    %c0_29 = arith.constant 0 : index
    %c192 = arith.constant 192 : index
    %87 = vector.load %arg18[%c0_29, %c192] : memref<32x256xf32, #tpu.memory_space<vmem>>, vector<16x64xf32>
    tpu.vector_store %arg18[%c0_29, %c192], %86 {strides = array<i32>} : memref<32x256xf32, #tpu.memory_space<vmem>>, vector<16x64xf32>,
    %88 = vector.extract_strided_slice %15 {offsets = [16, 0], sizes = [16, 64], strides = [1, 1]} : vector<32x256xbf16> to vector<16x64xbf16>
    %89 = vector.extract_strided_slice %17 {offsets = [16, 0], sizes = [16, 64], strides = [1, 1]} : vector<32x256xbf16> to vector<16x64xbf16>
    %90 = vector.extract_strided_slice %19 {offsets = [16, 0], sizes = [16, 64], strides = [1, 1]} : vector<32x256xbf16> to vector<16x64xbf16>
    %cst_30 = arith.constant dense<0.000000e+00> : vector<16x16xf32>
    %91 = tpu.matmul %88, %89, %cst_30 {dimension_numbers = #tpu.dot_dimension_numbers<[1], [1], [0], [0], [0, 0, 1, 0], [], []>} : vector<16x64xbf16>, vector<16x64xbf16>, vector<16x16xf32> -> vector<16x16xf32>
    %cst_31 = arith.constant dense<0xFF800000> : vector<16xf32>
    %92 = vector.multi_reduction <maximumf>, %91, %cst_31 [1] : vector<16x16xf32> to vector<16xf32>
    %93 = vector.shape_cast %92 : vector<16xf32> to vector<16x1xf32>
    %94 = vector.broadcast %93 : vector<16x1xf32> to vector<16x16xf32>
    %95 = arith.subf %91, %94 : vector<16x16xf32>
    %96 = math.exp %95 : vector<16x16xf32>
    %cst_32 = arith.constant dense<0.000000e+00> : vector<16xf32>
    %97 = vector.multi_reduction <add>, %96, %cst_32 [1] : vector<16x16xf32> to vector<16xf32>
    %98 = vector.shape_cast %97 : vector<16xf32> to vector<16x1xf32>
    %99 = tpu.reciprocal %98 {approx = true} : vector<16x1xf32> -> vector<16x1xf32>
    %100 = vector.broadcast %99 : vector<16x1xf32> to vector<16x16xf32>
    %101 = arith.mulf %96, %100 : vector<16x16xf32>
    %102 = arith.truncf %101 : vector<16x16xf32> to vector<16x16xbf16>
    %cst_33 = arith.constant dense<0.000000e+00> : vector<16x64xf32>
    %103 = tpu.matmul %102, %90, %cst_33 {dimension_numbers = #tpu.dot_dimension_numbers<[1], [0], [0], [1], [0, 0, 1, 1], [], []>} : vector<16x16xbf16>, vector<16x64xbf16>, vector<16x64xf32> -> vector<16x64xf32>
    %c16 = arith.constant 16 : index
    %c0_34 = arith.constant 0 : index
    %104 = vector.load %arg18[%c16, %c0_34] : memref<32x256xf32, #tpu.memory_space<vmem>>, vector<16x64xf32>
    tpu.vector_store %arg18[%c16, %c0_34], %103 {strides = array<i32>} : memref<32x256xf32, #tpu.memory_space<vmem>>, vector<16x64xf32>,
    %105 = vector.extract_strided_slice %15 {offsets = [16, 64], sizes = [16, 64], strides = [1, 1]} : vector<32x256xbf16> to vector<16x64xbf16>
    %106 = vector.extract_strided_slice %17 {offsets = [16, 64], sizes = [16, 64], strides = [1, 1]} : vector<32x256xbf16> to vector<16x64xbf16>
    %107 = vector.extract_strided_slice %19 {offsets = [16, 64], sizes = [16, 64], strides = [1, 1]} : vector<32x256xbf16> to vector<16x64xbf16>
    %cst_35 = arith.constant dense<0.000000e+00> : vector<16x16xf32>
    %108 = tpu.matmul %105, %106, %cst_35 {dimension_numbers = #tpu.dot_dimension_numbers<[1], [1], [0], [0], [0, 0, 1, 0], [], []>} : vector<16x64xbf16>, vector<16x64xbf16>, vector<16x16xf32> -> vector<16x16xf32>
    %cst_36 = arith.constant dense<0xFF800000> : vector<16xf32>
    %109 = vector.multi_reduction <maximumf>, %108, %cst_36 [1] : vector<16x16xf32> to vector<16xf32>
    %110 = vector.shape_cast %109 : vector<16xf32> to vector<16x1xf32>
    %111 = vector.broadcast %110 : vector<16x1xf32> to vector<16x16xf32>
    %112 = arith.subf %108, %111 : vector<16x16xf32>
    %113 = math.exp %112 : vector<16x16xf32>
    %cst_37 = arith.constant dense<0.000000e+00> : vector<16xf32>
    %114 = vector.multi_reduction <add>, %113, %cst_37 [1] : vector<16x16xf32> to vector<16xf32>
    %115 = vector.shape_cast %114 : vector<16xf32> to vector<16x1xf32>
    %116 = tpu.reciprocal %115 {approx = true} : vector<16x1xf32> -> vector<16x1xf32>
    %117 = vector.broadcast %116 : vector<16x1xf32> to vector<16x16xf32>
    %118 = arith.mulf %113, %117 : vector<16x16xf32>
    %119 = arith.truncf %118 : vector<16x16xf32> to vector<16x16xbf16>
    %cst_38 = arith.constant dense<0.000000e+00> : vector<16x64xf32>
    %120 = tpu.matmul %119, %107, %cst_38 {dimension_numbers = #tpu.dot_dimension_numbers<[1], [0], [0], [1], [0, 0, 1, 1], [], []>} : vector<16x16xbf16>, vector<16x64xbf16>, vector<16x64xf32> -> vector<16x64xf32>
    %c16_39 = arith.constant 16 : index
    %c64_40 = arith.constant 64 : index
    %121 = vector.load %arg18[%c16_39, %c64_40] : memref<32x256xf32, #tpu.memory_space<vmem>>, vector<16x64xf32>
    tpu.vector_store %arg18[%c16_39, %c64_40], %120 {strides = array<i32>} : memref<32x256xf32, #tpu.memory_space<vmem>>, vector<16x64xf32>,
    %122 = vector.extract_strided_slice %15 {offsets = [16, 128], sizes = [16, 64], strides = [1, 1]} : vector<32x256xbf16> to vector<16x64xbf16>
    %123 = vector.extract_strided_slice %17 {offsets = [16, 128], sizes = [16, 64], strides = [1, 1]} : vector<32x256xbf16> to vector<16x64xbf16>
    %124 = vector.extract_strided_slice %19 {offsets = [16, 128], sizes = [16, 64], strides = [1, 1]} : vector<32x256xbf16> to vector<16x64xbf16>
    %cst_41 = arith.constant dense<0.000000e+00> : vector<16x16xf32>
    %125 = tpu.matmul %122, %123, %cst_41 {dimension_numbers = #tpu.dot_dimension_numbers<[1], [1], [0], [0], [0, 0, 1, 0], [], []>} : vector<16x64xbf16>, vector<16x64xbf16>, vector<16x16xf32> -> vector<16x16xf32>
    %cst_42 = arith.constant dense<0xFF800000> : vector<16xf32>
    %126 = vector.multi_reduction <maximumf>, %125, %cst_42 [1] : vector<16x16xf32> to vector<16xf32>
    %127 = vector.shape_cast %126 : vector<16xf32> to vector<16x1xf32>
    %128 = vector.broadcast %127 : vector<16x1xf32> to vector<16x16xf32>
    %129 = arith.subf %125, %128 : vector<16x16xf32>
    %130 = math.exp %129 : vector<16x16xf32>
    %cst_43 = arith.constant dense<0.000000e+00> : vector<16xf32>
    %131 = vector.multi_reduction <add>, %130, %cst_43 [1] : vector<16x16xf32> to vector<16xf32>
    %132 = vector.shape_cast %131 : vector<16xf32> to vector<16x1xf32>
    %133 = tpu.reciprocal %132 {approx = true} : vector<16x1xf32> -> vector<16x1xf32>
    %134 = vector.broadcast %133 : vector<16x1xf32> to vector<16x16xf32>
    %135 = arith.mulf %130, %134 : vector<16x16xf32>
    %136 = arith.truncf %135 : vector<16x16xf32> to vector<16x16xbf16>
    %cst_44 = arith.constant dense<0.000000e+00> : vector<16x64xf32>
    %137 = tpu.matmul %136, %124, %cst_44 {dimension_numbers = #tpu.dot_dimension_numbers<[1], [0], [0], [1], [0, 0, 1, 1], [], []>} : vector<16x16xbf16>, vector<16x64xbf16>, vector<16x64xf32> -> vector<16x64xf32>
    %c16_45 = arith.constant 16 : index
    %c128_46 = arith.constant 128 : index
    %138 = vector.load %arg18[%c16_45, %c128_46] : memref<32x256xf32, #tpu.memory_space<vmem>>, vector<16x64xf32>
    tpu.vector_store %arg18[%c16_45, %c128_46], %137 {strides = array<i32>} : memref<32x256xf32, #tpu.memory_space<vmem>>, vector<16x64xf32>,
    %139 = vector.extract_strided_slice %15 {offsets = [16, 192], sizes = [16, 64], strides = [1, 1]} : vector<32x256xbf16> to vector<16x64xbf16>
    %140 = vector.extract_strided_slice %17 {offsets = [16, 192], sizes = [16, 64], strides = [1, 1]} : vector<32x256xbf16> to vector<16x64xbf16>
    %141 = vector.extract_strided_slice %19 {offsets = [16, 192], sizes = [16, 64], strides = [1, 1]} : vector<32x256xbf16> to vector<16x64xbf16>
    %cst_47 = arith.constant dense<0.000000e+00> : vector<16x16xf32>
    %142 = tpu.matmul %139, %140, %cst_47 {dimension_numbers = #tpu.dot_dimension_numbers<[1], [1], [0], [0], [0, 0, 1, 0], [], []>} : vector<16x64xbf16>, vector<16x64xbf16>, vector<16x16xf32> -> vector<16x16xf32>
    %cst_48 = arith.constant dense<0xFF800000> : vector<16xf32>
    %143 = vector.multi_reduction <maximumf>, %142, %cst_48 [1] : vector<16x16xf32> to vector<16xf32>
    %144 = vector.shape_cast %143 : vector<16xf32> to vector<16x1xf32>
    %145 = vector.broadcast %144 : vector<16x1xf32> to vector<16x16xf32>
    %146 = arith.subf %142, %145 : vector<16x16xf32>
    %147 = math.exp %146 : vector<16x16xf32>
    %cst_49 = arith.constant dense<0.000000e+00> : vector<16xf32>
    %148 = vector.multi_reduction <add>, %147, %cst_49 [1] : vector<16x16xf32> to vector<16xf32>
    %149 = vector.shape_cast %148 : vector<16xf32> to vector<16x1xf32>
    %150 = tpu.reciprocal %149 {approx = true} : vector<16x1xf32> -> vector<16x1xf32>
    %151 = vector.broadcast %150 : vector<16x1xf32> to vector<16x16xf32>
    %152 = arith.mulf %147, %151 : vector<16x16xf32>
    %153 = arith.truncf %152 : vector<16x16xf32> to vector<16x16xbf16>
    %cst_50 = arith.constant dense<0.000000e+00> : vector<16x64xf32>
    %154 = tpu.matmul %153, %141, %cst_50 {dimension_numbers = #tpu.dot_dimension_numbers<[1], [0], [0], [1], [0, 0, 1, 1], [], []>} : vector<16x16xbf16>, vector<16x64xbf16>, vector<16x64xf32> -> vector<16x64xf32>
    %c16_51 = arith.constant 16 : index
    %c192_52 = arith.constant 192 : index
    %155 = vector.load %arg18[%c16_51, %c192_52] : memref<32x256xf32, #tpu.memory_space<vmem>>, vector<16x64xf32>
    tpu.vector_store %arg18[%c16_51, %c192_52], %154 {strides = array<i32>} : memref<32x256xf32, #tpu.memory_space<vmem>>, vector<16x64xf32>,
    %c0_53 = arith.constant 0 : index
    %c0_54 = arith.constant 0 : index
    %156 = vector.load %arg18[%c0_53, %c0_54] : memref<32x256xf32, #tpu.memory_space<vmem>>, vector<32x256xf32>
    %157 = arith.truncf %156 : vector<32x256xf32> to vector<32x256xbf16>
    %c0_55 = arith.constant 0 : index
    %c0_56 = arith.constant 0 : index
    %c0_57 = arith.constant 0 : index
    %158 = vector.load %arg6[%c0_55, %c0_56, %c0_57] : memref<1x256x256xbf16, #tpu.memory_space<vmem>>, vector<1x256x256xbf16>
    %159 = vector.shape_cast %158 : vector<1x256x256xbf16> to vector<256x256xbf16>
    %cst_58 = arith.constant dense<0.000000e+00> : vector<32x256xf32>
    %160 = tpu.matmul %157, %159, %cst_58 {dimension_numbers = #tpu.dot_dimension_numbers<[1], [0], [0], [1], [0, 0, 1, 1], [], []>} : vector<32x256xbf16>, vector<256x256xbf16>, vector<32x256xf32> -> vector<32x256xf32>
    %c0_59 = arith.constant 0 : index
    %c0_60 = arith.constant 0 : index
    %c0_61 = arith.constant 0 : index
    %161 = vector.load %arg7[%c0_59, %c0_60, %c0_61] : memref<1x1x256xf32, #tpu.memory_space<vmem>>, vector<1x1x256xf32>
    %162 = vector.shape_cast %161 : vector<1x1x256xf32> to vector<1x256xf32>
    %163 = vector.broadcast %162 : vector<1x256xf32> to vector<32x256xf32>
    %164 = arith.addf %160, %163 : vector<32x256xf32>
    %165 = arith.addf %164, %3 : vector<32x256xf32>
    %c0_62 = arith.constant 0 : index
    %c0_63 = arith.constant 0 : index
    %c0_64 = arith.constant 0 : index
    %166 = vector.load %arg8[%c0_62, %c0_63, %c0_64] : memref<1x1x256xf32, #tpu.memory_space<vmem>>, vector<1x1x256xf32>
    %167 = vector.shape_cast %166 : vector<1x1x256xf32> to vector<1x256xf32>
    %c0_65 = arith.constant 0 : index
    %c0_66 = arith.constant 0 : index
    %c0_67 = arith.constant 0 : index
    %168 = vector.load %arg9[%c0_65, %c0_66, %c0_67] : memref<1x1x256xf32, #tpu.memory_space<vmem>>, vector<1x1x256xf32>
    %169 = vector.shape_cast %168 : vector<1x1x256xf32> to vector<1x256xf32>
    %cst_68 = arith.constant dense<0.000000e+00> : vector<32xf32>
    %170 = vector.multi_reduction <add>, %165, %cst_68 [1] : vector<32x256xf32> to vector<32xf32>
    %171 = vector.shape_cast %170 : vector<32xf32> to vector<32x1xf32>
    %cst_69 = arith.constant 2.560000e+02 : f32
    %172 = vector.broadcast %cst_69 : f32 to vector<32x1xf32>
    %173 = arith.divf %171, %172 : vector<32x1xf32>
    %174 = vector.broadcast %173 : vector<32x1xf32> to vector<32x256xf32>
    %175 = arith.subf %165, %174 : vector<32x256xf32>
    %176 = arith.mulf %175, %175 : vector<32x256xf32>
    %cst_70 = arith.constant dense<0.000000e+00> : vector<32xf32>
    %177 = vector.multi_reduction <add>, %176, %cst_70 [1] : vector<32x256xf32> to vector<32xf32>
    %178 = vector.shape_cast %177 : vector<32xf32> to vector<32x1xf32>
    %cst_71 = arith.constant 2.560000e+02 : f32
    %179 = vector.broadcast %cst_71 : f32 to vector<32x1xf32>
    %180 = arith.divf %178, %179 : vector<32x1xf32>
    %181 = vector.broadcast %173 : vector<32x1xf32> to vector<32x256xf32>
    %182 = arith.subf %165, %181 : vector<32x256xf32>
    %cst_72 = arith.constant 9.99999996E-13 : f32
    %183 = vector.broadcast %cst_72 : f32 to vector<32x1xf32>
    %184 = arith.addf %180, %183 : vector<32x1xf32>
    %185 = math.rsqrt %184 : vector<32x1xf32>
    %186 = vector.broadcast %185 : vector<32x1xf32> to vector<32x256xf32>
    %187 = arith.mulf %182, %186 : vector<32x256xf32>
    %188 = vector.broadcast %167 : vector<1x256xf32> to vector<32x256xf32>
    %189 = arith.mulf %187, %188 : vector<32x256xf32>
    %190 = vector.broadcast %169 : vector<1x256xf32> to vector<32x256xf32>
    %191 = arith.addf %189, %190 : vector<32x256xf32>
    %192 = arith.truncf %191 : vector<32x256xf32> to vector<32x256xbf16>
    %c0_73 = arith.constant 0 : index
    %c0_74 = arith.constant 0 : index
    %c0_75 = arith.constant 0 : index
    %193 = vector.load %arg10[%c0_73, %c0_74, %c0_75] : memref<1x256x512xbf16, #tpu.memory_space<vmem>>, vector<1x256x512xbf16>
    %194 = vector.shape_cast %193 : vector<1x256x512xbf16> to vector<256x512xbf16>
    %cst_76 = arith.constant dense<0.000000e+00> : vector<32x512xf32>
    %195 = tpu.matmul %192, %194, %cst_76 {dimension_numbers = #tpu.dot_dimension_numbers<[1], [0], [0], [1], [0, 0, 1, 1], [], []>} : vector<32x256xbf16>, vector<256x512xbf16>, vector<32x512xf32> -> vector<32x512xf32>
    %c0_77 = arith.constant 0 : index
    %c0_78 = arith.constant 0 : index
    %c0_79 = arith.constant 0 : index
    %196 = vector.load %arg11[%c0_77, %c0_78, %c0_79] : memref<1x1x512xf32, #tpu.memory_space<vmem>>, vector<1x1x512xf32>
    %197 = vector.shape_cast %196 : vector<1x1x512xf32> to vector<1x512xf32>
    %198 = vector.broadcast %197 : vector<1x512xf32> to vector<32x512xf32>
    %199 = arith.addf %195, %198 : vector<32x512xf32>
    %200 = arith.mulf %199, %199 : vector<32x512xf32>
    %201 = arith.mulf %199, %200 : vector<32x512xf32>
    %cst_80 = arith.constant 4.471500e-02 : f32
    %202 = vector.broadcast %cst_80 : f32 to vector<32x512xf32>
    %203 = arith.mulf %202, %201 : vector<32x512xf32>
    %204 = arith.addf %199, %203 : vector<32x512xf32>
    %cst_81 = arith.constant 0.797884583 : f32
    %205 = vector.broadcast %cst_81 : f32 to vector<32x512xf32>
    %206 = arith.mulf %205, %204 : vector<32x512xf32>
    %207 = math.tanh %206 : vector<32x512xf32>
    %cst_82 = arith.constant 1.000000e+00 : f32
    %208 = vector.broadcast %cst_82 : f32 to vector<32x512xf32>
    %209 = arith.addf %208, %207 : vector<32x512xf32>
    %cst_83 = arith.constant 5.000000e-01 : f32
    %210 = vector.broadcast %cst_83 : f32 to vector<32x512xf32>
    %211 = arith.mulf %210, %209 : vector<32x512xf32>
    %212 = arith.mulf %199, %211 : vector<32x512xf32>
    %213 = arith.truncf %212 : vector<32x512xf32> to vector<32x512xbf16>
    %c0_84 = arith.constant 0 : index
    %c0_85 = arith.constant 0 : index
    %c0_86 = arith.constant 0 : index
    %214 = vector.load %arg12[%c0_84, %c0_85, %c0_86] : memref<1x512x256xbf16, #tpu.memory_space<vmem>>, vector<1x512x256xbf16>
    %215 = vector.shape_cast %214 : vector<1x512x256xbf16> to vector<512x256xbf16>
    %cst_87 = arith.constant dense<0.000000e+00> : vector<32x256xf32>
    %216 = tpu.matmul %213, %215, %cst_87 {dimension_numbers = #tpu.dot_dimension_numbers<[1], [0], [0], [1], [0, 0, 1, 1], [], []>} : vector<32x512xbf16>, vector<512x256xbf16>, vector<32x256xf32> -> vector<32x256xf32>
    %c0_88 = arith.constant 0 : index
    %c0_89 = arith.constant 0 : index
    %c0_90 = arith.constant 0 : index
    %217 = vector.load %arg13[%c0_88, %c0_89, %c0_90] : memref<1x1x256xf32, #tpu.memory_space<vmem>>, vector<1x1x256xf32>
    %218 = vector.shape_cast %217 : vector<1x1x256xf32> to vector<1x256xf32>
    %219 = vector.broadcast %218 : vector<1x256xf32> to vector<32x256xf32>
    %220 = arith.addf %216, %219 : vector<32x256xf32>
    %221 = arith.addf %220, %191 : vector<32x256xf32>
    %c0_91 = arith.constant 0 : index
    %c0_92 = arith.constant 0 : index
    %c0_93 = arith.constant 0 : index
    %222 = vector.load %arg14[%c0_91, %c0_92, %c0_93] : memref<1x1x256xf32, #tpu.memory_space<vmem>>, vector<1x1x256xf32>
    %223 = vector.shape_cast %222 : vector<1x1x256xf32> to vector<1x256xf32>
    %c0_94 = arith.constant 0 : index
    %c0_95 = arith.constant 0 : index
    %c0_96 = arith.constant 0 : index
    %224 = vector.load %arg15[%c0_94, %c0_95, %c0_96] : memref<1x1x256xf32, #tpu.memory_space<vmem>>, vector<1x1x256xf32>
    %225 = vector.shape_cast %224 : vector<1x1x256xf32> to vector<1x256xf32>
    %cst_97 = arith.constant dense<0.000000e+00> : vector<32xf32>
    %226 = vector.multi_reduction <add>, %221, %cst_97 [1] : vector<32x256xf32> to vector<32xf32>
    %227 = vector.shape_cast %226 : vector<32xf32> to vector<32x1xf32>
    %cst_98 = arith.constant 2.560000e+02 : f32
    %228 = vector.broadcast %cst_98 : f32 to vector<32x1xf32>
    %229 = arith.divf %227, %228 : vector<32x1xf32>
    %230 = vector.broadcast %229 : vector<32x1xf32> to vector<32x256xf32>
    %231 = arith.subf %221, %230 : vector<32x256xf32>
    %232 = arith.mulf %231, %231 : vector<32x256xf32>
    %cst_99 = arith.constant dense<0.000000e+00> : vector<32xf32>
    %233 = vector.multi_reduction <add>, %232, %cst_99 [1] : vector<32x256xf32> to vector<32xf32>
    %234 = vector.shape_cast %233 : vector<32xf32> to vector<32x1xf32>
    %cst_100 = arith.constant 2.560000e+02 : f32
    %235 = vector.broadcast %cst_100 : f32 to vector<32x1xf32>
    %236 = arith.divf %234, %235 : vector<32x1xf32>
    %237 = vector.broadcast %229 : vector<32x1xf32> to vector<32x256xf32>
    %238 = arith.subf %221, %237 : vector<32x256xf32>
    %cst_101 = arith.constant 9.99999996E-13 : f32
    %239 = vector.broadcast %cst_101 : f32 to vector<32x1xf32>
    %240 = arith.addf %236, %239 : vector<32x1xf32>
    %241 = math.rsqrt %240 : vector<32x1xf32>
    %242 = vector.broadcast %241 : vector<32x1xf32> to vector<32x256xf32>
    %243 = arith.mulf %238, %242 : vector<32x256xf32>
    %244 = vector.broadcast %223 : vector<1x256xf32> to vector<32x256xf32>
    %245 = arith.mulf %243, %244 : vector<32x256xf32>
    %246 = vector.broadcast %225 : vector<1x256xf32> to vector<32x256xf32>
    %247 = arith.addf %245, %246 : vector<32x256xf32>
    %c0_102 = arith.constant 0 : index
    %c0_103 = arith.constant 0 : index
    %248 = vector.load %arg17[%c0_102, %c0_103] : memref<32x256xf32, #tpu.memory_space<vmem>>, vector<32x256xf32>
    tpu.vector_store %arg17[%c0_102, %c0_103], %247 {strides = array<i32>} : memref<32x256xf32, #tpu.memory_space<vmem>>, vector<32x256xf32>,
    %249 = arith.truncf %247 : vector<32x256xf32> to vector<32x256xbf16>
    %c0_104 = arith.constant 0 : index
    %c0_105 = arith.constant 0 : index
    %250 = vector.load %arg16[%c0_104, %c0_105] : memref<32x256xbf16, #tpu.memory_space<vmem>>, vector<32x256xbf16>
    tpu.vector_store %arg16[%c0_104, %c0_105], %249 {strides = array<i32>} : memref<32x256xbf16, #tpu.memory_space<vmem>>, vector<32x256xbf16>,
    return
  }
  func.func @transform_0(%arg0: i32) -> (i32, i32) {
    %c0_i32 = arith.constant 0 : i32
    %c0_i32_0 = arith.constant 0 : i32
    %c0_i32_1 = arith.constant 0 : i32
    return %c0_i32, %c0_i32_0 : i32, i32
  }
  func.func @transform_1(%arg0: i32) -> (i32, i32) {
    %c0_i32 = arith.constant 0 : i32
    %c0_i32_0 = arith.constant 0 : i32
    %c0_i32_1 = arith.constant 0 : i32
    return %c0_i32, %c0_i32_0 : i32, i32
  }
  func.func @transform_2(%arg0: i32) -> (i32, i32) {
    %c0_i32 = arith.constant 0 : i32
    %c0_i32_0 = arith.constant 0 : i32
    %c0_i32_1 = arith.constant 0 : i32
    return %c0_i32, %c0_i32_0 : i32, i32
  }
  func.func @transform_3(%arg0: i32) -> (i32, i32, i32) {
    %c0_i32 = arith.constant 0 : i32
    %c0_i32_0 = arith.constant 0 : i32
    %c0_i32_1 = arith.constant 0 : i32
    return %arg0, %c0_i32, %c0_i32_0 : i32, i32, i32
  }
  func.func @transform_4(%arg0: i32) -> (i32, i32, i32) {
    %c0_i32 = arith.constant 0 : i32
    %c0_i32_0 = arith.constant 0 : i32
    %c0_i32_1 = arith.constant 0 : i32
    return %arg0, %c0_i32, %c0_i32_0 : i32, i32, i32
  }
  func.func @transform_5(%arg0: i32) -> (i32, i32, i32) {
    %c0_i32 = arith.constant 0 : i32
    %c0_i32_0 = arith.constant 0 : i32
    %c0_i32_1 = arith.constant 0 : i32
    return %arg0, %c0_i32, %c0_i32_0 : i32, i32, i32
  }
  func.func @transform_6(%arg0: i32) -> (i32, i32, i32) {
    %c0_i32 = arith.constant 0 : i32
    %c0_i32_0 = arith.constant 0 : i32
    %c0_i32_1 = arith.constant 0 : i32
    return %arg0, %c0_i32, %c0_i32_0 : i32, i32, i32
  }
  func.func @transform_7(%arg0: i32) -> (i32, i32, i32) {
    %c0_i32 = arith.constant 0 : i32
    %c0_i32_0 = arith.constant 0 : i32
    %c0_i32_1 = arith.constant 0 : i32
    return %arg0, %c0_i32, %c0_i32_0 : i32, i32, i32
  }
  func.func @transform_8(%arg0: i32) -> (i32, i32, i32) {
    %c0_i32 = arith.constant 0 : i32
    %c0_i32_0 = arith.constant 0 : i32
    %c0_i32_1 = arith.constant 0 : i32
    return %arg0, %c0_i32, %c0_i32_0 : i32, i32, i32
  }
  func.func @transform_9(%arg0: i32) -> (i32, i32, i32) {
    %c0_i32 = arith.constant 0 : i32
    %c0_i32_0 = arith.constant 0 : i32
    %c0_i32_1 = arith.constant 0 : i32
    return %arg0, %c0_i32, %c0_i32_0 : i32, i32, i32
  }
  func.func @transform_10(%arg0: i32) -> (i32, i32, i32) {
    %c0_i32 = arith.constant 0 : i32
    %c0_i32_0 = arith.constant 0 : i32
    %c0_i32_1 = arith.constant 0 : i32
    return %arg0, %c0_i32, %c0_i32_0 : i32, i32, i32
  }
  func.func @transform_11(%arg0: i32) -> (i32, i32, i32) {
    %c0_i32 = arith.constant 0 : i32
    %c0_i32_0 = arith.constant 0 : i32
    %c0_i32_1 = arith.constant 0 : i32
    return %arg0, %c0_i32, %c0_i32_0 : i32, i32, i32
  }
  func.func @transform_12(%arg0: i32) -> (i32, i32, i32) {
    %c0_i32 = arith.constant 0 : i32
    %c0_i32_0 = arith.constant 0 : i32
    %c0_i32_1 = arith.constant 0 : i32
    return %arg0, %c0_i32, %c0_i32_0 : i32, i32, i32
  }
  func.func @transform_13(%arg0: i32) -> (i32, i32, i32) {
    %c0_i32 = arith.constant 0 : i32
    %c0_i32_0 = arith.constant 0 : i32
    %c0_i32_1 = arith.constant 0 : i32
    return %arg0, %c0_i32, %c0_i32_0 : i32, i32, i32
  }
  func.func @transform_14(%arg0: i32) -> (i32, i32, i32) {
    %c0_i32 = arith.constant 0 : i32
    %c0_i32_0 = arith.constant 0 : i32
    %c0_i32_1 = arith.constant 0 : i32
    return %arg0, %c0_i32, %c0_i32_0 : i32, i32, i32
  }
  func.func @transform_15(%arg0: i32) -> (i32, i32) {
    %c0_i32 = arith.constant 0 : i32
    %c0_i32_0 = arith.constant 0 : i32
    %c0_i32_1 = arith.constant 0 : i32
    return %c0_i32, %c0_i32_0 : i32, i32
  }
}

module attributes {stable_mosaic.version = 11 : i64} {
  func.func @kernel(%arg0: i32, %arg1: memref<16x256xbf16, #tpu.memory_space<vmem>>, %arg2: memref<256x1024xbf16, #tpu.memory_space<vmem>>, %arg3: memref<256x1024xbf16, #tpu.memory_space<vmem>>, %arg4: memref<1x1024xf32, #tpu.memory_space<vmem>>, %arg5: memref<2x256xbf16, #tpu.memory_space<vmem>>, %arg6: memref<2x256xbf16, #tpu.memory_space<vmem>>, %arg7: memref<256x1024xbf16, #tpu.memory_space<vmem>>, %arg8: memref<1x1024xf32, #tpu.memory_space<vmem>>, %arg9: memref<16x1024xf32, #tpu.memory_space<vmem>>, %arg10: memref<16x256xf32, #tpu.memory_space<vmem>>) attributes {dimension_semantics = [#tpu.dimension_semantics<arbitrary>], iteration_bounds = array<i64: 1>, scalar_prefetch = 0 : i64, scratch_operands = 1 : i64, tpu.core_type = #tpu.core_type<tc>, window_params = [{pipeline_mode = #tpu.pipeline_mode<synchronous>, transform_indices = @transform_0, window_bounds = array<i64: 16, 256>}, {pipeline_mode = #tpu.pipeline_mode<synchronous>, transform_indices = @transform_1, window_bounds = array<i64: 256, 1024>}, {pipeline_mode = #tpu.pipeline_mode<synchronous>, transform_indices = @transform_2, window_bounds = array<i64: 256, 1024>}, {pipeline_mode = #tpu.pipeline_mode<synchronous>, transform_indices = @transform_3, window_bounds = array<i64: 1, 1024>}, {pipeline_mode = #tpu.pipeline_mode<synchronous>, transform_indices = @transform_4, window_bounds = array<i64: 2, 256>}, {pipeline_mode = #tpu.pipeline_mode<synchronous>, transform_indices = @transform_5, window_bounds = array<i64: 2, 256>}, {pipeline_mode = #tpu.pipeline_mode<synchronous>, transform_indices = @transform_6, window_bounds = array<i64: 256, 1024>}, {pipeline_mode = #tpu.pipeline_mode<synchronous>, transform_indices = @transform_7, window_bounds = array<i64: 1, 1024>}, {pipeline_mode = #tpu.pipeline_mode<synchronous>, transform_indices = @transform_8, window_bounds = array<i64: 16, 1024>}]} {
    %c0 = arith.constant 0 : index
    %c0_0 = arith.constant 0 : index
    %0 = vector.load %arg1[%c0, %c0_0] : memref<16x256xbf16, #tpu.memory_space<vmem>>, vector<16x256xbf16>
    %c0_1 = arith.constant 0 : index
    %c0_2 = arith.constant 0 : index
    %1 = vector.load %arg2[%c0_1, %c0_2] : memref<256x1024xbf16, #tpu.memory_space<vmem>>, vector<256x1024xbf16>
    %cst = arith.constant dense<0.000000e+00> : vector<16x1024xf32>
    %2 = tpu.matmul %0, %1, %cst {dimension_numbers = #tpu.dot_dimension_numbers<[1], [0], [0], [1], [0, 0, 1, 1], [], []>} : vector<16x256xbf16>, vector<256x1024xbf16>, vector<16x1024xf32> -> vector<16x1024xf32>
    %c0_3 = arith.constant 0 : index
    %c0_4 = arith.constant 0 : index
    %3 = vector.load %arg4[%c0_3, %c0_4] : memref<1x1024xf32, #tpu.memory_space<vmem>>, vector<1x1024xf32>
    %4 = vector.broadcast %3 : vector<1x1024xf32> to vector<16x1024xf32>
    %5 = arith.addf %2, %4 : vector<16x1024xf32>
    %c0_5 = arith.constant 0 : index
    %c0_6 = arith.constant 0 : index
    %6 = vector.load %arg5[%c0_5, %c0_6] : memref<2x256xbf16, #tpu.memory_space<vmem>>, vector<2x256xbf16>
    %7 = arith.extf %6 : vector<2x256xbf16> to vector<2x256xf32>
    %c0_7 = arith.constant 0 : index
    %c0_8 = arith.constant 0 : index
    %8 = vector.load %arg6[%c0_7, %c0_8] : memref<2x256xbf16, #tpu.memory_space<vmem>>, vector<2x256xbf16>
    %9 = arith.extf %8 : vector<2x256xbf16> to vector<2x256xf32>
    %c0_9 = arith.constant 0 : index
    %c0_10 = arith.constant 0 : index
    %10 = vector.load %arg3[%c0_9, %c0_10] : memref<256x1024xbf16, #tpu.memory_space<vmem>>, vector<256x1024xbf16>
    %11 = vector.extract_strided_slice %5 {offsets = [0, 0], sizes = [2, 1024], strides = [1, 1]} : vector<16x1024xf32> to vector<2x1024xf32>
    %12 = arith.truncf %7 : vector<2x256xf32> to vector<2x256xbf16>
    %cst_11 = arith.constant dense<0.000000e+00> : vector<2x1024xf32>
    %13 = tpu.matmul %12, %10, %cst_11 {dimension_numbers = #tpu.dot_dimension_numbers<[1], [0], [0], [1], [0, 0, 1, 1], [], []>} : vector<2x256xbf16>, vector<256x1024xbf16>, vector<2x1024xf32> -> vector<2x1024xf32>
    %14 = arith.addf %11, %13 : vector<2x1024xf32>
    %15 = vector.extract_strided_slice %14 {offsets = [0, 0], sizes = [2, 256], strides = [1, 1]} : vector<2x1024xf32> to vector<2x256xf32>
    %16 = arith.negf %15 : vector<2x256xf32>
    %17 = math.exp %16 : vector<2x256xf32>
    %cst_12 = arith.constant 1.000000e+00 : f32
    %18 = vector.broadcast %cst_12 : f32 to vector<2x256xf32>
    %19 = arith.addf %18, %17 : vector<2x256xf32>
    %20 = arith.divf %18, %19 : vector<2x256xf32>
    %21 = vector.extract_strided_slice %14 {offsets = [0, 256], sizes = [2, 256], strides = [1, 1]} : vector<2x1024xf32> to vector<2x256xf32>
    %22 = arith.negf %21 : vector<2x256xf32>
    %23 = math.exp %22 : vector<2x256xf32>
    %cst_13 = arith.constant 1.000000e+00 : f32
    %24 = vector.broadcast %cst_13 : f32 to vector<2x256xf32>
    %25 = arith.addf %24, %23 : vector<2x256xf32>
    %26 = arith.divf %24, %25 : vector<2x256xf32>
    %27 = vector.extract_strided_slice %14 {offsets = [0, 512], sizes = [2, 256], strides = [1, 1]} : vector<2x1024xf32> to vector<2x256xf32>
    %28 = math.tanh %27 : vector<2x256xf32>
    %29 = vector.extract_strided_slice %14 {offsets = [0, 768], sizes = [2, 256], strides = [1, 1]} : vector<2x1024xf32> to vector<2x256xf32>
    %30 = arith.negf %29 : vector<2x256xf32>
    %31 = math.exp %30 : vector<2x256xf32>
    %cst_14 = arith.constant 1.000000e+00 : f32
    %32 = vector.broadcast %cst_14 : f32 to vector<2x256xf32>
    %33 = arith.addf %32, %31 : vector<2x256xf32>
    %34 = arith.divf %32, %33 : vector<2x256xf32>
    %35 = arith.mulf %26, %9 : vector<2x256xf32>
    %36 = arith.mulf %20, %28 : vector<2x256xf32>
    %37 = arith.addf %35, %36 : vector<2x256xf32>
    %38 = math.tanh %37 : vector<2x256xf32>
    %39 = arith.mulf %34, %38 : vector<2x256xf32>
    %c0_15 = arith.constant 0 : index
    %c0_16 = arith.constant 0 : index
    %40 = vector.load %arg10[%c0_15, %c0_16] : memref<16x256xf32, #tpu.memory_space<vmem>>, vector<2x256xf32>
    tpu.vector_store %arg10[%c0_15, %c0_16], %39 {strides = array<i32>} : memref<16x256xf32, #tpu.memory_space<vmem>>, vector<2x256xf32>,
    %41 = vector.extract_strided_slice %5 {offsets = [2, 0], sizes = [2, 1024], strides = [1, 1]} : vector<16x1024xf32> to vector<2x1024xf32>
    %42 = arith.truncf %39 : vector<2x256xf32> to vector<2x256xbf16>
    %cst_17 = arith.constant dense<0.000000e+00> : vector<2x1024xf32>
    %43 = tpu.matmul %42, %10, %cst_17 {dimension_numbers = #tpu.dot_dimension_numbers<[1], [0], [0], [1], [0, 0, 1, 1], [], []>} : vector<2x256xbf16>, vector<256x1024xbf16>, vector<2x1024xf32> -> vector<2x1024xf32>
    %44 = arith.addf %41, %43 : vector<2x1024xf32>
    %45 = vector.extract_strided_slice %44 {offsets = [0, 0], sizes = [2, 256], strides = [1, 1]} : vector<2x1024xf32> to vector<2x256xf32>
    %46 = arith.negf %45 : vector<2x256xf32>
    %47 = math.exp %46 : vector<2x256xf32>
    %cst_18 = arith.constant 1.000000e+00 : f32
    %48 = vector.broadcast %cst_18 : f32 to vector<2x256xf32>
    %49 = arith.addf %48, %47 : vector<2x256xf32>
    %50 = arith.divf %48, %49 : vector<2x256xf32>
    %51 = vector.extract_strided_slice %44 {offsets = [0, 256], sizes = [2, 256], strides = [1, 1]} : vector<2x1024xf32> to vector<2x256xf32>
    %52 = arith.negf %51 : vector<2x256xf32>
    %53 = math.exp %52 : vector<2x256xf32>
    %cst_19 = arith.constant 1.000000e+00 : f32
    %54 = vector.broadcast %cst_19 : f32 to vector<2x256xf32>
    %55 = arith.addf %54, %53 : vector<2x256xf32>
    %56 = arith.divf %54, %55 : vector<2x256xf32>
    %57 = vector.extract_strided_slice %44 {offsets = [0, 512], sizes = [2, 256], strides = [1, 1]} : vector<2x1024xf32> to vector<2x256xf32>
    %58 = math.tanh %57 : vector<2x256xf32>
    %59 = vector.extract_strided_slice %44 {offsets = [0, 768], sizes = [2, 256], strides = [1, 1]} : vector<2x1024xf32> to vector<2x256xf32>
    %60 = arith.negf %59 : vector<2x256xf32>
    %61 = math.exp %60 : vector<2x256xf32>
    %cst_20 = arith.constant 1.000000e+00 : f32
    %62 = vector.broadcast %cst_20 : f32 to vector<2x256xf32>
    %63 = arith.addf %62, %61 : vector<2x256xf32>
    %64 = arith.divf %62, %63 : vector<2x256xf32>
    %65 = arith.mulf %56, %37 : vector<2x256xf32>
    %66 = arith.mulf %50, %58 : vector<2x256xf32>
    %67 = arith.addf %65, %66 : vector<2x256xf32>
    %68 = math.tanh %67 : vector<2x256xf32>
    %69 = arith.mulf %64, %68 : vector<2x256xf32>
    %c2 = arith.constant 2 : index
    %c0_21 = arith.constant 0 : index
    %70 = vector.load %arg10[%c2, %c0_21] : memref<16x256xf32, #tpu.memory_space<vmem>>, vector<2x256xf32>
    tpu.vector_store %arg10[%c2, %c0_21], %69 {strides = array<i32>} : memref<16x256xf32, #tpu.memory_space<vmem>>, vector<2x256xf32>,
    %71 = vector.extract_strided_slice %5 {offsets = [4, 0], sizes = [2, 1024], strides = [1, 1]} : vector<16x1024xf32> to vector<2x1024xf32>
    %72 = arith.truncf %69 : vector<2x256xf32> to vector<2x256xbf16>
    %cst_22 = arith.constant dense<0.000000e+00> : vector<2x1024xf32>
    %73 = tpu.matmul %72, %10, %cst_22 {dimension_numbers = #tpu.dot_dimension_numbers<[1], [0], [0], [1], [0, 0, 1, 1], [], []>} : vector<2x256xbf16>, vector<256x1024xbf16>, vector<2x1024xf32> -> vector<2x1024xf32>
    %74 = arith.addf %71, %73 : vector<2x1024xf32>
    %75 = vector.extract_strided_slice %74 {offsets = [0, 0], sizes = [2, 256], strides = [1, 1]} : vector<2x1024xf32> to vector<2x256xf32>
    %76 = arith.negf %75 : vector<2x256xf32>
    %77 = math.exp %76 : vector<2x256xf32>
    %cst_23 = arith.constant 1.000000e+00 : f32
    %78 = vector.broadcast %cst_23 : f32 to vector<2x256xf32>
    %79 = arith.addf %78, %77 : vector<2x256xf32>
    %80 = arith.divf %78, %79 : vector<2x256xf32>
    %81 = vector.extract_strided_slice %74 {offsets = [0, 256], sizes = [2, 256], strides = [1, 1]} : vector<2x1024xf32> to vector<2x256xf32>
    %82 = arith.negf %81 : vector<2x256xf32>
    %83 = math.exp %82 : vector<2x256xf32>
    %cst_24 = arith.constant 1.000000e+00 : f32
    %84 = vector.broadcast %cst_24 : f32 to vector<2x256xf32>
    %85 = arith.addf %84, %83 : vector<2x256xf32>
    %86 = arith.divf %84, %85 : vector<2x256xf32>
    %87 = vector.extract_strided_slice %74 {offsets = [0, 512], sizes = [2, 256], strides = [1, 1]} : vector<2x1024xf32> to vector<2x256xf32>
    %88 = math.tanh %87 : vector<2x256xf32>
    %89 = vector.extract_strided_slice %74 {offsets = [0, 768], sizes = [2, 256], strides = [1, 1]} : vector<2x1024xf32> to vector<2x256xf32>
    %90 = arith.negf %89 : vector<2x256xf32>
    %91 = math.exp %90 : vector<2x256xf32>
    %cst_25 = arith.constant 1.000000e+00 : f32
    %92 = vector.broadcast %cst_25 : f32 to vector<2x256xf32>
    %93 = arith.addf %92, %91 : vector<2x256xf32>
    %94 = arith.divf %92, %93 : vector<2x256xf32>
    %95 = arith.mulf %86, %67 : vector<2x256xf32>
    %96 = arith.mulf %80, %88 : vector<2x256xf32>
    %97 = arith.addf %95, %96 : vector<2x256xf32>
    %98 = math.tanh %97 : vector<2x256xf32>
    %99 = arith.mulf %94, %98 : vector<2x256xf32>
    %c4 = arith.constant 4 : index
    %c0_26 = arith.constant 0 : index
    %100 = vector.load %arg10[%c4, %c0_26] : memref<16x256xf32, #tpu.memory_space<vmem>>, vector<2x256xf32>
    tpu.vector_store %arg10[%c4, %c0_26], %99 {strides = array<i32>} : memref<16x256xf32, #tpu.memory_space<vmem>>, vector<2x256xf32>,
    %101 = vector.extract_strided_slice %5 {offsets = [6, 0], sizes = [2, 1024], strides = [1, 1]} : vector<16x1024xf32> to vector<2x1024xf32>
    %102 = arith.truncf %99 : vector<2x256xf32> to vector<2x256xbf16>
    %cst_27 = arith.constant dense<0.000000e+00> : vector<2x1024xf32>
    %103 = tpu.matmul %102, %10, %cst_27 {dimension_numbers = #tpu.dot_dimension_numbers<[1], [0], [0], [1], [0, 0, 1, 1], [], []>} : vector<2x256xbf16>, vector<256x1024xbf16>, vector<2x1024xf32> -> vector<2x1024xf32>
    %104 = arith.addf %101, %103 : vector<2x1024xf32>
    %105 = vector.extract_strided_slice %104 {offsets = [0, 0], sizes = [2, 256], strides = [1, 1]} : vector<2x1024xf32> to vector<2x256xf32>
    %106 = arith.negf %105 : vector<2x256xf32>
    %107 = math.exp %106 : vector<2x256xf32>
    %cst_28 = arith.constant 1.000000e+00 : f32
    %108 = vector.broadcast %cst_28 : f32 to vector<2x256xf32>
    %109 = arith.addf %108, %107 : vector<2x256xf32>
    %110 = arith.divf %108, %109 : vector<2x256xf32>
    %111 = vector.extract_strided_slice %104 {offsets = [0, 256], sizes = [2, 256], strides = [1, 1]} : vector<2x1024xf32> to vector<2x256xf32>
    %112 = arith.negf %111 : vector<2x256xf32>
    %113 = math.exp %112 : vector<2x256xf32>
    %cst_29 = arith.constant 1.000000e+00 : f32
    %114 = vector.broadcast %cst_29 : f32 to vector<2x256xf32>
    %115 = arith.addf %114, %113 : vector<2x256xf32>
    %116 = arith.divf %114, %115 : vector<2x256xf32>
    %117 = vector.extract_strided_slice %104 {offsets = [0, 512], sizes = [2, 256], strides = [1, 1]} : vector<2x1024xf32> to vector<2x256xf32>
    %118 = math.tanh %117 : vector<2x256xf32>
    %119 = vector.extract_strided_slice %104 {offsets = [0, 768], sizes = [2, 256], strides = [1, 1]} : vector<2x1024xf32> to vector<2x256xf32>
    %120 = arith.negf %119 : vector<2x256xf32>
    %121 = math.exp %120 : vector<2x256xf32>
    %cst_30 = arith.constant 1.000000e+00 : f32
    %122 = vector.broadcast %cst_30 : f32 to vector<2x256xf32>
    %123 = arith.addf %122, %121 : vector<2x256xf32>
    %124 = arith.divf %122, %123 : vector<2x256xf32>
    %125 = arith.mulf %116, %97 : vector<2x256xf32>
    %126 = arith.mulf %110, %118 : vector<2x256xf32>
    %127 = arith.addf %125, %126 : vector<2x256xf32>
    %128 = math.tanh %127 : vector<2x256xf32>
    %129 = arith.mulf %124, %128 : vector<2x256xf32>
    %c6 = arith.constant 6 : index
    %c0_31 = arith.constant 0 : index
    %130 = vector.load %arg10[%c6, %c0_31] : memref<16x256xf32, #tpu.memory_space<vmem>>, vector<2x256xf32>
    tpu.vector_store %arg10[%c6, %c0_31], %129 {strides = array<i32>} : memref<16x256xf32, #tpu.memory_space<vmem>>, vector<2x256xf32>,
    %131 = vector.extract_strided_slice %5 {offsets = [8, 0], sizes = [2, 1024], strides = [1, 1]} : vector<16x1024xf32> to vector<2x1024xf32>
    %132 = arith.truncf %129 : vector<2x256xf32> to vector<2x256xbf16>
    %cst_32 = arith.constant dense<0.000000e+00> : vector<2x1024xf32>
    %133 = tpu.matmul %132, %10, %cst_32 {dimension_numbers = #tpu.dot_dimension_numbers<[1], [0], [0], [1], [0, 0, 1, 1], [], []>} : vector<2x256xbf16>, vector<256x1024xbf16>, vector<2x1024xf32> -> vector<2x1024xf32>
    %134 = arith.addf %131, %133 : vector<2x1024xf32>
    %135 = vector.extract_strided_slice %134 {offsets = [0, 0], sizes = [2, 256], strides = [1, 1]} : vector<2x1024xf32> to vector<2x256xf32>
    %136 = arith.negf %135 : vector<2x256xf32>
    %137 = math.exp %136 : vector<2x256xf32>
    %cst_33 = arith.constant 1.000000e+00 : f32
    %138 = vector.broadcast %cst_33 : f32 to vector<2x256xf32>
    %139 = arith.addf %138, %137 : vector<2x256xf32>
    %140 = arith.divf %138, %139 : vector<2x256xf32>
    %141 = vector.extract_strided_slice %134 {offsets = [0, 256], sizes = [2, 256], strides = [1, 1]} : vector<2x1024xf32> to vector<2x256xf32>
    %142 = arith.negf %141 : vector<2x256xf32>
    %143 = math.exp %142 : vector<2x256xf32>
    %cst_34 = arith.constant 1.000000e+00 : f32
    %144 = vector.broadcast %cst_34 : f32 to vector<2x256xf32>
    %145 = arith.addf %144, %143 : vector<2x256xf32>
    %146 = arith.divf %144, %145 : vector<2x256xf32>
    %147 = vector.extract_strided_slice %134 {offsets = [0, 512], sizes = [2, 256], strides = [1, 1]} : vector<2x1024xf32> to vector<2x256xf32>
    %148 = math.tanh %147 : vector<2x256xf32>
    %149 = vector.extract_strided_slice %134 {offsets = [0, 768], sizes = [2, 256], strides = [1, 1]} : vector<2x1024xf32> to vector<2x256xf32>
    %150 = arith.negf %149 : vector<2x256xf32>
    %151 = math.exp %150 : vector<2x256xf32>
    %cst_35 = arith.constant 1.000000e+00 : f32
    %152 = vector.broadcast %cst_35 : f32 to vector<2x256xf32>
    %153 = arith.addf %152, %151 : vector<2x256xf32>
    %154 = arith.divf %152, %153 : vector<2x256xf32>
    %155 = arith.mulf %146, %127 : vector<2x256xf32>
    %156 = arith.mulf %140, %148 : vector<2x256xf32>
    %157 = arith.addf %155, %156 : vector<2x256xf32>
    %158 = math.tanh %157 : vector<2x256xf32>
    %159 = arith.mulf %154, %158 : vector<2x256xf32>
    %c8 = arith.constant 8 : index
    %c0_36 = arith.constant 0 : index
    %160 = vector.load %arg10[%c8, %c0_36] : memref<16x256xf32, #tpu.memory_space<vmem>>, vector<2x256xf32>
    tpu.vector_store %arg10[%c8, %c0_36], %159 {strides = array<i32>} : memref<16x256xf32, #tpu.memory_space<vmem>>, vector<2x256xf32>,
    %161 = vector.extract_strided_slice %5 {offsets = [10, 0], sizes = [2, 1024], strides = [1, 1]} : vector<16x1024xf32> to vector<2x1024xf32>
    %162 = arith.truncf %159 : vector<2x256xf32> to vector<2x256xbf16>
    %cst_37 = arith.constant dense<0.000000e+00> : vector<2x1024xf32>
    %163 = tpu.matmul %162, %10, %cst_37 {dimension_numbers = #tpu.dot_dimension_numbers<[1], [0], [0], [1], [0, 0, 1, 1], [], []>} : vector<2x256xbf16>, vector<256x1024xbf16>, vector<2x1024xf32> -> vector<2x1024xf32>
    %164 = arith.addf %161, %163 : vector<2x1024xf32>
    %165 = vector.extract_strided_slice %164 {offsets = [0, 0], sizes = [2, 256], strides = [1, 1]} : vector<2x1024xf32> to vector<2x256xf32>
    %166 = arith.negf %165 : vector<2x256xf32>
    %167 = math.exp %166 : vector<2x256xf32>
    %cst_38 = arith.constant 1.000000e+00 : f32
    %168 = vector.broadcast %cst_38 : f32 to vector<2x256xf32>
    %169 = arith.addf %168, %167 : vector<2x256xf32>
    %170 = arith.divf %168, %169 : vector<2x256xf32>
    %171 = vector.extract_strided_slice %164 {offsets = [0, 256], sizes = [2, 256], strides = [1, 1]} : vector<2x1024xf32> to vector<2x256xf32>
    %172 = arith.negf %171 : vector<2x256xf32>
    %173 = math.exp %172 : vector<2x256xf32>
    %cst_39 = arith.constant 1.000000e+00 : f32
    %174 = vector.broadcast %cst_39 : f32 to vector<2x256xf32>
    %175 = arith.addf %174, %173 : vector<2x256xf32>
    %176 = arith.divf %174, %175 : vector<2x256xf32>
    %177 = vector.extract_strided_slice %164 {offsets = [0, 512], sizes = [2, 256], strides = [1, 1]} : vector<2x1024xf32> to vector<2x256xf32>
    %178 = math.tanh %177 : vector<2x256xf32>
    %179 = vector.extract_strided_slice %164 {offsets = [0, 768], sizes = [2, 256], strides = [1, 1]} : vector<2x1024xf32> to vector<2x256xf32>
    %180 = arith.negf %179 : vector<2x256xf32>
    %181 = math.exp %180 : vector<2x256xf32>
    %cst_40 = arith.constant 1.000000e+00 : f32
    %182 = vector.broadcast %cst_40 : f32 to vector<2x256xf32>
    %183 = arith.addf %182, %181 : vector<2x256xf32>
    %184 = arith.divf %182, %183 : vector<2x256xf32>
    %185 = arith.mulf %176, %157 : vector<2x256xf32>
    %186 = arith.mulf %170, %178 : vector<2x256xf32>
    %187 = arith.addf %185, %186 : vector<2x256xf32>
    %188 = math.tanh %187 : vector<2x256xf32>
    %189 = arith.mulf %184, %188 : vector<2x256xf32>
    %c10 = arith.constant 10 : index
    %c0_41 = arith.constant 0 : index
    %190 = vector.load %arg10[%c10, %c0_41] : memref<16x256xf32, #tpu.memory_space<vmem>>, vector<2x256xf32>
    tpu.vector_store %arg10[%c10, %c0_41], %189 {strides = array<i32>} : memref<16x256xf32, #tpu.memory_space<vmem>>, vector<2x256xf32>,
    %191 = vector.extract_strided_slice %5 {offsets = [12, 0], sizes = [2, 1024], strides = [1, 1]} : vector<16x1024xf32> to vector<2x1024xf32>
    %192 = arith.truncf %189 : vector<2x256xf32> to vector<2x256xbf16>
    %cst_42 = arith.constant dense<0.000000e+00> : vector<2x1024xf32>
    %193 = tpu.matmul %192, %10, %cst_42 {dimension_numbers = #tpu.dot_dimension_numbers<[1], [0], [0], [1], [0, 0, 1, 1], [], []>} : vector<2x256xbf16>, vector<256x1024xbf16>, vector<2x1024xf32> -> vector<2x1024xf32>
    %194 = arith.addf %191, %193 : vector<2x1024xf32>
    %195 = vector.extract_strided_slice %194 {offsets = [0, 0], sizes = [2, 256], strides = [1, 1]} : vector<2x1024xf32> to vector<2x256xf32>
    %196 = arith.negf %195 : vector<2x256xf32>
    %197 = math.exp %196 : vector<2x256xf32>
    %cst_43 = arith.constant 1.000000e+00 : f32
    %198 = vector.broadcast %cst_43 : f32 to vector<2x256xf32>
    %199 = arith.addf %198, %197 : vector<2x256xf32>
    %200 = arith.divf %198, %199 : vector<2x256xf32>
    %201 = vector.extract_strided_slice %194 {offsets = [0, 256], sizes = [2, 256], strides = [1, 1]} : vector<2x1024xf32> to vector<2x256xf32>
    %202 = arith.negf %201 : vector<2x256xf32>
    %203 = math.exp %202 : vector<2x256xf32>
    %cst_44 = arith.constant 1.000000e+00 : f32
    %204 = vector.broadcast %cst_44 : f32 to vector<2x256xf32>
    %205 = arith.addf %204, %203 : vector<2x256xf32>
    %206 = arith.divf %204, %205 : vector<2x256xf32>
    %207 = vector.extract_strided_slice %194 {offsets = [0, 512], sizes = [2, 256], strides = [1, 1]} : vector<2x1024xf32> to vector<2x256xf32>
    %208 = math.tanh %207 : vector<2x256xf32>
    %209 = vector.extract_strided_slice %194 {offsets = [0, 768], sizes = [2, 256], strides = [1, 1]} : vector<2x1024xf32> to vector<2x256xf32>
    %210 = arith.negf %209 : vector<2x256xf32>
    %211 = math.exp %210 : vector<2x256xf32>
    %cst_45 = arith.constant 1.000000e+00 : f32
    %212 = vector.broadcast %cst_45 : f32 to vector<2x256xf32>
    %213 = arith.addf %212, %211 : vector<2x256xf32>
    %214 = arith.divf %212, %213 : vector<2x256xf32>
    %215 = arith.mulf %206, %187 : vector<2x256xf32>
    %216 = arith.mulf %200, %208 : vector<2x256xf32>
    %217 = arith.addf %215, %216 : vector<2x256xf32>
    %218 = math.tanh %217 : vector<2x256xf32>
    %219 = arith.mulf %214, %218 : vector<2x256xf32>
    %c12 = arith.constant 12 : index
    %c0_46 = arith.constant 0 : index
    %220 = vector.load %arg10[%c12, %c0_46] : memref<16x256xf32, #tpu.memory_space<vmem>>, vector<2x256xf32>
    tpu.vector_store %arg10[%c12, %c0_46], %219 {strides = array<i32>} : memref<16x256xf32, #tpu.memory_space<vmem>>, vector<2x256xf32>,
    %221 = vector.extract_strided_slice %5 {offsets = [14, 0], sizes = [2, 1024], strides = [1, 1]} : vector<16x1024xf32> to vector<2x1024xf32>
    %222 = arith.truncf %219 : vector<2x256xf32> to vector<2x256xbf16>
    %cst_47 = arith.constant dense<0.000000e+00> : vector<2x1024xf32>
    %223 = tpu.matmul %222, %10, %cst_47 {dimension_numbers = #tpu.dot_dimension_numbers<[1], [0], [0], [1], [0, 0, 1, 1], [], []>} : vector<2x256xbf16>, vector<256x1024xbf16>, vector<2x1024xf32> -> vector<2x1024xf32>
    %224 = arith.addf %221, %223 : vector<2x1024xf32>
    %225 = vector.extract_strided_slice %224 {offsets = [0, 0], sizes = [2, 256], strides = [1, 1]} : vector<2x1024xf32> to vector<2x256xf32>
    %226 = arith.negf %225 : vector<2x256xf32>
    %227 = math.exp %226 : vector<2x256xf32>
    %cst_48 = arith.constant 1.000000e+00 : f32
    %228 = vector.broadcast %cst_48 : f32 to vector<2x256xf32>
    %229 = arith.addf %228, %227 : vector<2x256xf32>
    %230 = arith.divf %228, %229 : vector<2x256xf32>
    %231 = vector.extract_strided_slice %224 {offsets = [0, 256], sizes = [2, 256], strides = [1, 1]} : vector<2x1024xf32> to vector<2x256xf32>
    %232 = arith.negf %231 : vector<2x256xf32>
    %233 = math.exp %232 : vector<2x256xf32>
    %cst_49 = arith.constant 1.000000e+00 : f32
    %234 = vector.broadcast %cst_49 : f32 to vector<2x256xf32>
    %235 = arith.addf %234, %233 : vector<2x256xf32>
    %236 = arith.divf %234, %235 : vector<2x256xf32>
    %237 = vector.extract_strided_slice %224 {offsets = [0, 512], sizes = [2, 256], strides = [1, 1]} : vector<2x1024xf32> to vector<2x256xf32>
    %238 = math.tanh %237 : vector<2x256xf32>
    %239 = vector.extract_strided_slice %224 {offsets = [0, 768], sizes = [2, 256], strides = [1, 1]} : vector<2x1024xf32> to vector<2x256xf32>
    %240 = arith.negf %239 : vector<2x256xf32>
    %241 = math.exp %240 : vector<2x256xf32>
    %cst_50 = arith.constant 1.000000e+00 : f32
    %242 = vector.broadcast %cst_50 : f32 to vector<2x256xf32>
    %243 = arith.addf %242, %241 : vector<2x256xf32>
    %244 = arith.divf %242, %243 : vector<2x256xf32>
    %245 = arith.mulf %236, %217 : vector<2x256xf32>
    %246 = arith.mulf %230, %238 : vector<2x256xf32>
    %247 = arith.addf %245, %246 : vector<2x256xf32>
    %248 = math.tanh %247 : vector<2x256xf32>
    %249 = arith.mulf %244, %248 : vector<2x256xf32>
    %c14 = arith.constant 14 : index
    %c0_51 = arith.constant 0 : index
    %250 = vector.load %arg10[%c14, %c0_51] : memref<16x256xf32, #tpu.memory_space<vmem>>, vector<2x256xf32>
    tpu.vector_store %arg10[%c14, %c0_51], %249 {strides = array<i32>} : memref<16x256xf32, #tpu.memory_space<vmem>>, vector<2x256xf32>,
    %c0_52 = arith.constant 0 : index
    %c0_53 = arith.constant 0 : index
    %251 = vector.load %arg10[%c0_52, %c0_53] : memref<16x256xf32, #tpu.memory_space<vmem>>, vector<16x256xf32>
    %252 = arith.truncf %251 : vector<16x256xf32> to vector<16x256xbf16>
    %c0_54 = arith.constant 0 : index
    %c0_55 = arith.constant 0 : index
    %253 = vector.load %arg7[%c0_54, %c0_55] : memref<256x1024xbf16, #tpu.memory_space<vmem>>, vector<256x1024xbf16>
    %cst_56 = arith.constant dense<0.000000e+00> : vector<16x1024xf32>
    %254 = tpu.matmul %252, %253, %cst_56 {dimension_numbers = #tpu.dot_dimension_numbers<[1], [0], [0], [1], [0, 0, 1, 1], [], []>} : vector<16x256xbf16>, vector<256x1024xbf16>, vector<16x1024xf32> -> vector<16x1024xf32>
    %c0_57 = arith.constant 0 : index
    %c0_58 = arith.constant 0 : index
    %255 = vector.load %arg8[%c0_57, %c0_58] : memref<1x1024xf32, #tpu.memory_space<vmem>>, vector<1x1024xf32>
    %256 = vector.broadcast %255 : vector<1x1024xf32> to vector<16x1024xf32>
    %257 = arith.addf %254, %256 : vector<16x1024xf32>
    %c0_59 = arith.constant 0 : index
    %c0_60 = arith.constant 0 : index
    %258 = vector.load %arg9[%c0_59, %c0_60] : memref<16x1024xf32, #tpu.memory_space<vmem>>, vector<16x1024xf32>
    tpu.vector_store %arg9[%c0_59, %c0_60], %257 {strides = array<i32>} : memref<16x1024xf32, #tpu.memory_space<vmem>>, vector<16x1024xf32>,
    return
  }
  func.func @transform_0(%arg0: i32) -> (i32, i32) {
    %c0_i32 = arith.constant 0 : i32
    %c0_i32_0 = arith.constant 0 : i32
    %c0_i32_1 = arith.constant 0 : i32
    return %c0_i32, %c0_i32_0 : i32, i32
  }
  func.func @transform_1(%arg0: i32) -> (i32, i32) {
    %c0_i32 = arith.constant 0 : i32
    %c0_i32_0 = arith.constant 0 : i32
    %c0_i32_1 = arith.constant 0 : i32
    return %c0_i32, %c0_i32_0 : i32, i32
  }
  func.func @transform_2(%arg0: i32) -> (i32, i32) {
    %c0_i32 = arith.constant 0 : i32
    %c0_i32_0 = arith.constant 0 : i32
    %c0_i32_1 = arith.constant 0 : i32
    return %c0_i32, %c0_i32_0 : i32, i32
  }
  func.func @transform_3(%arg0: i32) -> (i32, i32) {
    %c0_i32 = arith.constant 0 : i32
    %c0_i32_0 = arith.constant 0 : i32
    %c0_i32_1 = arith.constant 0 : i32
    return %c0_i32, %c0_i32_0 : i32, i32
  }
  func.func @transform_4(%arg0: i32) -> (i32, i32) {
    %c0_i32 = arith.constant 0 : i32
    %c0_i32_0 = arith.constant 0 : i32
    %c0_i32_1 = arith.constant 0 : i32
    return %c0_i32, %c0_i32_0 : i32, i32
  }
  func.func @transform_5(%arg0: i32) -> (i32, i32) {
    %c0_i32 = arith.constant 0 : i32
    %c0_i32_0 = arith.constant 0 : i32
    %c0_i32_1 = arith.constant 0 : i32
    return %c0_i32, %c0_i32_0 : i32, i32
  }
  func.func @transform_6(%arg0: i32) -> (i32, i32) {
    %c0_i32 = arith.constant 0 : i32
    %c0_i32_0 = arith.constant 0 : i32
    %c0_i32_1 = arith.constant 0 : i32
    return %c0_i32, %c0_i32_0 : i32, i32
  }
  func.func @transform_7(%arg0: i32) -> (i32, i32) {
    %c0_i32 = arith.constant 0 : i32
    %c0_i32_0 = arith.constant 0 : i32
    %c0_i32_1 = arith.constant 0 : i32
    return %c0_i32, %c0_i32_0 : i32, i32
  }
  func.func @transform_8(%arg0: i32) -> (i32, i32) {
    %c0_i32 = arith.constant 0 : i32
    %c0_i32_0 = arith.constant 0 : i32
    %c0_i32_1 = arith.constant 0 : i32
    return %c0_i32, %c0_i32_0 : i32, i32
  }
}

</mosaic_0001>

<llo_original>
// kernel: seq2seq_forward.2
$region0: #{seq2seq_forward.2}
  #allocation0 [shape = 'u32[]', space=smem, size = 0x4, offset = 0x4, fixed_abs, tag = 'smem constant byte address 0x4 - core index']
  #allocation1 [shape = 'u32[144,128]{1,0:T(1,128)}', space=vmem, size = 0x12000, scoped, tag = 'internal scratch']
  #allocation2 [shape = 'f32[32,256]{1,0:T(8,128)}', space=vmem, size = 0x8000, scoped, tag = 'scratch operand']
  #allocation3 [shape = 'f32[32,256]{1,0:T(8,128)}', space=vmem, size = 0x8000, scoped, tag = 'scratch operand']
  %s0 = inlined_call_operand.vmem [shape: f32[32,256], index: 0, kind: input, shape index: {}]
  %s1 = inlined_call_operand.vmem [shape: f32[1,256], index: 1, kind: input, shape index: {}]
  %s2 = inlined_call_operand.hbm [shape: f32[1,256], index: 2, kind: input, shape index: {}]
  %s3 = inlined_call_operand.hbm [shape: bf16[2,256,768], index: 3, kind: input, shape index: {}]
  %s4 = inlined_call_operand.vmem [shape: f32[2,1,768], index: 4, kind: input, shape index: {}]
  %s5 = inlined_call_operand.hbm [shape: bf16[2,256,256], index: 5, kind: input, shape index: {}]
  %s6 = inlined_call_operand.vmem [shape: f32[2,1,256], index: 6, kind: input, shape index: {}]
  %s7 = inlined_call_operand.hbm [shape: f32[2,1,256], index: 7, kind: input, shape index: {}]
  %s8 = inlined_call_operand.hbm [shape: f32[2,1,256], index: 8, kind: input, shape index: {}]
  %s9 = inlined_call_operand.vmem [shape: bf16[2,256,512], index: 9, kind: input, shape index: {}]
  %s10 = inlined_call_operand.hbm [shape: f32[2,1,512], index: 10, kind: input, shape index: {}]
  %s11 = inlined_call_operand.hbm [shape: bf16[2,512,256], index: 11, kind: input, shape index: {}]
  %s12 = inlined_call_operand.hbm [shape: f32[2,1,256], index: 12, kind: input, shape index: {}]
  %s13 = inlined_call_operand.hbm [shape: f32[2,1,256], index: 13, kind: input, shape index: {}]
  %s14 = inlined_call_operand.hbm [shape: f32[2,1,256], index: 14, kind: input, shape index: {}]
  %s15 = inlined_call_operand.vmem [shape: bf16[32,256], index: 15, kind: output, shape index: {}]
  %s16 = sld [smem:[#allocation0]]
  $region137: #{seq2seq_forward.2} parent=0
    _
  %s18 = ssub.s32 1, %s16
  %s19 = scalar_select 0, %s18, %s16
  $region1: #{seq2seq_forward.2} parent=0
    #allocation4 [shape = 'u8[1024]{0}', space=vmem, size = 0x400, scoped, tag = 'input window, operand 2, single buffered']
    #allocation5 [shape = 's32[2]{0}', space=sflag, size = 0x8, scoped, tag = 'scoped memory for seq2seq_forward.2']
    #allocation6 [shape = 'u8[786432]{0}', space=vmem, size = 0xc0000, scoped, tag = 'input window, operand 3']
    #allocation7 [shape = 's32[2]{0}', space=sflag, size = 0x8, scoped, tag = 'scoped memory for seq2seq_forward.2']
    #allocation8 [shape = 'u8[262144]{0}', space=vmem, size = 0x40000, scoped, tag = 'input window, operand 5']
    #allocation9 [shape = 'u8[2048]{0}', space=vmem, size = 0x800, scoped, tag = 'input window, operand 7']
    #allocation10 [shape = 's32[2]{0}', space=sflag, size = 0x8, scoped, tag = 'scoped memory for seq2seq_forward.2']
    #allocation11 [shape = 'u8[2048]{0}', space=vmem, size = 0x800, scoped, tag = 'input window, operand 8']
    #allocation12 [shape = 'u8[4096]{0}', space=vmem, size = 0x1000, scoped, tag = 'input window, operand 10']
    #allocation13 [shape = 's32[2]{0}', space=sflag, size = 0x8, scoped, tag = 'scoped memory for seq2seq_forward.2']
    #allocation14 [shape = 'u8[524288]{0}', space=vmem, size = 0x80000, scoped, tag = 'input window, operand 11']
    #allocation15 [shape = 'u8[2048]{0}', space=vmem, size = 0x800, scoped, tag = 'input window, operand 12']
    #allocation16 [shape = 's32[2]{0}', space=sflag, size = 0x8, scoped, tag = 'scoped memory for seq2seq_forward.2']
    #allocation17 [shape = 'u8[2048]{0}', space=vmem, size = 0x800, scoped, tag = 'input window, operand 13']
    #allocation18 [shape = 'u8[2048]{0}', space=vmem, size = 0x800, scoped, tag = 'input window, operand 14']
    #allocation19 [shape = 's32[2]{0}', space=sflag, size = 0x8, scoped, tag = 'scoped memory for seq2seq_forward.2']
    %20 = vsyncpa [#allocation5], 0
    %21 = vsyncpa [#allocation7], 0
    %s22 = scalar_lea.sflag [#allocation7], 1
    %23 = vsyncpa %s22, 0
    %24 = vsyncpa [#allocation10], 0
    %s25 = scalar_lea.sflag [#allocation10], 1
    %26 = vsyncpa %s25, 0
    %27 = vsyncpa [#allocation13], 0
    %s28 = scalar_lea.sflag [#allocation13], 1
    %29 = vsyncpa %s28, 0
    %30 = vsyncpa [#allocation16], 0
    %s31 = scalar_lea.sflag [#allocation16], 1
    %32 = vsyncpa %s31, 0
    %33 = vsyncpa [#allocation19], 0
    %s34 = scalar_lea.sflag [#allocation19], 1
    %35 = vsyncpa %s34, 0
    loop: start=0, step=1, limit=4
    $region2: #{seq2seq_forward.2} parent=1 // loop_pre_header
      _
    $region3: #{seq2seq_forward.2} parent=1 // loop_header
      %s37 = sphi 0, %s41
      %p38 = scmp.ge.s32.totalorder %s37, 4
      %s45 = sphi 0, %s45
      %s47 = sphi 0, %s45
      %s48 = sphi 0, %s47
      %s62 = sphi 0, %s48
      %s66 = sphi 0, %s66
      %s68 = sphi 0, %s66
      %s69 = sphi 0, %s68
      %s83 = sphi 0, %s69
      %s87 = sphi 0, %s87
      %s89 = sphi 0, %s87
      %s90 = sphi 0, %s89
      %s104 = sphi 0, %s90
      %s110 = sphi 0, %s112
      %s113 = sphi 0, %s110
      %s114 = sphi 0, %s113
      %s130 = sphi 0, %s114
      %s136 = sphi 0, %s138
      %s139 = sphi 0, %s136
      %s140 = sphi 0, %s139
      %s156 = sphi 0, %s140
      %s162 = sphi 0, %s164
      %s165 = sphi 0, %s162
      %s166 = sphi 0, %s165
      %s182 = sphi 0, %s166
      %s188 = sphi 0, %s190
      %s191 = sphi 0, %s188
      %s192 = sphi 0, %s191
      %s208 = sphi 0, %s192
      %s214 = sphi 0, %s216
      %s217 = sphi 0, %s214
      %s218 = sphi 0, %s217
      %s234 = sphi 0, %s218
      %s240 = sphi 0, %s242
      %s243 = sphi 0, %s240
      %s244 = sphi 0, %s243
      %s260 = sphi 0, %s244
      %s266 = sphi 0, %s268
      %s269 = sphi 0, %s266
      %s270 = sphi 0, %s269
      %s286 = sphi 0, %s270
      %s292 = sphi 0, %s294
      %s295 = sphi 0, %s292
      %s296 = sphi 0, %s295
      %s312 = sphi 0, %s296
      %s318 = sphi 0, %s320
      %s321 = sphi 0, %s318
      %s322 = sphi 0, %s321
      %s338 = sphi 0, %s322
      %s344 = sphi 0, %s346
      %s347 = sphi 0, %s344
      %s348 = sphi 0, %s347
      %s364 = sphi 0, %s348
      %s370 = sphi 0, %s372
      %s373 = sphi 0, %s370
      %s374 = sphi 0, %s373
      %s390 = sphi 0, %s374
      %s396 = sphi 0, %s398
      %s399 = sphi 0, %s396
      %s400 = sphi 0, %s399
      %s416 = sphi 0, %s400
      %s420 = sphi 0, %s420
      %s422 = sphi 0, %s420
      %s423 = sphi 0, %s422
      %s437 = sphi 0, %s423
    $region4: #{seq2seq_forward.2} parent=1 // loop_header_branch
      %40 = sbr.rel (%p38) target = $region8
    $region5: #{seq2seq_forward.2} parent=1 // loop_body
      %s42 = ssub.s32 %s37, 1
      %s43 = ssub.s32 %s37, 2
      %s44 = sadd.s32 %s37, 1
      %s46 = sadd.s32 %s45, 1
      %p49 = scmp.eq.s32.totalorder %s37, 1
      %p50 = scmp.ne.s32.totalorder %s45, %s47
      %p51 = scmp.eq.s32.totalorder %s37, 0
      %p52 = por %p50, %p51
      %p53 = scmp.ne.s32.totalorder %s45, %s47
      %p54 = scmp.eq.s32.totalorder %s42, 1
      %p55 = por %p53, %p54
      %p56 = scmp.ne.s32.totalorder %s47, %s48
      %p57 = scmp.eq.s32.totalorder %s42, 0
      %p58 = por %p56, %p57
      %p59 = scmp.ne.s32.totalorder %s47, %s48
      %p60 = scmp.eq.s32.totalorder %s43, 1
      %p61 = por %p59, %p60
      %p63 = scmp.ne.s32.totalorder %s48, %s62
      %p64 = scmp.eq.s32.totalorder %s43, 0
      %p65 = por %p63, %p64
      %s67 = sadd.s32 %s66, 1
      %p70 = scmp.eq.s32.totalorder %s37, 1
      %p71 = scmp.ne.s32.totalorder %s66, %s68
      %p72 = scmp.eq.s32.totalorder %s37, 0
      %p73 = por %p71, %p72
      %p74 = scmp.ne.s32.totalorder %s66, %s68
      %p75 = scmp.eq.s32.totalorder %s42, 1
      %p76 = por %p74, %p75
      %p77 = scmp.ne.s32.totalorder %s68, %s69
      %p78 = scmp.eq.s32.totalorder %s42, 0
      %p79 = por %p77, %p78
      %p80 = scmp.ne.s32.totalorder %s68, %s69
      %p81 = scmp.eq.s32.totalorder %s43, 1
      %p82 = por %p80, %p81
      %p84 = scmp.ne.s32.totalorder %s69, %s83
      %p85 = scmp.eq.s32.totalorder %s43, 0
      %p86 = por %p84, %p85
      %s88 = sadd.s32 %s87, 1
      %p91 = scmp.eq.s32.totalorder %s37, 1
      %p92 = scmp.ne.s32.totalorder %s87, %s89
      %p93 = scmp.eq.s32.totalorder %s37, 0
      %p94 = por %p92, %p93
      %p95 = scmp.ne.s32.totalorder %s87, %s89
      %p96 = scmp.eq.s32.totalorder %s42, 1
      %p97 = por %p95, %p96
      %p98 = scmp.ne.s32.totalorder %s89, %s90
      %p99 = scmp.eq.s32.totalorder %s42, 0
      %p100 = por %p98, %p99
      %p101 = scmp.ne.s32.totalorder %s89, %s90
      %p102 = scmp.eq.s32.totalorder %s43, 1
      %p103 = por %p101, %p102
      %p105 = scmp.ne.s32.totalorder %s90, %s104
      %p106 = scmp.eq.s32.totalorder %s43, 0
      %p107 = por %p105, %p106
      %s108 = ssub.s32 %s37, %s44
      %p109 = scmp.eq.s32.totalorder %s108, 0
      %s111 = sadd.s32 %s110, 1
      %s112 = scalar_select %p109, %s110, %s111
      %p115 = pneg %p109
      %p116 = scmp.eq.s32.totalorder %s37, 1
      %p117 = por %p115, %p116
      %p118 = scmp.ne.s32.totalorder %s110, %s113
      %p119 = scmp.eq.s32.totalorder %s37, 0
      %p120 = por %p118, %p119
      %p121 = scmp.ne.s32.totalorder %s110, %s113
      %p122 = scmp.eq.s32.totalorder %s42, 1
      %p123 = por %p121, %p122
      %p124 = scmp.ne.s32.totalorder %s113, %s114
      %p125 = scmp.eq.s32.totalorder %s42, 0
      %p126 = por %p124, %p125
      %p127 = scmp.ne.s32.totalorder %s113, %s114
      %p128 = scmp.eq.s32.totalorder %s43, 1
      %p129 = por %p127, %p128
      %p131 = scmp.ne.s32.totalorder %s114, %s130
      %p132 = scmp.eq.s32.totalorder %s43, 0
      %p133 = por %p131, %p132
      %s134 = ssub.s32 %s37, %s44
      %p135 = scmp.eq.s32.totalorder %s134, 0
      %s137 = sadd.s32 %s136, 1
      %s138 = scalar_select %p135, %s136, %s137
      %p141 = pneg %p135
      %p142 = scmp.eq.s32.totalorder %s37, 1
      %p143 = por %p141, %p142
      %p144 = scmp.ne.s32.totalorder %s136, %s139
      %p145 = scmp.eq.s32.totalorder %s37, 0
      %p146 = por %p144, %p145
      %p147 = scmp.ne.s32.totalorder %s136, %s139
      %p148 = scmp.eq.s32.totalorder %s42, 1
      %p149 = por %p147, %p148
      %p150 = scmp.ne.s32.totalorder %s139, %s140
      %p151 = scmp.eq.s32.totalorder %s42, 0
      %p152 = por %p150, %p151
      %p153 = scmp.ne.s32.totalorder %s139, %s140
      %p154 = scmp.eq.s32.totalorder %s43, 1
      %p155 = por %p153, %p154
      %p157 = scmp.ne.s32.totalorder %s140, %s156
      %p158 = scmp.eq.s32.totalorder %s43, 0
      %p159 = por %p157, %p158
      %s160 = ssub.s32 %s37, %s44
      %p161 = scmp.eq.s32.totalorder %s160, 0
      %s163 = sadd.s32 %s162, 1
      %s164 = scalar_select %p161, %s162, %s163
      %p167 = pneg %p161
      %p168 = scmp.eq.s32.totalorder %s37, 1
      %p169 = por %p167, %p168
      %p170 = scmp.ne.s32.totalorder %s162, %s165
      %p171 = scmp.eq.s32.totalorder %s37, 0
      %p172 = por %p170, %p171
      %p173 = scmp.ne.s32.totalorder %s162, %s165
      %p174 = scmp.eq.s32.totalorder %s42, 1
      %p175 = por %p173, %p174
      %p176 = scmp.ne.s32.totalorder %s165, %s166
      %p177 = scmp.eq.s32.totalorder %s42, 0
      %p178 = por %p176, %p177
      %p179 = scmp.ne.s32.totalorder %s165, %s166
      %p180 = scmp.eq.s32.totalorder %s43, 1
      %p181 = por %p179, %p180
      %p183 = scmp.ne.s32.totalorder %s166, %s182
      %p184 = scmp.eq.s32.totalorder %s43, 0
      %p185 = por %p183, %p184
      %s186 = ssub.s32 %s37, %s44
      %p187 = scmp.eq.s32.totalorder %s186, 0
      %s189 = sadd.s32 %s188, 1
      %s190 = scalar_select %p187, %s188, %s189
      %p193 = pneg %p187
      %p194 = scmp.eq.s32.totalorder %s37, 1
      %p195 = por %p193, %p194
      %p196 = scmp.ne.s32.totalorder %s188, %s191
      %p197 = scmp.eq.s32.totalorder %s37, 0
      %p198 = por %p196, %p197
      %p199 = scmp.ne.s32.totalorder %s188, %s191
      %p200 = scmp.eq.s32.totalorder %s42, 1
      %p201 = por %p199, %p200
      %p202 = scmp.ne.s32.totalorder %s191, %s192
      %p203 = scmp.eq.s32.totalorder %s42, 0
      %p204 = por %p202, %p203
      %p205 = scmp.ne.s32.totalorder %s191, %s192
      %p206 = scmp.eq.s32.totalorder %s43, 1
      %p207 = por %p205, %p206
      %p209 = scmp.ne.s32.totalorder %s192, %s208
      %p210 = scmp.eq.s32.totalorder %s43, 0
      %p211 = por %p209, %p210
      %s212 = ssub.s32 %s37, %s44
      %p213 = scmp.eq.s32.totalorder %s212, 0
      %s215 = sadd.s32 %s214, 1
      %s216 = scalar_select %p213, %s214, %s215
      %p219 = pneg %p213
      %p220 = scmp.eq.s32.totalorder %s37, 1
      %p221 = por %p219, %p220
      %p222 = scmp.ne.s32.totalorder %s214, %s217
      %p223 = scmp.eq.s32.totalorder %s37, 0
      %p224 = por %p222, %p223
      %p225 = scmp.ne.s32.totalorder %s214, %s217
      %p226 = scmp.eq.s32.totalorder %s42, 1
      %p227 = por %p225, %p226
      %p228 = scmp.ne.s32.totalorder %s217, %s218
      %p229 = scmp.eq.s32.totalorder %s42, 0
      %p230 = por %p228, %p229
      %p231 = scmp.ne.s32.totalorder %s217, %s218
      %p232 = scmp.eq.s32.totalorder %s43, 1
      %p233 = por %p231, %p232
      %p235 = scmp.ne.s32.totalorder %s218, %s234
      %p236 = scmp.eq.s32.totalorder %s43, 0
      %p237 = por %p235, %p236
      %s238 = ssub.s32 %s37, %s44
      %p239 = scmp.eq.s32.totalorder %s238, 0
      %s241 = sadd.s32 %s240, 1
      %s242 = scalar_select %p239, %s240, %s241
      %p245 = pneg %p239
      %p246 = scmp.eq.s32.totalorder %s37, 1
      %p247 = por %p245, %p246
      %p248 = scmp.ne.s32.totalorder %s240, %s243
      %p249 = scmp.eq.s32.totalorder %s37, 0
      %p250 = por %p248, %p249
      %p251 = scmp.ne.s32.totalorder %s240, %s243
      %p252 = scmp.eq.s32.totalorder %s42, 1
      %p253 = por %p251, %p252
      %p254 = scmp.ne.s32.totalorder %s243, %s244
      %p255 = scmp.eq.s32.totalorder %s42, 0
      %p256 = por %p254, %p255
      %p257 = scmp.ne.s32.totalorder %s243, %s244
      %p258 = scmp.eq.s32.totalorder %s43, 1
      %p259 = por %p257, %p258
      %p261 = scmp.ne.s32.totalorder %s244, %s260
      %p262 = scmp.eq.s32.totalorder %s43, 0
      %p263 = por %p261, %p262
      %s264 = ssub.s32 %s37, %s44
      %p265 = scmp.eq.s32.totalorder %s264, 0
      %s267 = sadd.s32 %s266, 1
      %s268 = scalar_select %p265, %s266, %s267
      %p271 = pneg %p265
      %p272 = scmp.eq.s32.totalorder %s37, 1
      %p273 = por %p271, %p272
      %p274 = scmp.ne.s32.totalorder %s266, %s269
      %p275 = scmp.eq.s32.totalorder %s37, 0
      %p276 = por %p274, %p275
      %p277 = scmp.ne.s32.totalorder %s266, %s269
      %p278 = scmp.eq.s32.totalorder %s42, 1
      %p279 = por %p277, %p278
      %p280 = scmp.ne.s32.totalorder %s269, %s270
      %p281 = scmp.eq.s32.totalorder %s42, 0
      %p282 = por %p280, %p281
      %p283 = scmp.ne.s32.totalorder %s269, %s270
      %p284 = scmp.eq.s32.totalorder %s43, 1
      %p285 = por %p283, %p284
      %p287 = scmp.ne.s32.totalorder %s270, %s286
      %p288 = scmp.eq.s32.totalorder %s43, 0
      %p289 = por %p287, %p288
      %s290 = ssub.s32 %s37, %s44
      %p291 = scmp.eq.s32.totalorder %s290, 0
      %s293 = sadd.s32 %s292, 1
      %s294 = scalar_select %p291, %s292, %s293
      %p297 = pneg %p291
      %p298 = scmp.eq.s32.totalorder %s37, 1
      %p299 = por %p297, %p298
      %p300 = scmp.ne.s32.totalorder %s292, %s295
      %p301 = scmp.eq.s32.totalorder %s37, 0
      %p302 = por %p300, %p301
      %p303 = scmp.ne.s32.totalorder %s292, %s295
      %p304 = scmp.eq.s32.totalorder %s42, 1
      %p305 = por %p303, %p304
      %p306 = scmp.ne.s32.totalorder %s295, %s296
      %p307 = scmp.eq.s32.totalorder %s42, 0
      %p308 = por %p306, %p307
      %p309 = scmp.ne.s32.totalorder %s295, %s296
      %p310 = scmp.eq.s32.totalorder %s43, 1
      %p311 = por %p309, %p310
      %p313 = scmp.ne.s32.totalorder %s296, %s312
      %p314 = scmp.eq.s32.totalorder %s43, 0
      %p315 = por %p313, %p314
      %s316 = ssub.s32 %s37, %s44
      %p317 = scmp.eq.s32.totalorder %s316, 0
      %s319 = sadd.s32 %s318, 1
      %s320 = scalar_select %p317, %s318, %s319
      %p323 = pneg %p317
      %p324 = scmp.eq.s32.totalorder %s37, 1
      %p325 = por %p323, %p324
      %p326 = scmp.ne.s32.totalorder %s318, %s321
      %p327 = scmp.eq.s32.totalorder %s37, 0
      %p328 = por %p326, %p327
      %p329 = scmp.ne.s32.totalorder %s318, %s321
      %p330 = scmp.eq.s32.totalorder %s42, 1
      %p331 = por %p329, %p330
      %p332 = scmp.ne.s32.totalorder %s321, %s322
      %p333 = scmp.eq.s32.totalorder %s42, 0
      %p334 = por %p332, %p333
      %p335 = scmp.ne.s32.totalorder %s321, %s322
      %p336 = scmp.eq.s32.totalorder %s43, 1
      %p337 = por %p335, %p336
      %p339 = scmp.ne.s32.totalorder %s322, %s338
      %p340 = scmp.eq.s32.totalorder %s43, 0
      %p341 = por %p339, %p340
      %s342 = ssub.s32 %s37, %s44
      %p343 = scmp.eq.s32.totalorder %s342, 0
      %s345 = sadd.s32 %s344, 1
      %s346 = scalar_select %p343, %s344, %s345
      %p349 = pneg %p343
      %p350 = scmp.eq.s32.totalorder %s37, 1
      %p351 = por %p349, %p350
      %p352 = scmp.ne.s32.totalorder %s344, %s347
      %p353 = scmp.eq.s32.totalorder %s37, 0
      %p354 = por %p352, %p353
      %p355 = scmp.ne.s32.totalorder %s344, %s347
      %p356 = scmp.eq.s32.totalorder %s42, 1
      %p357 = por %p355, %p356
      %p358 = scmp.ne.s32.totalorder %s347, %s348
      %p359 = scmp.eq.s32.totalorder %s42, 0
      %p360 = por %p358, %p359
      %p361 = scmp.ne.s32.totalorder %s347, %s348
      %p362 = scmp.eq.s32.totalorder %s43, 1
      %p363 = por %p361, %p362
      %p365 = scmp.ne.s32.totalorder %s348, %s364
      %p366 = scmp.eq.s32.totalorder %s43, 0
      %p367 = por %p365, %p366
      %s368 = ssub.s32 %s37, %s44
      %p369 = scmp.eq.s32.totalorder %s368, 0
      %s371 = sadd.s32 %s370, 1
      %s372 = scalar_select %p369, %s370, %s371
      %p375 = pneg %p369
      %p376 = scmp.eq.s32.totalorder %s37, 1
      %p377 = por %p375, %p376
      %p378 = scmp.ne.s32.totalorder %s370, %s373
      %p379 = scmp.eq.s32.totalorder %s37, 0
      %p380 = por %p378, %p379
      %p381 = scmp.ne.s32.totalorder %s370, %s373
      %p382 = scmp.eq.s32.totalorder %s42, 1
      %p383 = por %p381, %p382
      %p384 = scmp.ne.s32.totalorder %s373, %s374
      %p385 = scmp.eq.s32.totalorder %s42, 0
      %p386 = por %p384, %p385
      %p387 = scmp.ne.s32.totalorder %s373, %s374
      %p388 = scmp.eq.s32.totalorder %s43, 1
      %p389 = por %p387, %p388
      %p391 = scmp.ne.s32.totalorder %s374, %s390
      %p392 = scmp.eq.s32.totalorder %s43, 0
      %p393 = por %p391, %p392
      %s394 = ssub.s32 %s37, %s44
      %p395 = scmp.eq.s32.totalorder %s394, 0
      %s397 = sadd.s32 %s396, 1
      %s398 = scalar_select %p395, %s396, %s397
      %p401 = pneg %p395
      %p402 = scmp.eq.s32.totalorder %s37, 1
      %p403 = por %p401, %p402
      %p404 = scmp.ne.s32.totalorder %s396, %s399
      %p405 = scmp.eq.s32.totalorder %s37, 0
      %p406 = por %p404, %p405
      %p407 = scmp.ne.s32.totalorder %s396, %s399
      %p408 = scmp.eq.s32.totalorder %s42, 1
      %p409 = por %p407, %p408
      %p410 = scmp.ne.s32.totalorder %s399, %s400
      %p411 = scmp.eq.s32.totalorder %s42, 0
      %p412 = por %p410, %p411
      %p413 = scmp.ne.s32.totalorder %s399, %s400
      %p414 = scmp.eq.s32.totalorder %s43, 1
      %p415 = por %p413, %p414
      %p417 = scmp.ne.s32.totalorder %s400, %s416
      %p418 = scmp.eq.s32.totalorder %s43, 0
      %p419 = por %p417, %p418
      %s421 = sadd.s32 %s420, 1
      %p424 = scmp.eq.s32.totalorder %s37, 1
      %p425 = scmp.ne.s32.totalorder %s420, %s422
      %p426 = scmp.eq.s32.totalorder %s37, 0
      %p427 = por %p425, %p426
      %p428 = scmp.ne.s32.totalorder %s420, %s422
      %p429 = scmp.eq.s32.totalorder %s42, 1
      %p430 = por %p428, %p429
      %p431 = scmp.ne.s32.totalorder %s422, %s423
      %p432 = scmp.eq.s32.totalorder %s42, 0
      %p433 = por %p431, %p432
      %p434 = scmp.ne.s32.totalorder %s422, %s423
      %p435 = scmp.eq.s32.totalorder %s43, 1
      %p436 = por %p434, %p435
      %p438 = scmp.ne.s32.totalorder %s423, %s437
      %p439 = scmp.eq.s32.totalorder %s43, 0
      %p440 = por %p438, %p439
      %p441 = scmp.le.s32.totalorder 1, %s37
      %p442 = scmp.lt.s32.totalorder %s37, 3
      %p443 = pnand %p441, %p442
      %p444 = pneg %p443
      // Predicated region
      $region9: #{seq2seq_forward.2} parent=5 // pred_check
        _
      $region10: #{seq2seq_forward.2} parent=5 // pred_check_branch
        %446 = sbr.rel (%p443) target = $region12
      $region11: #{seq2seq_forward.2} parent=5 // pred_region
        %s447 = ssub.s32 %s37, 1
        // Predicated region
        $region13: #{seq2seq_forward.2} parent=11 // pred_check
          %p448 = pneg %p58
        $region14: #{seq2seq_forward.2} parent=11 // pred_check_branch
          %450 = sbr.rel (%p448) target = $region16
        $region15: #{seq2seq_forward.2} parent=11 // pred_region
          _
        $region16: #{seq2seq_forward.2} parent=11 // pred_fallthru
          _
        // Predicated region
        $region17: #{seq2seq_forward.2} parent=11 // pred_check
          %p451 = pneg %p79
        $region18: #{seq2seq_forward.2} parent=11 // pred_check_branch
          %453 = sbr.rel (%p451) target = $region20
        $region19: #{seq2seq_forward.2} parent=11 // pred_region
          _
        $region20: #{seq2seq_forward.2} parent=11 // pred_fallthru
          _
        // Predicated region
        $region21: #{seq2seq_forward.2} parent=11 // pred_check
          %p454 = pneg %p100
        $region22: #{seq2seq_forward.2} parent=11 // pred_check_branch
          %456 = sbr.rel (%p454) target = $region24
        $region23: #{seq2seq_forward.2} parent=11 // pred_region
          %s458 = ssub.s32 32, 32
          %459 = vsyncadd [#allocation5], %s458
          %s461 = sshll.u32 [#allocation4], 4
          %s462 = int_to_ptr.vmem [resolvable:$true] %s461
          %464 = dma.hbm_to_vmem [thread:$0]  %s2, 32, %s462, [#allocation5]
        $region24: #{seq2seq_forward.2} parent=11 // pred_fallthru
          _
      $region12: #{seq2seq_forward.2} parent=5 // pred_fallthru
        _
      %p465 = scmp.lt.s32.totalorder %s37, 2
      // Predicated region
      $region25: #{seq2seq_forward.2} parent=5 // pred_check
        %p466 = pneg %p465
      $region26: #{seq2seq_forward.2} parent=5 // pred_check_branch
        %468 = sbr.rel (%p466) target = $region28
      $region27: #{seq2seq_forward.2} parent=5 // pred_region
        // Predicated region
        $region29: #{seq2seq_forward.2} parent=27 // pred_check
          %p469 = pneg %p120
        $region30: #{seq2seq_forward.2} parent=27 // pred_check_branch
          %471 = sbr.rel (%p469) target = $region32
        $region31: #{seq2seq_forward.2} parent=27 // pred_region
          %s472 = sand.u32 %s37, 1
          %s473 = scalar_lea.sflag [#allocation7], %s472
          %s474 = sand.u32 %s110, 1
          %s475 = smul.addr %s474, 768
          %s476 = scalar_lea.vmem [#allocation6], %s475
          %s478 = ssub.s32 12288, 12288
          %479 = vsyncadd %s473, %s478
          %s480 = smul.addr %s37, 192
          %s481 = smul.addr %s480, 64
          %s482 = scalar_lea.hbm %s3, %s481
          %s483 = sshll.u32 %s476, 4
          %s484 = int_to_ptr.vmem [resolvable:$true] %s483
          %489 = dma.hbm_to_vmem [thread:$0]  %s482, 12288, %s484, %s473, 384, 384, 24
        $region32: #{seq2seq_forward.2} parent=27 // pred_fallthru
          _
        // Predicated region
        $region33: #{seq2seq_forward.2} parent=27 // pred_check
          %p490 = pneg %p146
        $region34: #{seq2seq_forward.2} parent=27 // pred_check_branch
          %492 = sbr.rel (%p490) target = $region36
        $region35: #{seq2seq_forward.2} parent=27 // pred_region
          %p493 = scmp.lt.s32.totalorder %s37, 1
          %s494 = scalar_select %p493, %s37, 1
          %s495 = smul.addr %s494, 6
          %s496 = scalar_lea.vmem %s4, %s495
        $region36: #{seq2seq_forward.2} parent=27 // pred_fallthru
          _
        // Predicated region
        $region37: #{seq2seq_forward.2} parent=27 // pred_check
          %p497 = pneg %p172
        $region38: #{seq2seq_forward.2} parent=27 // pred_check_branch
          %499 = sbr.rel (%p497) target = $region40
        $region39: #{seq2seq_forward.2} parent=27 // pred_region
          %s500 = sand.u32 %s37, 1
          %s501 = scalar_lea.sflag [#allocation7], %s500
          %s502 = sand.u32 %s162, 1
          %s503 = smul.addr %s502, 256
          %s504 = scalar_lea.vmem [#allocation8], %s503
          %s506 = ssub.s32 4096, 4096
          %507 = vsyncadd %s501, %s506
          %s508 = smul.addr %s37, 64
          %s509 = smul.addr %s508, 64
          %s510 = scalar_lea.hbm %s5, %s509
          %s511 = sshll.u32 %s504, 4
          %s512 = int_to_ptr.vmem [resolvable:$true] %s511
          %517 = dma.hbm_to_vmem [thread:$0]  %s510, 4096, %s512, %s501, 128, 128, 8
        $region40: #{seq2seq_forward.2} parent=27 // pred_fallthru
          _
        // Predicated region
        $region41: #{seq2seq_forward.2} parent=27 // pred_check
          %p518 = pneg %p198
        $region42: #{seq2seq_forward.2} parent=27 // pred_check_branch
          %520 = sbr.rel (%p518) target = $region44
        $region43: #{seq2seq_forward.2} parent=27 // pred_region
          %p521 = scmp.lt.s32.totalorder %s37, 1
          %s522 = scalar_select %p521, %s37, 1
          %s523 = smul.addr %s522, 2
          %s524 = scalar_lea.vmem %s6, %s523
        $region44: #{seq2seq_forward.2} parent=27 // pred_fallthru
          _
        // Predicated region
        $region45: #{seq2seq_forward.2} parent=27 // pred_check
          %p525 = pneg %p224
        $region46: #{seq2seq_forward.2} parent=27 // pred_check_branch
          %527 = sbr.rel (%p525) target = $region48
        $region47: #{seq2seq_forward.2} parent=27 // pred_region
          %s528 = sand.u32 %s37, 1
          %s529 = scalar_lea.sflag [#allocation10], %s528
          %s530 = sand.u32 %s214, 1
          %s531 = smul.addr %s530, 2
          %s532 = scalar_lea.vmem [#allocation9], %s531
          %s534 = ssub.s32 32, 32
          %535 = vsyncadd %s529, %s534
          %s536 = smul.addr %s37, 2
          %s537 = smul.addr %s536, 16
          %s538 = scalar_lea.hbm %s7, %s537
          %s540 = sshll.u32 %s532, 4
          %s541 = int_to_ptr.vmem [resolvable:$true] %s540
          %543 = dma.hbm_to_vmem [thread:$0]  %s538, 32, %s541, %s529
        $region48: #{seq2seq_forward.2} parent=27 // pred_fallthru
          _
        // Predicated region
        $region49: #{seq2seq_forward.2} parent=27 // pred_check
          %p544 = pneg %p250
        $region50: #{seq2seq_forward.2} parent=27 // pred_check_branch
          %546 = sbr.rel (%p544) target = $region52
        $region51: #{seq2seq_forward.2} parent=27 // pred_region
          %s547 = sand.u32 %s37, 1
          %s548 = scalar_lea.sflag [#allocation10], %s547
          %s549 = sand.u32 %s240, 1
          %s550 = smul.addr %s549, 2
          %s551 = scalar_lea.vmem [#allocation11], %s550
          %s553 = ssub.s32 32, 32
          %554 = vsyncadd %s548, %s553
          %s555 = smul.addr %s37, 2
          %s556 = smul.addr %s555, 16
          %s557 = scalar_lea.hbm %s8, %s556
          %s559 = sshll.u32 %s551, 4
          %s560 = int_to_ptr.vmem [resolvable:$true] %s559
          %562 = dma.hbm_to_vmem [thread:$0]  %s557, 32, %s560, %s548
        $region52: #{seq2seq_forward.2} parent=27 // pred_fallthru
          _
        // Predicated region
        $region53: #{seq2seq_forward.2} parent=27 // pred_check
          %p563 = pneg %p276
        $region54: #{seq2seq_forward.2} parent=27 // pred_check_branch
          %565 = sbr.rel (%p563) target = $region56
        $region55: #{seq2seq_forward.2} parent=27 // pred_region
          %p566 = scmp.lt.s32.totalorder %s37, 1
          %s567 = scalar_select %p566, %s37, 1
          %s568 = smul.addr %s567, 128
          %s569 = smul.addr %s568, 4
          %s570 = scalar_lea.vmem %s9, %s569
        $region56: #{seq2seq_forward.2} parent=27 // pred_fallthru
          _
        // Predicated region
        $region57: #{seq2seq_forward.2} parent=27 // pred_check
          %p571 = pneg %p302
        $region58: #{seq2seq_forward.2} parent=27 // pred_check_branch
          %573 = sbr.rel (%p571) target = $region60
        $region59: #{seq2seq_forward.2} parent=27 // pred_region
          %s574 = sand.u32 %s37, 1
          %s575 = scalar_lea.sflag [#allocation13], %s574
          %s576 = sand.u32 %s292, 1
          %s577 = smul.addr %s576, 4
          %s578 = scalar_lea.vmem [#allocation12], %s577
          %s580 = ssub.s32 64, 64
          %581 = vsyncadd %s575, %s580
          %s582 = smul.addr %s37, 4
          %s583 = smul.addr %s582, 16
          %s584 = scalar_lea.hbm %s10, %s583
          %s586 = sshll.u32 %s578, 4
          %s587 = int_to_ptr.vmem [resolvable:$true] %s586
          %589 = dma.hbm_to_vmem [thread:$0]  %s584, 64, %s587, %s575
        $region60: #{seq2seq_forward.2} parent=27 // pred_fallthru
          _
        // Predicated region
        $region61: #{seq2seq_forward.2} parent=27 // pred_check
          %p590 = pneg %p328
        $region62: #{seq2seq_forward.2} parent=27 // pred_check_branch
          %592 = sbr.rel (%p590) target = $region64
        $region63: #{seq2seq_forward.2} parent=27 // pred_region
          %s593 = sand.u32 %s37, 1
          %s594 = scalar_lea.sflag [#allocation13], %s593
          %s595 = sand.u32 %s318, 1
          %s596 = smul.addr %s595, 512
          %s597 = scalar_lea.vmem [#allocation14], %s596
          %s599 = ssub.s32 8192, 8192
          %600 = vsyncadd %s594, %s599
          %s601 = smul.addr %s37, 128
          %s602 = smul.addr %s601, 64
          %s603 = scalar_lea.hbm %s11, %s602
          %s604 = sshll.u32 %s597, 4
          %s605 = int_to_ptr.vmem [resolvable:$true] %s604
          %610 = dma.hbm_to_vmem [thread:$0]  %s603, 8192, %s605, %s594, 128, 128, 8
        $region64: #{seq2seq_forward.2} parent=27 // pred_fallthru
          _
        // Predicated region
        $region65: #{seq2seq_forward.2} parent=27 // pred_check
          %p611 = pneg %p354
        $region66: #{seq2seq_forward.2} parent=27 // pred_check_branch
          %613 = sbr.rel (%p611) target = $region68
        $region67: #{seq2seq_forward.2} parent=27 // pred_region
          %s614 = sand.u32 %s37, 1
          %s615 = scalar_lea.sflag [#allocation16], %s614
          %s616 = sand.u32 %s344, 1
          %s617 = smul.addr %s616, 2
          %s618 = scalar_lea.vmem [#allocation15], %s617
          %s620 = ssub.s32 32, 32
          %621 = vsyncadd %s615, %s620
          %s622 = smul.addr %s37, 2
          %s623 = smul.addr %s622, 16
          %s624 = scalar_lea.hbm %s12, %s623
          %s626 = sshll.u32 %s618, 4
          %s627 = int_to_ptr.vmem [resolvable:$true] %s626
          %629 = dma.hbm_to_vmem [thread:$0]  %s624, 32, %s627, %s615
        $region68: #{seq2seq_forward.2} parent=27 // pred_fallthru
          _
        // Predicated region
        $region69: #{seq2seq_forward.2} parent=27 // pred_check
          %p630 = pneg %p380
        $region70: #{seq2seq_forward.2} parent=27 // pred_check_branch
          %632 = sbr.rel (%p630) target = $region72
        $region71: #{seq2seq_forward.2} parent=27 // pred_region
          %s633 = sand.u32 %s37, 1
          %s634 = scalar_lea.sflag [#allocation16], %s633
          %s635 = sand.u32 %s370, 1
          %s636 = smul.addr %s635, 2
          %s637 = scalar_lea.vmem [#allocation17], %s636
          %s639 = ssub.s32 32, 32
          %640 = vsyncadd %s634, %s639
          %s641 = smul.addr %s37, 2
          %s642 = smul.addr %s641, 16
          %s643 = scalar_lea.hbm %s13, %s642
          %s645 = sshll.u32 %s637, 4
          %s646 = int_to_ptr.vmem [resolvable:$true] %s645
          %648 = dma.hbm_to_vmem [thread:$0]  %s643, 32, %s646, %s634
        $region72: #{seq2seq_forward.2} parent=27 // pred_fallthru
          _
        // Predicated region
        $region73: #{seq2seq_forward.2} parent=27 // pred_check
          %p649 = pneg %p406
        $region74: #{seq2seq_forward.2} parent=27 // pred_check_branch
          %651 = sbr.rel (%p649) target = $region76
        $region75: #{seq2seq_forward.2} parent=27 // pred_region
          %s652 = sand.u32 %s396, 1
          %s653 = scalar_lea.sflag [#allocation19], %s652
          %s654 = sand.u32 %s396, 1
          %s655 = smul.addr %s654, 2
          %s656 = scalar_lea.vmem [#allocation18], %s655
          %s658 = ssub.s32 32, 32
          %659 = vsyncadd %s653, %s658
          %s660 = smul.addr %s37, 2
          %s661 = smul.addr %s660, 16
          %s662 = scalar_lea.hbm %s14, %s661
          %s664 = sshll.u32 %s656, 4
          %s665 = int_to_ptr.vmem [resolvable:$true] %s664
          %667 = dma.hbm_to_vmem [thread:$0]  %s662, 32, %s665, %s653
        $region76: #{seq2seq_forward.2} parent=27 // pred_fallthru
          _
      $region28: #{seq2seq_forward.2} parent=5 // pred_fallthru
        _
      %p668 = scmp.le.s32.totalorder 1, %s37
      %p669 = scmp.lt.s32.totalorder %s37, 3
      %p670 = pnand %p668, %p669
      %p671 = pneg %p670
      // Predicated region
      $region77: #{seq2seq_forward.2} parent=5 // pred_check
        _
      $region78: #{seq2seq_forward.2} parent=5 // pred_check_branch
        %673 = sbr.rel (%p670) target = $region80
      $region79: #{seq2seq_forward.2} parent=5 // pred_region
        %s674 = ssub.s32 %s37, 1
        // Predicated region
        $region81: #{seq2seq_forward.2} parent=79 // pred_check
          %p675 = pneg %p100
        $region82: #{seq2seq_forward.2} parent=79 // pred_check_branch
          %677 = sbr.rel (%p675) target = $region84
        $region83: #{seq2seq_forward.2} parent=79 // pred_region
          %678 = dma.done [#allocation5], 32
        $region84: #{seq2seq_forward.2} parent=79 // pred_fallthru
          _
        %s679 = sand.u32 %s42, 1
        %s680 = scalar_lea.sflag [#allocation7], %s679
        %s681 = sand.u32 %s113, 1
        %s682 = smul.addr %s681, 768
        %s683 = scalar_lea.vmem [#allocation6], %s682
        // Predicated region
        $region85: #{seq2seq_forward.2} parent=79 // pred_check
          %p684 = pneg %p126
        $region86: #{seq2seq_forward.2} parent=79 // pred_check_branch
          %686 = sbr.rel (%p684) target = $region88
        $region87: #{seq2seq_forward.2} parent=79 // pred_region
          %687 = dma.done %s680, 12288
        $region88: #{seq2seq_forward.2} parent=79 // pred_fallthru
          _
        %s688 = sand.u32 %s42, 1
        %s689 = scalar_lea.sflag [#allocation7], %s688
        %s690 = sand.u32 %s165, 1
        %s691 = smul.addr %s690, 256
        %s692 = scalar_lea.vmem [#allocation8], %s691
        // Predicated region
        $region89: #{seq2seq_forward.2} parent=79 // pred_check
          %p693 = pneg %p178
        $region90: #{seq2seq_forward.2} parent=79 // pred_check_branch
          %695 = sbr.rel (%p693) target = $region92
        $region91: #{seq2seq_forward.2} parent=79 // pred_region
          %696 = dma.done %s689, 4096
        $region92: #{seq2seq_forward.2} parent=79 // pred_fallthru
          _
        %s697 = sand.u32 %s42, 1
        %s698 = scalar_lea.sflag [#allocation10], %s697
        %s699 = sand.u32 %s217, 1
        %s700 = smul.addr %s699, 2
        %s701 = scalar_lea.vmem [#allocation9], %s700
        // Predicated region
        $region93: #{seq2seq_forward.2} parent=79 // pred_check
          %p702 = pneg %p230
        $region94: #{seq2seq_forward.2} parent=79 // pred_check_branch
          %704 = sbr.rel (%p702) target = $region96
        $region95: #{seq2seq_forward.2} parent=79 // pred_region
          %705 = dma.done %s698, 32
        $region96: #{seq2seq_forward.2} parent=79 // pred_fallthru
          _
        %s706 = sand.u32 %s42, 1
        %s707 = scalar_lea.sflag [#allocation10], %s706
        %s708 = sand.u32 %s243, 1
        %s709 = smul.addr %s708, 2
        %s710 = scalar_lea.vmem [#allocation11], %s709
        // Predicated region
        $region97: #{seq2seq_forward.2} parent=79 // pred_check
          %p711 = pneg %p256
        $region98: #{seq2seq_forward.2} parent=79 // pred_check_branch
          %713 = sbr.rel (%p711) target = $region100
        $region99: #{seq2seq_forward.2} parent=79 // pred_region
          %714 = dma.done %s707, 32
        $region100: #{seq2seq_forward.2} parent=79 // pred_fallthru
          _
        %s715 = sand.u32 %s42, 1
        %s716 = scalar_lea.sflag [#allocation13], %s715
        %s717 = sand.u32 %s295, 1
        %s718 = smul.addr %s717, 4
        %s719 = scalar_lea.vmem [#allocation12], %s718
        // Predicated region
        $region101: #{seq2seq_forward.2} parent=79 // pred_check
          %p720 = pneg %p308
        $region102: #{seq2seq_forward.2} parent=79 // pred_check_branch
          %722 = sbr.rel (%p720) target = $region104
        $region103: #{seq2seq_forward.2} parent=79 // pred_region
          %723 = dma.done %s716, 64
        $region104: #{seq2seq_forward.2} parent=79 // pred_fallthru
          _
        %s724 = sand.u32 %s42, 1
        %s725 = scalar_lea.sflag [#allocation13], %s724
        %s726 = sand.u32 %s321, 1
        %s727 = smul.addr %s726, 512
        %s728 = scalar_lea.vmem [#allocation14], %s727
        // Predicated region
        $region105: #{seq2seq_forward.2} parent=79 // pred_check
          %p729 = pneg %p334
        $region106: #{seq2seq_forward.2} parent=79 // pred_check_branch
          %731 = sbr.rel (%p729) target = $region108
        $region107: #{seq2seq_forward.2} parent=79 // pred_region
          %732 = dma.done %s725, 8192
        $region108: #{seq2seq_forward.2} parent=79 // pred_fallthru
          _
        %s733 = sand.u32 %s42, 1
        %s734 = scalar_lea.sflag [#allocation16], %s733
        %s735 = sand.u32 %s347, 1
        %s736 = smul.addr %s735, 2
        %s737 = scalar_lea.vmem [#allocation15], %s736
        // Predicated region
        $region109: #{seq2seq_forward.2} parent=79 // pred_check
          %p738 = pneg %p360
        $region110: #{seq2seq_forward.2} parent=79 // pred_check_branch
          %740 = sbr.rel (%p738) target = $region112
        $region111: #{seq2seq_forward.2} parent=79 // pred_region
          %741 = dma.done %s734, 32
        $region112: #{seq2seq_forward.2} parent=79 // pred_fallthru
          _
        %s742 = sand.u32 %s42, 1
        %s743 = scalar_lea.sflag [#allocation16], %s742
        %s744 = sand.u32 %s373, 1
        %s745 = smul.addr %s744, 2
        %s746 = scalar_lea.vmem [#allocation17], %s745
        // Predicated region
        $region113: #{seq2seq_forward.2} parent=79 // pred_check
          %p747 = pneg %p386
        $region114: #{seq2seq_forward.2} parent=79 // pred_check_branch
          %749 = sbr.rel (%p747) target = $region116
        $region115: #{seq2seq_forward.2} parent=79 // pred_region
          %750 = dma.done %s743, 32
        $region116: #{seq2seq_forward.2} parent=79 // pred_fallthru
          _
        %s751 = sand.u32 %s399, 1
        %s752 = scalar_lea.sflag [#allocation19], %s751
        %s753 = sand.u32 %s399, 1
        %s754 = smul.addr %s753, 2
        %s755 = scalar_lea.vmem [#allocation18], %s754
        // Predicated region
        $region117: #{seq2seq_forward.2} parent=79 // pred_check
          %p756 = pneg %p412
        $region118: #{seq2seq_forward.2} parent=79 // pred_check_branch
          %758 = sbr.rel (%p756) target = $region120
        $region119: #{seq2seq_forward.2} parent=79 // pred_region
          %759 = dma.done %s752, 32
        $region120: #{seq2seq_forward.2} parent=79 // pred_fallthru
          _
        %p760 = pneg %p58
        %p761 = pneg %p55
        %p762 = pneg %p79
        %p763 = pneg %p76
        %p764 = pneg %p100
        %p765 = pneg %p97
        %s766 = sand.u32 %s42, 1
        %s767 = scalar_lea.sflag [#allocation7], %s766
        %s768 = sand.u32 %s113, 1
        %s769 = smul.addr %s768, 768
        %s770 = scalar_lea.vmem [#allocation6], %s769
        %p771 = pneg %p126
        %p772 = pneg %p123
        %p773 = scmp.lt.s32.totalorder %s42, 1
        %s774 = scalar_select %p773, %s42, 1
        %s775 = smul.addr %s774, 6
        %s776 = scalar_lea.vmem %s4, %s775
        %p777 = pneg %p152
        %p778 = pneg %p149
        %s779 = sand.u32 %s42, 1
        %s780 = scalar_lea.sflag [#allocation7], %s779
        %s781 = sand.u32 %s165, 1
        %s782 = smul.addr %s781, 256
        %s783 = scalar_lea.vmem [#allocation8], %s782
        %p784 = pneg %p178
        %p785 = pneg %p175
        %p786 = scmp.lt.s32.totalorder %s42, 1
        %s787 = scalar_select %p786, %s42, 1
        %s788 = smul.addr %s787, 2
        %s789 = scalar_lea.vmem %s6, %s788
        %p790 = pneg %p204
        %p791 = pneg %p201
        %s792 = sand.u32 %s42, 1
        %s793 = scalar_lea.sflag [#allocation10], %s792
        %s794 = sand.u32 %s217, 1
        %s795 = smul.addr %s794, 2
        %s796 = scalar_lea.vmem [#allocation9], %s795
        %p797 = pneg %p230
        %p798 = pneg %p227
        %s799 = sand.u32 %s42, 1
        %s800 = scalar_lea.sflag [#allocation10], %s799
        %s801 = sand.u32 %s243, 1
        %s802 = smul.addr %s801, 2
        %s803 = scalar_lea.vmem [#allocation11], %s802
        %p804 = pneg %p256
        %p805 = pneg %p253
        %p806 = scmp.lt.s32.totalorder %s42, 1
        %s807 = scalar_select %p806, %s42, 1
        %s808 = smul.addr %s807, 128
        %s809 = smul.addr %s808, 4
        %s810 = scalar_lea.vmem %s9, %s809
        %p811 = pneg %p282
        %p812 = pneg %p279
        %s813 = sand.u32 %s42, 1
        %s814 = scalar_lea.sflag [#allocation13], %s813
        %s815 = sand.u32 %s295, 1
        %s816 = smul.addr %s815, 4
        %s817 = scalar_lea.vmem [#allocation12], %s816
        %p818 = pneg %p308
        %p819 = pneg %p305
        %s820 = sand.u32 %s42, 1
        %s821 = scalar_lea.sflag [#allocation13], %s820
        %s822 = sand.u32 %s321, 1
        %s823 = smul.addr %s822, 512
        %s824 = scalar_lea.vmem [#allocation14], %s823
        %p825 = pneg %p334
        %p826 = pneg %p331
        %s827 = sand.u32 %s42, 1
        %s828 = scalar_lea.sflag [#allocation16], %s827
        %s829 = sand.u32 %s347, 1
        %s830 = smul.addr %s829, 2
        %s831 = scalar_lea.vmem [#allocation15], %s830
        %p832 = pneg %p360
        %p833 = pneg %p357
        %s834 = sand.u32 %s42, 1
        %s835 = scalar_lea.sflag [#allocation16], %s834
        %s836 = sand.u32 %s373, 1
        %s837 = smul.addr %s836, 2
        %s838 = scalar_lea.vmem [#allocation17], %s837
        %p839 = pneg %p386
        %p840 = pneg %p383
        %s841 = sand.u32 %s399, 1
        %s842 = scalar_lea.sflag [#allocation19], %s841
        %s843 = sand.u32 %s399, 1
        %s844 = smul.addr %s843, 2
        %s845 = scalar_lea.vmem [#allocation18], %s844
        %p846 = pneg %p412
        %p847 = pneg %p409
        %p848 = pneg %p433
        %p849 = pneg %p430
        %p850 = scmp.lt.s32.totalorder %s42, 1
        %s851 = scalar_select %p850, %s42, 1
        %s852 = smul.addr %s851, 6
        %s853 = scalar_lea.vmem %s4, %s852
        %p854 = scmp.lt.s32.totalorder %s42, 1
        %s855 = scalar_select %p854, %s42, 1
        %s856 = smul.addr %s855, 2
        %s857 = scalar_lea.vmem %s6, %s856
        %p858 = scmp.lt.s32.totalorder %s42, 1
        %s859 = scalar_select %p858, %s42, 1
        %s860 = smul.addr %s859, 128
        %s861 = smul.addr %s860, 4
        %s862 = scalar_lea.vmem %s9, %s861
        %p864 = scmp.eq.s32.totalorder %s42, 0
        // Predicated region
        $region121: #{seq2seq_forward.2} parent=79 // pred_check
          %p865 = pneg %p864
        $region122: #{seq2seq_forward.2} parent=79 // pred_check_branch
          %867 = sbr.rel (%p865) target = $region124
        $region123: #{seq2seq_forward.2} parent=79 // pred_region
          %v868 = vld [vmem:[%s0] sm:$0xff]
          %v869 = vld [vmem:[%s0 + $0x8] sm:$0xff]
          %v870 = vld [vmem:[%s0 + $0x10] sm:$0xff]
          %v871 = vld [vmem:[%s0 + $0x18] sm:$0xff]
          %v872 = vld [vmem:[%s0 + $0x20] sm:$0xff]
          %v873 = vld [vmem:[%s0 + $0x28] sm:$0xff]
          %v874 = vld [vmem:[%s0 + $0x30] sm:$0xff]
          %v875 = vld [vmem:[%s0 + $0x38] sm:$0xff]
          %v876 = vld [vmem:[%s1] sm:$0x3]
          %v877 = vld [vmem:[#allocation4] sm:$0x3]
          %v878 = vadd.f32 %v868, %v869
          %879 = vadd.xlane.f32.xlu0 %v878
          %v880 = vpop.xlane.xlu0 %879
          %v881 = vadd.f32 %v870, %v871
          %882 = vadd.xlane.f32.xlu0 %v881
          %v883 = vpop.xlane.xlu0 %882
          %v884 = vadd.f32 %v872, %v873
          %885 = vadd.xlane.f32.xlu0 %v884
          %v886 = vpop.xlane.xlu0 %885
          %v887 = vadd.f32 %v874, %v875
          %888 = vadd.xlane.f32.xlu0 %v887
          %v889 = vpop.xlane.xlu0 %888
          %v890 = vrcp.pop 256.0
          %v891 = vmul.f32 %v880, %v890
          %v892 = vmul.f32 %v883, %v890
          %v893 = vmul.f32 %v886, %v890
          %v894 = vmul.f32 %v889, %v890
          %v895 = vsub.f32 %v868, %v891
          %v896 = vsub.f32 %v869, %v891
          %v897 = vsub.f32 %v870, %v892
          %v898 = vsub.f32 %v871, %v892
          %v899 = vsub.f32 %v872, %v893
          %v900 = vsub.f32 %v873, %v893
          %v901 = vsub.f32 %v874, %v894
          %v902 = vsub.f32 %v875, %v894
          %v903 = vmul.f32 %v895, %v895
          %v904 = vmul.f32 %v896, %v896
          %v905 = vmul.f32 %v897, %v897
          %v906 = vmul.f32 %v898, %v898
          %v907 = vmul.f32 %v899, %v899
          %v908 = vmul.f32 %v900, %v900
          %v909 = vmul.f32 %v901, %v901
          %v910 = vmul.f32 %v902, %v902
          %v911 = vadd.f32 %v903, %v904
          %912 = vadd.xlane.f32.xlu0 %v911
          %v913 = vpop.xlane.xlu0 %912
          %v914 = vadd.f32 %v905, %v906
          %915 = vadd.xlane.f32.xlu0 %v914
          %v916 = vpop.xlane.xlu0 %915
          %v917 = vadd.f32 %v907, %v908
          %918 = vadd.xlane.f32.xlu0 %v917
          %v919 = vpop.xlane.xlu0 %918
          %v920 = vadd.f32 %v909, %v910
          %921 = vadd.xlane.f32.xlu0 %v920
          %v922 = vpop.xlane.xlu0 %921
          %v923 = vmul.f32 %v913, %v890
          %v924 = vmul.f32 %v916, %v890
          %v925 = vmul.f32 %v919, %v890
          %v926 = vmul.f32 %v922, %v890
          %v927 = vadd.f32 %v923, 1e-12
          %v928 = vadd.f32 %v924, 1e-12
          %v929 = vadd.f32 %v925, 1e-12
          %v930 = vadd.f32 %v926, 1e-12
          %v931 = vrsqrt.pop %v927
          %v932 = vrsqrt.pop %v928
          %v933 = vrsqrt.pop %v929
          %v934 = vrsqrt.pop %v930
          %v935 = vmul.f32 %v895, %v931
          %v936 = vmul.f32 %v896, %v931
          %v937 = vmul.f32 %v897, %v932
          %v938 = vmul.f32 %v898, %v932
          %v939 = vmul.f32 %v899, %v933
          %v940 = vmul.f32 %v900, %v933
          %v941 = vmul.f32 %v901, %v934
          %v942 = vmul.f32 %v902, %v934
          %v944 = vlaneseq
          %v945 = vshrl.u32 %v944, 7
          %v946 = vsub.s32 0, %v945
          %v947 = vrot.slane %v876, %v946
          %v948 = vlaneseq
          %v949 = vshrl.u32 %v948, 7
          %v950 = vsub.s32 1, %v949
          %v951 = vrot.slane %v876, %v950
          %v954 = vmul.f32 %v935, %v947
          %v955 = vmul.f32 %v936, %v951
          %v956 = vmul.f32 %v937, %v947
          %v957 = vmul.f32 %v938, %v951
          %v958 = vmul.f32 %v939, %v947
          %v959 = vmul.f32 %v940, %v951
          %v960 = vmul.f32 %v941, %v947
          %v961 = vmul.f32 %v942, %v951
          %v963 = vlaneseq
          %v964 = vshrl.u32 %v963, 7
          %v965 = vsub.s32 0, %v964
          %v966 = vrot.slane %v877, %v965
          %v967 = vlaneseq
          %v968 = vshrl.u32 %v967, 7
          %v969 = vsub.s32 1, %v968
          %v970 = vrot.slane %v877, %v969
          %v973 = vadd.f32 %v954, %v966
          %v974 = vadd.f32 %v955, %v970
          %v975 = vadd.f32 %v956, %v966
          %v976 = vadd.f32 %v957, %v970
          %v977 = vadd.f32 %v958, %v966
          %v978 = vadd.f32 %v959, %v970
          %v979 = vadd.f32 %v960, %v966
          %v980 = vadd.f32 %v961, %v970
          %981 = vst [vmem:[#allocation2] sm:$0xff] %v973
          %982 = vst [vmem:[#allocation2 + $0x8] sm:$0xff] %v974
          %983 = vst [vmem:[#allocation2 + $0x10] sm:$0xff] %v975
          %984 = vst [vmem:[#allocation2 + $0x18] sm:$0xff] %v976
          %985 = vst [vmem:[#allocation2 + $0x20] sm:$0xff] %v977
          %986 = vst [vmem:[#allocation2 + $0x28] sm:$0xff] %v978
          %987 = vst [vmem:[#allocation2 + $0x30] sm:$0xff] %v979
          %988 = vst [vmem:[#allocation2 + $0x38] sm:$0xff] %v980
        $region124: #{seq2seq_forward.2} parent=79 // pred_fallthru
          _
        %v989 = vld [vmem:[#allocation2] sm:$0xff]
        %v990 = vld [vmem:[#allocation2 + $0x8] sm:$0xff]
        %v991 = vld [vmem:[#allocation2 + $0x10] sm:$0xff]
        %v992 = vld [vmem:[#allocation2 + $0x18] sm:$0xff]
        %v993 = vld [vmem:[#allocation2 + $0x20] sm:$0xff]
        %v994 = vld [vmem:[#allocation2 + $0x28] sm:$0xff]
        %v995 = vld [vmem:[#allocation2 + $0x30] sm:$0xff]
        %v996 = vld [vmem:[#allocation2 + $0x38] sm:$0xff]
        %v997 = vpack.c.bf16 %v991, %v989
        %v998 = vpack.c.bf16 %v992, %v990
        %v999 = vpack.c.bf16 %v995, %v993
        %v1000 = vpack.c.bf16 %v996, %v994
        %v1001 = vld [vmem:[%s683] sm:$0xff]
        %v1002 = vld [vmem:[%s683 + $0x8] sm:$0xff]
        %v1003 = vld [vmem:[%s683 + $0x10] sm:$0xff]
        %v1004 = vld [vmem:[%s683 + $0x18] sm:$0xff]
        %v1005 = vld [vmem:[%s683 + $0x20] sm:$0xff]
        %v1006 = vld [vmem:[%s683 + $0x28] sm:$0xff]
        %v1007 = vld [vmem:[%s683 + $0x30] sm:$0xff]
        %v1008 = vld [vmem:[%s683 + $0x38] sm:$0xff]
        %v1009 = vld [vmem:[%s683 + $0x40] sm:$0xff]
        %v1010 = vld [vmem:[%s683 + $0x48] sm:$0xff]
        %v1011 = vld [vmem:[%s683 + $0x50] sm:$0xff]
        %v1012 = vld [vmem:[%s683 + $0x58] sm:$0xff]
        %v1013 = vld [vmem:[%s683 + $0x60] sm:$0xff]
        %v1014 = vld [vmem:[%s683 + $0x68] sm:$0xff]
        %v1015 = vld [vmem:[%s683 + $0x70] sm:$0xff]
        %v1016 = vld [vmem:[%s683 + $0x78] sm:$0xff]
        %v1017 = vld [vmem:[%s683 + $0x80] sm:$0xff]
        %v1018 = vld [vmem:[%s683 + $0x88] sm:$0xff]
        %v1019 = vld [vmem:[%s683 + $0x90] sm:$0xff]
        %v1020 = vld [vmem:[%s683 + $0x98] sm:$0xff]
        %v1021 = vld [vmem:[%s683 + $0xa0] sm:$0xff]
        %v1022 = vld [vmem:[%s683 + $0xa8] sm:$0xff]
        %v1023 = vld [vmem:[%s683 + $0xb0] sm:$0xff]
        %v1024 = vld [vmem:[%s683 + $0xb8] sm:$0xff]
        %v1025 = vld [vmem:[%s683 + $0xc0] sm:$0xff]
        %v1026 = vld [vmem:[%s683 + $0xc8] sm:$0xff]
        %v1027 = vld [vmem:[%s683 + $0xd0] sm:$0xff]
        %v1028 = vld [vmem:[%s683 + $0xd8] sm:$0xff]
        %v1029 = vld [vmem:[%s683 + $0xe0] sm:$0xff]
        %v1030 = vld [vmem:[%s683 + $0xe8] sm:$0xff]
        %v1031 = vld [vmem:[%s683 + $0xf0] sm:$0xff]
        %v1032 = vld [vmem:[%s683 + $0xf8] sm:$0xff]
        %v1033 = vld [vmem:[%s683 + $0x100] sm:$0xff]
        %v1034 = vld [vmem:[%s683 + $0x108] sm:$0xff]
        %v1035 = vld [vmem:[%s683 + $0x110] sm:$0xff]
        %v1036 = vld [vmem:[%s683 + $0x118] sm:$0xff]
        %v1037 = vld [vmem:[%s683 + $0x120] sm:$0xff]
        %v1038 = vld [vmem:[%s683 + $0x128] sm:$0xff]
        %v1039 = vld [vmem:[%s683 + $0x130] sm:$0xff]
        %v1040 = vld [vmem:[%s683 + $0x138] sm:$0xff]
        %v1041 = vld [vmem:[%s683 + $0x140] sm:$0xff]
        %v1042 = vld [vmem:[%s683 + $0x148] sm:$0xff]
        %v1043 = vld [vmem:[%s683 + $0x150] sm:$0xff]
        %v1044 = vld [vmem:[%s683 + $0x158] sm:$0xff]
        %v1045 = vld [vmem:[%s683 + $0x160] sm:$0xff]
        %v1046 = vld [vmem:[%s683 + $0x168] sm:$0xff]
        %v1047 = vld [vmem:[%s683 + $0x170] sm:$0xff]
        %v1048 = vld [vmem:[%s683 + $0x178] sm:$0xff]
        %v1049 = vld [vmem:[%s683 + $0x180] sm:$0xff]
        %v1050 = vld [vmem:[%s683 + $0x188] sm:$0xff]
        %v1051 = vld [vmem:[%s683 + $0x190] sm:$0xff]
        %v1052 = vld [vmem:[%s683 + $0x198] sm:$0xff]
        %v1053 = vld [vmem:[%s683 + $0x1a0] sm:$0xff]
        %v1054 = vld [vmem:[%s683 + $0x1a8] sm:$0xff]
        %v1055 = vld [vmem:[%s683 + $0x1b0] sm:$0xff]
        %v1056 = vld [vmem:[%s683 + $0x1b8] sm:$0xff]
        %v1057 = vld [vmem:[%s683 + $0x1c0] sm:$0xff]
        %v1058 = vld [vmem:[%s683 + $0x1c8] sm:$0xff]
        %v1059 = vld [vmem:[%s683 + $0x1d0] sm:$0xff]
        %v1060 = vld [vmem:[%s683 + $0x1d8] sm:$0xff]
        %v1061 = vld [vmem:[%s683 + $0x1e0] sm:$0xff]
        %v1062 = vld [vmem:[%s683 + $0x1e8] sm:$0xff]
        %v1063 = vld [vmem:[%s683 + $0x1f0] sm:$0xff]
        %v1064 = vld [vmem:[%s683 + $0x1f8] sm:$0xff]
        %v1065 = vld [vmem:[%s683 + $0x200] sm:$0xff]
        %v1066 = vld [vmem:[%s683 + $0x208] sm:$0xff]
        %v1067 = vld [vmem:[%s683 + $0x210] sm:$0xff]
        %v1068 = vld [vmem:[%s683 + $0x218] sm:$0xff]
        %v1069 = vld [vmem:[%s683 + $0x220] sm:$0xff]
        %v1070 = vld [vmem:[%s683 + $0x228] sm:$0xff]
        %v1071 = vld [vmem:[%s683 + $0x230] sm:$0xff]
        %v1072 = vld [vmem:[%s683 + $0x238] sm:$0xff]
        %v1073 = vld [vmem:[%s683 + $0x240] sm:$0xff]
        %v1074 = vld [vmem:[%s683 + $0x248] sm:$0xff]
        %v1075 = vld [vmem:[%s683 + $0x250] sm:$0xff]
        %v1076 = vld [vmem:[%s683 + $0x258] sm:$0xff]
        %v1077 = vld [vmem:[%s683 + $0x260] sm:$0xff]
        %v1078 = vld [vmem:[%s683 + $0x268] sm:$0xff]
        %v1079 = vld [vmem:[%s683 + $0x270] sm:$0xff]
        %v1080 = vld [vmem:[%s683 + $0x278] sm:$0xff]
        %v1081 = vld [vmem:[%s683 + $0x280] sm:$0xff]
        %v1082 = vld [vmem:[%s683 + $0x288] sm:$0xff]
        %v1083 = vld [vmem:[%s683 + $0x290] sm:$0xff]
        %v1084 = vld [vmem:[%s683 + $0x298] sm:$0xff]
        %v1085 = vld [vmem:[%s683 + $0x2a0] sm:$0xff]
        %v1086 = vld [vmem:[%s683 + $0x2a8] sm:$0xff]
        %v1087 = vld [vmem:[%s683 + $0x2b0] sm:$0xff]
        %v1088 = vld [vmem:[%s683 + $0x2b8] sm:$0xff]
        %v1089 = vld [vmem:[%s683 + $0x2c0] sm:$0xff]
        %v1090 = vld [vmem:[%s683 + $0x2c8] sm:$0xff]
        %v1091 = vld [vmem:[%s683 + $0x2d0] sm:$0xff]
        %v1092 = vld [vmem:[%s683 + $0x2d8] sm:$0xff]
        %v1093 = vld [vmem:[%s683 + $0x2e0] sm:$0xff]
        %v1094 = vld [vmem:[%s683 + $0x2e8] sm:$0xff]
        %v1095 = vld [vmem:[%s683 + $0x2f0] sm:$0xff]
        %v1096 = vld [vmem:[%s683 + $0x2f8] sm:$0xff]
        %v1097 = vld [vmem:[%s853] sm:$0x3f]
        %v1099 = vlaneseq
        %v1100 = vshrl.u32 %v1099, 7
        %v1101 = vsub.s32 0, %v1100
        %v1102 = vrot.slane %v1097, %v1101
        %v1103 = vlaneseq
        %v1104 = vshrl.u32 %v1103, 7
        %v1105 = vsub.s32 1, %v1104
        %v1106 = vrot.slane %v1097, %v1105
        %v1107 = vlaneseq
        %v1108 = vshrl.u32 %v1107, 7
        %v1109 = vsub.s32 2, %v1108
        %v1110 = vrot.slane %v1097, %v1109
        %v1111 = vlaneseq
        %v1112 = vshrl.u32 %v1111, 7
        %v1113 = vsub.s32 3, %v1112
        %v1114 = vrot.slane %v1097, %v1113
        %v1115 = vlaneseq
        %v1116 = vshrl.u32 %v1115, 7
        %v1117 = vsub.s32 4, %v1116
        %v1118 = vrot.slane %v1097, %v1117
        %v1119 = vlaneseq
        %v1120 = vshrl.u32 %v1119, 7
        %v1121 = vsub.s32 5, %v1120
        %v1122 = vrot.slane %v1097, %v1121
        %v1225 = vunpack.c.l.b16 %v1001
        %v1226 = vunpack.c.h.b16 %v1001
        %v1227 = vunpack.c.l.b16 %v1002
        %v1228 = vunpack.c.h.b16 %v1002
        %v1229 = vunpack.c.l.b16 %v1003
        %v1230 = vunpack.c.h.b16 %v1003
        %v1231 = vunpack.c.l.b16 %v1004
        %v1232 = vunpack.c.h.b16 %v1004
        %v1233 = vunpack.c.l.b16 %v1005
        %v1234 = vunpack.c.h.b16 %v1005
        %v1235 = vunpack.c.l.b16 %v1006
        %v1236 = vunpack.c.h.b16 %v1006
        %v1237 = vunpack.c.l.b16 %v1007
        %v1238 = vunpack.c.h.b16 %v1007
        %v1239 = vunpack.c.l.b16 %v1008
        %v1240 = vunpack.c.h.b16 %v1008
        %v1241 = vunpack.c.l.b16 %v1009
        %v1242 = vunpack.c.h.b16 %v1009
        %v1243 = vunpack.c.l.b16 %v1010
        %v1244 = vunpack.c.h.b16 %v1010
        %v1245 = vunpack.c.l.b16 %v1011
        %v1246 = vunpack.c.h.b16 %v1011
        %v1247 = vunpack.c.l.b16 %v1012
        %v1248 = vunpack.c.h.b16 %v1012
        %v1249 = vunpack.c.l.b16 %v1013
        %v1250 = vunpack.c.h.b16 %v1013
        %v1251 = vunpack.c.l.b16 %v1014
        %v1252 = vunpack.c.h.b16 %v1014
        %v1253 = vunpack.c.l.b16 %v1015
        %v1254 = vunpack.c.h.b16 %v1015
        %v1255 = vunpack.c.l.b16 %v1016
        %v1256 = vunpack.c.h.b16 %v1016
        %v1257 = vunpack.c.l.b16 %v1017
        %v1258 = vunpack.c.h.b16 %v1017
        %v1259 = vunpack.c.l.b16 %v1018
        %v1260 = vunpack.c.h.b16 %v1018
        %v1261 = vunpack.c.l.b16 %v1019
        %v1262 = vunpack.c.h.b16 %v1019
        %v1263 = vunpack.c.l.b16 %v1020
        %v1264 = vunpack.c.h.b16 %v1020
        %v1265 = vunpack.c.l.b16 %v1021
        %v1266 = vunpack.c.h.b16 %v1021
        %v1267 = vunpack.c.l.b16 %v1022
        %v1268 = vunpack.c.h.b16 %v1022
        %v1269 = vunpack.c.l.b16 %v1023
        %v1270 = vunpack.c.h.b16 %v1023
        %v1271 = vunpack.c.l.b16 %v1024
        %v1272 = vunpack.c.h.b16 %v1024
        %v1273 = vunpack.c.l.b16 %v1025
        %v1274 = vunpack.c.h.b16 %v1025
        %v1275 = vunpack.c.l.b16 %v1026
        %v1276 = vunpack.c.h.b16 %v1026
        %v1277 = vunpack.c.l.b16 %v1027
        %v1278 = vunpack.c.h.b16 %v1027
        %v1279 = vunpack.c.l.b16 %v1028
        %v1280 = vunpack.c.h.b16 %v1028
        %v1281 = vunpack.c.l.b16 %v1029
        %v1282 = vunpack.c.h.b16 %v1029
        %v1283 = vunpack.c.l.b16 %v1030
        %v1284 = vunpack.c.h.b16 %v1030
        %v1285 = vunpack.c.l.b16 %v1031
        %v1286 = vunpack.c.h.b16 %v1031
        %v1287 = vunpack.c.l.b16 %v1032
        %v1288 = vunpack.c.h.b16 %v1032
        %v1289 = vunpack.c.l.b16 %v1033
        %v1290 = vunpack.c.h.b16 %v1033
        %v1291 = vunpack.c.l.b16 %v1034
        %v1292 = vunpack.c.h.b16 %v1034
        %v1293 = vunpack.c.l.b16 %v1035
        %v1294 = vunpack.c.h.b16 %v1035
        %v1295 = vunpack.c.l.b16 %v1036
        %v1296 = vunpack.c.h.b16 %v1036
        %v1297 = vunpack.c.l.b16 %v1037
        %v1298 = vunpack.c.h.b16 %v1037
        %v1299 = vunpack.c.l.b16 %v1038
        %v1300 = vunpack.c.h.b16 %v1038
        %v1301 = vunpack.c.l.b16 %v1039
        %v1302 = vunpack.c.h.b16 %v1039
        %v1303 = vunpack.c.l.b16 %v1040
        %v1304 = vunpack.c.h.b16 %v1040
        %v1305 = vunpack.c.l.b16 %v1041
        %v1306 = vunpack.c.h.b16 %v1041
        %v1307 = vunpack.c.l.b16 %v1042
        %v1308 = vunpack.c.h.b16 %v1042
        %v1309 = vunpack.c.l.b16 %v1043
        %v1310 = vunpack.c.h.b16 %v1043
        %v1311 = vunpack.c.l.b16 %v1044
        %v1312 = vunpack.c.h.b16 %v1044
        %v1313 = vunpack.c.l.b16 %v1045
        %v1314 = vunpack.c.h.b16 %v1045
        %v1315 = vunpack.c.l.b16 %v1046
        %v1316 = vunpack.c.h.b16 %v1046
        %v1317 = vunpack.c.l.b16 %v1047
        %v1318 = vunpack.c.h.b16 %v1047
        %v1319 = vunpack.c.l.b16 %v1048
        %v1320 = vunpack.c.h.b16 %v1048
        %v1321 = vunpack.c.l.b16 %v1049
        %v1322 = vunpack.c.h.b16 %v1049
        %v1323 = vunpack.c.l.b16 %v1050
        %v1324 = vunpack.c.h.b16 %v1050
        %v1325 = vunpack.c.l.b16 %v1051
        %v1326 = vunpack.c.h.b16 %v1051
        %v1327 = vunpack.c.l.b16 %v1052
        %v1328 = vunpack.c.h.b16 %v1052
        %v1329 = vunpack.c.l.b16 %v1053
        %v1330 = vunpack.c.h.b16 %v1053
        %v1331 = vunpack.c.l.b16 %v1054
        %v1332 = vunpack.c.h.b16 %v1054
        %v1333 = vunpack.c.l.b16 %v1055
        %v1334 = vunpack.c.h.b16 %v1055
        %v1335 = vunpack.c.l.b16 %v1056
        %v1336 = vunpack.c.h.b16 %v1056
        %v1337 = vunpack.c.l.b16 %v1057
        %v1338 = vunpack.c.h.b16 %v1057
        %v1339 = vunpack.c.l.b16 %v1058
        %v1340 = vunpack.c.h.b16 %v1058
        %v1341 = vunpack.c.l.b16 %v1059
        %v1342 = vunpack.c.h.b16 %v1059
        %v1343 = vunpack.c.l.b16 %v1060
        %v1344 = vunpack.c.h.b16 %v1060
        %v1345 = vunpack.c.l.b16 %v1061
        %v1346 = vunpack.c.h.b16 %v1061
        %v1347 = vunpack.c.l.b16 %v1062
        %v1348 = vunpack.c.h.b16 %v1062
        %v1349 = vunpack.c.l.b16 %v1063
        %v1350 = vunpack.c.h.b16 %v1063
        %v1351 = vunpack.c.l.b16 %v1064
        %v1352 = vunpack.c.h.b16 %v1064
        %v1353 = vunpack.c.l.b16 %v1065
        %v1354 = vunpack.c.h.b16 %v1065
        %v1355 = vunpack.c.l.b16 %v1066
        %v1356 = vunpack.c.h.b16 %v1066
        %v1357 = vunpack.c.l.b16 %v1067
        %v1358 = vunpack.c.h.b16 %v1067
        %v1359 = vunpack.c.l.b16 %v1068
        %v1360 = vunpack.c.h.b16 %v1068
        %v1361 = vunpack.c.l.b16 %v1069
        %v1362 = vunpack.c.h.b16 %v1069
        %v1363 = vunpack.c.l.b16 %v1070
        %v1364 = vunpack.c.h.b16 %v1070
        %v1365 = vunpack.c.l.b16 %v1071
        %v1366 = vunpack.c.h.b16 %v1071
        %v1367 = vunpack.c.l.b16 %v1072
        %v1368 = vunpack.c.h.b16 %v1072
        %v1369 = vunpack.c.l.b16 %v1073
        %v1370 = vunpack.c.h.b16 %v1073
        %v1371 = vunpack.c.l.b16 %v1074
        %v1372 = vunpack.c.h.b16 %v1074
        %v1373 = vunpack.c.l.b16 %v1075
        %v1374 = vunpack.c.h.b16 %v1075
        %v1375 = vunpack.c.l.b16 %v1076
        %v1376 = vunpack.c.h.b16 %v1076
        %v1377 = vunpack.c.l.b16 %v1077
        %v1378 = vunpack.c.h.b16 %v1077
        %v1379 = vunpack.c.l.b16 %v1078
        %v1380 = vunpack.c.h.b16 %v1078
        %v1381 = vunpack.c.l.b16 %v1079
        %v1382 = vunpack.c.h.b16 %v1079
        %v1383 = vunpack.c.l.b16 %v1080
        %v1384 = vunpack.c.h.b16 %v1080
        %v1385 = vunpack.c.l.b16 %v1081
        %v1386 = vunpack.c.h.b16 %v1081
        %v1387 = vunpack.c.l.b16 %v1082
        %v1388 = vunpack.c.h.b16 %v1082
        %v1389 = vunpack.c.l.b16 %v1083
        %v1390 = vunpack.c.h.b16 %v1083
        %v1391 = vunpack.c.l.b16 %v1084
        %v1392 = vunpack.c.h.b16 %v1084
        %v1393 = vunpack.c.l.b16 %v1085
        %v1394 = vunpack.c.h.b16 %v1085
        %v1395 = vunpack.c.l.b16 %v1086
        %v1396 = vunpack.c.h.b16 %v1086
        %v1397 = vunpack.c.l.b16 %v1087
        %v1398 = vunpack.c.h.b16 %v1087
        %v1399 = vunpack.c.l.b16 %v1088
        %v1400 = vunpack.c.h.b16 %v1088
        %v1401 = vunpack.c.l.b16 %v1089
        %v1402 = vunpack.c.h.b16 %v1089
        %v1403 = vunpack.c.l.b16 %v1090
        %v1404 = vunpack.c.h.b16 %v1090
        %v1405 = vunpack.c.l.b16 %v1091
        %v1406 = vunpack.c.h.b16 %v1091
        %v1407 = vunpack.c.l.b16 %v1092
        %v1408 = vunpack.c.h.b16 %v1092
        %v1409 = vunpack.c.l.b16 %v1093
        %v1410 = vunpack.c.h.b16 %v1093
        %v1411 = vunpack.c.l.b16 %v1094
        %v1412 = vunpack.c.h.b16 %v1094
        %v1413 = vunpack.c.l.b16 %v1095
        %v1414 = vunpack.c.h.b16 %v1095
        %v1415 = vunpack.c.l.b16 %v1096
        %v1416 = vunpack.c.h.b16 %v1096
        %v1417 = vpack.c.b16 %v1231, %v1225
        %v1418 = vpack.c.b16 %v1232, %v1226
        %v1419 = vpack.c.b16 %v1233, %v1227
        %v1420 = vpack.c.b16 %v1234, %v1228
        %v1421 = vpack.c.b16 %v1235, %v1229
        %v1422 = vpack.c.b16 %v1236, %v1230
        %v1423 = vpack.c.b16 %v1243, %v1237
        %v1424 = vpack.c.b16 %v1244, %v1238
        %v1425 = vpack.c.b16 %v1245, %v1239
        %v1426 = vpack.c.b16 %v1246, %v1240
        %v1427 = vpack.c.b16 %v1247, %v1241
        %v1428 = vpack.c.b16 %v1248, %v1242
        %v1429 = vpack.c.b16 %v1255, %v1249
        %v1430 = vpack.c.b16 %v1256, %v1250
        %v1431 = vpack.c.b16 %v1257, %v1251
        %v1432 = vpack.c.b16 %v1258, %v1252
        %v1433 = vpack.c.b16 %v1259, %v1253
        %v1434 = vpack.c.b16 %v1260, %v1254
        %v1435 = vpack.c.b16 %v1267, %v1261
        %v1436 = vpack.c.b16 %v1268, %v1262
        %v1437 = vpack.c.b16 %v1269, %v1263
        %v1438 = vpack.c.b16 %v1270, %v1264
        %v1439 = vpack.c.b16 %v1271, %v1265
        %v1440 = vpack.c.b16 %v1272, %v1266
        %v1441 = vpack.c.b16 %v1279, %v1273
        %v1442 = vpack.c.b16 %v1280, %v1274
        %v1443 = vpack.c.b16 %v1281, %v1275
        %v1444 = vpack.c.b16 %v1282, %v1276
        %v1445 = vpack.c.b16 %v1283, %v1277
        %v1446 = vpack.c.b16 %v1284, %v1278
        %v1447 = vpack.c.b16 %v1291, %v1285
        %v1448 = vpack.c.b16 %v1292, %v1286
        %v1449 = vpack.c.b16 %v1293, %v1287
        %v1450 = vpack.c.b16 %v1294, %v1288
        %v1451 = vpack.c.b16 %v1295, %v1289
        %v1452 = vpack.c.b16 %v1296, %v1290
        %v1453 = vpack.c.b16 %v1303, %v1297
        %v1454 = vpack.c.b16 %v1304, %v1298
        %v1455 = vpack.c.b16 %v1305, %v1299
        %v1456 = vpack.c.b16 %v1306, %v1300
        %v1457 = vpack.c.b16 %v1307, %v1301
        %v1458 = vpack.c.b16 %v1308, %v1302
        %v1459 = vpack.c.b16 %v1315, %v1309
        %v1460 = vpack.c.b16 %v1316, %v1310
        %v1461 = vpack.c.b16 %v1317, %v1311
        %v1462 = vpack.c.b16 %v1318, %v1312
        %v1463 = vpack.c.b16 %v1319, %v1313
        %v1464 = vpack.c.b16 %v1320, %v1314
        %v1465 = vpack.c.b16 %v1327, %v1321
        %v1466 = vpack.c.b16 %v1328, %v1322
        %v1467 = vpack.c.b16 %v1329, %v1323
        %v1468 = vpack.c.b16 %v1330, %v1324
        %v1469 = vpack.c.b16 %v1331, %v1325
        %v1470 = vpack.c.b16 %v1332, %v1326
        %v1471 = vpack.c.b16 %v1339, %v1333
        %v1472 = vpack.c.b16 %v1340, %v1334
        %v1473 = vpack.c.b16 %v1341, %v1335
        %v1474 = vpack.c.b16 %v1342, %v1336
        %v1475 = vpack.c.b16 %v1343, %v1337
        %v1476 = vpack.c.b16 %v1344, %v1338
        %v1477 = vpack.c.b16 %v1351, %v1345
        %v1478 = vpack.c.b16 %v1352, %v1346
        %v1479 = vpack.c.b16 %v1353, %v1347
        %v1480 = vpack.c.b16 %v1354, %v1348
        %v1481 = vpack.c.b16 %v1355, %v1349
        %v1482 = vpack.c.b16 %v1356, %v1350
        %v1483 = vpack.c.b16 %v1363, %v1357
        %v1484 = vpack.c.b16 %v1364, %v1358
        %v1485 = vpack.c.b16 %v1365, %v1359
        %v1486 = vpack.c.b16 %v1366, %v1360
        %v1487 = vpack.c.b16 %v1367, %v1361
        %v1488 = vpack.c.b16 %v1368, %v1362
        %v1489 = vpack.c.b16 %v1375, %v1369
        %v1490 = vpack.c.b16 %v1376, %v1370
        %v1491 = vpack.c.b16 %v1377, %v1371
        %v1492 = vpack.c.b16 %v1378, %v1372
        %v1493 = vpack.c.b16 %v1379, %v1373
        %v1494 = vpack.c.b16 %v1380, %v1374
        %v1495 = vpack.c.b16 %v1387, %v1381
        %v1496 = vpack.c.b16 %v1388, %v1382
        %v1497 = vpack.c.b16 %v1389, %v1383
        %v1498 = vpack.c.b16 %v1390, %v1384
        %v1499 = vpack.c.b16 %v1391, %v1385
        %v1500 = vpack.c.b16 %v1392, %v1386
        %v1501 = vpack.c.b16 %v1399, %v1393
        %v1502 = vpack.c.b16 %v1400, %v1394
        %v1503 = vpack.c.b16 %v1401, %v1395
        %v1504 = vpack.c.b16 %v1402, %v1396
        %v1505 = vpack.c.b16 %v1403, %v1397
        %v1506 = vpack.c.b16 %v1404, %v1398
        %v1507 = vpack.c.b16 %v1411, %v1405
        %v1508 = vpack.c.b16 %v1412, %v1406
        %v1509 = vpack.c.b16 %v1413, %v1407
        %v1510 = vpack.c.b16 %v1414, %v1408
        %v1511 = vpack.c.b16 %v1415, %v1409
        %v1512 = vpack.c.b16 %v1416, %v1410
        %1609 = vmatprep.subr.bf16.mxu0 %v1460
        %1610 = vmatpush1.bf16.msra.mxu0 %v1459
        %1611 = vmatprep.subr.bf16.mxu0 %v1454
        %1612 = vmatpush1.bf16.msra.mxu0 %v1453
        %1613 = vmatprep.subr.bf16.mxu0 %v1448
        %1614 = vmatpush1.bf16.msra.mxu0 %v1447
        %1615 = vmatprep.subr.bf16.mxu0 %v1442
        %1616 = vmatpush1.bf16.msra.mxu0 %v1441
        %1617 = vmatprep.subr.bf16.mxu0 %v1436
        %1618 = vmatpush1.bf16.msra.mxu0 %v1435
        %1619 = vmatprep.subr.bf16.mxu0 %v1430
        %1620 = vmatpush1.bf16.msra.mxu0 %v1429
        %1621 = vmatprep.subr.bf16.mxu0 %v1424
        %1622 = vmatpush1.bf16.msra.mxu0 %v1423
        %1623 = vmatprep.subr.bf16.mxu0 %v1418
        %1624 = vmatpush1.bf16.msra.mxu0 %v1417
        %1625 = vmatprep.subr.bf16.mxu0 %v1508
        %1626 = vmatpush2.bf16.msra.mxu0 %v1507
        %1627 = vmatprep.subr.bf16.mxu0 %v1502
        %1628 = vmatpush2.bf16.msra.mxu0 %v1501
        %1629 = vmatprep.subr.bf16.mxu0 %v1496
        %1630 = vmatpush2.bf16.msra.mxu0 %v1495
        %1631 = vmatprep.subr.bf16.mxu0 %v1490
        %1632 = vmatpush2.bf16.msra.mxu0 %v1489
        %1633 = vmatprep.subr.bf16.mxu0 %v1484
        %1634 = vmatpush2.bf16.msra.mxu0 %v1483
        %1635 = vmatprep.subr.bf16.mxu0 %v1478
        %1636 = vmatpush2.bf16.msra.mxu0 %v1477
        %1637 = vmatprep.subr.bf16.mxu0 %v1472
        %1638 = vmatpush2.bf16.msra.mxu0 %v1471
        %1639 = vmatprep.subr.bf16.mxu0 %v1466
        %1640 = vmatpush2.bf16.msra.mxu0 %v1465
        %1641 = vmatprep.mubr.bf16.mxu0 %v998
        %1642 = vmatmul.mubr.bf16.gmra.mxu0 %v997
        %v1643 = vpop.f32.mrf.mxu0
        %v1644 = vadd.f32 %v1102, %v1643
        %v1645 = vpop.f32.mrf.mxu0
        %v1646 = vadd.f32 %v1106, %v1645
        %v1647 = vpop.f32.mrf.mxu0
        %v1648 = vadd.f32 %v1102, %v1647
        %v1649 = vpop.f32.mrf.mxu0
        %v1650 = vadd.f32 %v1106, %v1649
        %1651 = vmatprep.mubr.bf16.mxu0 %v1000
        %1652 = vmatmul.mubr.bf16.gmra.mxu0 %v999
        %v1653 = vpop.f32.mrf.mxu0
        %v1654 = vadd.f32 %v1102, %v1653
        %v1655 = vpop.f32.mrf.mxu0
        %v1656 = vadd.f32 %v1106, %v1655
        %v1657 = vpop.f32.mrf.mxu0
        %v1658 = vadd.f32 %v1102, %v1657
        %v1659 = vpop.f32.mrf.mxu0
        %v1660 = vadd.f32 %v1106, %v1659
        %1661 = vdwg.mxu0
        %1662 = vmatprep.subr.bf16.mxu0 %v1462
        %1663 = vmatpush1.bf16.msra.mxu0 %v1461
        %1664 = vmatprep.subr.bf16.mxu0 %v1456
        %1665 = vmatpush1.bf16.msra.mxu0 %v1455
        %1666 = vmatprep.subr.bf16.mxu0 %v1450
        %1667 = vmatpush1.bf16.msra.mxu0 %v1449
        %1668 = vmatprep.subr.bf16.mxu0 %v1444
        %1669 = vmatpush1.bf16.msra.mxu0 %v1443
        %1670 = vmatprep.subr.bf16.mxu0 %v1438
        %1671 = vmatpush1.bf16.msra.mxu0 %v1437
        %1672 = vmatprep.subr.bf16.mxu0 %v1432
        %1673 = vmatpush1.bf16.msra.mxu0 %v1431
        %1674 = vmatprep.subr.bf16.mxu0 %v1426
        %1675 = vmatpush1.bf16.msra.mxu0 %v1425
        %1676 = vmatprep.subr.bf16.mxu0 %v1420
        %1677 = vmatpush1.bf16.msra.mxu0 %v1419
        %1678 = vmatprep.subr.bf16.mxu0 %v1510
        %1679 = vmatpush2.bf16.msra.mxu0 %v1509
        %1680 = vmatprep.subr.bf16.mxu0 %v1504
        %1681 = vmatpush2.bf16.msra.mxu0 %v1503
        %1682 = vmatprep.subr.bf16.mxu0 %v1498
        %1683 = vmatpush2.bf16.msra.mxu0 %v1497
        %1684 = vmatprep.subr.bf16.mxu0 %v1492
        %1685 = vmatpush2.bf16.msra.mxu0 %v1491
        %1686 = vmatprep.subr.bf16.mxu0 %v1486
        %1687 = vmatpush2.bf16.msra.mxu0 %v1485
        %1688 = vmatprep.subr.bf16.mxu0 %v1480
        %1689 = vmatpush2.bf16.msra.mxu0 %v1479
        %1690 = vmatprep.subr.bf16.mxu0 %v1474
        %1691 = vmatpush2.bf16.msra.mxu0 %v1473
        %1692 = vmatprep.subr.bf16.mxu0 %v1468
        %1693 = vmatpush2.bf16.msra.mxu0 %v1467
        %1694 = vmatprep.mubr.bf16.mxu0 %v998
        %1695 = vmatmul.mubr.bf16.gmra.mxu0 %v997
        %v1696 = vpop.f32.mrf.mxu0
        %v1697 = vadd.f32 %v1110, %v1696
        %v1698 = vpop.f32.mrf.mxu0
        %v1699 = vadd.f32 %v1114, %v1698
        %v1700 = vpop.f32.mrf.mxu0
        %v1701 = vadd.f32 %v1110, %v1700
        %v1702 = vpop.f32.mrf.mxu0
        %v1703 = vadd.f32 %v1114, %v1702
        %1704 = vmatprep.mubr.bf16.mxu0 %v1000
        %1705 = vmatmul.mubr.bf16.gmra.mxu0 %v999
        %v1706 = vpop.f32.mrf.mxu0
        %v1707 = vadd.f32 %v1110, %v1706
        %v1708 = vpop.f32.mrf.mxu0
        %v1709 = vadd.f32 %v1114, %v1708
        %v1710 = vpop.f32.mrf.mxu0
        %v1711 = vadd.f32 %v1110, %v1710
        %v1712 = vpop.f32.mrf.mxu0
        %v1713 = vadd.f32 %v1114, %v1712
        %1714 = vdwg.mxu0
        %1715 = vmatprep.subr.bf16.mxu0 %v1464
        %1716 = vmatpush1.bf16.msra.mxu0 %v1463
        %1717 = vmatprep.subr.bf16.mxu0 %v1458
        %1718 = vmatpush1.bf16.msra.mxu0 %v1457
        %1719 = vmatprep.subr.bf16.mxu0 %v1452
        %1720 = vmatpush1.bf16.msra.mxu0 %v1451
        %1721 = vmatprep.subr.bf16.mxu0 %v1446
        %1722 = vmatpush1.bf16.msra.mxu0 %v1445
        %1723 = vmatprep.subr.bf16.mxu0 %v1440
        %1724 = vmatpush1.bf16.msra.mxu0 %v1439
        %1725 = vmatprep.subr.bf16.mxu0 %v1434
        %1726 = vmatpush1.bf16.msra.mxu0 %v1433
        %1727 = vmatprep.subr.bf16.mxu0 %v1428
        %1728 = vmatpush1.bf16.msra.mxu0 %v1427
        %1729 = vmatprep.subr.bf16.mxu0 %v1422
        %1730 = vmatpush1.bf16.msra.mxu0 %v1421
        %1731 = vmatprep.subr.bf16.mxu0 %v1512
        %1732 = vmatpush2.bf16.msra.mxu0 %v1511
        %1733 = vmatprep.subr.bf16.mxu0 %v1506
        %1734 = vmatpush2.bf16.msra.mxu0 %v1505
        %1735 = vmatprep.subr.bf16.mxu0 %v1500
        %1736 = vmatpush2.bf16.msra.mxu0 %v1499
        %1737 = vmatprep.subr.bf16.mxu0 %v1494
        %1738 = vmatpush2.bf16.msra.mxu0 %v1493
        %1739 = vmatprep.subr.bf16.mxu0 %v1488
        %1740 = vmatpush2.bf16.msra.mxu0 %v1487
        %1741 = vmatprep.subr.bf16.mxu0 %v1482
        %1742 = vmatpush2.bf16.msra.mxu0 %v1481
        %1743 = vmatprep.subr.bf16.mxu0 %v1476
        %1744 = vmatpush2.bf16.msra.mxu0 %v1475
        %1745 = vmatprep.subr.bf16.mxu0 %v1470
        %1746 = vmatpush2.bf16.msra.mxu0 %v1469
        %1747 = vmatprep.mubr.bf16.mxu0 %v998
        %1748 = vmatmul.mubr.bf16.gmra.mxu0 %v997
        %v1749 = vpop.f32.mrf.mxu0
        %v1750 = vadd.f32 %v1118, %v1749
        %v1751 = vpop.f32.mrf.mxu0
        %v1752 = vadd.f32 %v1122, %v1751
        %v1753 = vpop.f32.mrf.mxu0
        %v1754 = vadd.f32 %v1118, %v1753
        %v1755 = vpop.f32.mrf.mxu0
        %v1756 = vadd.f32 %v1122, %v1755
        %1757 = vmatprep.mubr.bf16.mxu0 %v1000
        %1758 = vmatmul.mubr.bf16.gmra.mxu0 %v999
        %v1759 = vpop.f32.mrf.mxu0
        %v1760 = vadd.f32 %v1118, %v1759
        %v1761 = vpop.f32.mrf.mxu0
        %v1762 = vadd.f32 %v1122, %v1761
        %v1763 = vpop.f32.mrf.mxu0
        %v1764 = vadd.f32 %v1118, %v1763
        %v1765 = vpop.f32.mrf.mxu0
        %v1766 = vadd.f32 %v1122, %v1765
        %1767 = vdwg.mxu0
        %v1768 = vmul.f32 %v1644, 0.125
        %v1769 = vmul.f32 %v1646, 0.125
        %v1770 = vmul.f32 %v1648, 0.125
        %v1771 = vmul.f32 %v1650, 0.125
        %v1772 = vmul.f32 %v1654, 0.125
        %v1773 = vmul.f32 %v1656, 0.125
        %v1774 = vmul.f32 %v1658, 0.125
        %v1775 = vmul.f32 %v1660, 0.125
        %v1776 = vpack.c.bf16 %v1770, %v1768
        %v1777 = vpack.c.bf16 %v1771, %v1769
        %v1778 = vpack.c.bf16 %v1774, %v1772
        %v1779 = vpack.c.bf16 %v1775, %v1773
        %v1780 = vpack.c.bf16 %v1701, %v1697
        %v1781 = vpack.c.bf16 %v1703, %v1699
        %v1782 = vpack.c.bf16 %v1711, %v1707
        %v1783 = vpack.c.bf16 %v1713, %v1709
        %v1784 = vpack.c.bf16 %v1754, %v1750
        %v1785 = vpack.c.bf16 %v1756, %v1752
        %v1786 = vpack.c.bf16 %v1764, %v1760
        %v1787 = vpack.c.bf16 %v1766, %v1762
        %vm1788 = vcmask 523264
        %v1790 = vsel %vm1788, %v1776, 0
        %v1793 = vsel %vm1788, %v1780, 0
        %1795 = vmatprep.subr.bf16.mxu0 0
        %1796 = vmatpush1.bf16.xpose.msra.mxu0 0
        %1797 = vmatprep.subr.bf16.mxu0 0
        %1798 = vmatpush1.bf16.xpose.msra.mxu0 0
        %1799 = vmatprep.subr.bf16.mxu0 0
        %1800 = vmatpush1.bf16.xpose.msra.mxu0 0
        %1801 = vmatprep.subr.bf16.mxu0 0
        %1802 = vmatpush1.bf16.xpose.msra.mxu0 0
        %1803 = vmatprep.subr.bf16.mxu0 0
        %1804 = vmatpush1.bf16.xpose.msra.mxu0 0
        %1805 = vmatprep.subr.bf16.mxu0 0
        %1806 = vmatpush1.bf16.xpose.msra.mxu0 0
        %1807 = vmatprep.subr.bf16.mxu0 0
        %1808 = vmatpush1.bf16.xpose.msra.mxu0 0
        %1809 = vmatprep.subr.bf16.mxu0 0
        %1810 = vmatpush1.bf16.xpose.msra.mxu0 %v1793
        %1811 = vmatprep.subr.bf16.mxu0 0
        %1812 = vmatpush2.bf16.xpose.msra.mxu0 0
        %1813 = vmatprep.subr.bf16.mxu0 0
        %1814 = vmatpush2.bf16.xpose.msra.mxu0 0
        %1815 = vmatprep.subr.bf16.mxu0 0
        %1816 = vmatpush2.bf16.xpose.msra.mxu0 0
        %1817 = vmatprep.subr.bf16.mxu0 0
        %1818 = vmatpush2.bf16.xpose.msra.mxu0 0
        %1819 = vmatprep.subr.bf16.mxu0 0
        %1820 = vmatpush2.bf16.xpose.msra.mxu0 0
        %1821 = vmatprep.subr.bf16.mxu0 0
        %1822 = vmatpush2.bf16.xpose.msra.mxu0 0
        %1823 = vmatprep.subr.bf16.mxu0 0
        %1824 = vmatpush2.bf16.xpose.msra.mxu0 0
        %1825 = vmatprep.subr.bf16.mxu0 0
        %1826 = vmatpush2.bf16.xpose.msra.mxu0 0
        %1827 = vmatprep.mubr.bf16.mxu0 0
        %1828 = vmatmul.mubr.bf16.gmra.mxu0 %v1790
        %v1829 = vpop.f32.mrf.mxu0
        %v1830 = vadd.f32 0.0, %v1829
        %v1831 = vpop.f32.mrf.mxu0
        %v1832 = vpop.f32.mrf.mxu0
        %v1833 = vadd.f32 0.0, %v1832
        %v1834 = vpop.f32.mrf.mxu0
        %1835 = vdwg.mxu0
        %vm1836 = vcmask 130048
        %v1837 = vsel %vm1836, %v1830, -inf
        %1838 = vmax.xlane.f32.xlu0 %v1837
        %v1839 = vpop.xlane.xlu0 %1838
        %v1840 = vsel %vm1836, %v1833, -inf
        %1841 = vmax.xlane.f32.xlu0 %v1840
        %v1842 = vpop.xlane.xlu0 %1841
        %v1843 = vsub.f32 %v1830, %v1839
        %v1844 = vsub.f32 %v1833, %v1842
        %v1845 = vmul.f32 %v1843, 1.442695
        %v1846 = vpow.pop %v1845
        %v1847 = vmul.f32 %v1844, 1.442695
        %v1848 = vpow.pop %v1847
        %v1849 = vsel %vm1836, %v1846, 0.0
        %1850 = vadd.xlane.f32.xlu0 %v1849
        %v1851 = vpop.xlane.xlu0 %1850
        %v1852 = vsel %vm1836, %v1848, 0.0
        %1853 = vadd.xlane.f32.xlu0 %v1852
        %v1854 = vpop.xlane.xlu0 %1853
        %v1855 = vrcp.pop %v1851
        %v1856 = vrcp.pop %v1854
        %v1857 = vmul.f32 %v1846, %v1855
        %v1858 = vmul.f32 %v1848, %v1856
        %v1859 = vpack.c.bf16 %v1858, %v1857
        %v1861 = vsel %vm1836, %v1859, 0
        %1863 = vmatprep.subr.bf16.mxu0 0
        %1864 = vmatpush1.bf16.msra.mxu0 0
        %1865 = vmatprep.subr.bf16.mxu0 0
        %1866 = vmatpush1.bf16.msra.mxu0 0
        %1867 = vmatprep.subr.bf16.mxu0 0
        %1868 = vmatpush1.bf16.msra.mxu0 0
        %1869 = vmatprep.subr.bf16.mxu0 0
        %1870 = vmatpush1.bf16.msra.mxu0 0
        %1871 = vmatprep.subr.bf16.mxu0 0
        %1872 = vmatpush1.bf16.msra.mxu0 0
        %1873 = vmatprep.subr.bf16.mxu0 0
        %1874 = vmatpush1.bf16.msra.mxu0 0
        %1875 = vmatprep.subr.bf16.mxu0 0
        %1876 = vmatpush1.bf16.msra.mxu0 0
        %1877 = vmatprep.subr.bf16.mxu0 0
        %1878 = vmatpush1.bf16.msra.mxu0 %v1784
        %1879 = vmatprep.subr.bf16.mxu0 0
        %1880 = vmatpush2.bf16.msra.mxu0 0
        %1881 = vmatprep.subr.bf16.mxu0 0
        %1882 = vmatpush2.bf16.msra.mxu0 0
        %1883 = vmatprep.subr.bf16.mxu0 0
        %1884 = vmatpush2.bf16.msra.mxu0 0
        %1885 = vmatprep.subr.bf16.mxu0 0
        %1886 = vmatpush2.bf16.msra.mxu0 0
        %1887 = vmatprep.subr.bf16.mxu0 0
        %1888 = vmatpush2.bf16.msra.mxu0 0
        %1889 = vmatprep.subr.bf16.mxu0 0
        %1890 = vmatpush2.bf16.msra.mxu0 0
        %1891 = vmatprep.subr.bf16.mxu0 0
        %1892 = vmatpush2.bf16.msra.mxu0 0
        %1893 = vmatprep.subr.bf16.mxu0 0
        %1894 = vmatpush2.bf16.msra.mxu0 0
        %1895 = vmatprep.mubr.bf16.mxu0 0
        %1896 = vmatmul.mubr.bf16.gmra.mxu0 %v1861
        %v1897 = vpop.f32.mrf.mxu0
        %v1898 = vadd.f32 0.0, %v1897
        %v1899 = vpop.f32.mrf.mxu0
        %v1900 = vpop.f32.mrf.mxu0
        %v1901 = vadd.f32 0.0, %v1900
        %v1902 = vpop.f32.mrf.mxu0
        %1903 = vdwg.mxu0
        %1904 = vst.msk [vmem:[#allocation3] sm:$0xff] %vm1788, %v1898
        %1905 = vst.msk [vmem:[#allocation3 + $0x10] sm:$0xff] %vm1788, %v1901
        %1907 = vrot.lane.b32.xlu0 %v1776, 64
        %v1908 = vpop.permute.xlu0 %1907
        %1910 = vrot.lane.b32.xlu0 %v1780, 64
        %v1911 = vpop.permute.xlu0 %1910
        %v1913 = vsel %vm1788, %v1908, 0
        %v1916 = vsel %vm1788, %v1911, 0
        %1918 = vmatprep.subr.bf16.mxu0 0
        %1919 = vmatpush1.bf16.xpose.msra.mxu0 0
        %1920 = vmatprep.subr.bf16.mxu0 0
        %1921 = vmatpush1.bf16.xpose.msra.mxu0 0
        %1922 = vmatprep.subr.bf16.mxu0 0
        %1923 = vmatpush1.bf16.xpose.msra.mxu0 0
        %1924 = vmatprep.subr.bf16.mxu0 0
        %1925 = vmatpush1.bf16.xpose.msra.mxu0 0
        %1926 = vmatprep.subr.bf16.mxu0 0
        %1927 = vmatpush1.bf16.xpose.msra.mxu0 0
        %1928 = vmatprep.subr.bf16.mxu0 0
        %1929 = vmatpush1.bf16.xpose.msra.mxu0 0
        %1930 = vmatprep.subr.bf16.mxu0 0
        %1931 = vmatpush1.bf16.xpose.msra.mxu0 0
        %1932 = vmatprep.subr.bf16.mxu0 0
        %1933 = vmatpush1.bf16.xpose.msra.mxu0 %v1916
        %1934 = vmatprep.subr.bf16.mxu0 0
        %1935 = vmatpush2.bf16.xpose.msra.mxu0 0
        %1936 = vmatprep.subr.bf16.mxu0 0
        %1937 = vmatpush2.bf16.xpose.msra.mxu0 0
        %1938 = vmatprep.subr.bf16.mxu0 0
        %1939 = vmatpush2.bf16.xpose.msra.mxu0 0
        %1940 = vmatprep.subr.bf16.mxu0 0
        %1941 = vmatpush2.bf16.xpose.msra.mxu0 0
        %1942 = vmatprep.subr.bf16.mxu0 0
        %1943 = vmatpush2.bf16.xpose.msra.mxu0 0
        %1944 = vmatprep.subr.bf16.mxu0 0
        %1945 = vmatpush2.bf16.xpose.msra.mxu0 0
        %1946 = vmatprep.subr.bf16.mxu0 0
        %1947 = vmatpush2.bf16.xpose.msra.mxu0 0
        %1948 = vmatprep.subr.bf16.mxu0 0
        %1949 = vmatpush2.bf16.xpose.msra.mxu0 0
        %1950 = vmatprep.mubr.bf16.mxu0 0
        %1951 = vmatmul.mubr.bf16.gmra.mxu0 %v1913
        %v1952 = vpop.f32.mrf.mxu0
        %v1953 = vadd.f32 0.0, %v1952
        %v1954 = vpop.f32.mrf.mxu0
        %v1955 = vpop.f32.mrf.mxu0
        %v1956 = vadd.f32 0.0, %v1955
        %v1957 = vpop.f32.mrf.mxu0
        %1958 = vdwg.mxu0
        %v1959 = vsel %vm1836, %v1953, -inf
        %1960 = vmax.xlane.f32.xlu0 %v1959
        %v1961 = vpop.xlane.xlu0 %1960
        %v1962 = vsel %vm1836, %v1956, -inf
        %1963 = vmax.xlane.f32.xlu0 %v1962
        %v1964 = vpop.xlane.xlu0 %1963
        %v1965 = vsub.f32 %v1953, %v1961
        %v1966 = vsub.f32 %v1956, %v1964
        %v1967 = vmul.f32 %v1965, 1.442695
        %v1968 = vpow.pop %v1967
        %v1969 = vmul.f32 %v1966, 1.442695
        %v1970 = vpow.pop %v1969
        %v1971 = vsel %vm1836, %v1968, 0.0
        %1972 = vadd.xlane.f32.xlu0 %v1971
        %v1973 = vpop.xlane.xlu0 %1972
        %v1974 = vsel %vm1836, %v1970, 0.0
        %1975 = vadd.xlane.f32.xlu0 %v1974
        %v1976 = vpop.xlane.xlu0 %1975
        %v1977 = vrcp.pop %v1973
        %v1978 = vrcp.pop %v1976
        %v1979 = vmul.f32 %v1968, %v1977
        %v1980 = vmul.f32 %v1970, %v1978
        %v1981 = vpack.c.bf16 %v1980, %v1979
        %1983 = vrot.lane.b32.xlu0 %v1784, 64
        %v1984 = vpop.permute.xlu0 %1983
        %v1987 = vsel %vm1836, %v1981, 0
        %1989 = vmatprep.subr.bf16.mxu0 0
        %1990 = vmatpush1.bf16.msra.mxu0 0
        %1991 = vmatprep.subr.bf16.mxu0 0
        %1992 = vmatpush1.bf16.msra.mxu0 0
        %1993 = vmatprep.subr.bf16.mxu0 0
        %1994 = vmatpush1.bf16.msra.mxu0 0
        %1995 = vmatprep.subr.bf16.mxu0 0
        %1996 = vmatpush1.bf16.msra.mxu0 0
        %1997 = vmatprep.subr.bf16.mxu0 0
        %1998 = vmatpush1.bf16.msra.mxu0 0
        %1999 = vmatprep.subr.bf16.mxu0 0
        %2000 = vmatpush1.bf16.msra.mxu0 0
        %2001 = vmatprep.subr.bf16.mxu0 0
        %2002 = vmatpush1.bf16.msra.mxu0 0
        %2003 = vmatprep.subr.bf16.mxu0 0
        %2004 = vmatpush1.bf16.msra.mxu0 %v1984
        %2005 = vmatprep.subr.bf16.mxu0 0
        %2006 = vmatpush2.bf16.msra.mxu0 0
        %2007 = vmatprep.subr.bf16.mxu0 0
        %2008 = vmatpush2.bf16.msra.mxu0 0
        %2009 = vmatprep.subr.bf16.mxu0 0
        %2010 = vmatpush2.bf16.msra.mxu0 0
        %2011 = vmatprep.subr.bf16.mxu0 0
        %2012 = vmatpush2.bf16.msra.mxu0 0
        %2013 = vmatprep.subr.bf16.mxu0 0
        %2014 = vmatpush2.bf16.msra.mxu0 0
        %2015 = vmatprep.subr.bf16.mxu0 0
        %2016 = vmatpush2.bf16.msra.mxu0 0
        %2017 = vmatprep.subr.bf16.mxu0 0
        %2018 = vmatpush2.bf16.msra.mxu0 0
        %2019 = vmatprep.subr.bf16.mxu0 0
        %2020 = vmatpush2.bf16.msra.mxu0 0
        %2021 = vmatprep.mubr.bf16.mxu0 0
        %2022 = vmatmul.mubr.bf16.gmra.mxu0 %v1987
        %v2023 = vpop.f32.mrf.mxu0
        %v2024 = vadd.f32 0.0, %v2023
        %v2025 = vpop.f32.mrf.mxu0
        %v2026 = vpop.f32.mrf.mxu0
        %v2027 = vadd.f32 0.0, %v2026
        %v2028 = vpop.f32.mrf.mxu0
        %2029 = vdwg.mxu0
        %2032 = vrot.lane.b32.xlu0 %v2024, 64
        %v2033 = vpop.permute.xlu0 %2032
        %2034 = vrot.lane.b32.xlu0 %v2027, 64
        %v2035 = vpop.permute.xlu0 %2034
        %vm2038 = vcmask 1048064
        %2039 = vst.msk [vmem:[#allocation3] sm:$0xff] %vm2038, %v2033
        %2040 = vst.msk [vmem:[#allocation3 + $0x10] sm:$0xff] %vm2038, %v2035
        %v2042 = vsel %vm1788, %v1777, 0
        %v2045 = vsel %vm1788, %v1781, 0
        %2047 = vmatprep.subr.bf16.mxu0 0
        %2048 = vmatpush1.bf16.xpose.msra.mxu0 0
        %2049 = vmatprep.subr.bf16.mxu0 0
        %2050 = vmatpush1.bf16.xpose.msra.mxu0 0
        %2051 = vmatprep.subr.bf16.mxu0 0
        %2052 = vmatpush1.bf16.xpose.msra.mxu0 0
        %2053 = vmatprep.subr.bf16.mxu0 0
        %2054 = vmatpush1.bf16.xpose.msra.mxu0 0
        %2055 = vmatprep.subr.bf16.mxu0 0
        %2056 = vmatpush1.bf16.xpose.msra.mxu0 0
        %2057 = vmatprep.subr.bf16.mxu0 0
        %2058 = vmatpush1.bf16.xpose.msra.mxu0 0
        %2059 = vmatprep.subr.bf16.mxu0 0
        %2060 = vmatpush1.bf16.xpose.msra.mxu0 0
        %2061 = vmatprep.subr.bf16.mxu0 0
        %2062 = vmatpush1.bf16.xpose.msra.mxu0 %v2045
        %2063 = vmatprep.subr.bf16.mxu0 0
        %2064 = vmatpush2.bf16.xpose.msra.mxu0 0
        %2065 = vmatprep.subr.bf16.mxu0 0
        %2066 = vmatpush2.bf16.xpose.msra.mxu0 0
        %2067 = vmatprep.subr.bf16.mxu0 0
        %2068 = vmatpush2.bf16.xpose.msra.mxu0 0
        %2069 = vmatprep.subr.bf16.mxu0 0
        %2070 = vmatpush2.bf16.xpose.msra.mxu0 0
        %2071 = vmatprep.subr.bf16.mxu0 0
        %2072 = vmatpush2.bf16.xpose.msra.mxu0 0
        %2073 = vmatprep.subr.bf16.mxu0 0
        %2074 = vmatpush2.bf16.xpose.msra.mxu0 0
        %2075 = vmatprep.subr.bf16.mxu0 0
        %2076 = vmatpush2.bf16.xpose.msra.mxu0 0
        %2077 = vmatprep.subr.bf16.mxu0 0
        %2078 = vmatpush2.bf16.xpose.msra.mxu0 0
        %2079 = vmatprep.mubr.bf16.mxu0 0
        %2080 = vmatmul.mubr.bf16.gmra.mxu0 %v2042
        %v2081 = vpop.f32.mrf.mxu0
        %v2082 = vadd.f32 0.0, %v2081
        %v2083 = vpop.f32.mrf.mxu0
        %v2084 = vpop.f32.mrf.mxu0
        %v2085 = vadd.f32 0.0, %v2084
        %v2086 = vpop.f32.mrf.mxu0
        %2087 = vdwg.mxu0
        %v2088 = vsel %vm1836, %v2082, -inf
        %2089 = vmax.xlane.f32.xlu0 %v2088
        %v2090 = vpop.xlane.xlu0 %2089
        %v2091 = vsel %vm1836, %v2085, -inf
        %2092 = vmax.xlane.f32.xlu0 %v2091
        %v2093 = vpop.xlane.xlu0 %2092
        %v2094 = vsub.f32 %v2082, %v2090
        %v2095 = vsub.f32 %v2085, %v2093
        %v2096 = vmul.f32 %v2094, 1.442695
        %v2097 = vpow.pop %v2096
        %v2098 = vmul.f32 %v2095, 1.442695
        %v2099 = vpow.pop %v2098
        %v2100 = vsel %vm1836, %v2097, 0.0
        %2101 = vadd.xlane.f32.xlu0 %v2100
        %v2102 = vpop.xlane.xlu0 %2101
        %v2103 = vsel %vm1836, %v2099, 0.0
        %2104 = vadd.xlane.f32.xlu0 %v2103
        %v2105 = vpop.xlane.xlu0 %2104
        %v2106 = vrcp.pop %v2102
        %v2107 = vrcp.pop %v2105
        %v2108 = vmul.f32 %v2097, %v2106
        %v2109 = vmul.f32 %v2099, %v2107
        %v2110 = vpack.c.bf16 %v2109, %v2108
        %v2112 = vsel %vm1836, %v2110, 0
        %2114 = vmatprep.subr.bf16.mxu0 0
        %2115 = vmatpush1.bf16.msra.mxu0 0
        %2116 = vmatprep.subr.bf16.mxu0 0
        %2117 = vmatpush1.bf16.msra.mxu0 0
        %2118 = vmatprep.subr.bf16.mxu0 0
        %2119 = vmatpush1.bf16.msra.mxu0 0
        %2120 = vmatprep.subr.bf16.mxu0 0
        %2121 = vmatpush1.bf16.msra.mxu0 0
        %2122 = vmatprep.subr.bf16.mxu0 0
        %2123 = vmatpush1.bf16.msra.mxu0 0
        %2124 = vmatprep.subr.bf16.mxu0 0
        %2125 = vmatpush1.bf16.msra.mxu0 0
        %2126 = vmatprep.subr.bf16.mxu0 0
        %2127 = vmatpush1.bf16.msra.mxu0 0
        %2128 = vmatprep.subr.bf16.mxu0 0
        %2129 = vmatpush1.bf16.msra.mxu0 %v1785
        %2130 = vmatprep.subr.bf16.mxu0 0
        %2131 = vmatpush2.bf16.msra.mxu0 0
        %2132 = vmatprep.subr.bf16.mxu0 0
        %2133 = vmatpush2.bf16.msra.mxu0 0
        %2134 = vmatprep.subr.bf16.mxu0 0
        %2135 = vmatpush2.bf16.msra.mxu0 0
        %2136 = vmatprep.subr.bf16.mxu0 0
        %2137 = vmatpush2.bf16.msra.mxu0 0
        %2138 = vmatprep.subr.bf16.mxu0 0
        %2139 = vmatpush2.bf16.msra.mxu0 0
        %2140 = vmatprep.subr.bf16.mxu0 0
        %2141 = vmatpush2.bf16.msra.mxu0 0
        %2142 = vmatprep.subr.bf16.mxu0 0
        %2143 = vmatpush2.bf16.msra.mxu0 0
        %2144 = vmatprep.subr.bf16.mxu0 0
        %2145 = vmatpush2.bf16.msra.mxu0 0
        %2146 = vmatprep.mubr.bf16.mxu0 0
        %2147 = vmatmul.mubr.bf16.gmra.mxu0 %v2112
        %v2148 = vpop.f32.mrf.mxu0
        %v2149 = vadd.f32 0.0, %v2148
        %v2150 = vpop.f32.mrf.mxu0
        %v2151 = vpop.f32.mrf.mxu0
        %v2152 = vadd.f32 0.0, %v2151
        %v2153 = vpop.f32.mrf.mxu0
        %2154 = vdwg.mxu0
        %2155 = vst.msk [vmem:[#allocation3 + $0x8] sm:$0xff] %vm1788, %v2149
        %2156 = vst.msk [vmem:[#allocation3 + $0x18] sm:$0xff] %vm1788, %v2152
        %2158 = vrot.lane.b32.xlu0 %v1777, 64
        %v2159 = vpop.permute.xlu0 %2158
        %2161 = vrot.lane.b32.xlu0 %v1781, 64
        %v2162 = vpop.permute.xlu0 %2161
        %v2164 = vsel %vm1788, %v2159, 0
        %v2167 = vsel %vm1788, %v2162, 0
        %2169 = vmatprep.subr.bf16.mxu0 0
        %2170 = vmatpush1.bf16.xpose.msra.mxu0 0
        %2171 = vmatprep.subr.bf16.mxu0 0
        %2172 = vmatpush1.bf16.xpose.msra.mxu0 0
        %2173 = vmatprep.subr.bf16.mxu0 0
        %2174 = vmatpush1.bf16.xpose.msra.mxu0 0
        %2175 = vmatprep.subr.bf16.mxu0 0
        %2176 = vmatpush1.bf16.xpose.msra.mxu0 0
        %2177 = vmatprep.subr.bf16.mxu0 0
        %2178 = vmatpush1.bf16.xpose.msra.mxu0 0
        %2179 = vmatprep.subr.bf16.mxu0 0
        %2180 = vmatpush1.bf16.xpose.msra.mxu0 0
        %2181 = vmatprep.subr.bf16.mxu0 0
        %2182 = vmatpush1.bf16.xpose.msra.mxu0 0
        %2183 = vmatprep.subr.bf16.mxu0 0
        %2184 = vmatpush1.bf16.xpose.msra.mxu0 %v2167
        %2185 = vmatprep.subr.bf16.mxu0 0
        %2186 = vmatpush2.bf16.xpose.msra.mxu0 0
        %2187 = vmatprep.subr.bf16.mxu0 0
        %2188 = vmatpush2.bf16.xpose.msra.mxu0 0
        %2189 = vmatprep.subr.bf16.mxu0 0
        %2190 = vmatpush2.bf16.xpose.msra.mxu0 0
        %2191 = vmatprep.subr.bf16.mxu0 0
        %2192 = vmatpush2.bf16.xpose.msra.mxu0 0
        %2193 = vmatprep.subr.bf16.mxu0 0
        %2194 = vmatpush2.bf16.xpose.msra.mxu0 0
        %2195 = vmatprep.subr.bf16.mxu0 0
        %2196 = vmatpush2.bf16.xpose.msra.mxu0 0
        %2197 = vmatprep.subr.bf16.mxu0 0
        %2198 = vmatpush2.bf16.xpose.msra.mxu0 0
        %2199 = vmatprep.subr.bf16.mxu0 0
        %2200 = vmatpush2.bf16.xpose.msra.mxu0 0
        %2201 = vmatprep.mubr.bf16.mxu0 0
        %2202 = vmatmul.mubr.bf16.gmra.mxu0 %v2164
        %v2203 = vpop.f32.mrf.mxu0
        %v2204 = vadd.f32 0.0, %v2203
        %v2205 = vpop.f32.mrf.mxu0
        %v2206 = vpop.f32.mrf.mxu0
        %v2207 = vadd.f32 0.0, %v2206
        %v2208 = vpop.f32.mrf.mxu0
        %2209 = vdwg.mxu0
        %v2210 = vsel %vm1836, %v2204, -inf
        %2211 = vmax.xlane.f32.xlu0 %v2210
        %v2212 = vpop.xlane.xlu0 %2211
        %v2213 = vsel %vm1836, %v2207, -inf
        %2214 = vmax.xlane.f32.xlu0 %v2213
        %v2215 = vpop.xlane.xlu0 %2214
        %v2216 = vsub.f32 %v2204, %v2212
        %v2217 = vsub.f32 %v2207, %v2215
        %v2218 = vmul.f32 %v2216, 1.442695
        %v2219 = vpow.pop %v2218
        %v2220 = vmul.f32 %v2217, 1.442695
        %v2221 = vpow.pop %v2220
        %v2222 = vsel %vm1836, %v2219, 0.0
        %2223 = vadd.xlane.f32.xlu0 %v2222
        %v2224 = vpop.xlane.xlu0 %2223
        %v2225 = vsel %vm1836, %v2221, 0.0
        %2226 = vadd.xlane.f32.xlu0 %v2225
        %v2227 = vpop.xlane.xlu0 %2226
        %v2228 = vrcp.pop %v2224
        %v2229 = vrcp.pop %v2227
        %v2230 = vmul.f32 %v2219, %v2228
        %v2231 = vmul.f32 %v2221, %v2229
        %v2232 = vpack.c.bf16 %v2231, %v2230
        %2234 = vrot.lane.b32.xlu0 %v1785, 64
        %v2235 = vpop.permute.xlu0 %2234
        %v2238 = vsel %vm1836, %v2232, 0
        %2240 = vmatprep.subr.bf16.mxu0 0
        %2241 = vmatpush1.bf16.msra.mxu0 0
        %2242 = vmatprep.subr.bf16.mxu0 0
        %2243 = vmatpush1.bf16.msra.mxu0 0
        %2244 = vmatprep.subr.bf16.mxu0 0
        %2245 = vmatpush1.bf16.msra.mxu0 0
        %2246 = vmatprep.subr.bf16.mxu0 0
        %2247 = vmatpush1.bf16.msra.mxu0 0
        %2248 = vmatprep.subr.bf16.mxu0 0
        %2249 = vmatpush1.bf16.msra.mxu0 0
        %2250 = vmatprep.subr.bf16.mxu0 0
        %2251 = vmatpush1.bf16.msra.mxu0 0
        %2252 = vmatprep.subr.bf16.mxu0 0
        %2253 = vmatpush1.bf16.msra.mxu0 0
        %2254 = vmatprep.subr.bf16.mxu0 0
        %2255 = vmatpush1.bf16.msra.mxu0 %v2235
        %2256 = vmatprep.subr.bf16.mxu0 0
        %2257 = vmatpush2.bf16.msra.mxu0 0
        %2258 = vmatprep.subr.bf16.mxu0 0
        %2259 = vmatpush2.bf16.msra.mxu0 0
        %2260 = vmatprep.subr.bf16.mxu0 0
        %2261 = vmatpush2.bf16.msra.mxu0 0
        %2262 = vmatprep.subr.bf16.mxu0 0
        %2263 = vmatpush2.bf16.msra.mxu0 0
        %2264 = vmatprep.subr.bf16.mxu0 0
        %2265 = vmatpush2.bf16.msra.mxu0 0
        %2266 = vmatprep.subr.bf16.mxu0 0
        %2267 = vmatpush2.bf16.msra.mxu0 0
        %2268 = vmatprep.subr.bf16.mxu0 0
        %2269 = vmatpush2.bf16.msra.mxu0 0
        %2270 = vmatprep.subr.bf16.mxu0 0
        %2271 = vmatpush2.bf16.msra.mxu0 0
        %2272 = vmatprep.mubr.bf16.mxu0 0
        %2273 = vmatmul.mubr.bf16.gmra.mxu0 %v2238
        %v2274 = vpop.f32.mrf.mxu0
        %v2275 = vadd.f32 0.0, %v2274
        %v2276 = vpop.f32.mrf.mxu0
        %v2277 = vpop.f32.mrf.mxu0
        %v2278 = vadd.f32 0.0, %v2277
        %v2279 = vpop.f32.mrf.mxu0
        %2280 = vdwg.mxu0
        %2283 = vrot.lane.b32.xlu0 %v2275, 64
        %v2284 = vpop.permute.xlu0 %2283
        %2285 = vrot.lane.b32.xlu0 %v2278, 64
        %v2286 = vpop.permute.xlu0 %2285
        %2289 = vst.msk [vmem:[#allocation3 + $0x8] sm:$0xff] %vm2038, %v2284
        %2290 = vst.msk [vmem:[#allocation3 + $0x18] sm:$0xff] %vm2038, %v2286
        %v2292 = vsel %vm1788, %v1778, 0
        %v2295 = vsel %vm1788, %v1782, 0
        %2297 = vmatprep.subr.bf16.mxu0 0
        %2298 = vmatpush1.bf16.xpose.msra.mxu0 0
        %2299 = vmatprep.subr.bf16.mxu0 0
        %2300 = vmatpush1.bf16.xpose.msra.mxu0 0
        %2301 = vmatprep.subr.bf16.mxu0 0
        %2302 = vmatpush1.bf16.xpose.msra.mxu0 0
        %2303 = vmatprep.subr.bf16.mxu0 0
        %2304 = vmatpush1.bf16.xpose.msra.mxu0 0
        %2305 = vmatprep.subr.bf16.mxu0 0
        %2306 = vmatpush1.bf16.xpose.msra.mxu0 0
        %2307 = vmatprep.subr.bf16.mxu0 0
        %2308 = vmatpush1.bf16.xpose.msra.mxu0 0
        %2309 = vmatprep.subr.bf16.mxu0 0
        %2310 = vmatpush1.bf16.xpose.msra.mxu0 0
        %2311 = vmatprep.subr.bf16.mxu0 0
        %2312 = vmatpush1.bf16.xpose.msra.mxu0 %v2295
        %2313 = vmatprep.subr.bf16.mxu0 0
        %2314 = vmatpush2.bf16.xpose.msra.mxu0 0
        %2315 = vmatprep.subr.bf16.mxu0 0
        %2316 = vmatpush2.bf16.xpose.msra.mxu0 0
        %2317 = vmatprep.subr.bf16.mxu0 0
        %2318 = vmatpush2.bf16.xpose.msra.mxu0 0
        %2319 = vmatprep.subr.bf16.mxu0 0
        %2320 = vmatpush2.bf16.xpose.msra.mxu0 0
        %2321 = vmatprep.subr.bf16.mxu0 0
        %2322 = vmatpush2.bf16.xpose.msra.mxu0 0
        %2323 = vmatprep.subr.bf16.mxu0 0
        %2324 = vmatpush2.bf16.xpose.msra.mxu0 0
        %2325 = vmatprep.subr.bf16.mxu0 0
        %2326 = vmatpush2.bf16.xpose.msra.mxu0 0
        %2327 = vmatprep.subr.bf16.mxu0 0
        %2328 = vmatpush2.bf16.xpose.msra.mxu0 0
        %2329 = vmatprep.mubr.bf16.mxu0 0
        %2330 = vmatmul.mubr.bf16.gmra.mxu0 %v2292
        %v2331 = vpop.f32.mrf.mxu0
        %v2332 = vadd.f32 0.0, %v2331
        %v2333 = vpop.f32.mrf.mxu0
        %v2334 = vpop.f32.mrf.mxu0
        %v2335 = vadd.f32 0.0, %v2334
        %v2336 = vpop.f32.mrf.mxu0
        %2337 = vdwg.mxu0
        %v2338 = vsel %vm1836, %v2332, -inf
        %2339 = vmax.xlane.f32.xlu0 %v2338
        %v2340 = vpop.xlane.xlu0 %2339
        %v2341 = vsel %vm1836, %v2335, -inf
        %2342 = vmax.xlane.f32.xlu0 %v2341
        %v2343 = vpop.xlane.xlu0 %2342
        %v2344 = vsub.f32 %v2332, %v2340
        %v2345 = vsub.f32 %v2335, %v2343
        %v2346 = vmul.f32 %v2344, 1.442695
        %v2347 = vpow.pop %v2346
        %v2348 = vmul.f32 %v2345, 1.442695
        %v2349 = vpow.pop %v2348
        %v2350 = vsel %vm1836, %v2347, 0.0
        %2351 = vadd.xlane.f32.xlu0 %v2350
        %v2352 = vpop.xlane.xlu0 %2351
        %v2353 = vsel %vm1836, %v2349, 0.0
        %2354 = vadd.xlane.f32.xlu0 %v2353
        %v2355 = vpop.xlane.xlu0 %2354
        %v2356 = vrcp.pop %v2352
        %v2357 = vrcp.pop %v2355
        %v2358 = vmul.f32 %v2347, %v2356
        %v2359 = vmul.f32 %v2349, %v2357
        %v2360 = vpack.c.bf16 %v2359, %v2358
        %v2362 = vsel %vm1836, %v2360, 0
        %2364 = vmatprep.subr.bf16.mxu0 0
        %2365 = vmatpush1.bf16.msra.mxu0 0
        %2366 = vmatprep.subr.bf16.mxu0 0
        %2367 = vmatpush1.bf16.msra.mxu0 0
        %2368 = vmatprep.subr.bf16.mxu0 0
        %2369 = vmatpush1.bf16.msra.mxu0 0
        %2370 = vmatprep.subr.bf16.mxu0 0
        %2371 = vmatpush1.bf16.msra.mxu0 0
        %2372 = vmatprep.subr.bf16.mxu0 0
        %2373 = vmatpush1.bf16.msra.mxu0 0
        %2374 = vmatprep.subr.bf16.mxu0 0
        %2375 = vmatpush1.bf16.msra.mxu0 0
        %2376 = vmatprep.subr.bf16.mxu0 0
        %2377 = vmatpush1.bf16.msra.mxu0 0
        %2378 = vmatprep.subr.bf16.mxu0 0
        %2379 = vmatpush1.bf16.msra.mxu0 %v1786
        %2380 = vmatprep.subr.bf16.mxu0 0
        %2381 = vmatpush2.bf16.msra.mxu0 0
        %2382 = vmatprep.subr.bf16.mxu0 0
        %2383 = vmatpush2.bf16.msra.mxu0 0
        %2384 = vmatprep.subr.bf16.mxu0 0
        %2385 = vmatpush2.bf16.msra.mxu0 0
        %2386 = vmatprep.subr.bf16.mxu0 0
        %2387 = vmatpush2.bf16.msra.mxu0 0
        %2388 = vmatprep.subr.bf16.mxu0 0
        %2389 = vmatpush2.bf16.msra.mxu0 0
        %2390 = vmatprep.subr.bf16.mxu0 0
        %2391 = vmatpush2.bf16.msra.mxu0 0
        %2392 = vmatprep.subr.bf16.mxu0 0
        %2393 = vmatpush2.bf16.msra.mxu0 0
        %2394 = vmatprep.subr.bf16.mxu0 0
        %2395 = vmatpush2.bf16.msra.mxu0 0
        %2396 = vmatprep.mubr.bf16.mxu0 0
        %2397 = vmatmul.mubr.bf16.gmra.mxu0 %v2362
        %v2398 = vpop.f32.mrf.mxu0
        %v2399 = vadd.f32 0.0, %v2398
        %v2400 = vpop.f32.mrf.mxu0
        %v2401 = vpop.f32.mrf.mxu0
        %v2402 = vadd.f32 0.0, %v2401
        %v2403 = vpop.f32.mrf.mxu0
        %2404 = vdwg.mxu0
        %2405 = vst.msk [vmem:[#allocation3 + $0x20] sm:$0xff] %vm1788, %v2399
        %2406 = vst.msk [vmem:[#allocation3 + $0x30] sm:$0xff] %vm1788, %v2402
        %2408 = vrot.lane.b32.xlu0 %v1778, 64
        %v2409 = vpop.permute.xlu0 %2408
        %2411 = vrot.lane.b32.xlu0 %v1782, 64
        %v2412 = vpop.permute.xlu0 %2411
        %v2414 = vsel %vm1788, %v2409, 0
        %v2417 = vsel %vm1788, %v2412, 0
        %2419 = vmatprep.subr.bf16.mxu0 0
        %2420 = vmatpush1.bf16.xpose.msra.mxu0 0
        %2421 = vmatprep.subr.bf16.mxu0 0
        %2422 = vmatpush1.bf16.xpose.msra.mxu0 0
        %2423 = vmatprep.subr.bf16.mxu0 0
        %2424 = vmatpush1.bf16.xpose.msra.mxu0 0
        %2425 = vmatprep.subr.bf16.mxu0 0
        %2426 = vmatpush1.bf16.xpose.msra.mxu0 0
        %2427 = vmatprep.subr.bf16.mxu0 0
        %2428 = vmatpush1.bf16.xpose.msra.mxu0 0
        %2429 = vmatprep.subr.bf16.mxu0 0
        %2430 = vmatpush1.bf16.xpose.msra.mxu0 0
        %2431 = vmatprep.subr.bf16.mxu0 0
        %2432 = vmatpush1.bf16.xpose.msra.mxu0 0
        %2433 = vmatprep.subr.bf16.mxu0 0
        %2434 = vmatpush1.bf16.xpose.msra.mxu0 %v2417
        %2435 = vmatprep.subr.bf16.mxu0 0
        %2436 = vmatpush2.bf16.xpose.msra.mxu0 0
        %2437 = vmatprep.subr.bf16.mxu0 0
        %2438 = vmatpush2.bf16.xpose.msra.mxu0 0
        %2439 = vmatprep.subr.bf16.mxu0 0
        %2440 = vmatpush2.bf16.xpose.msra.mxu0 0
        %2441 = vmatprep.subr.bf16.mxu0 0
        %2442 = vmatpush2.bf16.xpose.msra.mxu0 0
        %2443 = vmatprep.subr.bf16.mxu0 0
        %2444 = vmatpush2.bf16.xpose.msra.mxu0 0
        %2445 = vmatprep.subr.bf16.mxu0 0
        %2446 = vmatpush2.bf16.xpose.msra.mxu0 0
        %2447 = vmatprep.subr.bf16.mxu0 0
        %2448 = vmatpush2.bf16.xpose.msra.mxu0 0
        %2449 = vmatprep.subr.bf16.mxu0 0
        %2450 = vmatpush2.bf16.xpose.msra.mxu0 0
        %2451 = vmatprep.mubr.bf16.mxu0 0
        %2452 = vmatmul.mubr.bf16.gmra.mxu0 %v2414
        %v2453 = vpop.f32.mrf.mxu0
        %v2454 = vadd.f32 0.0, %v2453
        %v2455 = vpop.f32.mrf.mxu0
        %v2456 = vpop.f32.mrf.mxu0
        %v2457 = vadd.f32 0.0, %v2456
        %v2458 = vpop.f32.mrf.mxu0
        %2459 = vdwg.mxu0
        %v2460 = vsel %vm1836, %v2454, -inf
        %2461 = vmax.xlane.f32.xlu0 %v2460
        %v2462 = vpop.xlane.xlu0 %2461
        %v2463 = vsel %vm1836, %v2457, -inf
        %2464 = vmax.xlane.f32.xlu0 %v2463
        %v2465 = vpop.xlane.xlu0 %2464
        %v2466 = vsub.f32 %v2454, %v2462
        %v2467 = vsub.f32 %v2457, %v2465
        %v2468 = vmul.f32 %v2466, 1.442695
        %v2469 = vpow.pop %v2468
        %v2470 = vmul.f32 %v2467, 1.442695
        %v2471 = vpow.pop %v2470
        %v2472 = vsel %vm1836, %v2469, 0.0
        %2473 = vadd.xlane.f32.xlu0 %v2472
        %v2474 = vpop.xlane.xlu0 %2473
        %v2475 = vsel %vm1836, %v2471, 0.0
        %2476 = vadd.xlane.f32.xlu0 %v2475
        %v2477 = vpop.xlane.xlu0 %2476
        %v2478 = vrcp.pop %v2474
        %v2479 = vrcp.pop %v2477
        %v2480 = vmul.f32 %v2469, %v2478
        %v2481 = vmul.f32 %v2471, %v2479
        %v2482 = vpack.c.bf16 %v2481, %v2480
        %2484 = vrot.lane.b32.xlu0 %v1786, 64
        %v2485 = vpop.permute.xlu0 %2484
        %v2488 = vsel %vm1836, %v2482, 0
        %2490 = vmatprep.subr.bf16.mxu0 0
        %2491 = vmatpush1.bf16.msra.mxu0 0
        %2492 = vmatprep.subr.bf16.mxu0 0
        %2493 = vmatpush1.bf16.msra.mxu0 0
        %2494 = vmatprep.subr.bf16.mxu0 0
        %2495 = vmatpush1.bf16.msra.mxu0 0
        %2496 = vmatprep.subr.bf16.mxu0 0
        %2497 = vmatpush1.bf16.msra.mxu0 0
        %2498 = vmatprep.subr.bf16.mxu0 0
        %2499 = vmatpush1.bf16.msra.mxu0 0
        %2500 = vmatprep.subr.bf16.mxu0 0
        %2501 = vmatpush1.bf16.msra.mxu0 0
        %2502 = vmatprep.subr.bf16.mxu0 0
        %2503 = vmatpush1.bf16.msra.mxu0 0
        %2504 = vmatprep.subr.bf16.mxu0 0
        %2505 = vmatpush1.bf16.msra.mxu0 %v2485
        %2506 = vmatprep.subr.bf16.mxu0 0
        %2507 = vmatpush2.bf16.msra.mxu0 0
        %2508 = vmatprep.subr.bf16.mxu0 0
        %2509 = vmatpush2.bf16.msra.mxu0 0
        %2510 = vmatprep.subr.bf16.mxu0 0
        %2511 = vmatpush2.bf16.msra.mxu0 0
        %2512 = vmatprep.subr.bf16.mxu0 0
        %2513 = vmatpush2.bf16.msra.mxu0 0
        %2514 = vmatprep.subr.bf16.mxu0 0
        %2515 = vmatpush2.bf16.msra.mxu0 0
        %2516 = vmatprep.subr.bf16.mxu0 0
        %2517 = vmatpush2.bf16.msra.mxu0 0
        %2518 = vmatprep.subr.bf16.mxu0 0
        %2519 = vmatpush2.bf16.msra.mxu0 0
        %2520 = vmatprep.subr.bf16.mxu0 0
        %2521 = vmatpush2.bf16.msra.mxu0 0
        %2522 = vmatprep.mubr.bf16.mxu0 0
        %2523 = vmatmul.mubr.bf16.gmra.mxu0 %v2488
        %v2524 = vpop.f32.mrf.mxu0
        %v2525 = vadd.f32 0.0, %v2524
        %v2526 = vpop.f32.mrf.mxu0
        %v2527 = vpop.f32.mrf.mxu0
        %v2528 = vadd.f32 0.0, %v2527
        %v2529 = vpop.f32.mrf.mxu0
        %2530 = vdwg.mxu0
        %2533 = vrot.lane.b32.xlu0 %v2525, 64
        %v2534 = vpop.permute.xlu0 %2533
        %2535 = vrot.lane.b32.xlu0 %v2528, 64
        %v2536 = vpop.permute.xlu0 %2535
        %2539 = vst.msk [vmem:[#allocation3 + $0x20] sm:$0xff] %vm2038, %v2534
        %2540 = vst.msk [vmem:[#allocation3 + $0x30] sm:$0xff] %vm2038, %v2536
        %v2542 = vsel %vm1788, %v1779, 0
        %v2545 = vsel %vm1788, %v1783, 0
        %2547 = vmatprep.subr.bf16.mxu0 0
        %2548 = vmatpush1.bf16.xpose.msra.mxu0 0
        %2549 = vmatprep.subr.bf16.mxu0 0
        %2550 = vmatpush1.bf16.xpose.msra.mxu0 0
        %2551 = vmatprep.subr.bf16.mxu0 0
        %2552 = vmatpush1.bf16.xpose.msra.mxu0 0
        %2553 = vmatprep.subr.bf16.mxu0 0
        %2554 = vmatpush1.bf16.xpose.msra.mxu0 0
        %2555 = vmatprep.subr.bf16.mxu0 0
        %2556 = vmatpush1.bf16.xpose.msra.mxu0 0
        %2557 = vmatprep.subr.bf16.mxu0 0
        %2558 = vmatpush1.bf16.xpose.msra.mxu0 0
        %2559 = vmatprep.subr.bf16.mxu0 0
        %2560 = vmatpush1.bf16.xpose.msra.mxu0 0
        %2561 = vmatprep.subr.bf16.mxu0 0
        %2562 = vmatpush1.bf16.xpose.msra.mxu0 %v2545
        %2563 = vmatprep.subr.bf16.mxu0 0
        %2564 = vmatpush2.bf16.xpose.msra.mxu0 0
        %2565 = vmatprep.subr.bf16.mxu0 0
        %2566 = vmatpush2.bf16.xpose.msra.mxu0 0
        %2567 = vmatprep.subr.bf16.mxu0 0
        %2568 = vmatpush2.bf16.xpose.msra.mxu0 0
        %2569 = vmatprep.subr.bf16.mxu0 0
        %2570 = vmatpush2.bf16.xpose.msra.mxu0 0
        %2571 = vmatprep.subr.bf16.mxu0 0
        %2572 = vmatpush2.bf16.xpose.msra.mxu0 0
        %2573 = vmatprep.subr.bf16.mxu0 0
        %2574 = vmatpush2.bf16.xpose.msra.mxu0 0
        %2575 = vmatprep.subr.bf16.mxu0 0
        %2576 = vmatpush2.bf16.xpose.msra.mxu0 0
        %2577 = vmatprep.subr.bf16.mxu0 0
        %2578 = vmatpush2.bf16.xpose.msra.mxu0 0
        %2579 = vmatprep.mubr.bf16.mxu0 0
        %2580 = vmatmul.mubr.bf16.gmra.mxu0 %v2542
        %v2581 = vpop.f32.mrf.mxu0
        %v2582 = vadd.f32 0.0, %v2581
        %v2583 = vpop.f32.mrf.mxu0
        %v2584 = vpop.f32.mrf.mxu0
        %v2585 = vadd.f32 0.0, %v2584
        %v2586 = vpop.f32.mrf.mxu0
        %2587 = vdwg.mxu0
        %v2588 = vsel %vm1836, %v2582, -inf
        %2589 = vmax.xlane.f32.xlu0 %v2588
        %v2590 = vpop.xlane.xlu0 %2589
        %v2591 = vsel %vm1836, %v2585, -inf
        %2592 = vmax.xlane.f32.xlu0 %v2591
        %v2593 = vpop.xlane.xlu0 %2592
        %v2594 = vsub.f32 %v2582, %v2590
        %v2595 = vsub.f32 %v2585, %v2593
        %v2596 = vmul.f32 %v2594, 1.442695
        %v2597 = vpow.pop %v2596
        %v2598 = vmul.f32 %v2595, 1.442695
        %v2599 = vpow.pop %v2598
        %v2600 = vsel %vm1836, %v2597, 0.0
        %2601 = vadd.xlane.f32.xlu0 %v2600
        %v2602 = vpop.xlane.xlu0 %2601
        %v2603 = vsel %vm1836, %v2599, 0.0
        %2604 = vadd.xlane.f32.xlu0 %v2603
        %v2605 = vpop.xlane.xlu0 %2604
        %v2606 = vrcp.pop %v2602
        %v2607 = vrcp.pop %v2605
        %v2608 = vmul.f32 %v2597, %v2606
        %v2609 = vmul.f32 %v2599, %v2607
        %v2610 = vpack.c.bf16 %v2609, %v2608
        %v2612 = vsel %vm1836, %v2610, 0
        %2614 = vmatprep.subr.bf16.mxu0 0
        %2615 = vmatpush1.bf16.msra.mxu0 0
        %2616 = vmatprep.subr.bf16.mxu0 0
        %2617 = vmatpush1.bf16.msra.mxu0 0
        %2618 = vmatprep.subr.bf16.mxu0 0
        %2619 = vmatpush1.bf16.msra.mxu0 0
        %2620 = vmatprep.subr.bf16.mxu0 0
        %2621 = vmatpush1.bf16.msra.mxu0 0
        %2622 = vmatprep.subr.bf16.mxu0 0
        %2623 = vmatpush1.bf16.msra.mxu0 0
        %2624 = vmatprep.subr.bf16.mxu0 0
        %2625 = vmatpush1.bf16.msra.mxu0 0
        %2626 = vmatprep.subr.bf16.mxu0 0
        %2627 = vmatpush1.bf16.msra.mxu0 0
        %2628 = vmatprep.subr.bf16.mxu0 0
        %2629 = vmatpush1.bf16.msra.mxu0 %v1787
        %2630 = vmatprep.subr.bf16.mxu0 0
        %2631 = vmatpush2.bf16.msra.mxu0 0
        %2632 = vmatprep.subr.bf16.mxu0 0
        %2633 = vmatpush2.bf16.msra.mxu0 0
        %2634 = vmatprep.subr.bf16.mxu0 0
        %2635 = vmatpush2.bf16.msra.mxu0 0
        %2636 = vmatprep.subr.bf16.mxu0 0
        %2637 = vmatpush2.bf16.msra.mxu0 0
        %2638 = vmatprep.subr.bf16.mxu0 0
        %2639 = vmatpush2.bf16.msra.mxu0 0
        %2640 = vmatprep.subr.bf16.mxu0 0
        %2641 = vmatpush2.bf16.msra.mxu0 0
        %2642 = vmatprep.subr.bf16.mxu0 0
        %2643 = vmatpush2.bf16.msra.mxu0 0
        %2644 = vmatprep.subr.bf16.mxu0 0
        %2645 = vmatpush2.bf16.msra.mxu0 0
        %2646 = vmatprep.mubr.bf16.mxu0 0
        %2647 = vmatmul.mubr.bf16.gmra.mxu0 %v2612
        %v2648 = vpop.f32.mrf.mxu0
        %v2649 = vadd.f32 0.0, %v2648
        %v2650 = vpop.f32.mrf.mxu0
        %v2651 = vpop.f32.mrf.mxu0
        %v2652 = vadd.f32 0.0, %v2651
        %v2653 = vpop.f32.mrf.mxu0
        %2654 = vdwg.mxu0
        %2655 = vst.msk [vmem:[#allocation3 + $0x28] sm:$0xff] %vm1788, %v2649
        %2656 = vst.msk [vmem:[#allocation3 + $0x38] sm:$0xff] %vm1788, %v2652
        %2658 = vrot.lane.b32.xlu0 %v1779, 64
        %v2659 = vpop.permute.xlu0 %2658
        %2661 = vrot.lane.b32.xlu0 %v1783, 64
        %v2662 = vpop.permute.xlu0 %2661
        %v2664 = vsel %vm1788, %v2659, 0
        %v2667 = vsel %vm1788, %v2662, 0
        %2669 = vmatprep.subr.bf16.mxu0 0
        %2670 = vmatpush1.bf16.xpose.msra.mxu0 0
        %2671 = vmatprep.subr.bf16.mxu0 0
        %2672 = vmatpush1.bf16.xpose.msra.mxu0 0
        %2673 = vmatprep.subr.bf16.mxu0 0
        %2674 = vmatpush1.bf16.xpose.msra.mxu0 0
        %2675 = vmatprep.subr.bf16.mxu0 0
        %2676 = vmatpush1.bf16.xpose.msra.mxu0 0
        %2677 = vmatprep.subr.bf16.mxu0 0
        %2678 = vmatpush1.bf16.xpose.msra.mxu0 0
        %2679 = vmatprep.subr.bf16.mxu0 0
        %2680 = vmatpush1.bf16.xpose.msra.mxu0 0
        %2681 = vmatprep.subr.bf16.mxu0 0
        %2682 = vmatpush1.bf16.xpose.msra.mxu0 0
        %2683 = vmatprep.subr.bf16.mxu0 0
        %2684 = vmatpush1.bf16.xpose.msra.mxu0 %v2667
        %2685 = vmatprep.subr.bf16.mxu0 0
        %2686 = vmatpush2.bf16.xpose.msra.mxu0 0
        %2687 = vmatprep.subr.bf16.mxu0 0
        %2688 = vmatpush2.bf16.xpose.msra.mxu0 0
        %2689 = vmatprep.subr.bf16.mxu0 0
        %2690 = vmatpush2.bf16.xpose.msra.mxu0 0
        %2691 = vmatprep.subr.bf16.mxu0 0
        %2692 = vmatpush2.bf16.xpose.msra.mxu0 0
        %2693 = vmatprep.subr.bf16.mxu0 0
        %2694 = vmatpush2.bf16.xpose.msra.mxu0 0
        %2695 = vmatprep.subr.bf16.mxu0 0
        %2696 = vmatpush2.bf16.xpose.msra.mxu0 0
        %2697 = vmatprep.subr.bf16.mxu0 0
        %2698 = vmatpush2.bf16.xpose.msra.mxu0 0
        %2699 = vmatprep.subr.bf16.mxu0 0
        %2700 = vmatpush2.bf16.xpose.msra.mxu0 0
        %2701 = vmatprep.mubr.bf16.mxu0 0
        %2702 = vmatmul.mubr.bf16.gmra.mxu0 %v2664
        %v2703 = vpop.f32.mrf.mxu0
        %v2704 = vadd.f32 0.0, %v2703
        %v2705 = vpop.f32.mrf.mxu0
        %v2706 = vpop.f32.mrf.mxu0
        %v2707 = vadd.f32 0.0, %v2706
        %v2708 = vpop.f32.mrf.mxu0
        %2709 = vdwg.mxu0
        %v2710 = vsel %vm1836, %v2704, -inf
        %2711 = vmax.xlane.f32.xlu0 %v2710
        %v2712 = vpop.xlane.xlu0 %2711
        %v2713 = vsel %vm1836, %v2707, -inf
        %2714 = vmax.xlane.f32.xlu0 %v2713
        %v2715 = vpop.xlane.xlu0 %2714
        %v2716 = vsub.f32 %v2704, %v2712
        %v2717 = vsub.f32 %v2707, %v2715
        %v2718 = vmul.f32 %v2716, 1.442695
        %v2719 = vpow.pop %v2718
        %v2720 = vmul.f32 %v2717, 1.442695
        %v2721 = vpow.pop %v2720
        %v2722 = vsel %vm1836, %v2719, 0.0
        %2723 = vadd.xlane.f32.xlu0 %v2722
        %v2724 = vpop.xlane.xlu0 %2723
        %v2725 = vsel %vm1836, %v2721, 0.0
        %2726 = vadd.xlane.f32.xlu0 %v2725
        %v2727 = vpop.xlane.xlu0 %2726
        %v2728 = vrcp.pop %v2724
        %v2729 = vrcp.pop %v2727
        %v2730 = vmul.f32 %v2719, %v2728
        %v2731 = vmul.f32 %v2721, %v2729
        %v2732 = vpack.c.bf16 %v2731, %v2730
        %2734 = vrot.lane.b32.xlu0 %v1787, 64
        %v2735 = vpop.permute.xlu0 %2734
        %v2738 = vsel %vm1836, %v2732, 0
        %2740 = vmatprep.subr.bf16.mxu0 0
        %2741 = vmatpush1.bf16.msra.mxu0 0
        %2742 = vmatprep.subr.bf16.mxu0 0
        %2743 = vmatpush1.bf16.msra.mxu0 0
        %2744 = vmatprep.subr.bf16.mxu0 0
        %2745 = vmatpush1.bf16.msra.mxu0 0
        %2746 = vmatprep.subr.bf16.mxu0 0
        %2747 = vmatpush1.bf16.msra.mxu0 0
        %2748 = vmatprep.subr.bf16.mxu0 0
        %2749 = vmatpush1.bf16.msra.mxu0 0
        %2750 = vmatprep.subr.bf16.mxu0 0
        %2751 = vmatpush1.bf16.msra.mxu0 0
        %2752 = vmatprep.subr.bf16.mxu0 0
        %2753 = vmatpush1.bf16.msra.mxu0 0
        %2754 = vmatprep.subr.bf16.mxu0 0
        %2755 = vmatpush1.bf16.msra.mxu0 %v2735
        %2756 = vmatprep.subr.bf16.mxu0 0
        %2757 = vmatpush2.bf16.msra.mxu0 0
        %2758 = vmatprep.subr.bf16.mxu0 0
        %2759 = vmatpush2.bf16.msra.mxu0 0
        %2760 = vmatprep.subr.bf16.mxu0 0
        %2761 = vmatpush2.bf16.msra.mxu0 0
        %2762 = vmatprep.subr.bf16.mxu0 0
        %2763 = vmatpush2.bf16.msra.mxu0 0
        %2764 = vmatprep.subr.bf16.mxu0 0
        %2765 = vmatpush2.bf16.msra.mxu0 0
        %2766 = vmatprep.subr.bf16.mxu0 0
        %2767 = vmatpush2.bf16.msra.mxu0 0
        %2768 = vmatprep.subr.bf16.mxu0 0
        %2769 = vmatpush2.bf16.msra.mxu0 0
        %2770 = vmatprep.subr.bf16.mxu0 0
        %2771 = vmatpush2.bf16.msra.mxu0 0
        %2772 = vmatprep.mubr.bf16.mxu0 0
        %2773 = vmatmul.mubr.bf16.gmra.mxu0 %v2738
        %v2774 = vpop.f32.mrf.mxu0
        %v2775 = vadd.f32 0.0, %v2774
        %v2776 = vpop.f32.mrf.mxu0
        %v2777 = vpop.f32.mrf.mxu0
        %v2778 = vadd.f32 0.0, %v2777
        %v2779 = vpop.f32.mrf.mxu0
        %2780 = vdwg.mxu0
        %2783 = vrot.lane.b32.xlu0 %v2775, 64
        %v2784 = vpop.permute.xlu0 %2783
        %2785 = vrot.lane.b32.xlu0 %v2778, 64
        %v2786 = vpop.permute.xlu0 %2785
        %2789 = vst.msk [vmem:[#allocation3 + $0x28] sm:$0xff] %vm2038, %v2784
        %2790 = vst.msk [vmem:[#allocation3 + $0x38] sm:$0xff] %vm2038, %v2786
        %v2791 = vld [vmem:[#allocation3] sm:$0xff]
        %v2792 = vld [vmem:[#allocation3 + $0x8] sm:$0xff]
        %v2793 = vld [vmem:[#allocation3 + $0x10] sm:$0xff]
        %v2794 = vld [vmem:[#allocation3 + $0x18] sm:$0xff]
        %v2795 = vld [vmem:[#allocation3 + $0x20] sm:$0xff]
        %v2796 = vld [vmem:[#allocation3 + $0x28] sm:$0xff]
        %v2797 = vld [vmem:[#allocation3 + $0x30] sm:$0xff]
        %v2798 = vld [vmem:[#allocation3 + $0x38] sm:$0xff]
        %v2799 = vpack.c.bf16 %v2793, %v2791
        %v2800 = vpack.c.bf16 %v2794, %v2792
        %v2801 = vpack.c.bf16 %v2797, %v2795
        %v2802 = vpack.c.bf16 %v2798, %v2796
        %v2803 = vld [vmem:[%s692] sm:$0xff]
        %v2804 = vld [vmem:[%s692 + $0x8] sm:$0xff]
        %v2805 = vld [vmem:[%s692 + $0x10] sm:$0xff]
        %v2806 = vld [vmem:[%s692 + $0x18] sm:$0xff]
        %v2807 = vld [vmem:[%s692 + $0x20] sm:$0xff]
        %v2808 = vld [vmem:[%s692 + $0x28] sm:$0xff]
        %v2809 = vld [vmem:[%s692 + $0x30] sm:$0xff]
        %v2810 = vld [vmem:[%s692 + $0x38] sm:$0xff]
        %v2811 = vld [vmem:[%s692 + $0x40] sm:$0xff]
        %v2812 = vld [vmem:[%s692 + $0x48] sm:$0xff]
        %v2813 = vld [vmem:[%s692 + $0x50] sm:$0xff]
        %v2814 = vld [vmem:[%s692 + $0x58] sm:$0xff]
        %v2815 = vld [vmem:[%s692 + $0x60] sm:$0xff]
        %v2816 = vld [vmem:[%s692 + $0x68] sm:$0xff]
        %v2817 = vld [vmem:[%s692 + $0x70] sm:$0xff]
        %v2818 = vld [vmem:[%s692 + $0x78] sm:$0xff]
        %v2819 = vld [vmem:[%s692 + $0x80] sm:$0xff]
        %v2820 = vld [vmem:[%s692 + $0x88] sm:$0xff]
        %v2821 = vld [vmem:[%s692 + $0x90] sm:$0xff]
        %v2822 = vld [vmem:[%s692 + $0x98] sm:$0xff]
        %v2823 = vld [vmem:[%s692 + $0xa0] sm:$0xff]
        %v2824 = vld [vmem:[%s692 + $0xa8] sm:$0xff]
        %v2825 = vld [vmem:[%s692 + $0xb0] sm:$0xff]
        %v2826 = vld [vmem:[%s692 + $0xb8] sm:$0xff]
        %v2827 = vld [vmem:[%s692 + $0xc0] sm:$0xff]
        %v2828 = vld [vmem:[%s692 + $0xc8] sm:$0xff]
        %v2829 = vld [vmem:[%s692 + $0xd0] sm:$0xff]
        %v2830 = vld [vmem:[%s692 + $0xd8] sm:$0xff]
        %v2831 = vld [vmem:[%s692 + $0xe0] sm:$0xff]
        %v2832 = vld [vmem:[%s692 + $0xe8] sm:$0xff]
        %v2833 = vld [vmem:[%s692 + $0xf0] sm:$0xff]
        %v2834 = vld [vmem:[%s692 + $0xf8] sm:$0xff]
        %v2835 = vld [vmem:[%s857] sm:$0x3]
        %v2837 = vlaneseq
        %v2838 = vshrl.u32 %v2837, 7
        %v2839 = vsub.s32 0, %v2838
        %v2840 = vrot.slane %v2835, %v2839
        %v2841 = vlaneseq
        %v2842 = vshrl.u32 %v2841, 7
        %v2843 = vsub.s32 1, %v2842
        %v2844 = vrot.slane %v2835, %v2843
        %v2879 = vunpack.c.l.b16 %v2803
        %v2880 = vunpack.c.h.b16 %v2803
        %v2881 = vunpack.c.l.b16 %v2804
        %v2882 = vunpack.c.h.b16 %v2804
        %v2883 = vunpack.c.l.b16 %v2805
        %v2884 = vunpack.c.h.b16 %v2805
        %v2885 = vunpack.c.l.b16 %v2806
        %v2886 = vunpack.c.h.b16 %v2806
        %v2887 = vunpack.c.l.b16 %v2807
        %v2888 = vunpack.c.h.b16 %v2807
        %v2889 = vunpack.c.l.b16 %v2808
        %v2890 = vunpack.c.h.b16 %v2808
        %v2891 = vunpack.c.l.b16 %v2809
        %v2892 = vunpack.c.h.b16 %v2809
        %v2893 = vunpack.c.l.b16 %v2810
        %v2894 = vunpack.c.h.b16 %v2810
        %v2895 = vunpack.c.l.b16 %v2811
        %v2896 = vunpack.c.h.b16 %v2811
        %v2897 = vunpack.c.l.b16 %v2812
        %v2898 = vunpack.c.h.b16 %v2812
        %v2899 = vunpack.c.l.b16 %v2813
        %v2900 = vunpack.c.h.b16 %v2813
        %v2901 = vunpack.c.l.b16 %v2814
        %v2902 = vunpack.c.h.b16 %v2814
        %v2903 = vunpack.c.l.b16 %v2815
        %v2904 = vunpack.c.h.b16 %v2815
        %v2905 = vunpack.c.l.b16 %v2816
        %v2906 = vunpack.c.h.b16 %v2816
        %v2907 = vunpack.c.l.b16 %v2817
        %v2908 = vunpack.c.h.b16 %v2817
        %v2909 = vunpack.c.l.b16 %v2818
        %v2910 = vunpack.c.h.b16 %v2818
        %v2911 = vunpack.c.l.b16 %v2819
        %v2912 = vunpack.c.h.b16 %v2819
        %v2913 = vunpack.c.l.b16 %v2820
        %v2914 = vunpack.c.h.b16 %v2820
        %v2915 = vunpack.c.l.b16 %v2821
        %v2916 = vunpack.c.h.b16 %v2821
        %v2917 = vunpack.c.l.b16 %v2822
        %v2918 = vunpack.c.h.b16 %v2822
        %v2919 = vunpack.c.l.b16 %v2823
        %v2920 = vunpack.c.h.b16 %v2823
        %v2921 = vunpack.c.l.b16 %v2824
        %v2922 = vunpack.c.h.b16 %v2824
        %v2923 = vunpack.c.l.b16 %v2825
        %v2924 = vunpack.c.h.b16 %v2825
        %v2925 = vunpack.c.l.b16 %v2826
        %v2926 = vunpack.c.h.b16 %v2826
        %v2927 = vunpack.c.l.b16 %v2827
        %v2928 = vunpack.c.h.b16 %v2827
        %v2929 = vunpack.c.l.b16 %v2828
        %v2930 = vunpack.c.h.b16 %v2828
        %v2931 = vunpack.c.l.b16 %v2829
        %v2932 = vunpack.c.h.b16 %v2829
        %v2933 = vunpack.c.l.b16 %v2830
        %v2934 = vunpack.c.h.b16 %v2830
        %v2935 = vunpack.c.l.b16 %v2831
        %v2936 = vunpack.c.h.b16 %v2831
        %v2937 = vunpack.c.l.b16 %v2832
        %v2938 = vunpack.c.h.b16 %v2832
        %v2939 = vunpack.c.l.b16 %v2833
        %v2940 = vunpack.c.h.b16 %v2833
        %v2941 = vunpack.c.l.b16 %v2834
        %v2942 = vunpack.c.h.b16 %v2834
        %v2943 = vpack.c.b16 %v2881, %v2879
        %v2944 = vpack.c.b16 %v2882, %v2880
        %v2945 = vpack.c.b16 %v2885, %v2883
        %v2946 = vpack.c.b16 %v2886, %v2884
        %v2947 = vpack.c.b16 %v2889, %v2887
        %v2948 = vpack.c.b16 %v2890, %v2888
        %v2949 = vpack.c.b16 %v2893, %v2891
        %v2950 = vpack.c.b16 %v2894, %v2892
        %v2951 = vpack.c.b16 %v2897, %v2895
        %v2952 = vpack.c.b16 %v2898, %v2896
        %v2953 = vpack.c.b16 %v2901, %v2899
        %v2954 = vpack.c.b16 %v2902, %v2900
        %v2955 = vpack.c.b16 %v2905, %v2903
        %v2956 = vpack.c.b16 %v2906, %v2904
        %v2957 = vpack.c.b16 %v2909, %v2907
        %v2958 = vpack.c.b16 %v2910, %v2908
        %v2959 = vpack.c.b16 %v2913, %v2911
        %v2960 = vpack.c.b16 %v2914, %v2912
        %v2961 = vpack.c.b16 %v2917, %v2915
        %v2962 = vpack.c.b16 %v2918, %v2916
        %v2963 = vpack.c.b16 %v2921, %v2919
        %v2964 = vpack.c.b16 %v2922, %v2920
        %v2965 = vpack.c.b16 %v2925, %v2923
        %v2966 = vpack.c.b16 %v2926, %v2924
        %v2967 = vpack.c.b16 %v2929, %v2927
        %v2968 = vpack.c.b16 %v2930, %v2928
        %v2969 = vpack.c.b16 %v2933, %v2931
        %v2970 = vpack.c.b16 %v2934, %v2932
        %v2971 = vpack.c.b16 %v2937, %v2935
        %v2972 = vpack.c.b16 %v2938, %v2936
        %v2973 = vpack.c.b16 %v2941, %v2939
        %v2974 = vpack.c.b16 %v2942, %v2940
        %3007 = vmatprep.subr.bf16.mxu0 %v2958
        %3008 = vmatpush1.bf16.msra.mxu0 %v2957
        %3009 = vmatprep.subr.bf16.mxu0 %v2956
        %3010 = vmatpush1.bf16.msra.mxu0 %v2955
        %3011 = vmatprep.subr.bf16.mxu0 %v2954
        %3012 = vmatpush1.bf16.msra.mxu0 %v2953
        %3013 = vmatprep.subr.bf16.mxu0 %v2952
        %3014 = vmatpush1.bf16.msra.mxu0 %v2951
        %3015 = vmatprep.subr.bf16.mxu0 %v2950
        %3016 = vmatpush1.bf16.msra.mxu0 %v2949
        %3017 = vmatprep.subr.bf16.mxu0 %v2948
        %3018 = vmatpush1.bf16.msra.mxu0 %v2947
        %3019 = vmatprep.subr.bf16.mxu0 %v2946
        %3020 = vmatpush1.bf16.msra.mxu0 %v2945
        %3021 = vmatprep.subr.bf16.mxu0 %v2944
        %3022 = vmatpush1.bf16.msra.mxu0 %v2943
        %3023 = vmatprep.subr.bf16.mxu0 %v2974
        %3024 = vmatpush2.bf16.msra.mxu0 %v2973
        %3025 = vmatprep.subr.bf16.mxu0 %v2972
        %3026 = vmatpush2.bf16.msra.mxu0 %v2971
        %3027 = vmatprep.subr.bf16.mxu0 %v2970
        %3028 = vmatpush2.bf16.msra.mxu0 %v2969
        %3029 = vmatprep.subr.bf16.mxu0 %v2968
        %3030 = vmatpush2.bf16.msra.mxu0 %v2967
        %3031 = vmatprep.subr.bf16.mxu0 %v2966
        %3032 = vmatpush2.bf16.msra.mxu0 %v2965
        %3033 = vmatprep.subr.bf16.mxu0 %v2964
        %3034 = vmatpush2.bf16.msra.mxu0 %v2963
        %3035 = vmatprep.subr.bf16.mxu0 %v2962
        %3036 = vmatpush2.bf16.msra.mxu0 %v2961
        %3037 = vmatprep.subr.bf16.mxu0 %v2960
        %3038 = vmatpush2.bf16.msra.mxu0 %v2959
        %3039 = vmatprep.mubr.bf16.mxu0 %v2800
        %3040 = vmatmul.mubr.bf16.gmra.mxu0 %v2799
        %v3041 = vpop.f32.mrf.mxu0
        %v3042 = vadd.f32 %v2840, %v3041
        %v3043 = vpop.f32.mrf.mxu0
        %v3044 = vadd.f32 %v2844, %v3043
        %v3045 = vpop.f32.mrf.mxu0
        %v3046 = vadd.f32 %v2840, %v3045
        %v3047 = vpop.f32.mrf.mxu0
        %v3048 = vadd.f32 %v2844, %v3047
        %3049 = vmatprep.mubr.bf16.mxu0 %v2802
        %3050 = vmatmul.mubr.bf16.gmra.mxu0 %v2801
        %v3051 = vpop.f32.mrf.mxu0
        %v3052 = vadd.f32 %v2840, %v3051
        %v3053 = vpop.f32.mrf.mxu0
        %v3054 = vadd.f32 %v2844, %v3053
        %v3055 = vpop.f32.mrf.mxu0
        %v3056 = vadd.f32 %v2840, %v3055
        %v3057 = vpop.f32.mrf.mxu0
        %v3058 = vadd.f32 %v2844, %v3057
        %3059 = vdwg.mxu0
        %v3060 = vadd.f32 %v3042, %v989
        %v3061 = vadd.f32 %v3044, %v990
        %v3062 = vadd.f32 %v3046, %v991
        %v3063 = vadd.f32 %v3048, %v992
        %v3064 = vadd.f32 %v3052, %v993
        %v3065 = vadd.f32 %v3054, %v994
        %v3066 = vadd.f32 %v3056, %v995
        %v3067 = vadd.f32 %v3058, %v996
        %v3068 = vld [vmem:[%s701] sm:$0x3]
        %v3069 = vld [vmem:[%s710] sm:$0x3]
        %v3070 = vadd.f32 %v3060, %v3061
        %3071 = vadd.xlane.f32.xlu0 %v3070
        %v3072 = vpop.xlane.xlu0 %3071
        %v3073 = vadd.f32 %v3062, %v3063
        %3074 = vadd.xlane.f32.xlu0 %v3073
        %v3075 = vpop.xlane.xlu0 %3074
        %v3076 = vadd.f32 %v3064, %v3065
        %3077 = vadd.xlane.f32.xlu0 %v3076
        %v3078 = vpop.xlane.xlu0 %3077
        %v3079 = vadd.f32 %v3066, %v3067
        %3080 = vadd.xlane.f32.xlu0 %v3079
        %v3081 = vpop.xlane.xlu0 %3080
        %v3082 = vrcp.pop 256.0
        %v3083 = vmul.f32 %v3072, %v3082
        %v3084 = vmul.f32 %v3075, %v3082
        %v3085 = vmul.f32 %v3078, %v3082
        %v3086 = vmul.f32 %v3081, %v3082
        %v3087 = vsub.f32 %v3060, %v3083
        %v3088 = vsub.f32 %v3061, %v3083
        %v3089 = vsub.f32 %v3062, %v3084
        %v3090 = vsub.f32 %v3063, %v3084
        %v3091 = vsub.f32 %v3064, %v3085
        %v3092 = vsub.f32 %v3065, %v3085
        %v3093 = vsub.f32 %v3066, %v3086
        %v3094 = vsub.f32 %v3067, %v3086
        %v3095 = vmul.f32 %v3087, %v3087
        %v3096 = vmul.f32 %v3088, %v3088
        %v3097 = vmul.f32 %v3089, %v3089
        %v3098 = vmul.f32 %v3090, %v3090
        %v3099 = vmul.f32 %v3091, %v3091
        %v3100 = vmul.f32 %v3092, %v3092
        %v3101 = vmul.f32 %v3093, %v3093
        %v3102 = vmul.f32 %v3094, %v3094
        %v3103 = vadd.f32 %v3095, %v3096
        %3104 = vadd.xlane.f32.xlu0 %v3103
        %v3105 = vpop.xlane.xlu0 %3104
        %v3106 = vadd.f32 %v3097, %v3098
        %3107 = vadd.xlane.f32.xlu0 %v3106
        %v3108 = vpop.xlane.xlu0 %3107
        %v3109 = vadd.f32 %v3099, %v3100
        %3110 = vadd.xlane.f32.xlu0 %v3109
        %v3111 = vpop.xlane.xlu0 %3110
        %v3112 = vadd.f32 %v3101, %v3102
        %3113 = vadd.xlane.f32.xlu0 %v3112
        %v3114 = vpop.xlane.xlu0 %3113
        %v3115 = vmul.f32 %v3105, %v3082
        %v3116 = vmul.f32 %v3108, %v3082
        %v3117 = vmul.f32 %v3111, %v3082
        %v3118 = vmul.f32 %v3114, %v3082
        %v3119 = vadd.f32 %v3115, 1e-12
        %v3120 = vadd.f32 %v3116, 1e-12
        %v3121 = vadd.f32 %v3117, 1e-12
        %v3122 = vadd.f32 %v3118, 1e-12
        %v3123 = vrsqrt.pop %v3119
        %v3124 = vrsqrt.pop %v3120
        %v3125 = vrsqrt.pop %v3121
        %v3126 = vrsqrt.pop %v3122
        %v3127 = vmul.f32 %v3087, %v3123
        %v3128 = vmul.f32 %v3088, %v3123
        %v3129 = vmul.f32 %v3089, %v3124
        %v3130 = vmul.f32 %v3090, %v3124
        %v3131 = vmul.f32 %v3091, %v3125
        %v3132 = vmul.f32 %v3092, %v3125
        %v3133 = vmul.f32 %v3093, %v3126
        %v3134 = vmul.f32 %v3094, %v3126
        %v3136 = vlaneseq
        %v3137 = vshrl.u32 %v3136, 7
        %v3138 = vsub.s32 0, %v3137
        %v3139 = vrot.slane %v3068, %v3138
        %v3140 = vlaneseq
        %v3141 = vshrl.u32 %v3140, 7
        %v3142 = vsub.s32 1, %v3141
        %v3143 = vrot.slane %v3068, %v3142
        %v3146 = vmul.f32 %v3127, %v3139
        %v3147 = vmul.f32 %v3128, %v3143
        %v3148 = vmul.f32 %v3129, %v3139
        %v3149 = vmul.f32 %v3130, %v3143
        %v3150 = vmul.f32 %v3131, %v3139
        %v3151 = vmul.f32 %v3132, %v3143
        %v3152 = vmul.f32 %v3133, %v3139
        %v3153 = vmul.f32 %v3134, %v3143
        %v3155 = vlaneseq
        %v3156 = vshrl.u32 %v3155, 7
        %v3157 = vsub.s32 0, %v3156
        %v3158 = vrot.slane %v3069, %v3157
        %v3159 = vlaneseq
        %v3160 = vshrl.u32 %v3159, 7
        %v3161 = vsub.s32 1, %v3160
        %v3162 = vrot.slane %v3069, %v3161
        %v3165 = vadd.f32 %v3146, %v3158
        %v3166 = vadd.f32 %v3147, %v3162
        %v3167 = vadd.f32 %v3148, %v3158
        %v3168 = vadd.f32 %v3149, %v3162
        %v3169 = vadd.f32 %v3150, %v3158
        %v3170 = vadd.f32 %v3151, %v3162
        %v3171 = vadd.f32 %v3152, %v3158
        %v3172 = vadd.f32 %v3153, %v3162
        %v3173 = vpack.c.bf16 %v3167, %v3165
        %v3174 = vpack.c.bf16 %v3168, %v3166
        %v3175 = vpack.c.bf16 %v3171, %v3169
        %v3176 = vpack.c.bf16 %v3172, %v3170
        %v3177 = vld [vmem:[%s862] sm:$0xff]
        %v3178 = vld [vmem:[%s862 + $0x8] sm:$0xff]
        %v3179 = vld [vmem:[%s862 + $0x10] sm:$0xff]
        %v3180 = vld [vmem:[%s862 + $0x18] sm:$0xff]
        %v3181 = vld [vmem:[%s862 + $0x20] sm:$0xff]
        %v3182 = vld [vmem:[%s862 + $0x28] sm:$0xff]
        %v3183 = vld [vmem:[%s862 + $0x30] sm:$0xff]
        %v3184 = vld [vmem:[%s862 + $0x38] sm:$0xff]
        %v3185 = vld [vmem:[%s862 + $0x40] sm:$0xff]
        %v3186 = vld [vmem:[%s862 + $0x48] sm:$0xff]
        %v3187 = vld [vmem:[%s862 + $0x50] sm:$0xff]
        %v3188 = vld [vmem:[%s862 + $0x58] sm:$0xff]
        %v3189 = vld [vmem:[%s862 + $0x60] sm:$0xff]
        %v3190 = vld [vmem:[%s862 + $0x68] sm:$0xff]
        %v3191 = vld [vmem:[%s862 + $0x70] sm:$0xff]
        %v3192 = vld [vmem:[%s862 + $0x78] sm:$0xff]
        %v3193 = vld [vmem:[%s862 + $0x80] sm:$0xff]
        %v3194 = vld [vmem:[%s862 + $0x88] sm:$0xff]
        %v3195 = vld [vmem:[%s862 + $0x90] sm:$0xff]
        %v3196 = vld [vmem:[%s862 + $0x98] sm:$0xff]
        %v3197 = vld [vmem:[%s862 + $0xa0] sm:$0xff]
        %v3198 = vld [vmem:[%s862 + $0xa8] sm:$0xff]
        %v3199 = vld [vmem:[%s862 + $0xb0] sm:$0xff]
        %v3200 = vld [vmem:[%s862 + $0xb8] sm:$0xff]
        %v3201 = vld [vmem:[%s862 + $0xc0] sm:$0xff]
        %v3202 = vld [vmem:[%s862 + $0xc8] sm:$0xff]
        %v3203 = vld [vmem:[%s862 + $0xd0] sm:$0xff]
        %v3204 = vld [vmem:[%s862 + $0xd8] sm:$0xff]
        %v3205 = vld [vmem:[%s862 + $0xe0] sm:$0xff]
        %v3206 = vld [vmem:[%s862 + $0xe8] sm:$0xff]
        %v3207 = vld [vmem:[%s862 + $0xf0] sm:$0xff]
        %v3208 = vld [vmem:[%s862 + $0xf8] sm:$0xff]
        %v3209 = vld [vmem:[%s862 + $0x100] sm:$0xff]
        %v3210 = vld [vmem:[%s862 + $0x108] sm:$0xff]
        %v3211 = vld [vmem:[%s862 + $0x110] sm:$0xff]
        %v3212 = vld [vmem:[%s862 + $0x118] sm:$0xff]
        %v3213 = vld [vmem:[%s862 + $0x120] sm:$0xff]
        %v3214 = vld [vmem:[%s862 + $0x128] sm:$0xff]
        %v3215 = vld [vmem:[%s862 + $0x130] sm:$0xff]
        %v3216 = vld [vmem:[%s862 + $0x138] sm:$0xff]
        %v3217 = vld [vmem:[%s862 + $0x140] sm:$0xff]
        %v3218 = vld [vmem:[%s862 + $0x148] sm:$0xff]
        %v3219 = vld [vmem:[%s862 + $0x150] sm:$0xff]
        %v3220 = vld [vmem:[%s862 + $0x158] sm:$0xff]
        %v3221 = vld [vmem:[%s862 + $0x160] sm:$0xff]
        %v3222 = vld [vmem:[%s862 + $0x168] sm:$0xff]
        %v3223 = vld [vmem:[%s862 + $0x170] sm:$0xff]
        %v3224 = vld [vmem:[%s862 + $0x178] sm:$0xff]
        %v3225 = vld [vmem:[%s862 + $0x180] sm:$0xff]
        %v3226 = vld [vmem:[%s862 + $0x188] sm:$0xff]
        %v3227 = vld [vmem:[%s862 + $0x190] sm:$0xff]
        %v3228 = vld [vmem:[%s862 + $0x198] sm:$0xff]
        %v3229 = vld [vmem:[%s862 + $0x1a0] sm:$0xff]
        %v3230 = vld [vmem:[%s862 + $0x1a8] sm:$0xff]
        %v3231 = vld [vmem:[%s862 + $0x1b0] sm:$0xff]
        %v3232 = vld [vmem:[%s862 + $0x1b8] sm:$0xff]
        %v3233 = vld [vmem:[%s862 + $0x1c0] sm:$0xff]
        %v3234 = vld [vmem:[%s862 + $0x1c8] sm:$0xff]
        %v3235 = vld [vmem:[%s862 + $0x1d0] sm:$0xff]
        %v3236 = vld [vmem:[%s862 + $0x1d8] sm:$0xff]
        %v3237 = vld [vmem:[%s862 + $0x1e0] sm:$0xff]
        %v3238 = vld [vmem:[%s862 + $0x1e8] sm:$0xff]
        %v3239 = vld [vmem:[%s862 + $0x1f0] sm:$0xff]
        %v3240 = vld [vmem:[%s862 + $0x1f8] sm:$0xff]
        %v3241 = vld [vmem:[%s719] sm:$0xf]
        %v3243 = vlaneseq
        %v3244 = vshrl.u32 %v3243, 7
        %v3245 = vsub.s32 0, %v3244
        %v3246 = vrot.slane %v3241, %v3245
        %v3247 = vlaneseq
        %v3248 = vshrl.u32 %v3247, 7
        %v3249 = vsub.s32 1, %v3248
        %v3250 = vrot.slane %v3241, %v3249
        %v3251 = vlaneseq
        %v3252 = vshrl.u32 %v3251, 7
        %v3253 = vsub.s32 2, %v3252
        %v3254 = vrot.slane %v3241, %v3253
        %v3255 = vlaneseq
        %v3256 = vshrl.u32 %v3255, 7
        %v3257 = vsub.s32 3, %v3256
        %v3258 = vrot.slane %v3241, %v3257
        %v3327 = vunpack.c.l.b16 %v3177
        %v3328 = vunpack.c.h.b16 %v3177
        %v3329 = vunpack.c.l.b16 %v3178
        %v3330 = vunpack.c.h.b16 %v3178
        %v3331 = vunpack.c.l.b16 %v3179
        %v3332 = vunpack.c.h.b16 %v3179
        %v3333 = vunpack.c.l.b16 %v3180
        %v3334 = vunpack.c.h.b16 %v3180
        %v3335 = vunpack.c.l.b16 %v3181
        %v3336 = vunpack.c.h.b16 %v3181
        %v3337 = vunpack.c.l.b16 %v3182
        %v3338 = vunpack.c.h.b16 %v3182
        %v3339 = vunpack.c.l.b16 %v3183
        %v3340 = vunpack.c.h.b16 %v3183
        %v3341 = vunpack.c.l.b16 %v3184
        %v3342 = vunpack.c.h.b16 %v3184
        %v3343 = vunpack.c.l.b16 %v3185
        %v3344 = vunpack.c.h.b16 %v3185
        %v3345 = vunpack.c.l.b16 %v3186
        %v3346 = vunpack.c.h.b16 %v3186
        %v3347 = vunpack.c.l.b16 %v3187
        %v3348 = vunpack.c.h.b16 %v3187
        %v3349 = vunpack.c.l.b16 %v3188
        %v3350 = vunpack.c.h.b16 %v3188
        %v3351 = vunpack.c.l.b16 %v3189
        %v3352 = vunpack.c.h.b16 %v3189
        %v3353 = vunpack.c.l.b16 %v3190
        %v3354 = vunpack.c.h.b16 %v3190
        %v3355 = vunpack.c.l.b16 %v3191
        %v3356 = vunpack.c.h.b16 %v3191
        %v3357 = vunpack.c.l.b16 %v3192
        %v3358 = vunpack.c.h.b16 %v3192
        %v3359 = vunpack.c.l.b16 %v3193
        %v3360 = vunpack.c.h.b16 %v3193
        %v3361 = vunpack.c.l.b16 %v3194
        %v3362 = vunpack.c.h.b16 %v3194
        %v3363 = vunpack.c.l.b16 %v3195
        %v3364 = vunpack.c.h.b16 %v3195
        %v3365 = vunpack.c.l.b16 %v3196
        %v3366 = vunpack.c.h.b16 %v3196
        %v3367 = vunpack.c.l.b16 %v3197
        %v3368 = vunpack.c.h.b16 %v3197
        %v3369 = vunpack.c.l.b16 %v3198
        %v3370 = vunpack.c.h.b16 %v3198
        %v3371 = vunpack.c.l.b16 %v3199
        %v3372 = vunpack.c.h.b16 %v3199
        %v3373 = vunpack.c.l.b16 %v3200
        %v3374 = vunpack.c.h.b16 %v3200
        %v3375 = vunpack.c.l.b16 %v3201
        %v3376 = vunpack.c.h.b16 %v3201
        %v3377 = vunpack.c.l.b16 %v3202
        %v3378 = vunpack.c.h.b16 %v3202
        %v3379 = vunpack.c.l.b16 %v3203
        %v3380 = vunpack.c.h.b16 %v3203
        %v3381 = vunpack.c.l.b16 %v3204
        %v3382 = vunpack.c.h.b16 %v3204
        %v3383 = vunpack.c.l.b16 %v3205
        %v3384 = vunpack.c.h.b16 %v3205
        %v3385 = vunpack.c.l.b16 %v3206
        %v3386 = vunpack.c.h.b16 %v3206
        %v3387 = vunpack.c.l.b16 %v3207
        %v3388 = vunpack.c.h.b16 %v3207
        %v3389 = vunpack.c.l.b16 %v3208
        %v3390 = vunpack.c.h.b16 %v3208
        %v3391 = vunpack.c.l.b16 %v3209
        %v3392 = vunpack.c.h.b16 %v3209
        %v3393 = vunpack.c.l.b16 %v3210
        %v3394 = vunpack.c.h.b16 %v3210
        %v3395 = vunpack.c.l.b16 %v3211
        %v3396 = vunpack.c.h.b16 %v3211
        %v3397 = vunpack.c.l.b16 %v3212
        %v3398 = vunpack.c.h.b16 %v3212
        %v3399 = vunpack.c.l.b16 %v3213
        %v3400 = vunpack.c.h.b16 %v3213
        %v3401 = vunpack.c.l.b16 %v3214
        %v3402 = vunpack.c.h.b16 %v3214
        %v3403 = vunpack.c.l.b16 %v3215
        %v3404 = vunpack.c.h.b16 %v3215
        %v3405 = vunpack.c.l.b16 %v3216
        %v3406 = vunpack.c.h.b16 %v3216
        %v3407 = vunpack.c.l.b16 %v3217
        %v3408 = vunpack.c.h.b16 %v3217
        %v3409 = vunpack.c.l.b16 %v3218
        %v3410 = vunpack.c.h.b16 %v3218
        %v3411 = vunpack.c.l.b16 %v3219
        %v3412 = vunpack.c.h.b16 %v3219
        %v3413 = vunpack.c.l.b16 %v3220
        %v3414 = vunpack.c.h.b16 %v3220
        %v3415 = vunpack.c.l.b16 %v3221
        %v3416 = vunpack.c.h.b16 %v3221
        %v3417 = vunpack.c.l.b16 %v3222
        %v3418 = vunpack.c.h.b16 %v3222
        %v3419 = vunpack.c.l.b16 %v3223
        %v3420 = vunpack.c.h.b16 %v3223
        %v3421 = vunpack.c.l.b16 %v3224
        %v3422 = vunpack.c.h.b16 %v3224
        %v3423 = vunpack.c.l.b16 %v3225
        %v3424 = vunpack.c.h.b16 %v3225
        %v3425 = vunpack.c.l.b16 %v3226
        %v3426 = vunpack.c.h.b16 %v3226
        %v3427 = vunpack.c.l.b16 %v3227
        %v3428 = vunpack.c.h.b16 %v3227
        %v3429 = vunpack.c.l.b16 %v3228
        %v3430 = vunpack.c.h.b16 %v3228
        %v3431 = vunpack.c.l.b16 %v3229
        %v3432 = vunpack.c.h.b16 %v3229
        %v3433 = vunpack.c.l.b16 %v3230
        %v3434 = vunpack.c.h.b16 %v3230
        %v3435 = vunpack.c.l.b16 %v3231
        %v3436 = vunpack.c.h.b16 %v3231
        %v3437 = vunpack.c.l.b16 %v3232
        %v3438 = vunpack.c.h.b16 %v3232
        %v3439 = vunpack.c.l.b16 %v3233
        %v3440 = vunpack.c.h.b16 %v3233
        %v3441 = vunpack.c.l.b16 %v3234
        %v3442 = vunpack.c.h.b16 %v3234
        %v3443 = vunpack.c.l.b16 %v3235
        %v3444 = vunpack.c.h.b16 %v3235
        %v3445 = vunpack.c.l.b16 %v3236
        %v3446 = vunpack.c.h.b16 %v3236
        %v3447 = vunpack.c.l.b16 %v3237
        %v3448 = vunpack.c.h.b16 %v3237
        %v3449 = vunpack.c.l.b16 %v3238
        %v3450 = vunpack.c.h.b16 %v3238
        %v3451 = vunpack.c.l.b16 %v3239
        %v3452 = vunpack.c.h.b16 %v3239
        %v3453 = vunpack.c.l.b16 %v3240
        %v3454 = vunpack.c.h.b16 %v3240
        %v3455 = vpack.c.b16 %v3331, %v3327
        %v3456 = vpack.c.b16 %v3332, %v3328
        %v3457 = vpack.c.b16 %v3333, %v3329
        %v3458 = vpack.c.b16 %v3334, %v3330
        %v3459 = vpack.c.b16 %v3339, %v3335
        %v3460 = vpack.c.b16 %v3340, %v3336
        %v3461 = vpack.c.b16 %v3341, %v3337
        %v3462 = vpack.c.b16 %v3342, %v3338
        %v3463 = vpack.c.b16 %v3347, %v3343
        %v3464 = vpack.c.b16 %v3348, %v3344
        %v3465 = vpack.c.b16 %v3349, %v3345
        %v3466 = vpack.c.b16 %v3350, %v3346
        %v3467 = vpack.c.b16 %v3355, %v3351
        %v3468 = vpack.c.b16 %v3356, %v3352
        %v3469 = vpack.c.b16 %v3357, %v3353
        %v3470 = vpack.c.b16 %v3358, %v3354
        %v3471 = vpack.c.b16 %v3363, %v3359
        %v3472 = vpack.c.b16 %v3364, %v3360
        %v3473 = vpack.c.b16 %v3365, %v3361
        %v3474 = vpack.c.b16 %v3366, %v3362
        %v3475 = vpack.c.b16 %v3371, %v3367
        %v3476 = vpack.c.b16 %v3372, %v3368
        %v3477 = vpack.c.b16 %v3373, %v3369
        %v3478 = vpack.c.b16 %v3374, %v3370
        %v3479 = vpack.c.b16 %v3379, %v3375
        %v3480 = vpack.c.b16 %v3380, %v3376
        %v3481 = vpack.c.b16 %v3381, %v3377
        %v3482 = vpack.c.b16 %v3382, %v3378
        %v3483 = vpack.c.b16 %v3387, %v3383
        %v3484 = vpack.c.b16 %v3388, %v3384
        %v3485 = vpack.c.b16 %v3389, %v3385
        %v3486 = vpack.c.b16 %v3390, %v3386
        %v3487 = vpack.c.b16 %v3395, %v3391
        %v3488 = vpack.c.b16 %v3396, %v3392
        %v3489 = vpack.c.b16 %v3397, %v3393
        %v3490 = vpack.c.b16 %v3398, %v3394
        %v3491 = vpack.c.b16 %v3403, %v3399
        %v3492 = vpack.c.b16 %v3404, %v3400
        %v3493 = vpack.c.b16 %v3405, %v3401
        %v3494 = vpack.c.b16 %v3406, %v3402
        %v3495 = vpack.c.b16 %v3411, %v3407
        %v3496 = vpack.c.b16 %v3412, %v3408
        %v3497 = vpack.c.b16 %v3413, %v3409
        %v3498 = vpack.c.b16 %v3414, %v3410
        %v3499 = vpack.c.b16 %v3419, %v3415
        %v3500 = vpack.c.b16 %v3420, %v3416
        %v3501 = vpack.c.b16 %v3421, %v3417
        %v3502 = vpack.c.b16 %v3422, %v3418
        %v3503 = vpack.c.b16 %v3427, %v3423
        %v3504 = vpack.c.b16 %v3428, %v3424
        %v3505 = vpack.c.b16 %v3429, %v3425
        %v3506 = vpack.c.b16 %v3430, %v3426
        %v3507 = vpack.c.b16 %v3435, %v3431
        %v3508 = vpack.c.b16 %v3436, %v3432
        %v3509 = vpack.c.b16 %v3437, %v3433
        %v3510 = vpack.c.b16 %v3438, %v3434
        %v3511 = vpack.c.b16 %v3443, %v3439
        %v3512 = vpack.c.b16 %v3444, %v3440
        %v3513 = vpack.c.b16 %v3445, %v3441
        %v3514 = vpack.c.b16 %v3446, %v3442
        %v3515 = vpack.c.b16 %v3451, %v3447
        %v3516 = vpack.c.b16 %v3452, %v3448
        %v3517 = vpack.c.b16 %v3453, %v3449
        %v3518 = vpack.c.b16 %v3454, %v3450
        %3583 = vmatprep.subr.bf16.mxu0 %v3484
        %3584 = vmatpush1.bf16.msra.mxu0 %v3483
        %3585 = vmatprep.subr.bf16.mxu0 %v3480
        %3586 = vmatpush1.bf16.msra.mxu0 %v3479
        %3587 = vmatprep.subr.bf16.mxu0 %v3476
        %3588 = vmatpush1.bf16.msra.mxu0 %v3475
        %3589 = vmatprep.subr.bf16.mxu0 %v3472
        %3590 = vmatpush1.bf16.msra.mxu0 %v3471
        %3591 = vmatprep.subr.bf16.mxu0 %v3468
        %3592 = vmatpush1.bf16.msra.mxu0 %v3467
        %3593 = vmatprep.subr.bf16.mxu0 %v3464
        %3594 = vmatpush1.bf16.msra.mxu0 %v3463
        %3595 = vmatprep.subr.bf16.mxu0 %v3460
        %3596 = vmatpush1.bf16.msra.mxu0 %v3459
        %3597 = vmatprep.subr.bf16.mxu0 %v3456
        %3598 = vmatpush1.bf16.msra.mxu0 %v3455
        %3599 = vmatprep.subr.bf16.mxu0 %v3516
        %3600 = vmatpush2.bf16.msra.mxu0 %v3515
        %3601 = vmatprep.subr.bf16.mxu0 %v3512
        %3602 = vmatpush2.bf16.msra.mxu0 %v3511
        %3603 = vmatprep.subr.bf16.mxu0 %v3508
        %3604 = vmatpush2.bf16.msra.mxu0 %v3507
        %3605 = vmatprep.subr.bf16.mxu0 %v3504
        %3606 = vmatpush2.bf16.msra.mxu0 %v3503
        %3607 = vmatprep.subr.bf16.mxu0 %v3500
        %3608 = vmatpush2.bf16.msra.mxu0 %v3499
        %3609 = vmatprep.subr.bf16.mxu0 %v3496
        %3610 = vmatpush2.bf16.msra.mxu0 %v3495
        %3611 = vmatprep.subr.bf16.mxu0 %v3492
        %3612 = vmatpush2.bf16.msra.mxu0 %v3491
        %3613 = vmatprep.subr.bf16.mxu0 %v3488
        %3614 = vmatpush2.bf16.msra.mxu0 %v3487
        %3615 = vmatprep.mubr.bf16.mxu0 %v3174
        %3616 = vmatmul.mubr.bf16.gmra.mxu0 %v3173
        %v3617 = vpop.f32.mrf.mxu0
        %v3618 = vadd.f32 %v3246, %v3617
        %v3619 = vpop.f32.mrf.mxu0
        %v3620 = vadd.f32 %v3250, %v3619
        %v3621 = vpop.f32.mrf.mxu0
        %v3622 = vadd.f32 %v3246, %v3621
        %v3623 = vpop.f32.mrf.mxu0
        %v3624 = vadd.f32 %v3250, %v3623
        %3625 = vmatprep.mubr.bf16.mxu0 %v3176
        %3626 = vmatmul.mubr.bf16.gmra.mxu0 %v3175
        %v3627 = vpop.f32.mrf.mxu0
        %v3628 = vadd.f32 %v3246, %v3627
        %v3629 = vpop.f32.mrf.mxu0
        %v3630 = vadd.f32 %v3250, %v3629
        %v3631 = vpop.f32.mrf.mxu0
        %v3632 = vadd.f32 %v3246, %v3631
        %v3633 = vpop.f32.mrf.mxu0
        %v3634 = vadd.f32 %v3250, %v3633
        %3635 = vdwg.mxu0
        %3636 = vmatprep.subr.bf16.mxu0 %v3486
        %3637 = vmatpush1.bf16.msra.mxu0 %v3485
        %3638 = vmatprep.subr.bf16.mxu0 %v3482
        %3639 = vmatpush1.bf16.msra.mxu0 %v3481
        %3640 = vmatprep.subr.bf16.mxu0 %v3478
        %3641 = vmatpush1.bf16.msra.mxu0 %v3477
        %3642 = vmatprep.subr.bf16.mxu0 %v3474
        %3643 = vmatpush1.bf16.msra.mxu0 %v3473
        %3644 = vmatprep.subr.bf16.mxu0 %v3470
        %3645 = vmatpush1.bf16.msra.mxu0 %v3469
        %3646 = vmatprep.subr.bf16.mxu0 %v3466
        %3647 = vmatpush1.bf16.msra.mxu0 %v3465
        %3648 = vmatprep.subr.bf16.mxu0 %v3462
        %3649 = vmatpush1.bf16.msra.mxu0 %v3461
        %3650 = vmatprep.subr.bf16.mxu0 %v3458
        %3651 = vmatpush1.bf16.msra.mxu0 %v3457
        %3652 = vmatprep.subr.bf16.mxu0 %v3518
        %3653 = vmatpush2.bf16.msra.mxu0 %v3517
        %3654 = vmatprep.subr.bf16.mxu0 %v3514
        %3655 = vmatpush2.bf16.msra.mxu0 %v3513
        %3656 = vmatprep.subr.bf16.mxu0 %v3510
        %3657 = vmatpush2.bf16.msra.mxu0 %v3509
        %3658 = vmatprep.subr.bf16.mxu0 %v3506
        %3659 = vmatpush2.bf16.msra.mxu0 %v3505
        %3660 = vmatprep.subr.bf16.mxu0 %v3502
        %3661 = vmatpush2.bf16.msra.mxu0 %v3501
        %3662 = vmatprep.subr.bf16.mxu0 %v3498
        %3663 = vmatpush2.bf16.msra.mxu0 %v3497
        %3664 = vmatprep.subr.bf16.mxu0 %v3494
        %3665 = vmatpush2.bf16.msra.mxu0 %v3493
        %3666 = vmatprep.subr.bf16.mxu0 %v3490
        %3667 = vmatpush2.bf16.msra.mxu0 %v3489
        %3668 = vmatprep.mubr.bf16.mxu0 %v3174
        %3669 = vmatmul.mubr.bf16.gmra.mxu0 %v3173
        %v3670 = vpop.f32.mrf.mxu0
        %v3671 = vadd.f32 %v3254, %v3670
        %v3672 = vpop.f32.mrf.mxu0
        %v3673 = vadd.f32 %v3258, %v3672
        %v3674 = vpop.f32.mrf.mxu0
        %v3675 = vadd.f32 %v3254, %v3674
        %v3676 = vpop.f32.mrf.mxu0
        %v3677 = vadd.f32 %v3258, %v3676
        %3678 = vmatprep.mubr.bf16.mxu0 %v3176
        %3679 = vmatmul.mubr.bf16.gmra.mxu0 %v3175
        %v3680 = vpop.f32.mrf.mxu0
        %v3681 = vadd.f32 %v3254, %v3680
        %v3682 = vpop.f32.mrf.mxu0
        %v3683 = vadd.f32 %v3258, %v3682
        %v3684 = vpop.f32.mrf.mxu0
        %v3685 = vadd.f32 %v3254, %v3684
        %v3686 = vpop.f32.mrf.mxu0
        %v3687 = vadd.f32 %v3258, %v3686
        %3688 = vdwg.mxu0
        %v3689 = vmul.f32 %v3618, %v3618
        %v3690 = vmul.f32 %v3620, %v3620
        %v3691 = vmul.f32 %v3671, %v3671
        %v3692 = vmul.f32 %v3673, %v3673
        %v3693 = vmul.f32 %v3622, %v3622
        %v3694 = vmul.f32 %v3624, %v3624
        %v3695 = vmul.f32 %v3675, %v3675
        %v3696 = vmul.f32 %v3677, %v3677
        %v3697 = vmul.f32 %v3628, %v3628
        %v3698 = vmul.f32 %v3630, %v3630
        %v3699 = vmul.f32 %v3681, %v3681
        %v3700 = vmul.f32 %v3683, %v3683
        %v3701 = vmul.f32 %v3632, %v3632
        %v3702 = vmul.f32 %v3634, %v3634
        %v3703 = vmul.f32 %v3685, %v3685
        %v3704 = vmul.f32 %v3687, %v3687
        %v3705 = vmul.f32 %v3618, %v3689
        %v3706 = vmul.f32 %v3620, %v3690
        %v3707 = vmul.f32 %v3671, %v3691
        %v3708 = vmul.f32 %v3673, %v3692
        %v3709 = vmul.f32 %v3622, %v3693
        %v3710 = vmul.f32 %v3624, %v3694
        %v3711 = vmul.f32 %v3675, %v3695
        %v3712 = vmul.f32 %v3677, %v3696
        %v3713 = vmul.f32 %v3628, %v3697
        %v3714 = vmul.f32 %v3630, %v3698
        %v3715 = vmul.f32 %v3681, %v3699
        %v3716 = vmul.f32 %v3683, %v3700
        %v3717 = vmul.f32 %v3632, %v3701
        %v3718 = vmul.f32 %v3634, %v3702
        %v3719 = vmul.f32 %v3685, %v3703
        %v3720 = vmul.f32 %v3687, %v3704
        %v3721 = vmul.f32 %v3705, 0.044715
        %v3722 = vmul.f32 %v3706, 0.044715
        %v3723 = vmul.f32 %v3707, 0.044715
        %v3724 = vmul.f32 %v3708, 0.044715
        %v3725 = vmul.f32 %v3709, 0.044715
        %v3726 = vmul.f32 %v3710, 0.044715
        %v3727 = vmul.f32 %v3711, 0.044715
        %v3728 = vmul.f32 %v3712, 0.044715
        %v3729 = vmul.f32 %v3713, 0.044715
        %v3730 = vmul.f32 %v3714, 0.044715
        %v3731 = vmul.f32 %v3715, 0.044715
        %v3732 = vmul.f32 %v3716, 0.044715
        %v3733 = vmul.f32 %v3717, 0.044715
        %v3734 = vmul.f32 %v3718, 0.044715
        %v3735 = vmul.f32 %v3719, 0.044715
        %v3736 = vmul.f32 %v3720, 0.044715
        %v3737 = vadd.f32 %v3618, %v3721
        %v3738 = vadd.f32 %v3620, %v3722
        %v3739 = vadd.f32 %v3671, %v3723
        %v3740 = vadd.f32 %v3673, %v3724
        %v3741 = vadd.f32 %v3622, %v3725
        %v3742 = vadd.f32 %v3624, %v3726
        %v3743 = vadd.f32 %v3675, %v3727
        %v3744 = vadd.f32 %v3677, %v3728
        %v3745 = vadd.f32 %v3628, %v3729
        %v3746 = vadd.f32 %v3630, %v3730
        %v3747 = vadd.f32 %v3681, %v3731
        %v3748 = vadd.f32 %v3683, %v3732
        %v3749 = vadd.f32 %v3632, %v3733
        %v3750 = vadd.f32 %v3634, %v3734
        %v3751 = vadd.f32 %v3685, %v3735
        %v3752 = vadd.f32 %v3687, %v3736
        %v3753 = vmul.f32 %v3737, 0.7978846
        %v3754 = vmul.f32 %v3738, 0.7978846
        %v3755 = vmul.f32 %v3739, 0.7978846
        %v3756 = vmul.f32 %v3740, 0.7978846
        %v3757 = vmul.f32 %v3741, 0.7978846
        %v3758 = vmul.f32 %v3742, 0.7978846
        %v3759 = vmul.f32 %v3743, 0.7978846
        %v3760 = vmul.f32 %v3744, 0.7978846
        %v3761 = vmul.f32 %v3745, 0.7978846
        %v3762 = vmul.f32 %v3746, 0.7978846
        %v3763 = vmul.f32 %v3747, 0.7978846
        %v3764 = vmul.f32 %v3748, 0.7978846
        %v3765 = vmul.f32 %v3749, 0.7978846
        %v3766 = vmul.f32 %v3750, 0.7978846
        %v3767 = vmul.f32 %v3751, 0.7978846
        %v3768 = vmul.f32 %v3752, 0.7978846
        %v3769 = vtanh.pop %v3753
        %v3770 = vtanh.pop %v3754
        %v3771 = vtanh.pop %v3755
        %v3772 = vtanh.pop %v3756
        %v3773 = vtanh.pop %v3757
        %v3774 = vtanh.pop %v3758
        %v3775 = vtanh.pop %v3759
        %v3776 = vtanh.pop %v3760
        %v3777 = vtanh.pop %v3761
        %v3778 = vtanh.pop %v3762
        %v3779 = vtanh.pop %v3763
        %v3780 = vtanh.pop %v3764
        %v3781 = vtanh.pop %v3765
        %v3782 = vtanh.pop %v3766
        %v3783 = vtanh.pop %v3767
        %v3784 = vtanh.pop %v3768
        %v3785 = vadd.f32 %v3769, 1.0
        %v3786 = vadd.f32 %v3770, 1.0
        %v3787 = vadd.f32 %v3771, 1.0
        %v3788 = vadd.f32 %v3772, 1.0
        %v3789 = vadd.f32 %v3773, 1.0
        %v3790 = vadd.f32 %v3774, 1.0
        %v3791 = vadd.f32 %v3775, 1.0
        %v3792 = vadd.f32 %v3776, 1.0
        %v3793 = vadd.f32 %v3777, 1.0
        %v3794 = vadd.f32 %v3778, 1.0
        %v3795 = vadd.f32 %v3779, 1.0
        %v3796 = vadd.f32 %v3780, 1.0
        %v3797 = vadd.f32 %v3781, 1.0
        %v3798 = vadd.f32 %v3782, 1.0
        %v3799 = vadd.f32 %v3783, 1.0
        %v3800 = vadd.f32 %v3784, 1.0
        %v3801 = vmul.f32 %v3785, 0.5
        %v3802 = vmul.f32 %v3786, 0.5
        %v3803 = vmul.f32 %v3787, 0.5
        %v3804 = vmul.f32 %v3788, 0.5
        %v3805 = vmul.f32 %v3789, 0.5
        %v3806 = vmul.f32 %v3790, 0.5
        %v3807 = vmul.f32 %v3791, 0.5
        %v3808 = vmul.f32 %v3792, 0.5
        %v3809 = vmul.f32 %v3793, 0.5
        %v3810 = vmul.f32 %v3794, 0.5
        %v3811 = vmul.f32 %v3795, 0.5
        %v3812 = vmul.f32 %v3796, 0.5
        %v3813 = vmul.f32 %v3797, 0.5
        %v3814 = vmul.f32 %v3798, 0.5
        %v3815 = vmul.f32 %v3799, 0.5
        %v3816 = vmul.f32 %v3800, 0.5
        %v3817 = vmul.f32 %v3618, %v3801
        %v3818 = vmul.f32 %v3620, %v3802
        %v3819 = vmul.f32 %v3671, %v3803
        %v3820 = vmul.f32 %v3673, %v3804
        %v3821 = vmul.f32 %v3622, %v3805
        %v3822 = vmul.f32 %v3624, %v3806
        %v3823 = vmul.f32 %v3675, %v3807
        %v3824 = vmul.f32 %v3677, %v3808
        %v3825 = vmul.f32 %v3628, %v3809
        %v3826 = vmul.f32 %v3630, %v3810
        %v3827 = vmul.f32 %v3681, %v3811
        %v3828 = vmul.f32 %v3683, %v3812
        %v3829 = vmul.f32 %v3632, %v3813
        %v3830 = vmul.f32 %v3634, %v3814
        %v3831 = vmul.f32 %v3685, %v3815
        %v3832 = vmul.f32 %v3687, %v3816
        %v3833 = vpack.c.bf16 %v3821, %v3817
        %v3834 = vpack.c.bf16 %v3822, %v3818
        %v3835 = vpack.c.bf16 %v3823, %v3819
        %v3836 = vpack.c.bf16 %v3824, %v3820
        %v3837 = vpack.c.bf16 %v3829, %v3825
        %v3838 = vpack.c.bf16 %v3830, %v3826
        %v3839 = vpack.c.bf16 %v3831, %v3827
        %v3840 = vpack.c.bf16 %v3832, %v3828
        %v3841 = vld [vmem:[%s728] sm:$0xff]
        %v3842 = vld [vmem:[%s728 + $0x8] sm:$0xff]
        %v3843 = vld [vmem:[%s728 + $0x10] sm:$0xff]
        %v3844 = vld [vmem:[%s728 + $0x18] sm:$0xff]
        %v3845 = vld [vmem:[%s728 + $0x20] sm:$0xff]
        %v3846 = vld [vmem:[%s728 + $0x28] sm:$0xff]
        %v3847 = vld [vmem:[%s728 + $0x30] sm:$0xff]
        %v3848 = vld [vmem:[%s728 + $0x38] sm:$0xff]
        %v3849 = vld [vmem:[%s728 + $0x40] sm:$0xff]
        %v3850 = vld [vmem:[%s728 + $0x48] sm:$0xff]
        %v3851 = vld [vmem:[%s728 + $0x50] sm:$0xff]
        %v3852 = vld [vmem:[%s728 + $0x58] sm:$0xff]
        %v3853 = vld [vmem:[%s728 + $0x60] sm:$0xff]
        %v3854 = vld [vmem:[%s728 + $0x68] sm:$0xff]
        %v3855 = vld [vmem:[%s728 + $0x70] sm:$0xff]
        %v3856 = vld [vmem:[%s728 + $0x78] sm:$0xff]
        %v3857 = vld [vmem:[%s728 + $0x80] sm:$0xff]
        %v3858 = vld [vmem:[%s728 + $0x88] sm:$0xff]
        %v3859 = vld [vmem:[%s728 + $0x90] sm:$0xff]
        %v3860 = vld [vmem:[%s728 + $0x98] sm:$0xff]
        %v3861 = vld [vmem:[%s728 + $0xa0] sm:$0xff]
        %v3862 = vld [vmem:[%s728 + $0xa8] sm:$0xff]
        %v3863 = vld [vmem:[%s728 + $0xb0] sm:$0xff]
        %v3864 = vld [vmem:[%s728 + $0xb8] sm:$0xff]
        %v3865 = vld [vmem:[%s728 + $0xc0] sm:$0xff]
        %v3866 = vld [vmem:[%s728 + $0xc8] sm:$0xff]
        %v3867 = vld [vmem:[%s728 + $0xd0] sm:$0xff]
        %v3868 = vld [vmem:[%s728 + $0xd8] sm:$0xff]
        %v3869 = vld [vmem:[%s728 + $0xe0] sm:$0xff]
        %v3870 = vld [vmem:[%s728 + $0xe8] sm:$0xff]
        %v3871 = vld [vmem:[%s728 + $0xf0] sm:$0xff]
        %v3872 = vld [vmem:[%s728 + $0xf8] sm:$0xff]
        %v3873 = vld [vmem:[%s728 + $0x100] sm:$0xff]
        %v3874 = vld [vmem:[%s728 + $0x108] sm:$0xff]
        %v3875 = vld [vmem:[%s728 + $0x110] sm:$0xff]
        %v3876 = vld [vmem:[%s728 + $0x118] sm:$0xff]
        %v3877 = vld [vmem:[%s728 + $0x120] sm:$0xff]
        %v3878 = vld [vmem:[%s728 + $0x128] sm:$0xff]
        %v3879 = vld [vmem:[%s728 + $0x130] sm:$0xff]
        %v3880 = vld [vmem:[%s728 + $0x138] sm:$0xff]
        %v3881 = vld [vmem:[%s728 + $0x140] sm:$0xff]
        %v3882 = vld [vmem:[%s728 + $0x148] sm:$0xff]
        %v3883 = vld [vmem:[%s728 + $0x150] sm:$0xff]
        %v3884 = vld [vmem:[%s728 + $0x158] sm:$0xff]
        %v3885 = vld [vmem:[%s728 + $0x160] sm:$0xff]
        %v3886 = vld [vmem:[%s728 + $0x168] sm:$0xff]
        %v3887 = vld [vmem:[%s728 + $0x170] sm:$0xff]
        %v3888 = vld [vmem:[%s728 + $0x178] sm:$0xff]
        %v3889 = vld [vmem:[%s728 + $0x180] sm:$0xff]
        %v3890 = vld [vmem:[%s728 + $0x188] sm:$0xff]
        %v3891 = vld [vmem:[%s728 + $0x190] sm:$0xff]
        %v3892 = vld [vmem:[%s728 + $0x198] sm:$0xff]
        %v3893 = vld [vmem:[%s728 + $0x1a0] sm:$0xff]
        %v3894 = vld [vmem:[%s728 + $0x1a8] sm:$0xff]
        %v3895 = vld [vmem:[%s728 + $0x1b0] sm:$0xff]
        %v3896 = vld [vmem:[%s728 + $0x1b8] sm:$0xff]
        %v3897 = vld [vmem:[%s728 + $0x1c0] sm:$0xff]
        %v3898 = vld [vmem:[%s728 + $0x1c8] sm:$0xff]
        %v3899 = vld [vmem:[%s728 + $0x1d0] sm:$0xff]
        %v3900 = vld [vmem:[%s728 + $0x1d8] sm:$0xff]
        %v3901 = vld [vmem:[%s728 + $0x1e0] sm:$0xff]
        %v3902 = vld [vmem:[%s728 + $0x1e8] sm:$0xff]
        %v3903 = vld [vmem:[%s728 + $0x1f0] sm:$0xff]
        %v3904 = vld [vmem:[%s728 + $0x1f8] sm:$0xff]
        %v3905 = vld [vmem:[%s737] sm:$0x3]
        %v3907 = vlaneseq
        %v3908 = vshrl.u32 %v3907, 7
        %v3909 = vsub.s32 0, %v3908
        %v3910 = vrot.slane %v3905, %v3909
        %v3911 = vlaneseq
        %v3912 = vshrl.u32 %v3911, 7
        %v3913 = vsub.s32 1, %v3912
        %v3914 = vrot.slane %v3905, %v3913
        %v3981 = vunpack.c.l.b16 %v3841
        %v3982 = vunpack.c.h.b16 %v3841
        %v3983 = vunpack.c.l.b16 %v3842
        %v3984 = vunpack.c.h.b16 %v3842
        %v3985 = vunpack.c.l.b16 %v3843
        %v3986 = vunpack.c.h.b16 %v3843
        %v3987 = vunpack.c.l.b16 %v3844
        %v3988 = vunpack.c.h.b16 %v3844
        %v3989 = vunpack.c.l.b16 %v3845
        %v3990 = vunpack.c.h.b16 %v3845
        %v3991 = vunpack.c.l.b16 %v3846
        %v3992 = vunpack.c.h.b16 %v3846
        %v3993 = vunpack.c.l.b16 %v3847
        %v3994 = vunpack.c.h.b16 %v3847
        %v3995 = vunpack.c.l.b16 %v3848
        %v3996 = vunpack.c.h.b16 %v3848
        %v3997 = vunpack.c.l.b16 %v3849
        %v3998 = vunpack.c.h.b16 %v3849
        %v3999 = vunpack.c.l.b16 %v3850
        %v4000 = vunpack.c.h.b16 %v3850
        %v4001 = vunpack.c.l.b16 %v3851
        %v4002 = vunpack.c.h.b16 %v3851
        %v4003 = vunpack.c.l.b16 %v3852
        %v4004 = vunpack.c.h.b16 %v3852
        %v4005 = vunpack.c.l.b16 %v3853
        %v4006 = vunpack.c.h.b16 %v3853
        %v4007 = vunpack.c.l.b16 %v3854
        %v4008 = vunpack.c.h.b16 %v3854
        %v4009 = vunpack.c.l.b16 %v3855
        %v4010 = vunpack.c.h.b16 %v3855
        %v4011 = vunpack.c.l.b16 %v3856
        %v4012 = vunpack.c.h.b16 %v3856
        %v4013 = vunpack.c.l.b16 %v3857
        %v4014 = vunpack.c.h.b16 %v3857
        %v4015 = vunpack.c.l.b16 %v3858
        %v4016 = vunpack.c.h.b16 %v3858
        %v4017 = vunpack.c.l.b16 %v3859
        %v4018 = vunpack.c.h.b16 %v3859
        %v4019 = vunpack.c.l.b16 %v3860
        %v4020 = vunpack.c.h.b16 %v3860
        %v4021 = vunpack.c.l.b16 %v3861
        %v4022 = vunpack.c.h.b16 %v3861
        %v4023 = vunpack.c.l.b16 %v3862
        %v4024 = vunpack.c.h.b16 %v3862
        %v4025 = vunpack.c.l.b16 %v3863
        %v4026 = vunpack.c.h.b16 %v3863
        %v4027 = vunpack.c.l.b16 %v3864
        %v4028 = vunpack.c.h.b16 %v3864
        %v4029 = vunpack.c.l.b16 %v3865
        %v4030 = vunpack.c.h.b16 %v3865
        %v4031 = vunpack.c.l.b16 %v3866
        %v4032 = vunpack.c.h.b16 %v3866
        %v4033 = vunpack.c.l.b16 %v3867
        %v4034 = vunpack.c.h.b16 %v3867
        %v4035 = vunpack.c.l.b16 %v3868
        %v4036 = vunpack.c.h.b16 %v3868
        %v4037 = vunpack.c.l.b16 %v3869
        %v4038 = vunpack.c.h.b16 %v3869
        %v4039 = vunpack.c.l.b16 %v3870
        %v4040 = vunpack.c.h.b16 %v3870
        %v4041 = vunpack.c.l.b16 %v3871
        %v4042 = vunpack.c.h.b16 %v3871
        %v4043 = vunpack.c.l.b16 %v3872
        %v4044 = vunpack.c.h.b16 %v3872
        %v4045 = vunpack.c.l.b16 %v3873
        %v4046 = vunpack.c.h.b16 %v3873
        %v4047 = vunpack.c.l.b16 %v3874
        %v4048 = vunpack.c.h.b16 %v3874
        %v4049 = vunpack.c.l.b16 %v3875
        %v4050 = vunpack.c.h.b16 %v3875
        %v4051 = vunpack.c.l.b16 %v3876
        %v4052 = vunpack.c.h.b16 %v3876
        %v4053 = vunpack.c.l.b16 %v3877
        %v4054 = vunpack.c.h.b16 %v3877
        %v4055 = vunpack.c.l.b16 %v3878
        %v4056 = vunpack.c.h.b16 %v3878
        %v4057 = vunpack.c.l.b16 %v3879
        %v4058 = vunpack.c.h.b16 %v3879
        %v4059 = vunpack.c.l.b16 %v3880
        %v4060 = vunpack.c.h.b16 %v3880
        %v4061 = vunpack.c.l.b16 %v3881
        %v4062 = vunpack.c.h.b16 %v3881
        %v4063 = vunpack.c.l.b16 %v3882
        %v4064 = vunpack.c.h.b16 %v3882
        %v4065 = vunpack.c.l.b16 %v3883
        %v4066 = vunpack.c.h.b16 %v3883
        %v4067 = vunpack.c.l.b16 %v3884
        %v4068 = vunpack.c.h.b16 %v3884
        %v4069 = vunpack.c.l.b16 %v3885
        %v4070 = vunpack.c.h.b16 %v3885
        %v4071 = vunpack.c.l.b16 %v3886
        %v4072 = vunpack.c.h.b16 %v3886
        %v4073 = vunpack.c.l.b16 %v3887
        %v4074 = vunpack.c.h.b16 %v3887
        %v4075 = vunpack.c.l.b16 %v3888
        %v4076 = vunpack.c.h.b16 %v3888
        %v4077 = vunpack.c.l.b16 %v3889
        %v4078 = vunpack.c.h.b16 %v3889
        %v4079 = vunpack.c.l.b16 %v3890
        %v4080 = vunpack.c.h.b16 %v3890
        %v4081 = vunpack.c.l.b16 %v3891
        %v4082 = vunpack.c.h.b16 %v3891
        %v4083 = vunpack.c.l.b16 %v3892
        %v4084 = vunpack.c.h.b16 %v3892
        %v4085 = vunpack.c.l.b16 %v3893
        %v4086 = vunpack.c.h.b16 %v3893
        %v4087 = vunpack.c.l.b16 %v3894
        %v4088 = vunpack.c.h.b16 %v3894
        %v4089 = vunpack.c.l.b16 %v3895
        %v4090 = vunpack.c.h.b16 %v3895
        %v4091 = vunpack.c.l.b16 %v3896
        %v4092 = vunpack.c.h.b16 %v3896
        %v4093 = vunpack.c.l.b16 %v3897
        %v4094 = vunpack.c.h.b16 %v3897
        %v4095 = vunpack.c.l.b16 %v3898
        %v4096 = vunpack.c.h.b16 %v3898
        %v4097 = vunpack.c.l.b16 %v3899
        %v4098 = vunpack.c.h.b16 %v3899
        %v4099 = vunpack.c.l.b16 %v3900
        %v4100 = vunpack.c.h.b16 %v3900
        %v4101 = vunpack.c.l.b16 %v3901
        %v4102 = vunpack.c.h.b16 %v3901
        %v4103 = vunpack.c.l.b16 %v3902
        %v4104 = vunpack.c.h.b16 %v3902
        %v4105 = vunpack.c.l.b16 %v3903
        %v4106 = vunpack.c.h.b16 %v3903
        %v4107 = vunpack.c.l.b16 %v3904
        %v4108 = vunpack.c.h.b16 %v3904
        %v4109 = vpack.c.b16 %v3983, %v3981
        %v4110 = vpack.c.b16 %v3984, %v3982
        %v4111 = vpack.c.b16 %v3987, %v3985
        %v4112 = vpack.c.b16 %v3988, %v3986
        %v4113 = vpack.c.b16 %v3991, %v3989
        %v4114 = vpack.c.b16 %v3992, %v3990
        %v4115 = vpack.c.b16 %v3995, %v3993
        %v4116 = vpack.c.b16 %v3996, %v3994
        %v4117 = vpack.c.b16 %v3999, %v3997
        %v4118 = vpack.c.b16 %v4000, %v3998
        %v4119 = vpack.c.b16 %v4003, %v4001
        %v4120 = vpack.c.b16 %v4004, %v4002
        %v4121 = vpack.c.b16 %v4007, %v4005
        %v4122 = vpack.c.b16 %v4008, %v4006
        %v4123 = vpack.c.b16 %v4011, %v4009
        %v4124 = vpack.c.b16 %v4012, %v4010
        %v4125 = vpack.c.b16 %v4015, %v4013
        %v4126 = vpack.c.b16 %v4016, %v4014
        %v4127 = vpack.c.b16 %v4019, %v4017
        %v4128 = vpack.c.b16 %v4020, %v4018
        %v4129 = vpack.c.b16 %v4023, %v4021
        %v4130 = vpack.c.b16 %v4024, %v4022
        %v4131 = vpack.c.b16 %v4027, %v4025
        %v4132 = vpack.c.b16 %v4028, %v4026
        %v4133 = vpack.c.b16 %v4031, %v4029
        %v4134 = vpack.c.b16 %v4032, %v4030
        %v4135 = vpack.c.b16 %v4035, %v4033
        %v4136 = vpack.c.b16 %v4036, %v4034
        %v4137 = vpack.c.b16 %v4039, %v4037
        %v4138 = vpack.c.b16 %v4040, %v4038
        %v4139 = vpack.c.b16 %v4043, %v4041
        %v4140 = vpack.c.b16 %v4044, %v4042
        %v4141 = vpack.c.b16 %v4047, %v4045
        %v4142 = vpack.c.b16 %v4048, %v4046
        %v4143 = vpack.c.b16 %v4051, %v4049
        %v4144 = vpack.c.b16 %v4052, %v4050
        %v4145 = vpack.c.b16 %v4055, %v4053
        %v4146 = vpack.c.b16 %v4056, %v4054
        %v4147 = vpack.c.b16 %v4059, %v4057
        %v4148 = vpack.c.b16 %v4060, %v4058
        %v4149 = vpack.c.b16 %v4063, %v4061
        %v4150 = vpack.c.b16 %v4064, %v4062
        %v4151 = vpack.c.b16 %v4067, %v4065
        %v4152 = vpack.c.b16 %v4068, %v4066
        %v4153 = vpack.c.b16 %v4071, %v4069
        %v4154 = vpack.c.b16 %v4072, %v4070
        %v4155 = vpack.c.b16 %v4075, %v4073
        %v4156 = vpack.c.b16 %v4076, %v4074
        %v4157 = vpack.c.b16 %v4079, %v4077
        %v4158 = vpack.c.b16 %v4080, %v4078
        %v4159 = vpack.c.b16 %v4083, %v4081
        %v4160 = vpack.c.b16 %v4084, %v4082
        %v4161 = vpack.c.b16 %v4087, %v4085
        %v4162 = vpack.c.b16 %v4088, %v4086
        %v4163 = vpack.c.b16 %v4091, %v4089
        %v4164 = vpack.c.b16 %v4092, %v4090
        %v4165 = vpack.c.b16 %v4095, %v4093
        %v4166 = vpack.c.b16 %v4096, %v4094
        %v4167 = vpack.c.b16 %v4099, %v4097
        %v4168 = vpack.c.b16 %v4100, %v4098
        %v4169 = vpack.c.b16 %v4103, %v4101
        %v4170 = vpack.c.b16 %v4104, %v4102
        %v4171 = vpack.c.b16 %v4107, %v4105
        %v4172 = vpack.c.b16 %v4108, %v4106
        %4237 = vmatprep.subr.bf16.mxu0 %v4124
        %4238 = vmatpush1.bf16.msra.mxu0 %v4123
        %4239 = vmatprep.subr.bf16.mxu0 %v4122
        %4240 = vmatpush1.bf16.msra.mxu0 %v4121
        %4241 = vmatprep.subr.bf16.mxu0 %v4120
        %4242 = vmatpush1.bf16.msra.mxu0 %v4119
        %4243 = vmatprep.subr.bf16.mxu0 %v4118
        %4244 = vmatpush1.bf16.msra.mxu0 %v4117
        %4245 = vmatprep.subr.bf16.mxu0 %v4116
        %4246 = vmatpush1.bf16.msra.mxu0 %v4115
        %4247 = vmatprep.subr.bf16.mxu0 %v4114
        %4248 = vmatpush1.bf16.msra.mxu0 %v4113
        %4249 = vmatprep.subr.bf16.mxu0 %v4112
        %4250 = vmatpush1.bf16.msra.mxu0 %v4111
        %4251 = vmatprep.subr.bf16.mxu0 %v4110
        %4252 = vmatpush1.bf16.msra.mxu0 %v4109
        %4253 = vmatprep.subr.bf16.mxu0 %v4140
        %4254 = vmatpush2.bf16.msra.mxu0 %v4139
        %4255 = vmatprep.subr.bf16.mxu0 %v4138
        %4256 = vmatpush2.bf16.msra.mxu0 %v4137
        %4257 = vmatprep.subr.bf16.mxu0 %v4136
        %4258 = vmatpush2.bf16.msra.mxu0 %v4135
        %4259 = vmatprep.subr.bf16.mxu0 %v4134
        %4260 = vmatpush2.bf16.msra.mxu0 %v4133
        %4261 = vmatprep.subr.bf16.mxu0 %v4132
        %4262 = vmatpush2.bf16.msra.mxu0 %v4131
        %4263 = vmatprep.subr.bf16.mxu0 %v4130
        %4264 = vmatpush2.bf16.msra.mxu0 %v4129
        %4265 = vmatprep.subr.bf16.mxu0 %v4128
        %4266 = vmatpush2.bf16.msra.mxu0 %v4127
        %4267 = vmatprep.subr.bf16.mxu0 %v4126
        %4268 = vmatpush2.bf16.msra.mxu0 %v4125
        %4269 = vmatprep.mubr.bf16.mxu0 %v3834
        %4270 = vmatmul.mubr.bf16.gmra.mxu0 %v3833
        %v4271 = vpop.f32.mrf.mxu0
        %v4272 = vadd.f32 %v3910, %v4271
        %v4273 = vpop.f32.mrf.mxu0
        %v4274 = vadd.f32 %v3914, %v4273
        %v4275 = vpop.f32.mrf.mxu0
        %v4276 = vadd.f32 %v3910, %v4275
        %v4277 = vpop.f32.mrf.mxu0
        %v4278 = vadd.f32 %v3914, %v4277
        %4279 = vmatprep.mubr.bf16.mxu0 %v3838
        %4280 = vmatmul.mubr.bf16.gmra.mxu0 %v3837
        %v4281 = vpop.f32.mrf.mxu0
        %v4282 = vadd.f32 %v3910, %v4281
        %v4283 = vpop.f32.mrf.mxu0
        %v4284 = vadd.f32 %v3914, %v4283
        %v4285 = vpop.f32.mrf.mxu0
        %v4286 = vadd.f32 %v3910, %v4285
        %v4287 = vpop.f32.mrf.mxu0
        %v4288 = vadd.f32 %v3914, %v4287
        %4289 = vdwg.mxu0
        %4290 = vmatprep.subr.bf16.mxu0 %v4156
        %4291 = vmatpush1.bf16.msra.mxu0 %v4155
        %4292 = vmatprep.subr.bf16.mxu0 %v4154
        %4293 = vmatpush1.bf16.msra.mxu0 %v4153
        %4294 = vmatprep.subr.bf16.mxu0 %v4152
        %4295 = vmatpush1.bf16.msra.mxu0 %v4151
        %4296 = vmatprep.subr.bf16.mxu0 %v4150
        %4297 = vmatpush1.bf16.msra.mxu0 %v4149
        %4298 = vmatprep.subr.bf16.mxu0 %v4148
        %4299 = vmatpush1.bf16.msra.mxu0 %v4147
        %4300 = vmatprep.subr.bf16.mxu0 %v4146
        %4301 = vmatpush1.bf16.msra.mxu0 %v4145
        %4302 = vmatprep.subr.bf16.mxu0 %v4144
        %4303 = vmatpush1.bf16.msra.mxu0 %v4143
        %4304 = vmatprep.subr.bf16.mxu0 %v4142
        %4305 = vmatpush1.bf16.msra.mxu0 %v4141
        %4306 = vmatprep.subr.bf16.mxu0 %v4172
        %4307 = vmatpush2.bf16.msra.mxu0 %v4171
        %4308 = vmatprep.subr.bf16.mxu0 %v4170
        %4309 = vmatpush2.bf16.msra.mxu0 %v4169
        %4310 = vmatprep.subr.bf16.mxu0 %v4168
        %4311 = vmatpush2.bf16.msra.mxu0 %v4167
        %4312 = vmatprep.subr.bf16.mxu0 %v4166
        %4313 = vmatpush2.bf16.msra.mxu0 %v4165
        %4314 = vmatprep.subr.bf16.mxu0 %v4164
        %4315 = vmatpush2.bf16.msra.mxu0 %v4163
        %4316 = vmatprep.subr.bf16.mxu0 %v4162
        %4317 = vmatpush2.bf16.msra.mxu0 %v4161
        %4318 = vmatprep.subr.bf16.mxu0 %v4160
        %4319 = vmatpush2.bf16.msra.mxu0 %v4159
        %4320 = vmatprep.subr.bf16.mxu0 %v4158
        %4321 = vmatpush2.bf16.msra.mxu0 %v4157
        %4322 = vmatprep.mubr.bf16.mxu0 %v3836
        %4323 = vmatmul.mubr.bf16.gmra.mxu0 %v3835
        %v4324 = vpop.f32.mrf.mxu0
        %v4325 = vadd.f32 %v4272, %v4324
        %v4326 = vpop.f32.mrf.mxu0
        %v4327 = vadd.f32 %v4274, %v4326
        %v4328 = vpop.f32.mrf.mxu0
        %v4329 = vadd.f32 %v4276, %v4328
        %v4330 = vpop.f32.mrf.mxu0
        %v4331 = vadd.f32 %v4278, %v4330
        %4332 = vmatprep.mubr.bf16.mxu0 %v3840
        %4333 = vmatmul.mubr.bf16.gmra.mxu0 %v3839
        %v4334 = vpop.f32.mrf.mxu0
        %v4335 = vadd.f32 %v4282, %v4334
        %v4336 = vpop.f32.mrf.mxu0
        %v4337 = vadd.f32 %v4284, %v4336
        %v4338 = vpop.f32.mrf.mxu0
        %v4339 = vadd.f32 %v4286, %v4338
        %v4340 = vpop.f32.mrf.mxu0
        %v4341 = vadd.f32 %v4288, %v4340
        %4342 = vdwg.mxu0
        %v4343 = vadd.f32 %v4325, %v3165
        %v4344 = vadd.f32 %v4327, %v3166
        %v4345 = vadd.f32 %v4329, %v3167
        %v4346 = vadd.f32 %v4331, %v3168
        %v4347 = vadd.f32 %v4335, %v3169
        %v4348 = vadd.f32 %v4337, %v3170
        %v4349 = vadd.f32 %v4339, %v3171
        %v4350 = vadd.f32 %v4341, %v3172
        %v4351 = vld [vmem:[%s746] sm:$0x3]
        %v4352 = vld [vmem:[%s755] sm:$0x3]
        %v4353 = vadd.f32 %v4343, %v4344
        %4354 = vadd.xlane.f32.xlu0 %v4353
        %v4355 = vpop.xlane.xlu0 %4354
        %v4356 = vadd.f32 %v4345, %v4346
        %4357 = vadd.xlane.f32.xlu0 %v4356
        %v4358 = vpop.xlane.xlu0 %4357
        %v4359 = vadd.f32 %v4347, %v4348
        %4360 = vadd.xlane.f32.xlu0 %v4359
        %v4361 = vpop.xlane.xlu0 %4360
        %v4362 = vadd.f32 %v4349, %v4350
        %4363 = vadd.xlane.f32.xlu0 %v4362
        %v4364 = vpop.xlane.xlu0 %4363
        %v4365 = vmul.f32 %v4355, %v3082
        %v4366 = vmul.f32 %v4358, %v3082
        %v4367 = vmul.f32 %v4361, %v3082
        %v4368 = vmul.f32 %v4364, %v3082
        %v4369 = vsub.f32 %v4343, %v4365
        %v4370 = vsub.f32 %v4344, %v4365
        %v4371 = vsub.f32 %v4345, %v4366
        %v4372 = vsub.f32 %v4346, %v4366
        %v4373 = vsub.f32 %v4347, %v4367
        %v4374 = vsub.f32 %v4348, %v4367
        %v4375 = vsub.f32 %v4349, %v4368
        %v4376 = vsub.f32 %v4350, %v4368
        %v4377 = vmul.f32 %v4369, %v4369
        %v4378 = vmul.f32 %v4370, %v4370
        %v4379 = vmul.f32 %v4371, %v4371
        %v4380 = vmul.f32 %v4372, %v4372
        %v4381 = vmul.f32 %v4373, %v4373
        %v4382 = vmul.f32 %v4374, %v4374
        %v4383 = vmul.f32 %v4375, %v4375
        %v4384 = vmul.f32 %v4376, %v4376
        %v4385 = vadd.f32 %v4377, %v4378
        %4386 = vadd.xlane.f32.xlu0 %v4385
        %v4387 = vpop.xlane.xlu0 %4386
        %v4388 = vadd.f32 %v4379, %v4380
        %4389 = vadd.xlane.f32.xlu0 %v4388
        %v4390 = vpop.xlane.xlu0 %4389
        %v4391 = vadd.f32 %v4381, %v4382
        %4392 = vadd.xlane.f32.xlu0 %v4391
        %v4393 = vpop.xlane.xlu0 %4392
        %v4394 = vadd.f32 %v4383, %v4384
        %4395 = vadd.xlane.f32.xlu0 %v4394
        %v4396 = vpop.xlane.xlu0 %4395
        %v4397 = vmul.f32 %v4387, %v3082
        %v4398 = vmul.f32 %v4390, %v3082
        %v4399 = vmul.f32 %v4393, %v3082
        %v4400 = vmul.f32 %v4396, %v3082
        %v4401 = vadd.f32 %v4397, 1e-12
        %v4402 = vadd.f32 %v4398, 1e-12
        %v4403 = vadd.f32 %v4399, 1e-12
        %v4404 = vadd.f32 %v4400, 1e-12
        %v4405 = vrsqrt.pop %v4401
        %v4406 = vrsqrt.pop %v4402
        %v4407 = vrsqrt.pop %v4403
        %v4408 = vrsqrt.pop %v4404
        %v4409 = vmul.f32 %v4369, %v4405
        %v4410 = vmul.f32 %v4370, %v4405
        %v4411 = vmul.f32 %v4371, %v4406
        %v4412 = vmul.f32 %v4372, %v4406
        %v4413 = vmul.f32 %v4373, %v4407
        %v4414 = vmul.f32 %v4374, %v4407
        %v4415 = vmul.f32 %v4375, %v4408
        %v4416 = vmul.f32 %v4376, %v4408
        %v4418 = vlaneseq
        %v4419 = vshrl.u32 %v4418, 7
        %v4420 = vsub.s32 0, %v4419
        %v4421 = vrot.slane %v4351, %v4420
        %v4422 = vlaneseq
        %v4423 = vshrl.u32 %v4422, 7
        %v4424 = vsub.s32 1, %v4423
        %v4425 = vrot.slane %v4351, %v4424
        %v4428 = vmul.f32 %v4409, %v4421
        %v4429 = vmul.f32 %v4410, %v4425
        %v4430 = vmul.f32 %v4411, %v4421
        %v4431 = vmul.f32 %v4412, %v4425
        %v4432 = vmul.f32 %v4413, %v4421
        %v4433 = vmul.f32 %v4414, %v4425
        %v4434 = vmul.f32 %v4415, %v4421
        %v4435 = vmul.f32 %v4416, %v4425
        %v4437 = vlaneseq
        %v4438 = vshrl.u32 %v4437, 7
        %v4439 = vsub.s32 0, %v4438
        %v4440 = vrot.slane %v4352, %v4439
        %v4441 = vlaneseq
        %v4442 = vshrl.u32 %v4441, 7
        %v4443 = vsub.s32 1, %v4442
        %v4444 = vrot.slane %v4352, %v4443
        %v4447 = vadd.f32 %v4428, %v4440
        %v4448 = vadd.f32 %v4429, %v4444
        %v4449 = vadd.f32 %v4430, %v4440
        %v4450 = vadd.f32 %v4431, %v4444
        %v4451 = vadd.f32 %v4432, %v4440
        %v4452 = vadd.f32 %v4433, %v4444
        %v4453 = vadd.f32 %v4434, %v4440
        %v4454 = vadd.f32 %v4435, %v4444
        %4455 = vst [vmem:[#allocation2] sm:$0xff] %v4447
        %4456 = vst [vmem:[#allocation2 + $0x8] sm:$0xff] %v4448
        %4457 = vst [vmem:[#allocation2 + $0x10] sm:$0xff] %v4449
        %4458 = vst [vmem:[#allocation2 + $0x18] sm:$0xff] %v4450
        %4459 = vst [vmem:[#allocation2 + $0x20] sm:$0xff] %v4451
        %4460 = vst [vmem:[#allocation2 + $0x28] sm:$0xff] %v4452
        %4461 = vst [vmem:[#allocation2 + $0x30] sm:$0xff] %v4453
        %4462 = vst [vmem:[#allocation2 + $0x38] sm:$0xff] %v4454
        %v4463 = vpack.c.bf16 %v4449, %v4447
        %v4464 = vpack.c.bf16 %v4450, %v4448
        %v4465 = vpack.c.bf16 %v4453, %v4451
        %v4466 = vpack.c.bf16 %v4454, %v4452
        %v4471 = vunpack.c.l.b16 %v4463
        %v4472 = vunpack.c.l.b16 %v4464
        %v4473 = vunpack.c.h.b16 %v4463
        %v4474 = vunpack.c.h.b16 %v4464
        %v4475 = vunpack.c.l.b16 %v4465
        %v4476 = vunpack.c.l.b16 %v4466
        %v4477 = vunpack.c.h.b16 %v4465
        %v4478 = vunpack.c.h.b16 %v4466
        %v4479 = vpack.c.b16 %v4472, %v4471
        %v4480 = vpack.c.b16 %v4474, %v4473
        %v4481 = vpack.c.b16 %v4476, %v4475
        %v4482 = vpack.c.b16 %v4478, %v4477
        %4487 = vst [vmem:[%s15] sm:$0xff] %v4479
        %4488 = vst [vmem:[%s15 + $0x8] sm:$0xff] %v4480
        %4489 = vst [vmem:[%s15 + $0x10] sm:$0xff] %v4481
        %4490 = vst [vmem:[%s15 + $0x18] sm:$0xff] %v4482
        // Predicated region
        $region125: #{seq2seq_forward.2} parent=79 // pred_check
          %p4491 = pneg %p430
        $region126: #{seq2seq_forward.2} parent=79 // pred_check_branch
          %4493 = sbr.rel (%p4491) target = $region128
        $region127: #{seq2seq_forward.2} parent=79 // pred_region
          _
        $region128: #{seq2seq_forward.2} parent=79 // pred_fallthru
          _
        // Predicated region
        $region129: #{seq2seq_forward.2} parent=79 // pred_check
          %p4494 = pneg %p430
        $region130: #{seq2seq_forward.2} parent=79 // pred_check_branch
          %4496 = sbr.rel (%p4494) target = $region132
        $region131: #{seq2seq_forward.2} parent=79 // pred_region
          _
        $region132: #{seq2seq_forward.2} parent=79 // pred_fallthru
          _
      $region80: #{seq2seq_forward.2} parent=5 // pred_fallthru
        _
      %p4497 = scmp.le.s32.totalorder 2, %s37
      // Predicated region
      $region133: #{seq2seq_forward.2} parent=5 // pred_check
        %p4498 = pneg %p4497
      $region134: #{seq2seq_forward.2} parent=5 // pred_check_branch
        %4500 = sbr.rel (%p4498) target = $region136
      $region135: #{seq2seq_forward.2} parent=5 // pred_region
        %s4501 = ssub.s32 %s37, 2
      $region136: #{seq2seq_forward.2} parent=5 // pred_fallthru
        _
    $region6: #{seq2seq_forward.2} parent=1 // loop_footer
      %s41 = sadd.s32 1, %s37
    $region7: #{seq2seq_forward.2} parent=1 // loop_footer_branch
      %36 = sbr.rel target = $region3
    $region8: #{seq2seq_forward.2} parent=1 // loop_exit
      _
    %4502 = vsyncpa [#allocation5], 1
    %s4503 = scalar_lea.sflag [#allocation5], 1
    %4504 = vsyncpa %s4503, 1
    %4505 = vsyncpa [#allocation7], 1
    %s4506 = scalar_lea.sflag [#allocation7], 1
    %4507 = vsyncpa %s4506, 1
    %4508 = vsyncpa [#allocation10], 1
    %s4509 = scalar_lea.sflag [#allocation10], 1
    %4510 = vsyncpa %s4509, 1
    %4511 = vsyncpa [#allocation13], 1
    %s4512 = scalar_lea.sflag [#allocation13], 1
    %4513 = vsyncpa %s4512, 1
    %4514 = vsyncpa [#allocation16], 1
    %s4515 = scalar_lea.sflag [#allocation16], 1
    %4516 = vsyncpa %s4515, 1
    %4517 = vsyncpa [#allocation19], 1
    %s4518 = scalar_lea.sflag [#allocation19], 1
    %4519 = vsyncpa %s4518, 1

// kernel: seq2seq_forward.3
$region0: #{seq2seq_forward.3}
  #allocation0 [shape = 'u32[]', space=smem, size = 0x4, offset = 0x4, fixed_abs, tag = 'smem constant byte address 0x4 - core index']
  #allocation1 [shape = 'u32[144,128]{1,0:T(1,128)}', space=vmem, size = 0x12000, scoped, tag = 'internal scratch']
  #allocation2 [shape = 'f32[16,256]{1,0:T(8,128)}', space=vmem, size = 0x4000, scoped, tag = 'scratch operand']
  %s0 = inlined_call_operand.vmem [shape: bf16[16,256], index: 0, kind: input, shape index: {}]
  %s1 = inlined_call_operand.vmem [shape: bf16[256,1024], index: 1, kind: input, shape index: {}]
  %s2 = inlined_call_operand.vmem [shape: bf16[256,1024], index: 2, kind: input, shape index: {}]
  %s3 = inlined_call_operand.vmem [shape: f32[1,1024], index: 3, kind: input, shape index: {}]
  %s4 = inlined_call_operand.vmem [shape: bf16[2,256], index: 4, kind: input, shape index: {}, may-alias: {4,5}]
  %s5 = inlined_call_operand.vmem [shape: bf16[2,256], index: 5, kind: input, shape index: {}, may-alias: {4,5}]
  %s6 = inlined_call_operand.vmem [shape: bf16[256,1024], index: 6, kind: input, shape index: {}]
  %s7 = inlined_call_operand.vmem [shape: f32[1,1024], index: 7, kind: input, shape index: {}]
  %s8 = inlined_call_operand.vmem [shape: f32[16,1024], index: 8, kind: output, shape index: {}]
  %s9 = sld [smem:[#allocation0]]
  $region42: #{seq2seq_forward.3} parent=0
    _
  %s11 = ssub.s32 1, %s9
  %s12 = scalar_select 0, %s11, %s9
  // Predicated region
  $region2: #{seq2seq_forward.3} parent=0 // pred_check
    _
  $region3: #{seq2seq_forward.3} parent=0 // pred_check_branch
    %14 = sbr.rel (0) target = $region5
  $region4: #{seq2seq_forward.3} parent=0 // pred_region
    _
  $region5: #{seq2seq_forward.3} parent=0 // pred_fallthru
    _
  // Predicated region
  $region6: #{seq2seq_forward.3} parent=0 // pred_check
    _
  $region7: #{seq2seq_forward.3} parent=0 // pred_check_branch
    %16 = sbr.rel (0) target = $region9
  $region8: #{seq2seq_forward.3} parent=0 // pred_region
    _
  $region9: #{seq2seq_forward.3} parent=0 // pred_fallthru
    _
  // Predicated region
  $region10: #{seq2seq_forward.3} parent=0 // pred_check
    _
  $region11: #{seq2seq_forward.3} parent=0 // pred_check_branch
    %18 = sbr.rel (0) target = $region13
  $region12: #{seq2seq_forward.3} parent=0 // pred_region
    _
  $region13: #{seq2seq_forward.3} parent=0 // pred_fallthru
    _
  // Predicated region
  $region14: #{seq2seq_forward.3} parent=0 // pred_check
    _
  $region15: #{seq2seq_forward.3} parent=0 // pred_check_branch
    %20 = sbr.rel (0) target = $region17
  $region16: #{seq2seq_forward.3} parent=0 // pred_region
    _
  $region17: #{seq2seq_forward.3} parent=0 // pred_fallthru
    _
  // Predicated region
  $region18: #{seq2seq_forward.3} parent=0 // pred_check
    _
  $region19: #{seq2seq_forward.3} parent=0 // pred_check_branch
    %22 = sbr.rel (0) target = $region21
  $region20: #{seq2seq_forward.3} parent=0 // pred_region
    _
  $region21: #{seq2seq_forward.3} parent=0 // pred_fallthru
    _
  // Predicated region
  $region22: #{seq2seq_forward.3} parent=0 // pred_check
    _
  $region23: #{seq2seq_forward.3} parent=0 // pred_check_branch
    %24 = sbr.rel (0) target = $region25
  $region24: #{seq2seq_forward.3} parent=0 // pred_region
    _
  $region25: #{seq2seq_forward.3} parent=0 // pred_fallthru
    _
  // Predicated region
  $region26: #{seq2seq_forward.3} parent=0 // pred_check
    _
  $region27: #{seq2seq_forward.3} parent=0 // pred_check_branch
    %26 = sbr.rel (0) target = $region29
  $region28: #{seq2seq_forward.3} parent=0 // pred_region
    _
  $region29: #{seq2seq_forward.3} parent=0 // pred_fallthru
    _
  // Predicated region
  $region30: #{seq2seq_forward.3} parent=0 // pred_check
    _
  $region31: #{seq2seq_forward.3} parent=0 // pred_check_branch
    %28 = sbr.rel (0) target = $region33
  $region32: #{seq2seq_forward.3} parent=0 // pred_region
    _
  $region33: #{seq2seq_forward.3} parent=0 // pred_fallthru
    _
  %v29 = vld [vmem:[%s0] sm:$0xff]
  %v30 = vld [vmem:[%s0 + $0x8] sm:$0xff]
  %v31 = vld [vmem:[%s1] sm:$0xff]
  %v32 = vld [vmem:[%s1 + $0x8] sm:$0xff]
  %v33 = vld [vmem:[%s1 + $0x10] sm:$0xff]
  %v34 = vld [vmem:[%s1 + $0x18] sm:$0xff]
  %v35 = vld [vmem:[%s1 + $0x20] sm:$0xff]
  %v36 = vld [vmem:[%s1 + $0x28] sm:$0xff]
  %v37 = vld [vmem:[%s1 + $0x30] sm:$0xff]
  %v38 = vld [vmem:[%s1 + $0x38] sm:$0xff]
  %v39 = vld [vmem:[%s1 + $0x40] sm:$0xff]
  %v40 = vld [vmem:[%s1 + $0x48] sm:$0xff]
  %v41 = vld [vmem:[%s1 + $0x50] sm:$0xff]
  %v42 = vld [vmem:[%s1 + $0x58] sm:$0xff]
  %v43 = vld [vmem:[%s1 + $0x60] sm:$0xff]
  %v44 = vld [vmem:[%s1 + $0x68] sm:$0xff]
  %v45 = vld [vmem:[%s1 + $0x70] sm:$0xff]
  %v46 = vld [vmem:[%s1 + $0x78] sm:$0xff]
  %v47 = vld [vmem:[%s1 + $0x80] sm:$0xff]
  %v48 = vld [vmem:[%s1 + $0x88] sm:$0xff]
  %v49 = vld [vmem:[%s1 + $0x90] sm:$0xff]
  %v50 = vld [vmem:[%s1 + $0x98] sm:$0xff]
  %v51 = vld [vmem:[%s1 + $0xa0] sm:$0xff]
  %v52 = vld [vmem:[%s1 + $0xa8] sm:$0xff]
  %v53 = vld [vmem:[%s1 + $0xb0] sm:$0xff]
  %v54 = vld [vmem:[%s1 + $0xb8] sm:$0xff]
  %v55 = vld [vmem:[%s1 + $0xc0] sm:$0xff]
  %v56 = vld [vmem:[%s1 + $0xc8] sm:$0xff]
  %v57 = vld [vmem:[%s1 + $0xd0] sm:$0xff]
  %v58 = vld [vmem:[%s1 + $0xd8] sm:$0xff]
  %v59 = vld [vmem:[%s1 + $0xe0] sm:$0xff]
  %v60 = vld [vmem:[%s1 + $0xe8] sm:$0xff]
  %v61 = vld [vmem:[%s1 + $0xf0] sm:$0xff]
  %v62 = vld [vmem:[%s1 + $0xf8] sm:$0xff]
  %v63 = vld [vmem:[%s1 + $0x100] sm:$0xff]
  %v64 = vld [vmem:[%s1 + $0x108] sm:$0xff]
  %v65 = vld [vmem:[%s1 + $0x110] sm:$0xff]
  %v66 = vld [vmem:[%s1 + $0x118] sm:$0xff]
  %v67 = vld [vmem:[%s1 + $0x120] sm:$0xff]
  %v68 = vld [vmem:[%s1 + $0x128] sm:$0xff]
  %v69 = vld [vmem:[%s1 + $0x130] sm:$0xff]
  %v70 = vld [vmem:[%s1 + $0x138] sm:$0xff]
  %v71 = vld [vmem:[%s1 + $0x140] sm:$0xff]
  %v72 = vld [vmem:[%s1 + $0x148] sm:$0xff]
  %v73 = vld [vmem:[%s1 + $0x150] sm:$0xff]
  %v74 = vld [vmem:[%s1 + $0x158] sm:$0xff]
  %v75 = vld [vmem:[%s1 + $0x160] sm:$0xff]
  %v76 = vld [vmem:[%s1 + $0x168] sm:$0xff]
  %v77 = vld [vmem:[%s1 + $0x170] sm:$0xff]
  %v78 = vld [vmem:[%s1 + $0x178] sm:$0xff]
  %v79 = vld [vmem:[%s1 + $0x180] sm:$0xff]
  %v80 = vld [vmem:[%s1 + $0x188] sm:$0xff]
  %v81 = vld [vmem:[%s1 + $0x190] sm:$0xff]
  %v82 = vld [vmem:[%s1 + $0x198] sm:$0xff]
  %v83 = vld [vmem:[%s1 + $0x1a0] sm:$0xff]
  %v84 = vld [vmem:[%s1 + $0x1a8] sm:$0xff]
  %v85 = vld [vmem:[%s1 + $0x1b0] sm:$0xff]
  %v86 = vld [vmem:[%s1 + $0x1b8] sm:$0xff]
  %v87 = vld [vmem:[%s1 + $0x1c0] sm:$0xff]
  %v88 = vld [vmem:[%s1 + $0x1c8] sm:$0xff]
  %v89 = vld [vmem:[%s1 + $0x1d0] sm:$0xff]
  %v90 = vld [vmem:[%s1 + $0x1d8] sm:$0xff]
  %v91 = vld [vmem:[%s1 + $0x1e0] sm:$0xff]
  %v92 = vld [vmem:[%s1 + $0x1e8] sm:$0xff]
  %v93 = vld [vmem:[%s1 + $0x1f0] sm:$0xff]
  %v94 = vld [vmem:[%s1 + $0x1f8] sm:$0xff]
  %v95 = vld [vmem:[%s1 + $0x200] sm:$0xff]
  %v96 = vld [vmem:[%s1 + $0x208] sm:$0xff]
  %v97 = vld [vmem:[%s1 + $0x210] sm:$0xff]
  %v98 = vld [vmem:[%s1 + $0x218] sm:$0xff]
  %v99 = vld [vmem:[%s1 + $0x220] sm:$0xff]
  %v100 = vld [vmem:[%s1 + $0x228] sm:$0xff]
  %v101 = vld [vmem:[%s1 + $0x230] sm:$0xff]
  %v102 = vld [vmem:[%s1 + $0x238] sm:$0xff]
  %v103 = vld [vmem:[%s1 + $0x240] sm:$0xff]
  %v104 = vld [vmem:[%s1 + $0x248] sm:$0xff]
  %v105 = vld [vmem:[%s1 + $0x250] sm:$0xff]
  %v106 = vld [vmem:[%s1 + $0x258] sm:$0xff]
  %v107 = vld [vmem:[%s1 + $0x260] sm:$0xff]
  %v108 = vld [vmem:[%s1 + $0x268] sm:$0xff]
  %v109 = vld [vmem:[%s1 + $0x270] sm:$0xff]
  %v110 = vld [vmem:[%s1 + $0x278] sm:$0xff]
  %v111 = vld [vmem:[%s1 + $0x280] sm:$0xff]
  %v112 = vld [vmem:[%s1 + $0x288] sm:$0xff]
  %v113 = vld [vmem:[%s1 + $0x290] sm:$0xff]
  %v114 = vld [vmem:[%s1 + $0x298] sm:$0xff]
  %v115 = vld [vmem:[%s1 + $0x2a0] sm:$0xff]
  %v116 = vld [vmem:[%s1 + $0x2a8] sm:$0xff]
  %v117 = vld [vmem:[%s1 + $0x2b0] sm:$0xff]
  %v118 = vld [vmem:[%s1 + $0x2b8] sm:$0xff]
  %v119 = vld [vmem:[%s1 + $0x2c0] sm:$0xff]
  %v120 = vld [vmem:[%s1 + $0x2c8] sm:$0xff]
  %v121 = vld [vmem:[%s1 + $0x2d0] sm:$0xff]
  %v122 = vld [vmem:[%s1 + $0x2d8] sm:$0xff]
  %v123 = vld [vmem:[%s1 + $0x2e0] sm:$0xff]
  %v124 = vld [vmem:[%s1 + $0x2e8] sm:$0xff]
  %v125 = vld [vmem:[%s1 + $0x2f0] sm:$0xff]
  %v126 = vld [vmem:[%s1 + $0x2f8] sm:$0xff]
  %v127 = vld [vmem:[%s1 + $0x300] sm:$0xff]
  %v128 = vld [vmem:[%s1 + $0x308] sm:$0xff]
  %v129 = vld [vmem:[%s1 + $0x310] sm:$0xff]
  %v130 = vld [vmem:[%s1 + $0x318] sm:$0xff]
  %v131 = vld [vmem:[%s1 + $0x320] sm:$0xff]
  %v132 = vld [vmem:[%s1 + $0x328] sm:$0xff]
  %v133 = vld [vmem:[%s1 + $0x330] sm:$0xff]
  %v134 = vld [vmem:[%s1 + $0x338] sm:$0xff]
  %v135 = vld [vmem:[%s1 + $0x340] sm:$0xff]
  %v136 = vld [vmem:[%s1 + $0x348] sm:$0xff]
  %v137 = vld [vmem:[%s1 + $0x350] sm:$0xff]
  %v138 = vld [vmem:[%s1 + $0x358] sm:$0xff]
  %v139 = vld [vmem:[%s1 + $0x360] sm:$0xff]
  %v140 = vld [vmem:[%s1 + $0x368] sm:$0xff]
  %v141 = vld [vmem:[%s1 + $0x370] sm:$0xff]
  %v142 = vld [vmem:[%s1 + $0x378] sm:$0xff]
  %v143 = vld [vmem:[%s1 + $0x380] sm:$0xff]
  %v144 = vld [vmem:[%s1 + $0x388] sm:$0xff]
  %v145 = vld [vmem:[%s1 + $0x390] sm:$0xff]
  %v146 = vld [vmem:[%s1 + $0x398] sm:$0xff]
  %v147 = vld [vmem:[%s1 + $0x3a0] sm:$0xff]
  %v148 = vld [vmem:[%s1 + $0x3a8] sm:$0xff]
  %v149 = vld [vmem:[%s1 + $0x3b0] sm:$0xff]
  %v150 = vld [vmem:[%s1 + $0x3b8] sm:$0xff]
  %v151 = vld [vmem:[%s1 + $0x3c0] sm:$0xff]
  %v152 = vld [vmem:[%s1 + $0x3c8] sm:$0xff]
  %v153 = vld [vmem:[%s1 + $0x3d0] sm:$0xff]
  %v154 = vld [vmem:[%s1 + $0x3d8] sm:$0xff]
  %v155 = vld [vmem:[%s1 + $0x3e0] sm:$0xff]
  %v156 = vld [vmem:[%s1 + $0x3e8] sm:$0xff]
  %v157 = vld [vmem:[%s1 + $0x3f0] sm:$0xff]
  %v158 = vld [vmem:[%s1 + $0x3f8] sm:$0xff]
  %v159 = vld [vmem:[%s3] sm:$0xff]
  %v161 = vlaneseq
  %v162 = vshrl.u32 %v161, 7
  %v163 = vsub.s32 0, %v162
  %v164 = vrot.slane %v159, %v163
  %v165 = vlaneseq
  %v166 = vshrl.u32 %v165, 7
  %v167 = vsub.s32 1, %v166
  %v168 = vrot.slane %v159, %v167
  %v169 = vlaneseq
  %v170 = vshrl.u32 %v169, 7
  %v171 = vsub.s32 2, %v170
  %v172 = vrot.slane %v159, %v171
  %v173 = vlaneseq
  %v174 = vshrl.u32 %v173, 7
  %v175 = vsub.s32 3, %v174
  %v176 = vrot.slane %v159, %v175
  %v177 = vlaneseq
  %v178 = vshrl.u32 %v177, 7
  %v179 = vsub.s32 4, %v178
  %v180 = vrot.slane %v159, %v179
  %v181 = vlaneseq
  %v182 = vshrl.u32 %v181, 7
  %v183 = vsub.s32 5, %v182
  %v184 = vrot.slane %v159, %v183
  %v185 = vlaneseq
  %v186 = vshrl.u32 %v185, 7
  %v187 = vsub.s32 6, %v186
  %v188 = vrot.slane %v159, %v187
  %v189 = vlaneseq
  %v190 = vshrl.u32 %v189, 7
  %v191 = vsub.s32 7, %v190
  %v192 = vrot.slane %v159, %v191
  %v203 = vunpack.c.l.b16 %v29
  %v204 = vunpack.c.h.b16 %v29
  %v205 = vunpack.c.l.b16 %v30
  %v206 = vunpack.c.h.b16 %v30
  %v207 = vpack.c.b16 %v205, %v203
  %v208 = vpack.c.b16 %v206, %v204
  %v339 = vunpack.c.l.b16 %v31
  %v340 = vunpack.c.h.b16 %v31
  %v341 = vunpack.c.l.b16 %v32
  %v342 = vunpack.c.h.b16 %v32
  %v343 = vunpack.c.l.b16 %v33
  %v344 = vunpack.c.h.b16 %v33
  %v345 = vunpack.c.l.b16 %v34
  %v346 = vunpack.c.h.b16 %v34
  %v347 = vunpack.c.l.b16 %v35
  %v348 = vunpack.c.h.b16 %v35
  %v349 = vunpack.c.l.b16 %v36
  %v350 = vunpack.c.h.b16 %v36
  %v351 = vunpack.c.l.b16 %v37
  %v352 = vunpack.c.h.b16 %v37
  %v353 = vunpack.c.l.b16 %v38
  %v354 = vunpack.c.h.b16 %v38
  %v355 = vunpack.c.l.b16 %v39
  %v356 = vunpack.c.h.b16 %v39
  %v357 = vunpack.c.l.b16 %v40
  %v358 = vunpack.c.h.b16 %v40
  %v359 = vunpack.c.l.b16 %v41
  %v360 = vunpack.c.h.b16 %v41
  %v361 = vunpack.c.l.b16 %v42
  %v362 = vunpack.c.h.b16 %v42
  %v363 = vunpack.c.l.b16 %v43
  %v364 = vunpack.c.h.b16 %v43
  %v365 = vunpack.c.l.b16 %v44
  %v366 = vunpack.c.h.b16 %v44
  %v367 = vunpack.c.l.b16 %v45
  %v368 = vunpack.c.h.b16 %v45
  %v369 = vunpack.c.l.b16 %v46
  %v370 = vunpack.c.h.b16 %v46
  %v371 = vunpack.c.l.b16 %v47
  %v372 = vunpack.c.h.b16 %v47
  %v373 = vunpack.c.l.b16 %v48
  %v374 = vunpack.c.h.b16 %v48
  %v375 = vunpack.c.l.b16 %v49
  %v376 = vunpack.c.h.b16 %v49
  %v377 = vunpack.c.l.b16 %v50
  %v378 = vunpack.c.h.b16 %v50
  %v379 = vunpack.c.l.b16 %v51
  %v380 = vunpack.c.h.b16 %v51
  %v381 = vunpack.c.l.b16 %v52
  %v382 = vunpack.c.h.b16 %v52
  %v383 = vunpack.c.l.b16 %v53
  %v384 = vunpack.c.h.b16 %v53
  %v385 = vunpack.c.l.b16 %v54
  %v386 = vunpack.c.h.b16 %v54
  %v387 = vunpack.c.l.b16 %v55
  %v388 = vunpack.c.h.b16 %v55
  %v389 = vunpack.c.l.b16 %v56
  %v390 = vunpack.c.h.b16 %v56
  %v391 = vunpack.c.l.b16 %v57
  %v392 = vunpack.c.h.b16 %v57
  %v393 = vunpack.c.l.b16 %v58
  %v394 = vunpack.c.h.b16 %v58
  %v395 = vunpack.c.l.b16 %v59
  %v396 = vunpack.c.h.b16 %v59
  %v397 = vunpack.c.l.b16 %v60
  %v398 = vunpack.c.h.b16 %v60
  %v399 = vunpack.c.l.b16 %v61
  %v400 = vunpack.c.h.b16 %v61
  %v401 = vunpack.c.l.b16 %v62
  %v402 = vunpack.c.h.b16 %v62
  %v403 = vunpack.c.l.b16 %v63
  %v404 = vunpack.c.h.b16 %v63
  %v405 = vunpack.c.l.b16 %v64
  %v406 = vunpack.c.h.b16 %v64
  %v407 = vunpack.c.l.b16 %v65
  %v408 = vunpack.c.h.b16 %v65
  %v409 = vunpack.c.l.b16 %v66
  %v410 = vunpack.c.h.b16 %v66
  %v411 = vunpack.c.l.b16 %v67
  %v412 = vunpack.c.h.b16 %v67
  %v413 = vunpack.c.l.b16 %v68
  %v414 = vunpack.c.h.b16 %v68
  %v415 = vunpack.c.l.b16 %v69
  %v416 = vunpack.c.h.b16 %v69
  %v417 = vunpack.c.l.b16 %v70
  %v418 = vunpack.c.h.b16 %v70
  %v419 = vunpack.c.l.b16 %v71
  %v420 = vunpack.c.h.b16 %v71
  %v421 = vunpack.c.l.b16 %v72
  %v422 = vunpack.c.h.b16 %v72
  %v423 = vunpack.c.l.b16 %v73
  %v424 = vunpack.c.h.b16 %v73
  %v425 = vunpack.c.l.b16 %v74
  %v426 = vunpack.c.h.b16 %v74
  %v427 = vunpack.c.l.b16 %v75
  %v428 = vunpack.c.h.b16 %v75
  %v429 = vunpack.c.l.b16 %v76
  %v430 = vunpack.c.h.b16 %v76
  %v431 = vunpack.c.l.b16 %v77
  %v432 = vunpack.c.h.b16 %v77
  %v433 = vunpack.c.l.b16 %v78
  %v434 = vunpack.c.h.b16 %v78
  %v435 = vunpack.c.l.b16 %v79
  %v436 = vunpack.c.h.b16 %v79
  %v437 = vunpack.c.l.b16 %v80
  %v438 = vunpack.c.h.b16 %v80
  %v439 = vunpack.c.l.b16 %v81
  %v440 = vunpack.c.h.b16 %v81
  %v441 = vunpack.c.l.b16 %v82
  %v442 = vunpack.c.h.b16 %v82
  %v443 = vunpack.c.l.b16 %v83
  %v444 = vunpack.c.h.b16 %v83
  %v445 = vunpack.c.l.b16 %v84
  %v446 = vunpack.c.h.b16 %v84
  %v447 = vunpack.c.l.b16 %v85
  %v448 = vunpack.c.h.b16 %v85
  %v449 = vunpack.c.l.b16 %v86
  %v450 = vunpack.c.h.b16 %v86
  %v451 = vunpack.c.l.b16 %v87
  %v452 = vunpack.c.h.b16 %v87
  %v453 = vunpack.c.l.b16 %v88
  %v454 = vunpack.c.h.b16 %v88
  %v455 = vunpack.c.l.b16 %v89
  %v456 = vunpack.c.h.b16 %v89
  %v457 = vunpack.c.l.b16 %v90
  %v458 = vunpack.c.h.b16 %v90
  %v459 = vunpack.c.l.b16 %v91
  %v460 = vunpack.c.h.b16 %v91
  %v461 = vunpack.c.l.b16 %v92
  %v462 = vunpack.c.h.b16 %v92
  %v463 = vunpack.c.l.b16 %v93
  %v464 = vunpack.c.h.b16 %v93
  %v465 = vunpack.c.l.b16 %v94
  %v466 = vunpack.c.h.b16 %v94
  %v467 = vunpack.c.l.b16 %v95
  %v468 = vunpack.c.h.b16 %v95
  %v469 = vunpack.c.l.b16 %v96
  %v470 = vunpack.c.h.b16 %v96
  %v471 = vunpack.c.l.b16 %v97
  %v472 = vunpack.c.h.b16 %v97
  %v473 = vunpack.c.l.b16 %v98
  %v474 = vunpack.c.h.b16 %v98
  %v475 = vunpack.c.l.b16 %v99
  %v476 = vunpack.c.h.b16 %v99
  %v477 = vunpack.c.l.b16 %v100
  %v478 = vunpack.c.h.b16 %v100
  %v479 = vunpack.c.l.b16 %v101
  %v480 = vunpack.c.h.b16 %v101
  %v481 = vunpack.c.l.b16 %v102
  %v482 = vunpack.c.h.b16 %v102
  %v483 = vunpack.c.l.b16 %v103
  %v484 = vunpack.c.h.b16 %v103
  %v485 = vunpack.c.l.b16 %v104
  %v486 = vunpack.c.h.b16 %v104
  %v487 = vunpack.c.l.b16 %v105
  %v488 = vunpack.c.h.b16 %v105
  %v489 = vunpack.c.l.b16 %v106
  %v490 = vunpack.c.h.b16 %v106
  %v491 = vunpack.c.l.b16 %v107
  %v492 = vunpack.c.h.b16 %v107
  %v493 = vunpack.c.l.b16 %v108
  %v494 = vunpack.c.h.b16 %v108
  %v495 = vunpack.c.l.b16 %v109
  %v496 = vunpack.c.h.b16 %v109
  %v497 = vunpack.c.l.b16 %v110
  %v498 = vunpack.c.h.b16 %v110
  %v499 = vunpack.c.l.b16 %v111
  %v500 = vunpack.c.h.b16 %v111
  %v501 = vunpack.c.l.b16 %v112
  %v502 = vunpack.c.h.b16 %v112
  %v503 = vunpack.c.l.b16 %v113
  %v504 = vunpack.c.h.b16 %v113
  %v505 = vunpack.c.l.b16 %v114
  %v506 = vunpack.c.h.b16 %v114
  %v507 = vunpack.c.l.b16 %v115
  %v508 = vunpack.c.h.b16 %v115
  %v509 = vunpack.c.l.b16 %v116
  %v510 = vunpack.c.h.b16 %v116
  %v511 = vunpack.c.l.b16 %v117
  %v512 = vunpack.c.h.b16 %v117
  %v513 = vunpack.c.l.b16 %v118
  %v514 = vunpack.c.h.b16 %v118
  %v515 = vunpack.c.l.b16 %v119
  %v516 = vunpack.c.h.b16 %v119
  %v517 = vunpack.c.l.b16 %v120
  %v518 = vunpack.c.h.b16 %v120
  %v519 = vunpack.c.l.b16 %v121
  %v520 = vunpack.c.h.b16 %v121
  %v521 = vunpack.c.l.b16 %v122
  %v522 = vunpack.c.h.b16 %v122
  %v523 = vunpack.c.l.b16 %v123
  %v524 = vunpack.c.h.b16 %v123
  %v525 = vunpack.c.l.b16 %v124
  %v526 = vunpack.c.h.b16 %v124
  %v527 = vunpack.c.l.b16 %v125
  %v528 = vunpack.c.h.b16 %v125
  %v529 = vunpack.c.l.b16 %v126
  %v530 = vunpack.c.h.b16 %v126
  %v531 = vunpack.c.l.b16 %v127
  %v532 = vunpack.c.h.b16 %v127
  %v533 = vunpack.c.l.b16 %v128
  %v534 = vunpack.c.h.b16 %v128
  %v535 = vunpack.c.l.b16 %v129
  %v536 = vunpack.c.h.b16 %v129
  %v537 = vunpack.c.l.b16 %v130
  %v538 = vunpack.c.h.b16 %v130
  %v539 = vunpack.c.l.b16 %v131
  %v540 = vunpack.c.h.b16 %v131
  %v541 = vunpack.c.l.b16 %v132
  %v542 = vunpack.c.h.b16 %v132
  %v543 = vunpack.c.l.b16 %v133
  %v544 = vunpack.c.h.b16 %v133
  %v545 = vunpack.c.l.b16 %v134
  %v546 = vunpack.c.h.b16 %v134
  %v547 = vunpack.c.l.b16 %v135
  %v548 = vunpack.c.h.b16 %v135
  %v549 = vunpack.c.l.b16 %v136
  %v550 = vunpack.c.h.b16 %v136
  %v551 = vunpack.c.l.b16 %v137
  %v552 = vunpack.c.h.b16 %v137
  %v553 = vunpack.c.l.b16 %v138
  %v554 = vunpack.c.h.b16 %v138
  %v555 = vunpack.c.l.b16 %v139
  %v556 = vunpack.c.h.b16 %v139
  %v557 = vunpack.c.l.b16 %v140
  %v558 = vunpack.c.h.b16 %v140
  %v559 = vunpack.c.l.b16 %v141
  %v560 = vunpack.c.h.b16 %v141
  %v561 = vunpack.c.l.b16 %v142
  %v562 = vunpack.c.h.b16 %v142
  %v563 = vunpack.c.l.b16 %v143
  %v564 = vunpack.c.h.b16 %v143
  %v565 = vunpack.c.l.b16 %v144
  %v566 = vunpack.c.h.b16 %v144
  %v567 = vunpack.c.l.b16 %v145
  %v568 = vunpack.c.h.b16 %v145
  %v569 = vunpack.c.l.b16 %v146
  %v570 = vunpack.c.h.b16 %v146
  %v571 = vunpack.c.l.b16 %v147
  %v572 = vunpack.c.h.b16 %v147
  %v573 = vunpack.c.l.b16 %v148
  %v574 = vunpack.c.h.b16 %v148
  %v575 = vunpack.c.l.b16 %v149
  %v576 = vunpack.c.h.b16 %v149
  %v577 = vunpack.c.l.b16 %v150
  %v578 = vunpack.c.h.b16 %v150
  %v579 = vunpack.c.l.b16 %v151
  %v580 = vunpack.c.h.b16 %v151
  %v581 = vunpack.c.l.b16 %v152
  %v582 = vunpack.c.h.b16 %v152
  %v583 = vunpack.c.l.b16 %v153
  %v584 = vunpack.c.h.b16 %v153
  %v585 = vunpack.c.l.b16 %v154
  %v586 = vunpack.c.h.b16 %v154
  %v587 = vunpack.c.l.b16 %v155
  %v588 = vunpack.c.h.b16 %v155
  %v589 = vunpack.c.l.b16 %v156
  %v590 = vunpack.c.h.b16 %v156
  %v591 = vunpack.c.l.b16 %v157
  %v592 = vunpack.c.h.b16 %v157
  %v593 = vunpack.c.l.b16 %v158
  %v594 = vunpack.c.h.b16 %v158
  %v595 = vpack.c.b16 %v347, %v339
  %v596 = vpack.c.b16 %v348, %v340
  %v597 = vpack.c.b16 %v349, %v341
  %v598 = vpack.c.b16 %v350, %v342
  %v599 = vpack.c.b16 %v351, %v343
  %v600 = vpack.c.b16 %v352, %v344
  %v601 = vpack.c.b16 %v353, %v345
  %v602 = vpack.c.b16 %v354, %v346
  %v603 = vpack.c.b16 %v363, %v355
  %v604 = vpack.c.b16 %v364, %v356
  %v605 = vpack.c.b16 %v365, %v357
  %v606 = vpack.c.b16 %v366, %v358
  %v607 = vpack.c.b16 %v367, %v359
  %v608 = vpack.c.b16 %v368, %v360
  %v609 = vpack.c.b16 %v369, %v361
  %v610 = vpack.c.b16 %v370, %v362
  %v611 = vpack.c.b16 %v379, %v371
  %v612 = vpack.c.b16 %v380, %v372
  %v613 = vpack.c.b16 %v381, %v373
  %v614 = vpack.c.b16 %v382, %v374
  %v615 = vpack.c.b16 %v383, %v375
  %v616 = vpack.c.b16 %v384, %v376
  %v617 = vpack.c.b16 %v385, %v377
  %v618 = vpack.c.b16 %v386, %v378
  %v619 = vpack.c.b16 %v395, %v387
  %v620 = vpack.c.b16 %v396, %v388
  %v621 = vpack.c.b16 %v397, %v389
  %v622 = vpack.c.b16 %v398, %v390
  %v623 = vpack.c.b16 %v399, %v391
  %v624 = vpack.c.b16 %v400, %v392
  %v625 = vpack.c.b16 %v401, %v393
  %v626 = vpack.c.b16 %v402, %v394
  %v627 = vpack.c.b16 %v411, %v403
  %v628 = vpack.c.b16 %v412, %v404
  %v629 = vpack.c.b16 %v413, %v405
  %v630 = vpack.c.b16 %v414, %v406
  %v631 = vpack.c.b16 %v415, %v407
  %v632 = vpack.c.b16 %v416, %v408
  %v633 = vpack.c.b16 %v417, %v409
  %v634 = vpack.c.b16 %v418, %v410
  %v635 = vpack.c.b16 %v427, %v419
  %v636 = vpack.c.b16 %v428, %v420
  %v637 = vpack.c.b16 %v429, %v421
  %v638 = vpack.c.b16 %v430, %v422
  %v639 = vpack.c.b16 %v431, %v423
  %v640 = vpack.c.b16 %v432, %v424
  %v641 = vpack.c.b16 %v433, %v425
  %v642 = vpack.c.b16 %v434, %v426
  %v643 = vpack.c.b16 %v443, %v435
  %v644 = vpack.c.b16 %v444, %v436
  %v645 = vpack.c.b16 %v445, %v437
  %v646 = vpack.c.b16 %v446, %v438
  %v647 = vpack.c.b16 %v447, %v439
  %v648 = vpack.c.b16 %v448, %v440
  %v649 = vpack.c.b16 %v449, %v441
  %v650 = vpack.c.b16 %v450, %v442
  %v651 = vpack.c.b16 %v459, %v451
  %v652 = vpack.c.b16 %v460, %v452
  %v653 = vpack.c.b16 %v461, %v453
  %v654 = vpack.c.b16 %v462, %v454
  %v655 = vpack.c.b16 %v463, %v455
  %v656 = vpack.c.b16 %v464, %v456
  %v657 = vpack.c.b16 %v465, %v457
  %v658 = vpack.c.b16 %v466, %v458
  %v659 = vpack.c.b16 %v475, %v467
  %v660 = vpack.c.b16 %v476, %v468
  %v661 = vpack.c.b16 %v477, %v469
  %v662 = vpack.c.b16 %v478, %v470
  %v663 = vpack.c.b16 %v479, %v471
  %v664 = vpack.c.b16 %v480, %v472
  %v665 = vpack.c.b16 %v481, %v473
  %v666 = vpack.c.b16 %v482, %v474
  %v667 = vpack.c.b16 %v491, %v483
  %v668 = vpack.c.b16 %v492, %v484
  %v669 = vpack.c.b16 %v493, %v485
  %v670 = vpack.c.b16 %v494, %v486
  %v671 = vpack.c.b16 %v495, %v487
  %v672 = vpack.c.b16 %v496, %v488
  %v673 = vpack.c.b16 %v497, %v489
  %v674 = vpack.c.b16 %v498, %v490
  %v675 = vpack.c.b16 %v507, %v499
  %v676 = vpack.c.b16 %v508, %v500
  %v677 = vpack.c.b16 %v509, %v501
  %v678 = vpack.c.b16 %v510, %v502
  %v679 = vpack.c.b16 %v511, %v503
  %v680 = vpack.c.b16 %v512, %v504
  %v681 = vpack.c.b16 %v513, %v505
  %v682 = vpack.c.b16 %v514, %v506
  %v683 = vpack.c.b16 %v523, %v515
  %v684 = vpack.c.b16 %v524, %v516
  %v685 = vpack.c.b16 %v525, %v517
  %v686 = vpack.c.b16 %v526, %v518
  %v687 = vpack.c.b16 %v527, %v519
  %v688 = vpack.c.b16 %v528, %v520
  %v689 = vpack.c.b16 %v529, %v521
  %v690 = vpack.c.b16 %v530, %v522
  %v691 = vpack.c.b16 %v539, %v531
  %v692 = vpack.c.b16 %v540, %v532
  %v693 = vpack.c.b16 %v541, %v533
  %v694 = vpack.c.b16 %v542, %v534
  %v695 = vpack.c.b16 %v543, %v535
  %v696 = vpack.c.b16 %v544, %v536
  %v697 = vpack.c.b16 %v545, %v537
  %v698 = vpack.c.b16 %v546, %v538
  %v699 = vpack.c.b16 %v555, %v547
  %v700 = vpack.c.b16 %v556, %v548
  %v701 = vpack.c.b16 %v557, %v549
  %v702 = vpack.c.b16 %v558, %v550
  %v703 = vpack.c.b16 %v559, %v551
  %v704 = vpack.c.b16 %v560, %v552
  %v705 = vpack.c.b16 %v561, %v553
  %v706 = vpack.c.b16 %v562, %v554
  %v707 = vpack.c.b16 %v571, %v563
  %v708 = vpack.c.b16 %v572, %v564
  %v709 = vpack.c.b16 %v573, %v565
  %v710 = vpack.c.b16 %v574, %v566
  %v711 = vpack.c.b16 %v575, %v567
  %v712 = vpack.c.b16 %v576, %v568
  %v713 = vpack.c.b16 %v577, %v569
  %v714 = vpack.c.b16 %v578, %v570
  %v715 = vpack.c.b16 %v587, %v579
  %v716 = vpack.c.b16 %v588, %v580
  %v717 = vpack.c.b16 %v589, %v581
  %v718 = vpack.c.b16 %v590, %v582
  %v719 = vpack.c.b16 %v591, %v583
  %v720 = vpack.c.b16 %v592, %v584
  %v721 = vpack.c.b16 %v593, %v585
  %v722 = vpack.c.b16 %v594, %v586
  %851 = vmatprep.subr.bf16.mxu0 %v652
  %852 = vmatpush1.bf16.msra.mxu0 %v651
  %853 = vmatprep.subr.bf16.mxu0 %v644
  %854 = vmatpush1.bf16.msra.mxu0 %v643
  %855 = vmatprep.subr.bf16.mxu0 %v636
  %856 = vmatpush1.bf16.msra.mxu0 %v635
  %857 = vmatprep.subr.bf16.mxu0 %v628
  %858 = vmatpush1.bf16.msra.mxu0 %v627
  %859 = vmatprep.subr.bf16.mxu0 %v620
  %860 = vmatpush1.bf16.msra.mxu0 %v619
  %861 = vmatprep.subr.bf16.mxu0 %v612
  %862 = vmatpush1.bf16.msra.mxu0 %v611
  %863 = vmatprep.subr.bf16.mxu0 %v604
  %864 = vmatpush1.bf16.msra.mxu0 %v603
  %865 = vmatprep.subr.bf16.mxu0 %v596
  %866 = vmatpush1.bf16.msra.mxu0 %v595
  %867 = vmatprep.subr.bf16.mxu0 %v716
  %868 = vmatpush2.bf16.msra.mxu0 %v715
  %869 = vmatprep.subr.bf16.mxu0 %v708
  %870 = vmatpush2.bf16.msra.mxu0 %v707
  %871 = vmatprep.subr.bf16.mxu0 %v700
  %872 = vmatpush2.bf16.msra.mxu0 %v699
  %873 = vmatprep.subr.bf16.mxu0 %v692
  %874 = vmatpush2.bf16.msra.mxu0 %v691
  %875 = vmatprep.subr.bf16.mxu0 %v684
  %876 = vmatpush2.bf16.msra.mxu0 %v683
  %877 = vmatprep.subr.bf16.mxu0 %v676
  %878 = vmatpush2.bf16.msra.mxu0 %v675
  %879 = vmatprep.subr.bf16.mxu0 %v668
  %880 = vmatpush2.bf16.msra.mxu0 %v667
  %881 = vmatprep.subr.bf16.mxu0 %v660
  %882 = vmatpush2.bf16.msra.mxu0 %v659
  %883 = vmatprep.mubr.bf16.mxu0 %v208
  %884 = vmatmul.mubr.bf16.gmra.mxu0 %v207
  %v885 = vpop.f32.mrf.mxu0
  %v886 = vadd.f32 %v164, %v885
  %v887 = vpop.f32.mrf.mxu0
  %v888 = vadd.f32 %v168, %v887
  %v889 = vpop.f32.mrf.mxu0
  %v890 = vadd.f32 %v164, %v889
  %v891 = vpop.f32.mrf.mxu0
  %v892 = vadd.f32 %v168, %v891
  %893 = vdwg.mxu0
  %894 = vmatprep.subr.bf16.mxu0 %v654
  %895 = vmatpush1.bf16.msra.mxu0 %v653
  %896 = vmatprep.subr.bf16.mxu0 %v646
  %897 = vmatpush1.bf16.msra.mxu0 %v645
  %898 = vmatprep.subr.bf16.mxu0 %v638
  %899 = vmatpush1.bf16.msra.mxu0 %v637
  %900 = vmatprep.subr.bf16.mxu0 %v630
  %901 = vmatpush1.bf16.msra.mxu0 %v629
  %902 = vmatprep.subr.bf16.mxu0 %v622
  %903 = vmatpush1.bf16.msra.mxu0 %v621
  %904 = vmatprep.subr.bf16.mxu0 %v614
  %905 = vmatpush1.bf16.msra.mxu0 %v613
  %906 = vmatprep.subr.bf16.mxu0 %v606
  %907 = vmatpush1.bf16.msra.mxu0 %v605
  %908 = vmatprep.subr.bf16.mxu0 %v598
  %909 = vmatpush1.bf16.msra.mxu0 %v597
  %910 = vmatprep.subr.bf16.mxu0 %v718
  %911 = vmatpush2.bf16.msra.mxu0 %v717
  %912 = vmatprep.subr.bf16.mxu0 %v710
  %913 = vmatpush2.bf16.msra.mxu0 %v709
  %914 = vmatprep.subr.bf16.mxu0 %v702
  %915 = vmatpush2.bf16.msra.mxu0 %v701
  %916 = vmatprep.subr.bf16.mxu0 %v694
  %917 = vmatpush2.bf16.msra.mxu0 %v693
  %918 = vmatprep.subr.bf16.mxu0 %v686
  %919 = vmatpush2.bf16.msra.mxu0 %v685
  %920 = vmatprep.subr.bf16.mxu0 %v678
  %921 = vmatpush2.bf16.msra.mxu0 %v677
  %922 = vmatprep.subr.bf16.mxu0 %v670
  %923 = vmatpush2.bf16.msra.mxu0 %v669
  %924 = vmatprep.subr.bf16.mxu0 %v662
  %925 = vmatpush2.bf16.msra.mxu0 %v661
  %926 = vmatprep.mubr.bf16.mxu0 %v208
  %927 = vmatmul.mubr.bf16.gmra.mxu0 %v207
  %v928 = vpop.f32.mrf.mxu0
  %v929 = vadd.f32 %v172, %v928
  %v930 = vpop.f32.mrf.mxu0
  %v931 = vadd.f32 %v176, %v930
  %v932 = vpop.f32.mrf.mxu0
  %v933 = vadd.f32 %v172, %v932
  %v934 = vpop.f32.mrf.mxu0
  %v935 = vadd.f32 %v176, %v934
  %936 = vdwg.mxu0
  %937 = vmatprep.subr.bf16.mxu0 %v656
  %938 = vmatpush1.bf16.msra.mxu0 %v655
  %939 = vmatprep.subr.bf16.mxu0 %v648
  %940 = vmatpush1.bf16.msra.mxu0 %v647
  %941 = vmatprep.subr.bf16.mxu0 %v640
  %942 = vmatpush1.bf16.msra.mxu0 %v639
  %943 = vmatprep.subr.bf16.mxu0 %v632
  %944 = vmatpush1.bf16.msra.mxu0 %v631
  %945 = vmatprep.subr.bf16.mxu0 %v624
  %946 = vmatpush1.bf16.msra.mxu0 %v623
  %947 = vmatprep.subr.bf16.mxu0 %v616
  %948 = vmatpush1.bf16.msra.mxu0 %v615
  %949 = vmatprep.subr.bf16.mxu0 %v608
  %950 = vmatpush1.bf16.msra.mxu0 %v607
  %951 = vmatprep.subr.bf16.mxu0 %v600
  %952 = vmatpush1.bf16.msra.mxu0 %v599
  %953 = vmatprep.subr.bf16.mxu0 %v720
  %954 = vmatpush2.bf16.msra.mxu0 %v719
  %955 = vmatprep.subr.bf16.mxu0 %v712
  %956 = vmatpush2.bf16.msra.mxu0 %v711
  %957 = vmatprep.subr.bf16.mxu0 %v704
  %958 = vmatpush2.bf16.msra.mxu0 %v703
  %959 = vmatprep.subr.bf16.mxu0 %v696
  %960 = vmatpush2.bf16.msra.mxu0 %v695
  %961 = vmatprep.subr.bf16.mxu0 %v688
  %962 = vmatpush2.bf16.msra.mxu0 %v687
  %963 = vmatprep.subr.bf16.mxu0 %v680
  %964 = vmatpush2.bf16.msra.mxu0 %v679
  %965 = vmatprep.subr.bf16.mxu0 %v672
  %966 = vmatpush2.bf16.msra.mxu0 %v671
  %967 = vmatprep.subr.bf16.mxu0 %v664
  %968 = vmatpush2.bf16.msra.mxu0 %v663
  %969 = vmatprep.mubr.bf16.mxu0 %v208
  %970 = vmatmul.mubr.bf16.gmra.mxu0 %v207
  %v971 = vpop.f32.mrf.mxu0
  %v972 = vadd.f32 %v180, %v971
  %v973 = vpop.f32.mrf.mxu0
  %v974 = vadd.f32 %v184, %v973
  %v975 = vpop.f32.mrf.mxu0
  %v976 = vadd.f32 %v180, %v975
  %v977 = vpop.f32.mrf.mxu0
  %v978 = vadd.f32 %v184, %v977
  %979 = vdwg.mxu0
  %980 = vmatprep.subr.bf16.mxu0 %v658
  %981 = vmatpush1.bf16.msra.mxu0 %v657
  %982 = vmatprep.subr.bf16.mxu0 %v650
  %983 = vmatpush1.bf16.msra.mxu0 %v649
  %984 = vmatprep.subr.bf16.mxu0 %v642
  %985 = vmatpush1.bf16.msra.mxu0 %v641
  %986 = vmatprep.subr.bf16.mxu0 %v634
  %987 = vmatpush1.bf16.msra.mxu0 %v633
  %988 = vmatprep.subr.bf16.mxu0 %v626
  %989 = vmatpush1.bf16.msra.mxu0 %v625
  %990 = vmatprep.subr.bf16.mxu0 %v618
  %991 = vmatpush1.bf16.msra.mxu0 %v617
  %992 = vmatprep.subr.bf16.mxu0 %v610
  %993 = vmatpush1.bf16.msra.mxu0 %v609
  %994 = vmatprep.subr.bf16.mxu0 %v602
  %995 = vmatpush1.bf16.msra.mxu0 %v601
  %996 = vmatprep.subr.bf16.mxu0 %v722
  %997 = vmatpush2.bf16.msra.mxu0 %v721
  %998 = vmatprep.subr.bf16.mxu0 %v714
  %999 = vmatpush2.bf16.msra.mxu0 %v713
  %1000 = vmatprep.subr.bf16.mxu0 %v706
  %1001 = vmatpush2.bf16.msra.mxu0 %v705
  %1002 = vmatprep.subr.bf16.mxu0 %v698
  %1003 = vmatpush2.bf16.msra.mxu0 %v697
  %1004 = vmatprep.subr.bf16.mxu0 %v690
  %1005 = vmatpush2.bf16.msra.mxu0 %v689
  %1006 = vmatprep.subr.bf16.mxu0 %v682
  %1007 = vmatpush2.bf16.msra.mxu0 %v681
  %1008 = vmatprep.subr.bf16.mxu0 %v674
  %1009 = vmatpush2.bf16.msra.mxu0 %v673
  %1010 = vmatprep.subr.bf16.mxu0 %v666
  %1011 = vmatpush2.bf16.msra.mxu0 %v665
  %1012 = vmatprep.mubr.bf16.mxu0 %v208
  %1013 = vmatmul.mubr.bf16.gmra.mxu0 %v207
  %v1014 = vpop.f32.mrf.mxu0
  %v1015 = vadd.f32 %v188, %v1014
  %v1016 = vpop.f32.mrf.mxu0
  %v1017 = vadd.f32 %v192, %v1016
  %v1018 = vpop.f32.mrf.mxu0
  %v1019 = vadd.f32 %v188, %v1018
  %v1020 = vpop.f32.mrf.mxu0
  %v1021 = vadd.f32 %v192, %v1020
  %1022 = vdwg.mxu0
  %v1023 = vld [vmem:[%s4] sm:$0x3]
  %v1024 = vld [vmem:[%s5] sm:$0x3]
  %v1025 = vunpack.c.l.bf16 %v1024
  %v1026 = vld [vmem:[%s2] sm:$0xff]
  %v1027 = vld [vmem:[%s2 + $0x8] sm:$0xff]
  %v1028 = vld [vmem:[%s2 + $0x10] sm:$0xff]
  %v1029 = vld [vmem:[%s2 + $0x18] sm:$0xff]
  %v1030 = vld [vmem:[%s2 + $0x20] sm:$0xff]
  %v1031 = vld [vmem:[%s2 + $0x28] sm:$0xff]
  %v1032 = vld [vmem:[%s2 + $0x30] sm:$0xff]
  %v1033 = vld [vmem:[%s2 + $0x38] sm:$0xff]
  %v1034 = vld [vmem:[%s2 + $0x40] sm:$0xff]
  %v1035 = vld [vmem:[%s2 + $0x48] sm:$0xff]
  %v1036 = vld [vmem:[%s2 + $0x50] sm:$0xff]
  %v1037 = vld [vmem:[%s2 + $0x58] sm:$0xff]
  %v1038 = vld [vmem:[%s2 + $0x60] sm:$0xff]
  %v1039 = vld [vmem:[%s2 + $0x68] sm:$0xff]
  %v1040 = vld [vmem:[%s2 + $0x70] sm:$0xff]
  %v1041 = vld [vmem:[%s2 + $0x78] sm:$0xff]
  %v1042 = vld [vmem:[%s2 + $0x80] sm:$0xff]
  %v1043 = vld [vmem:[%s2 + $0x88] sm:$0xff]
  %v1044 = vld [vmem:[%s2 + $0x90] sm:$0xff]
  %v1045 = vld [vmem:[%s2 + $0x98] sm:$0xff]
  %v1046 = vld [vmem:[%s2 + $0xa0] sm:$0xff]
  %v1047 = vld [vmem:[%s2 + $0xa8] sm:$0xff]
  %v1048 = vld [vmem:[%s2 + $0xb0] sm:$0xff]
  %v1049 = vld [vmem:[%s2 + $0xb8] sm:$0xff]
  %v1050 = vld [vmem:[%s2 + $0xc0] sm:$0xff]
  %v1051 = vld [vmem:[%s2 + $0xc8] sm:$0xff]
  %v1052 = vld [vmem:[%s2 + $0xd0] sm:$0xff]
  %v1053 = vld [vmem:[%s2 + $0xd8] sm:$0xff]
  %v1054 = vld [vmem:[%s2 + $0xe0] sm:$0xff]
  %v1055 = vld [vmem:[%s2 + $0xe8] sm:$0xff]
  %v1056 = vld [vmem:[%s2 + $0xf0] sm:$0xff]
  %v1057 = vld [vmem:[%s2 + $0xf8] sm:$0xff]
  %v1058 = vld [vmem:[%s2 + $0x100] sm:$0xff]
  %v1059 = vld [vmem:[%s2 + $0x108] sm:$0xff]
  %v1060 = vld [vmem:[%s2 + $0x110] sm:$0xff]
  %v1061 = vld [vmem:[%s2 + $0x118] sm:$0xff]
  %v1062 = vld [vmem:[%s2 + $0x120] sm:$0xff]
  %v1063 = vld [vmem:[%s2 + $0x128] sm:$0xff]
  %v1064 = vld [vmem:[%s2 + $0x130] sm:$0xff]
  %v1065 = vld [vmem:[%s2 + $0x138] sm:$0xff]
  %v1066 = vld [vmem:[%s2 + $0x140] sm:$0xff]
  %v1067 = vld [vmem:[%s2 + $0x148] sm:$0xff]
  %v1068 = vld [vmem:[%s2 + $0x150] sm:$0xff]
  %v1069 = vld [vmem:[%s2 + $0x158] sm:$0xff]
  %v1070 = vld [vmem:[%s2 + $0x160] sm:$0xff]
  %v1071 = vld [vmem:[%s2 + $0x168] sm:$0xff]
  %v1072 = vld [vmem:[%s2 + $0x170] sm:$0xff]
  %v1073 = vld [vmem:[%s2 + $0x178] sm:$0xff]
  %v1074 = vld [vmem:[%s2 + $0x180] sm:$0xff]
  %v1075 = vld [vmem:[%s2 + $0x188] sm:$0xff]
  %v1076 = vld [vmem:[%s2 + $0x190] sm:$0xff]
  %v1077 = vld [vmem:[%s2 + $0x198] sm:$0xff]
  %v1078 = vld [vmem:[%s2 + $0x1a0] sm:$0xff]
  %v1079 = vld [vmem:[%s2 + $0x1a8] sm:$0xff]
  %v1080 = vld [vmem:[%s2 + $0x1b0] sm:$0xff]
  %v1081 = vld [vmem:[%s2 + $0x1b8] sm:$0xff]
  %v1082 = vld [vmem:[%s2 + $0x1c0] sm:$0xff]
  %v1083 = vld [vmem:[%s2 + $0x1c8] sm:$0xff]
  %v1084 = vld [vmem:[%s2 + $0x1d0] sm:$0xff]
  %v1085 = vld [vmem:[%s2 + $0x1d8] sm:$0xff]
  %v1086 = vld [vmem:[%s2 + $0x1e0] sm:$0xff]
  %v1087 = vld [vmem:[%s2 + $0x1e8] sm:$0xff]
  %v1088 = vld [vmem:[%s2 + $0x1f0] sm:$0xff]
  %v1089 = vld [vmem:[%s2 + $0x1f8] sm:$0xff]
  %v1090 = vld [vmem:[%s2 + $0x200] sm:$0xff]
  %v1091 = vld [vmem:[%s2 + $0x208] sm:$0xff]
  %v1092 = vld [vmem:[%s2 + $0x210] sm:$0xff]
  %v1093 = vld [vmem:[%s2 + $0x218] sm:$0xff]
  %v1094 = vld [vmem:[%s2 + $0x220] sm:$0xff]
  %v1095 = vld [vmem:[%s2 + $0x228] sm:$0xff]
  %v1096 = vld [vmem:[%s2 + $0x230] sm:$0xff]
  %v1097 = vld [vmem:[%s2 + $0x238] sm:$0xff]
  %v1098 = vld [vmem:[%s2 + $0x240] sm:$0xff]
  %v1099 = vld [vmem:[%s2 + $0x248] sm:$0xff]
  %v1100 = vld [vmem:[%s2 + $0x250] sm:$0xff]
  %v1101 = vld [vmem:[%s2 + $0x258] sm:$0xff]
  %v1102 = vld [vmem:[%s2 + $0x260] sm:$0xff]
  %v1103 = vld [vmem:[%s2 + $0x268] sm:$0xff]
  %v1104 = vld [vmem:[%s2 + $0x270] sm:$0xff]
  %v1105 = vld [vmem:[%s2 + $0x278] sm:$0xff]
  %v1106 = vld [vmem:[%s2 + $0x280] sm:$0xff]
  %v1107 = vld [vmem:[%s2 + $0x288] sm:$0xff]
  %v1108 = vld [vmem:[%s2 + $0x290] sm:$0xff]
  %v1109 = vld [vmem:[%s2 + $0x298] sm:$0xff]
  %v1110 = vld [vmem:[%s2 + $0x2a0] sm:$0xff]
  %v1111 = vld [vmem:[%s2 + $0x2a8] sm:$0xff]
  %v1112 = vld [vmem:[%s2 + $0x2b0] sm:$0xff]
  %v1113 = vld [vmem:[%s2 + $0x2b8] sm:$0xff]
  %v1114 = vld [vmem:[%s2 + $0x2c0] sm:$0xff]
  %v1115 = vld [vmem:[%s2 + $0x2c8] sm:$0xff]
  %v1116 = vld [vmem:[%s2 + $0x2d0] sm:$0xff]
  %v1117 = vld [vmem:[%s2 + $0x2d8] sm:$0xff]
  %v1118 = vld [vmem:[%s2 + $0x2e0] sm:$0xff]
  %v1119 = vld [vmem:[%s2 + $0x2e8] sm:$0xff]
  %v1120 = vld [vmem:[%s2 + $0x2f0] sm:$0xff]
  %v1121 = vld [vmem:[%s2 + $0x2f8] sm:$0xff]
  %v1122 = vld [vmem:[%s2 + $0x300] sm:$0xff]
  %v1123 = vld [vmem:[%s2 + $0x308] sm:$0xff]
  %v1124 = vld [vmem:[%s2 + $0x310] sm:$0xff]
  %v1125 = vld [vmem:[%s2 + $0x318] sm:$0xff]
  %v1126 = vld [vmem:[%s2 + $0x320] sm:$0xff]
  %v1127 = vld [vmem:[%s2 + $0x328] sm:$0xff]
  %v1128 = vld [vmem:[%s2 + $0x330] sm:$0xff]
  %v1129 = vld [vmem:[%s2 + $0x338] sm:$0xff]
  %v1130 = vld [vmem:[%s2 + $0x340] sm:$0xff]
  %v1131 = vld [vmem:[%s2 + $0x348] sm:$0xff]
  %v1132 = vld [vmem:[%s2 + $0x350] sm:$0xff]
  %v1133 = vld [vmem:[%s2 + $0x358] sm:$0xff]
  %v1134 = vld [vmem:[%s2 + $0x360] sm:$0xff]
  %v1135 = vld [vmem:[%s2 + $0x368] sm:$0xff]
  %v1136 = vld [vmem:[%s2 + $0x370] sm:$0xff]
  %v1137 = vld [vmem:[%s2 + $0x378] sm:$0xff]
  %v1138 = vld [vmem:[%s2 + $0x380] sm:$0xff]
  %v1139 = vld [vmem:[%s2 + $0x388] sm:$0xff]
  %v1140 = vld [vmem:[%s2 + $0x390] sm:$0xff]
  %v1141 = vld [vmem:[%s2 + $0x398] sm:$0xff]
  %v1142 = vld [vmem:[%s2 + $0x3a0] sm:$0xff]
  %v1143 = vld [vmem:[%s2 + $0x3a8] sm:$0xff]
  %v1144 = vld [vmem:[%s2 + $0x3b0] sm:$0xff]
  %v1145 = vld [vmem:[%s2 + $0x3b8] sm:$0xff]
  %v1146 = vld [vmem:[%s2 + $0x3c0] sm:$0xff]
  %v1147 = vld [vmem:[%s2 + $0x3c8] sm:$0xff]
  %v1148 = vld [vmem:[%s2 + $0x3d0] sm:$0xff]
  %v1149 = vld [vmem:[%s2 + $0x3d8] sm:$0xff]
  %v1150 = vld [vmem:[%s2 + $0x3e0] sm:$0xff]
  %v1151 = vld [vmem:[%s2 + $0x3e8] sm:$0xff]
  %v1152 = vld [vmem:[%s2 + $0x3f0] sm:$0xff]
  %v1153 = vld [vmem:[%s2 + $0x3f8] sm:$0xff]
  %v1156 = vunpack.c.l.s4 1966171168
  %v1157 = vunpack.c.0.s8 %v1156
  %v1158 = vlaneseq
  %v1159 = vshrl.u32 %v1158, 7
  %v1160 = vsub.s32 %v1157, %v1159
  %v1161 = vrot.slane %v1023, %v1160
  %v1162 = vcombine.high %v1161, %v1161
  %v1164 = vunpack.c.l.s4 1966171168
  %v1165 = vunpack.c.0.s8 %v1164
  %v1166 = vlaneseq
  %v1167 = vshrl.u32 %v1166, 7
  %v1168 = vsub.s32 %v1165, %v1167
  %v1169 = vrot.slane %v1161, %v1168
  %v1171 = vunpack.c.l.s4 1966171168
  %v1172 = vunpack.c.0.s8 %v1171
  %v1173 = vlaneseq
  %v1174 = vshrl.u32 %v1173, 7
  %v1175 = vsub.s32 %v1172, %v1174
  %v1176 = vrot.slane %v1162, %v1175
  %v1307 = vunpack.c.l.b16 %v1026
  %v1308 = vunpack.c.h.b16 %v1026
  %v1309 = vunpack.c.l.b16 %v1027
  %v1310 = vunpack.c.h.b16 %v1027
  %v1311 = vunpack.c.l.b16 %v1028
  %v1312 = vunpack.c.h.b16 %v1028
  %v1313 = vunpack.c.l.b16 %v1029
  %v1314 = vunpack.c.h.b16 %v1029
  %v1315 = vunpack.c.l.b16 %v1030
  %v1316 = vunpack.c.h.b16 %v1030
  %v1317 = vunpack.c.l.b16 %v1031
  %v1318 = vunpack.c.h.b16 %v1031
  %v1319 = vunpack.c.l.b16 %v1032
  %v1320 = vunpack.c.h.b16 %v1032
  %v1321 = vunpack.c.l.b16 %v1033
  %v1322 = vunpack.c.h.b16 %v1033
  %v1323 = vunpack.c.l.b16 %v1034
  %v1324 = vunpack.c.h.b16 %v1034
  %v1325 = vunpack.c.l.b16 %v1035
  %v1326 = vunpack.c.h.b16 %v1035
  %v1327 = vunpack.c.l.b16 %v1036
  %v1328 = vunpack.c.h.b16 %v1036
  %v1329 = vunpack.c.l.b16 %v1037
  %v1330 = vunpack.c.h.b16 %v1037
  %v1331 = vunpack.c.l.b16 %v1038
  %v1332 = vunpack.c.h.b16 %v1038
  %v1333 = vunpack.c.l.b16 %v1039
  %v1334 = vunpack.c.h.b16 %v1039
  %v1335 = vunpack.c.l.b16 %v1040
  %v1336 = vunpack.c.h.b16 %v1040
  %v1337 = vunpack.c.l.b16 %v1041
  %v1338 = vunpack.c.h.b16 %v1041
  %v1339 = vunpack.c.l.b16 %v1042
  %v1340 = vunpack.c.h.b16 %v1042
  %v1341 = vunpack.c.l.b16 %v1043
  %v1342 = vunpack.c.h.b16 %v1043
  %v1343 = vunpack.c.l.b16 %v1044
  %v1344 = vunpack.c.h.b16 %v1044
  %v1345 = vunpack.c.l.b16 %v1045
  %v1346 = vunpack.c.h.b16 %v1045
  %v1347 = vunpack.c.l.b16 %v1046
  %v1348 = vunpack.c.h.b16 %v1046
  %v1349 = vunpack.c.l.b16 %v1047
  %v1350 = vunpack.c.h.b16 %v1047
  %v1351 = vunpack.c.l.b16 %v1048
  %v1352 = vunpack.c.h.b16 %v1048
  %v1353 = vunpack.c.l.b16 %v1049
  %v1354 = vunpack.c.h.b16 %v1049
  %v1355 = vunpack.c.l.b16 %v1050
  %v1356 = vunpack.c.h.b16 %v1050
  %v1357 = vunpack.c.l.b16 %v1051
  %v1358 = vunpack.c.h.b16 %v1051
  %v1359 = vunpack.c.l.b16 %v1052
  %v1360 = vunpack.c.h.b16 %v1052
  %v1361 = vunpack.c.l.b16 %v1053
  %v1362 = vunpack.c.h.b16 %v1053
  %v1363 = vunpack.c.l.b16 %v1054
  %v1364 = vunpack.c.h.b16 %v1054
  %v1365 = vunpack.c.l.b16 %v1055
  %v1366 = vunpack.c.h.b16 %v1055
  %v1367 = vunpack.c.l.b16 %v1056
  %v1368 = vunpack.c.h.b16 %v1056
  %v1369 = vunpack.c.l.b16 %v1057
  %v1370 = vunpack.c.h.b16 %v1057
  %v1371 = vunpack.c.l.b16 %v1058
  %v1372 = vunpack.c.h.b16 %v1058
  %v1373 = vunpack.c.l.b16 %v1059
  %v1374 = vunpack.c.h.b16 %v1059
  %v1375 = vunpack.c.l.b16 %v1060
  %v1376 = vunpack.c.h.b16 %v1060
  %v1377 = vunpack.c.l.b16 %v1061
  %v1378 = vunpack.c.h.b16 %v1061
  %v1379 = vunpack.c.l.b16 %v1062
  %v1380 = vunpack.c.h.b16 %v1062
  %v1381 = vunpack.c.l.b16 %v1063
  %v1382 = vunpack.c.h.b16 %v1063
  %v1383 = vunpack.c.l.b16 %v1064
  %v1384 = vunpack.c.h.b16 %v1064
  %v1385 = vunpack.c.l.b16 %v1065
  %v1386 = vunpack.c.h.b16 %v1065
  %v1387 = vunpack.c.l.b16 %v1066
  %v1388 = vunpack.c.h.b16 %v1066
  %v1389 = vunpack.c.l.b16 %v1067
  %v1390 = vunpack.c.h.b16 %v1067
  %v1391 = vunpack.c.l.b16 %v1068
  %v1392 = vunpack.c.h.b16 %v1068
  %v1393 = vunpack.c.l.b16 %v1069
  %v1394 = vunpack.c.h.b16 %v1069
  %v1395 = vunpack.c.l.b16 %v1070
  %v1396 = vunpack.c.h.b16 %v1070
  %v1397 = vunpack.c.l.b16 %v1071
  %v1398 = vunpack.c.h.b16 %v1071
  %v1399 = vunpack.c.l.b16 %v1072
  %v1400 = vunpack.c.h.b16 %v1072
  %v1401 = vunpack.c.l.b16 %v1073
  %v1402 = vunpack.c.h.b16 %v1073
  %v1403 = vunpack.c.l.b16 %v1074
  %v1404 = vunpack.c.h.b16 %v1074
  %v1405 = vunpack.c.l.b16 %v1075
  %v1406 = vunpack.c.h.b16 %v1075
  %v1407 = vunpack.c.l.b16 %v1076
  %v1408 = vunpack.c.h.b16 %v1076
  %v1409 = vunpack.c.l.b16 %v1077
  %v1410 = vunpack.c.h.b16 %v1077
  %v1411 = vunpack.c.l.b16 %v1078
  %v1412 = vunpack.c.h.b16 %v1078
  %v1413 = vunpack.c.l.b16 %v1079
  %v1414 = vunpack.c.h.b16 %v1079
  %v1415 = vunpack.c.l.b16 %v1080
  %v1416 = vunpack.c.h.b16 %v1080
  %v1417 = vunpack.c.l.b16 %v1081
  %v1418 = vunpack.c.h.b16 %v1081
  %v1419 = vunpack.c.l.b16 %v1082
  %v1420 = vunpack.c.h.b16 %v1082
  %v1421 = vunpack.c.l.b16 %v1083
  %v1422 = vunpack.c.h.b16 %v1083
  %v1423 = vunpack.c.l.b16 %v1084
  %v1424 = vunpack.c.h.b16 %v1084
  %v1425 = vunpack.c.l.b16 %v1085
  %v1426 = vunpack.c.h.b16 %v1085
  %v1427 = vunpack.c.l.b16 %v1086
  %v1428 = vunpack.c.h.b16 %v1086
  %v1429 = vunpack.c.l.b16 %v1087
  %v1430 = vunpack.c.h.b16 %v1087
  %v1431 = vunpack.c.l.b16 %v1088
  %v1432 = vunpack.c.h.b16 %v1088
  %v1433 = vunpack.c.l.b16 %v1089
  %v1434 = vunpack.c.h.b16 %v1089
  %v1435 = vunpack.c.l.b16 %v1090
  %v1436 = vunpack.c.h.b16 %v1090
  %v1437 = vunpack.c.l.b16 %v1091
  %v1438 = vunpack.c.h.b16 %v1091
  %v1439 = vunpack.c.l.b16 %v1092
  %v1440 = vunpack.c.h.b16 %v1092
  %v1441 = vunpack.c.l.b16 %v1093
  %v1442 = vunpack.c.h.b16 %v1093
  %v1443 = vunpack.c.l.b16 %v1094
  %v1444 = vunpack.c.h.b16 %v1094
  %v1445 = vunpack.c.l.b16 %v1095
  %v1446 = vunpack.c.h.b16 %v1095
  %v1447 = vunpack.c.l.b16 %v1096
  %v1448 = vunpack.c.h.b16 %v1096
  %v1449 = vunpack.c.l.b16 %v1097
  %v1450 = vunpack.c.h.b16 %v1097
  %v1451 = vunpack.c.l.b16 %v1098
  %v1452 = vunpack.c.h.b16 %v1098
  %v1453 = vunpack.c.l.b16 %v1099
  %v1454 = vunpack.c.h.b16 %v1099
  %v1455 = vunpack.c.l.b16 %v1100
  %v1456 = vunpack.c.h.b16 %v1100
  %v1457 = vunpack.c.l.b16 %v1101
  %v1458 = vunpack.c.h.b16 %v1101
  %v1459 = vunpack.c.l.b16 %v1102
  %v1460 = vunpack.c.h.b16 %v1102
  %v1461 = vunpack.c.l.b16 %v1103
  %v1462 = vunpack.c.h.b16 %v1103
  %v1463 = vunpack.c.l.b16 %v1104
  %v1464 = vunpack.c.h.b16 %v1104
  %v1465 = vunpack.c.l.b16 %v1105
  %v1466 = vunpack.c.h.b16 %v1105
  %v1467 = vunpack.c.l.b16 %v1106
  %v1468 = vunpack.c.h.b16 %v1106
  %v1469 = vunpack.c.l.b16 %v1107
  %v1470 = vunpack.c.h.b16 %v1107
  %v1471 = vunpack.c.l.b16 %v1108
  %v1472 = vunpack.c.h.b16 %v1108
  %v1473 = vunpack.c.l.b16 %v1109
  %v1474 = vunpack.c.h.b16 %v1109
  %v1475 = vunpack.c.l.b16 %v1110
  %v1476 = vunpack.c.h.b16 %v1110
  %v1477 = vunpack.c.l.b16 %v1111
  %v1478 = vunpack.c.h.b16 %v1111
  %v1479 = vunpack.c.l.b16 %v1112
  %v1480 = vunpack.c.h.b16 %v1112
  %v1481 = vunpack.c.l.b16 %v1113
  %v1482 = vunpack.c.h.b16 %v1113
  %v1483 = vunpack.c.l.b16 %v1114
  %v1484 = vunpack.c.h.b16 %v1114
  %v1485 = vunpack.c.l.b16 %v1115
  %v1486 = vunpack.c.h.b16 %v1115
  %v1487 = vunpack.c.l.b16 %v1116
  %v1488 = vunpack.c.h.b16 %v1116
  %v1489 = vunpack.c.l.b16 %v1117
  %v1490 = vunpack.c.h.b16 %v1117
  %v1491 = vunpack.c.l.b16 %v1118
  %v1492 = vunpack.c.h.b16 %v1118
  %v1493 = vunpack.c.l.b16 %v1119
  %v1494 = vunpack.c.h.b16 %v1119
  %v1495 = vunpack.c.l.b16 %v1120
  %v1496 = vunpack.c.h.b16 %v1120
  %v1497 = vunpack.c.l.b16 %v1121
  %v1498 = vunpack.c.h.b16 %v1121
  %v1499 = vunpack.c.l.b16 %v1122
  %v1500 = vunpack.c.h.b16 %v1122
  %v1501 = vunpack.c.l.b16 %v1123
  %v1502 = vunpack.c.h.b16 %v1123
  %v1503 = vunpack.c.l.b16 %v1124
  %v1504 = vunpack.c.h.b16 %v1124
  %v1505 = vunpack.c.l.b16 %v1125
  %v1506 = vunpack.c.h.b16 %v1125
  %v1507 = vunpack.c.l.b16 %v1126
  %v1508 = vunpack.c.h.b16 %v1126
  %v1509 = vunpack.c.l.b16 %v1127
  %v1510 = vunpack.c.h.b16 %v1127
  %v1511 = vunpack.c.l.b16 %v1128
  %v1512 = vunpack.c.h.b16 %v1128
  %v1513 = vunpack.c.l.b16 %v1129
  %v1514 = vunpack.c.h.b16 %v1129
  %v1515 = vunpack.c.l.b16 %v1130
  %v1516 = vunpack.c.h.b16 %v1130
  %v1517 = vunpack.c.l.b16 %v1131
  %v1518 = vunpack.c.h.b16 %v1131
  %v1519 = vunpack.c.l.b16 %v1132
  %v1520 = vunpack.c.h.b16 %v1132
  %v1521 = vunpack.c.l.b16 %v1133
  %v1522 = vunpack.c.h.b16 %v1133
  %v1523 = vunpack.c.l.b16 %v1134
  %v1524 = vunpack.c.h.b16 %v1134
  %v1525 = vunpack.c.l.b16 %v1135
  %v1526 = vunpack.c.h.b16 %v1135
  %v1527 = vunpack.c.l.b16 %v1136
  %v1528 = vunpack.c.h.b16 %v1136
  %v1529 = vunpack.c.l.b16 %v1137
  %v1530 = vunpack.c.h.b16 %v1137
  %v1531 = vunpack.c.l.b16 %v1138
  %v1532 = vunpack.c.h.b16 %v1138
  %v1533 = vunpack.c.l.b16 %v1139
  %v1534 = vunpack.c.h.b16 %v1139
  %v1535 = vunpack.c.l.b16 %v1140
  %v1536 = vunpack.c.h.b16 %v1140
  %v1537 = vunpack.c.l.b16 %v1141
  %v1538 = vunpack.c.h.b16 %v1141
  %v1539 = vunpack.c.l.b16 %v1142
  %v1540 = vunpack.c.h.b16 %v1142
  %v1541 = vunpack.c.l.b16 %v1143
  %v1542 = vunpack.c.h.b16 %v1143
  %v1543 = vunpack.c.l.b16 %v1144
  %v1544 = vunpack.c.h.b16 %v1144
  %v1545 = vunpack.c.l.b16 %v1145
  %v1546 = vunpack.c.h.b16 %v1145
  %v1547 = vunpack.c.l.b16 %v1146
  %v1548 = vunpack.c.h.b16 %v1146
  %v1549 = vunpack.c.l.b16 %v1147
  %v1550 = vunpack.c.h.b16 %v1147
  %v1551 = vunpack.c.l.b16 %v1148
  %v1552 = vunpack.c.h.b16 %v1148
  %v1553 = vunpack.c.l.b16 %v1149
  %v1554 = vunpack.c.h.b16 %v1149
  %v1555 = vunpack.c.l.b16 %v1150
  %v1556 = vunpack.c.h.b16 %v1150
  %v1557 = vunpack.c.l.b16 %v1151
  %v1558 = vunpack.c.h.b16 %v1151
  %v1559 = vunpack.c.l.b16 %v1152
  %v1560 = vunpack.c.h.b16 %v1152
  %v1561 = vunpack.c.l.b16 %v1153
  %v1562 = vunpack.c.h.b16 %v1153
  %v1563 = vpack.c.b16 %v1315, %v1307
  %v1564 = vpack.c.b16 %v1316, %v1308
  %v1565 = vpack.c.b16 %v1317, %v1309
  %v1566 = vpack.c.b16 %v1318, %v1310
  %v1567 = vpack.c.b16 %v1319, %v1311
  %v1568 = vpack.c.b16 %v1320, %v1312
  %v1569 = vpack.c.b16 %v1321, %v1313
  %v1570 = vpack.c.b16 %v1322, %v1314
  %v1571 = vpack.c.b16 %v1331, %v1323
  %v1572 = vpack.c.b16 %v1332, %v1324
  %v1573 = vpack.c.b16 %v1333, %v1325
  %v1574 = vpack.c.b16 %v1334, %v1326
  %v1575 = vpack.c.b16 %v1335, %v1327
  %v1576 = vpack.c.b16 %v1336, %v1328
  %v1577 = vpack.c.b16 %v1337, %v1329
  %v1578 = vpack.c.b16 %v1338, %v1330
  %v1579 = vpack.c.b16 %v1347, %v1339
  %v1580 = vpack.c.b16 %v1348, %v1340
  %v1581 = vpack.c.b16 %v1349, %v1341
  %v1582 = vpack.c.b16 %v1350, %v1342
  %v1583 = vpack.c.b16 %v1351, %v1343
  %v1584 = vpack.c.b16 %v1352, %v1344
  %v1585 = vpack.c.b16 %v1353, %v1345
  %v1586 = vpack.c.b16 %v1354, %v1346
  %v1587 = vpack.c.b16 %v1363, %v1355
  %v1588 = vpack.c.b16 %v1364, %v1356
  %v1589 = vpack.c.b16 %v1365, %v1357
  %v1590 = vpack.c.b16 %v1366, %v1358
  %v1591 = vpack.c.b16 %v1367, %v1359
  %v1592 = vpack.c.b16 %v1368, %v1360
  %v1593 = vpack.c.b16 %v1369, %v1361
  %v1594 = vpack.c.b16 %v1370, %v1362
  %v1595 = vpack.c.b16 %v1379, %v1371
  %v1596 = vpack.c.b16 %v1380, %v1372
  %v1597 = vpack.c.b16 %v1381, %v1373
  %v1598 = vpack.c.b16 %v1382, %v1374
  %v1599 = vpack.c.b16 %v1383, %v1375
  %v1600 = vpack.c.b16 %v1384, %v1376
  %v1601 = vpack.c.b16 %v1385, %v1377
  %v1602 = vpack.c.b16 %v1386, %v1378
  %v1603 = vpack.c.b16 %v1395, %v1387
  %v1604 = vpack.c.b16 %v1396, %v1388
  %v1605 = vpack.c.b16 %v1397, %v1389
  %v1606 = vpack.c.b16 %v1398, %v1390
  %v1607 = vpack.c.b16 %v1399, %v1391
  %v1608 = vpack.c.b16 %v1400, %v1392
  %v1609 = vpack.c.b16 %v1401, %v1393
  %v1610 = vpack.c.b16 %v1402, %v1394
  %v1611 = vpack.c.b16 %v1411, %v1403
  %v1612 = vpack.c.b16 %v1412, %v1404
  %v1613 = vpack.c.b16 %v1413, %v1405
  %v1614 = vpack.c.b16 %v1414, %v1406
  %v1615 = vpack.c.b16 %v1415, %v1407
  %v1616 = vpack.c.b16 %v1416, %v1408
  %v1617 = vpack.c.b16 %v1417, %v1409
  %v1618 = vpack.c.b16 %v1418, %v1410
  %v1619 = vpack.c.b16 %v1427, %v1419
  %v1620 = vpack.c.b16 %v1428, %v1420
  %v1621 = vpack.c.b16 %v1429, %v1421
  %v1622 = vpack.c.b16 %v1430, %v1422
  %v1623 = vpack.c.b16 %v1431, %v1423
  %v1624 = vpack.c.b16 %v1432, %v1424
  %v1625 = vpack.c.b16 %v1433, %v1425
  %v1626 = vpack.c.b16 %v1434, %v1426
  %v1627 = vpack.c.b16 %v1443, %v1435
  %v1628 = vpack.c.b16 %v1444, %v1436
  %v1629 = vpack.c.b16 %v1445, %v1437
  %v1630 = vpack.c.b16 %v1446, %v1438
  %v1631 = vpack.c.b16 %v1447, %v1439
  %v1632 = vpack.c.b16 %v1448, %v1440
  %v1633 = vpack.c.b16 %v1449, %v1441
  %v1634 = vpack.c.b16 %v1450, %v1442
  %v1635 = vpack.c.b16 %v1459, %v1451
  %v1636 = vpack.c.b16 %v1460, %v1452
  %v1637 = vpack.c.b16 %v1461, %v1453
  %v1638 = vpack.c.b16 %v1462, %v1454
  %v1639 = vpack.c.b16 %v1463, %v1455
  %v1640 = vpack.c.b16 %v1464, %v1456
  %v1641 = vpack.c.b16 %v1465, %v1457
  %v1642 = vpack.c.b16 %v1466, %v1458
  %v1643 = vpack.c.b16 %v1475, %v1467
  %v1644 = vpack.c.b16 %v1476, %v1468
  %v1645 = vpack.c.b16 %v1477, %v1469
  %v1646 = vpack.c.b16 %v1478, %v1470
  %v1647 = vpack.c.b16 %v1479, %v1471
  %v1648 = vpack.c.b16 %v1480, %v1472
  %v1649 = vpack.c.b16 %v1481, %v1473
  %v1650 = vpack.c.b16 %v1482, %v1474
  %v1651 = vpack.c.b16 %v1491, %v1483
  %v1652 = vpack.c.b16 %v1492, %v1484
  %v1653 = vpack.c.b16 %v1493, %v1485
  %v1654 = vpack.c.b16 %v1494, %v1486
  %v1655 = vpack.c.b16 %v1495, %v1487
  %v1656 = vpack.c.b16 %v1496, %v1488
  %v1657 = vpack.c.b16 %v1497, %v1489
  %v1658 = vpack.c.b16 %v1498, %v1490
  %v1659 = vpack.c.b16 %v1507, %v1499
  %v1660 = vpack.c.b16 %v1508, %v1500
  %v1661 = vpack.c.b16 %v1509, %v1501
  %v1662 = vpack.c.b16 %v1510, %v1502
  %v1663 = vpack.c.b16 %v1511, %v1503
  %v1664 = vpack.c.b16 %v1512, %v1504
  %v1665 = vpack.c.b16 %v1513, %v1505
  %v1666 = vpack.c.b16 %v1514, %v1506
  %v1667 = vpack.c.b16 %v1523, %v1515
  %v1668 = vpack.c.b16 %v1524, %v1516
  %v1669 = vpack.c.b16 %v1525, %v1517
  %v1670 = vpack.c.b16 %v1526, %v1518
  %v1671 = vpack.c.b16 %v1527, %v1519
  %v1672 = vpack.c.b16 %v1528, %v1520
  %v1673 = vpack.c.b16 %v1529, %v1521
  %v1674 = vpack.c.b16 %v1530, %v1522
  %v1675 = vpack.c.b16 %v1539, %v1531
  %v1676 = vpack.c.b16 %v1540, %v1532
  %v1677 = vpack.c.b16 %v1541, %v1533
  %v1678 = vpack.c.b16 %v1542, %v1534
  %v1679 = vpack.c.b16 %v1543, %v1535
  %v1680 = vpack.c.b16 %v1544, %v1536
  %v1681 = vpack.c.b16 %v1545, %v1537
  %v1682 = vpack.c.b16 %v1546, %v1538
  %v1683 = vpack.c.b16 %v1555, %v1547
  %v1684 = vpack.c.b16 %v1556, %v1548
  %v1685 = vpack.c.b16 %v1557, %v1549
  %v1686 = vpack.c.b16 %v1558, %v1550
  %v1687 = vpack.c.b16 %v1559, %v1551
  %v1688 = vpack.c.b16 %v1560, %v1552
  %v1689 = vpack.c.b16 %v1561, %v1553
  %v1690 = vpack.c.b16 %v1562, %v1554
  %1819 = vmatprep.subr.bf16.mxu0 %v1620
  %1820 = vmatpush1.bf16.msra.mxu0 %v1619
  %1821 = vmatprep.subr.bf16.mxu0 %v1612
  %1822 = vmatpush1.bf16.msra.mxu0 %v1611
  %1823 = vmatprep.subr.bf16.mxu0 %v1604
  %1824 = vmatpush1.bf16.msra.mxu0 %v1603
  %1825 = vmatprep.subr.bf16.mxu0 %v1596
  %1826 = vmatpush1.bf16.msra.mxu0 %v1595
  %1827 = vmatprep.subr.bf16.mxu0 %v1588
  %1828 = vmatpush1.bf16.msra.mxu0 %v1587
  %1829 = vmatprep.subr.bf16.mxu0 %v1580
  %1830 = vmatpush1.bf16.msra.mxu0 %v1579
  %1831 = vmatprep.subr.bf16.mxu0 %v1572
  %1832 = vmatpush1.bf16.msra.mxu0 %v1571
  %1833 = vmatprep.subr.bf16.mxu0 %v1564
  %1834 = vmatpush1.bf16.msra.mxu0 %v1563
  %1835 = vmatprep.subr.bf16.mxu0 %v1684
  %1836 = vmatpush2.bf16.msra.mxu0 %v1683
  %1837 = vmatprep.subr.bf16.mxu0 %v1676
  %1838 = vmatpush2.bf16.msra.mxu0 %v1675
  %1839 = vmatprep.subr.bf16.mxu0 %v1668
  %1840 = vmatpush2.bf16.msra.mxu0 %v1667
  %1841 = vmatprep.subr.bf16.mxu0 %v1660
  %1842 = vmatpush2.bf16.msra.mxu0 %v1659
  %1843 = vmatprep.subr.bf16.mxu0 %v1652
  %1844 = vmatpush2.bf16.msra.mxu0 %v1651
  %1845 = vmatprep.subr.bf16.mxu0 %v1644
  %1846 = vmatpush2.bf16.msra.mxu0 %v1643
  %1847 = vmatprep.subr.bf16.mxu0 %v1636
  %1848 = vmatpush2.bf16.msra.mxu0 %v1635
  %1849 = vmatprep.subr.bf16.mxu0 %v1628
  %1850 = vmatpush2.bf16.msra.mxu0 %v1627
  %1851 = vmatprep.mubr.bf16.mxu0 %v1176
  %1852 = vmatmul.mubr.bf16.gmra.mxu0 %v1169
  %v1853 = vpop.f32.mrf.mxu0
  %v1854 = vadd.f32 0.0, %v1853
  %v1855 = vpop.f32.mrf.mxu0
  %v1856 = vadd.f32 0.0, %v1855
  %v1857 = vpop.f32.mrf.mxu0
  %v1858 = vpop.f32.mrf.mxu0
  %1859 = vdwg.mxu0
  %1860 = vmatprep.subr.bf16.mxu0 %v1622
  %1861 = vmatpush1.bf16.msra.mxu0 %v1621
  %1862 = vmatprep.subr.bf16.mxu0 %v1614
  %1863 = vmatpush1.bf16.msra.mxu0 %v1613
  %1864 = vmatprep.subr.bf16.mxu0 %v1606
  %1865 = vmatpush1.bf16.msra.mxu0 %v1605
  %1866 = vmatprep.subr.bf16.mxu0 %v1598
  %1867 = vmatpush1.bf16.msra.mxu0 %v1597
  %1868 = vmatprep.subr.bf16.mxu0 %v1590
  %1869 = vmatpush1.bf16.msra.mxu0 %v1589
  %1870 = vmatprep.subr.bf16.mxu0 %v1582
  %1871 = vmatpush1.bf16.msra.mxu0 %v1581
  %1872 = vmatprep.subr.bf16.mxu0 %v1574
  %1873 = vmatpush1.bf16.msra.mxu0 %v1573
  %1874 = vmatprep.subr.bf16.mxu0 %v1566
  %1875 = vmatpush1.bf16.msra.mxu0 %v1565
  %1876 = vmatprep.subr.bf16.mxu0 %v1686
  %1877 = vmatpush2.bf16.msra.mxu0 %v1685
  %1878 = vmatprep.subr.bf16.mxu0 %v1678
  %1879 = vmatpush2.bf16.msra.mxu0 %v1677
  %1880 = vmatprep.subr.bf16.mxu0 %v1670
  %1881 = vmatpush2.bf16.msra.mxu0 %v1669
  %1882 = vmatprep.subr.bf16.mxu0 %v1662
  %1883 = vmatpush2.bf16.msra.mxu0 %v1661
  %1884 = vmatprep.subr.bf16.mxu0 %v1654
  %1885 = vmatpush2.bf16.msra.mxu0 %v1653
  %1886 = vmatprep.subr.bf16.mxu0 %v1646
  %1887 = vmatpush2.bf16.msra.mxu0 %v1645
  %1888 = vmatprep.subr.bf16.mxu0 %v1638
  %1889 = vmatpush2.bf16.msra.mxu0 %v1637
  %1890 = vmatprep.subr.bf16.mxu0 %v1630
  %1891 = vmatpush2.bf16.msra.mxu0 %v1629
  %1892 = vmatprep.mubr.bf16.mxu0 %v1176
  %1893 = vmatmul.mubr.bf16.gmra.mxu0 %v1169
  %v1894 = vpop.f32.mrf.mxu0
  %v1895 = vadd.f32 0.0, %v1894
  %v1896 = vpop.f32.mrf.mxu0
  %v1897 = vadd.f32 0.0, %v1896
  %v1898 = vpop.f32.mrf.mxu0
  %v1899 = vpop.f32.mrf.mxu0
  %1900 = vdwg.mxu0
  %1901 = vmatprep.subr.bf16.mxu0 %v1624
  %1902 = vmatpush1.bf16.msra.mxu0 %v1623
  %1903 = vmatprep.subr.bf16.mxu0 %v1616
  %1904 = vmatpush1.bf16.msra.mxu0 %v1615
  %1905 = vmatprep.subr.bf16.mxu0 %v1608
  %1906 = vmatpush1.bf16.msra.mxu0 %v1607
  %1907 = vmatprep.subr.bf16.mxu0 %v1600
  %1908 = vmatpush1.bf16.msra.mxu0 %v1599
  %1909 = vmatprep.subr.bf16.mxu0 %v1592
  %1910 = vmatpush1.bf16.msra.mxu0 %v1591
  %1911 = vmatprep.subr.bf16.mxu0 %v1584
  %1912 = vmatpush1.bf16.msra.mxu0 %v1583
  %1913 = vmatprep.subr.bf16.mxu0 %v1576
  %1914 = vmatpush1.bf16.msra.mxu0 %v1575
  %1915 = vmatprep.subr.bf16.mxu0 %v1568
  %1916 = vmatpush1.bf16.msra.mxu0 %v1567
  %1917 = vmatprep.subr.bf16.mxu0 %v1688
  %1918 = vmatpush2.bf16.msra.mxu0 %v1687
  %1919 = vmatprep.subr.bf16.mxu0 %v1680
  %1920 = vmatpush2.bf16.msra.mxu0 %v1679
  %1921 = vmatprep.subr.bf16.mxu0 %v1672
  %1922 = vmatpush2.bf16.msra.mxu0 %v1671
  %1923 = vmatprep.subr.bf16.mxu0 %v1664
  %1924 = vmatpush2.bf16.msra.mxu0 %v1663
  %1925 = vmatprep.subr.bf16.mxu0 %v1656
  %1926 = vmatpush2.bf16.msra.mxu0 %v1655
  %1927 = vmatprep.subr.bf16.mxu0 %v1648
  %1928 = vmatpush2.bf16.msra.mxu0 %v1647
  %1929 = vmatprep.subr.bf16.mxu0 %v1640
  %1930 = vmatpush2.bf16.msra.mxu0 %v1639
  %1931 = vmatprep.subr.bf16.mxu0 %v1632
  %1932 = vmatpush2.bf16.msra.mxu0 %v1631
  %1933 = vmatprep.mubr.bf16.mxu0 %v1176
  %1934 = vmatmul.mubr.bf16.gmra.mxu0 %v1169
  %v1935 = vpop.f32.mrf.mxu0
  %v1936 = vadd.f32 0.0, %v1935
  %v1937 = vpop.f32.mrf.mxu0
  %v1938 = vadd.f32 0.0, %v1937
  %v1939 = vpop.f32.mrf.mxu0
  %v1940 = vpop.f32.mrf.mxu0
  %1941 = vdwg.mxu0
  %1942 = vmatprep.subr.bf16.mxu0 %v1626
  %1943 = vmatpush1.bf16.msra.mxu0 %v1625
  %1944 = vmatprep.subr.bf16.mxu0 %v1618
  %1945 = vmatpush1.bf16.msra.mxu0 %v1617
  %1946 = vmatprep.subr.bf16.mxu0 %v1610
  %1947 = vmatpush1.bf16.msra.mxu0 %v1609
  %1948 = vmatprep.subr.bf16.mxu0 %v1602
  %1949 = vmatpush1.bf16.msra.mxu0 %v1601
  %1950 = vmatprep.subr.bf16.mxu0 %v1594
  %1951 = vmatpush1.bf16.msra.mxu0 %v1593
  %1952 = vmatprep.subr.bf16.mxu0 %v1586
  %1953 = vmatpush1.bf16.msra.mxu0 %v1585
  %1954 = vmatprep.subr.bf16.mxu0 %v1578
  %1955 = vmatpush1.bf16.msra.mxu0 %v1577
  %1956 = vmatprep.subr.bf16.mxu0 %v1570
  %1957 = vmatpush1.bf16.msra.mxu0 %v1569
  %1958 = vmatprep.subr.bf16.mxu0 %v1690
  %1959 = vmatpush2.bf16.msra.mxu0 %v1689
  %1960 = vmatprep.subr.bf16.mxu0 %v1682
  %1961 = vmatpush2.bf16.msra.mxu0 %v1681
  %1962 = vmatprep.subr.bf16.mxu0 %v1674
  %1963 = vmatpush2.bf16.msra.mxu0 %v1673
  %1964 = vmatprep.subr.bf16.mxu0 %v1666
  %1965 = vmatpush2.bf16.msra.mxu0 %v1665
  %1966 = vmatprep.subr.bf16.mxu0 %v1658
  %1967 = vmatpush2.bf16.msra.mxu0 %v1657
  %1968 = vmatprep.subr.bf16.mxu0 %v1650
  %1969 = vmatpush2.bf16.msra.mxu0 %v1649
  %1970 = vmatprep.subr.bf16.mxu0 %v1642
  %1971 = vmatpush2.bf16.msra.mxu0 %v1641
  %1972 = vmatprep.subr.bf16.mxu0 %v1634
  %1973 = vmatpush2.bf16.msra.mxu0 %v1633
  %1974 = vmatprep.mubr.bf16.mxu0 %v1176
  %1975 = vmatmul.mubr.bf16.gmra.mxu0 %v1169
  %v1976 = vpop.f32.mrf.mxu0
  %v1977 = vadd.f32 0.0, %v1976
  %v1978 = vpop.f32.mrf.mxu0
  %v1979 = vadd.f32 0.0, %v1978
  %v1980 = vpop.f32.mrf.mxu0
  %v1981 = vpop.f32.mrf.mxu0
  %1982 = vdwg.mxu0
  %v1983 = vadd.f32 %v886, %v1854
  %v1984 = vadd.f32 %v888, %v1856
  %v1985 = vadd.f32 %v929, %v1895
  %v1986 = vadd.f32 %v931, %v1897
  %v1987 = vadd.f32 %v972, %v1936
  %v1988 = vadd.f32 %v974, %v1938
  %v1989 = vadd.f32 %v1015, %v1977
  %v1990 = vadd.f32 %v1017, %v1979
  %v1991 = vxor.u32 %v1983, 2147483648
  %v1992 = vxor.u32 %v1984, 2147483648
  %v1993 = vmul.f32 %v1991, 1.442695
  %v1994 = vpow.pop %v1993
  %v1995 = vmul.f32 %v1992, 1.442695
  %v1996 = vpow.pop %v1995
  %v1997 = vadd.f32 %v1994, 1.0
  %v1998 = vadd.f32 %v1996, 1.0
  %v1999 = vrcp.pop %v1997
  %v2000 = vmul.f32 1.0, %v1999
  %v2001 = vrcp.pop %v1998
  %v2002 = vmul.f32 1.0, %v2001
  %v2003 = vxor.u32 %v1985, 2147483648
  %v2004 = vxor.u32 %v1986, 2147483648
  %v2005 = vmul.f32 %v2003, 1.442695
  %v2006 = vpow.pop %v2005
  %v2007 = vmul.f32 %v2004, 1.442695
  %v2008 = vpow.pop %v2007
  %v2009 = vadd.f32 %v2006, 1.0
  %v2010 = vadd.f32 %v2008, 1.0
  %v2011 = vrcp.pop %v2009
  %v2012 = vmul.f32 1.0, %v2011
  %v2013 = vrcp.pop %v2010
  %v2014 = vmul.f32 1.0, %v2013
  %v2015 = vtanh.pop %v1987
  %v2016 = vtanh.pop %v1988
  %v2017 = vxor.u32 %v1989, 2147483648
  %v2018 = vxor.u32 %v1990, 2147483648
  %v2019 = vmul.f32 %v2017, 1.442695
  %v2020 = vpow.pop %v2019
  %v2021 = vmul.f32 %v2018, 1.442695
  %v2022 = vpow.pop %v2021
  %v2023 = vadd.f32 %v2020, 1.0
  %v2024 = vadd.f32 %v2022, 1.0
  %v2025 = vrcp.pop %v2023
  %v2026 = vmul.f32 1.0, %v2025
  %v2027 = vrcp.pop %v2024
  %v2028 = vmul.f32 1.0, %v2027
  %v2031 = vunpack.c.l.s4 1983009808
  %v2032 = vunpack.c.0.s8 %v2031
  %v2033 = vlaneseq
  %v2034 = vshrl.u32 %v2033, 7
  %v2035 = vsub.s32 %v2032, %v2034
  %v2036 = vrot.slane %v1025, %v2035
  %v2037 = vcombine.high %v2036, %v2036
  %v2040 = vmul.f32 %v2012, %v2036
  %v2041 = vmul.f32 %v2014, %v2037
  %v2042 = vmul.f32 %v2000, %v2015
  %v2043 = vmul.f32 %v2002, %v2016
  %v2044 = vadd.f32 %v2040, %v2042
  %v2045 = vadd.f32 %v2041, %v2043
  %v2046 = vtanh.pop %v2044
  %v2047 = vtanh.pop %v2045
  %v2048 = vmul.f32 %v2026, %v2046
  %v2049 = vmul.f32 %v2028, %v2047
  %2050 = vst [vmem:[#allocation2] sm:$0x3] %v2048
  %2051 = vst [vmem:[#allocation2 + $0x8] sm:$0x3] %v2049
  %v2052 = vpack.c.bf16 %v2048, %v2048
  %v2053 = vpack.c.bf16 %v2049, %v2049
  %2054 = vmatprep.subr.bf16.mxu0 %v1620
  %2055 = vmatpush1.bf16.msra.mxu0 %v1619
  %2056 = vmatprep.subr.bf16.mxu0 %v1612
  %2057 = vmatpush1.bf16.msra.mxu0 %v1611
  %2058 = vmatprep.subr.bf16.mxu0 %v1604
  %2059 = vmatpush1.bf16.msra.mxu0 %v1603
  %2060 = vmatprep.subr.bf16.mxu0 %v1596
  %2061 = vmatpush1.bf16.msra.mxu0 %v1595
  %2062 = vmatprep.subr.bf16.mxu0 %v1588
  %2063 = vmatpush1.bf16.msra.mxu0 %v1587
  %2064 = vmatprep.subr.bf16.mxu0 %v1580
  %2065 = vmatpush1.bf16.msra.mxu0 %v1579
  %2066 = vmatprep.subr.bf16.mxu0 %v1572
  %2067 = vmatpush1.bf16.msra.mxu0 %v1571
  %2068 = vmatprep.subr.bf16.mxu0 %v1564
  %2069 = vmatpush1.bf16.msra.mxu0 %v1563
  %2070 = vmatprep.subr.bf16.mxu0 %v1684
  %2071 = vmatpush2.bf16.msra.mxu0 %v1683
  %2072 = vmatprep.subr.bf16.mxu0 %v1676
  %2073 = vmatpush2.bf16.msra.mxu0 %v1675
  %2074 = vmatprep.subr.bf16.mxu0 %v1668
  %2075 = vmatpush2.bf16.msra.mxu0 %v1667
  %2076 = vmatprep.subr.bf16.mxu0 %v1660
  %2077 = vmatpush2.bf16.msra.mxu0 %v1659
  %2078 = vmatprep.subr.bf16.mxu0 %v1652
  %2079 = vmatpush2.bf16.msra.mxu0 %v1651
  %2080 = vmatprep.subr.bf16.mxu0 %v1644
  %2081 = vmatpush2.bf16.msra.mxu0 %v1643
  %2082 = vmatprep.subr.bf16.mxu0 %v1636
  %2083 = vmatpush2.bf16.msra.mxu0 %v1635
  %2084 = vmatprep.subr.bf16.mxu0 %v1628
  %2085 = vmatpush2.bf16.msra.mxu0 %v1627
  %2086 = vmatprep.mubr.bf16.mxu0 %v2053
  %2087 = vmatmul.mubr.bf16.gmra.mxu0 %v2052
  %v2088 = vpop.f32.mrf.mxu0
  %v2089 = vadd.f32 0.0, %v2088
  %v2090 = vpop.f32.mrf.mxu0
  %v2091 = vadd.f32 0.0, %v2090
  %v2092 = vpop.f32.mrf.mxu0
  %v2093 = vpop.f32.mrf.mxu0
  %2094 = vdwg.mxu0
  %2095 = vmatprep.subr.bf16.mxu0 %v1622
  %2096 = vmatpush1.bf16.msra.mxu0 %v1621
  %2097 = vmatprep.subr.bf16.mxu0 %v1614
  %2098 = vmatpush1.bf16.msra.mxu0 %v1613
  %2099 = vmatprep.subr.bf16.mxu0 %v1606
  %2100 = vmatpush1.bf16.msra.mxu0 %v1605
  %2101 = vmatprep.subr.bf16.mxu0 %v1598
  %2102 = vmatpush1.bf16.msra.mxu0 %v1597
  %2103 = vmatprep.subr.bf16.mxu0 %v1590
  %2104 = vmatpush1.bf16.msra.mxu0 %v1589
  %2105 = vmatprep.subr.bf16.mxu0 %v1582
  %2106 = vmatpush1.bf16.msra.mxu0 %v1581
  %2107 = vmatprep.subr.bf16.mxu0 %v1574
  %2108 = vmatpush1.bf16.msra.mxu0 %v1573
  %2109 = vmatprep.subr.bf16.mxu0 %v1566
  %2110 = vmatpush1.bf16.msra.mxu0 %v1565
  %2111 = vmatprep.subr.bf16.mxu0 %v1686
  %2112 = vmatpush2.bf16.msra.mxu0 %v1685
  %2113 = vmatprep.subr.bf16.mxu0 %v1678
  %2114 = vmatpush2.bf16.msra.mxu0 %v1677
  %2115 = vmatprep.subr.bf16.mxu0 %v1670
  %2116 = vmatpush2.bf16.msra.mxu0 %v1669
  %2117 = vmatprep.subr.bf16.mxu0 %v1662
  %2118 = vmatpush2.bf16.msra.mxu0 %v1661
  %2119 = vmatprep.subr.bf16.mxu0 %v1654
  %2120 = vmatpush2.bf16.msra.mxu0 %v1653
  %2121 = vmatprep.subr.bf16.mxu0 %v1646
  %2122 = vmatpush2.bf16.msra.mxu0 %v1645
  %2123 = vmatprep.subr.bf16.mxu0 %v1638
  %2124 = vmatpush2.bf16.msra.mxu0 %v1637
  %2125 = vmatprep.subr.bf16.mxu0 %v1630
  %2126 = vmatpush2.bf16.msra.mxu0 %v1629
  %2127 = vmatprep.mubr.bf16.mxu0 %v2053
  %2128 = vmatmul.mubr.bf16.gmra.mxu0 %v2052
  %v2129 = vpop.f32.mrf.mxu0
  %v2130 = vadd.f32 0.0, %v2129
  %v2131 = vpop.f32.mrf.mxu0
  %v2132 = vadd.f32 0.0, %v2131
  %v2133 = vpop.f32.mrf.mxu0
  %v2134 = vpop.f32.mrf.mxu0
  %2135 = vdwg.mxu0
  %2136 = vmatprep.subr.bf16.mxu0 %v1624
  %2137 = vmatpush1.bf16.msra.mxu0 %v1623
  %2138 = vmatprep.subr.bf16.mxu0 %v1616
  %2139 = vmatpush1.bf16.msra.mxu0 %v1615
  %2140 = vmatprep.subr.bf16.mxu0 %v1608
  %2141 = vmatpush1.bf16.msra.mxu0 %v1607
  %2142 = vmatprep.subr.bf16.mxu0 %v1600
  %2143 = vmatpush1.bf16.msra.mxu0 %v1599
  %2144 = vmatprep.subr.bf16.mxu0 %v1592
  %2145 = vmatpush1.bf16.msra.mxu0 %v1591
  %2146 = vmatprep.subr.bf16.mxu0 %v1584
  %2147 = vmatpush1.bf16.msra.mxu0 %v1583
  %2148 = vmatprep.subr.bf16.mxu0 %v1576
  %2149 = vmatpush1.bf16.msra.mxu0 %v1575
  %2150 = vmatprep.subr.bf16.mxu0 %v1568
  %2151 = vmatpush1.bf16.msra.mxu0 %v1567
  %2152 = vmatprep.subr.bf16.mxu0 %v1688
  %2153 = vmatpush2.bf16.msra.mxu0 %v1687
  %2154 = vmatprep.subr.bf16.mxu0 %v1680
  %2155 = vmatpush2.bf16.msra.mxu0 %v1679
  %2156 = vmatprep.subr.bf16.mxu0 %v1672
  %2157 = vmatpush2.bf16.msra.mxu0 %v1671
  %2158 = vmatprep.subr.bf16.mxu0 %v1664
  %2159 = vmatpush2.bf16.msra.mxu0 %v1663
  %2160 = vmatprep.subr.bf16.mxu0 %v1656
  %2161 = vmatpush2.bf16.msra.mxu0 %v1655
  %2162 = vmatprep.subr.bf16.mxu0 %v1648
  %2163 = vmatpush2.bf16.msra.mxu0 %v1647
  %2164 = vmatprep.subr.bf16.mxu0 %v1640
  %2165 = vmatpush2.bf16.msra.mxu0 %v1639
  %2166 = vmatprep.subr.bf16.mxu0 %v1632
  %2167 = vmatpush2.bf16.msra.mxu0 %v1631
  %2168 = vmatprep.mubr.bf16.mxu0 %v2053
  %2169 = vmatmul.mubr.bf16.gmra.mxu0 %v2052
  %v2170 = vpop.f32.mrf.mxu0
  %v2171 = vadd.f32 0.0, %v2170
  %v2172 = vpop.f32.mrf.mxu0
  %v2173 = vadd.f32 0.0, %v2172
  %v2174 = vpop.f32.mrf.mxu0
  %v2175 = vpop.f32.mrf.mxu0
  %2176 = vdwg.mxu0
  %2177 = vmatprep.subr.bf16.mxu0 %v1626
  %2178 = vmatpush1.bf16.msra.mxu0 %v1625
  %2179 = vmatprep.subr.bf16.mxu0 %v1618
  %2180 = vmatpush1.bf16.msra.mxu0 %v1617
  %2181 = vmatprep.subr.bf16.mxu0 %v1610
  %2182 = vmatpush1.bf16.msra.mxu0 %v1609
  %2183 = vmatprep.subr.bf16.mxu0 %v1602
  %2184 = vmatpush1.bf16.msra.mxu0 %v1601
  %2185 = vmatprep.subr.bf16.mxu0 %v1594
  %2186 = vmatpush1.bf16.msra.mxu0 %v1593
  %2187 = vmatprep.subr.bf16.mxu0 %v1586
  %2188 = vmatpush1.bf16.msra.mxu0 %v1585
  %2189 = vmatprep.subr.bf16.mxu0 %v1578
  %2190 = vmatpush1.bf16.msra.mxu0 %v1577
  %2191 = vmatprep.subr.bf16.mxu0 %v1570
  %2192 = vmatpush1.bf16.msra.mxu0 %v1569
  %2193 = vmatprep.subr.bf16.mxu0 %v1690
  %2194 = vmatpush2.bf16.msra.mxu0 %v1689
  %2195 = vmatprep.subr.bf16.mxu0 %v1682
  %2196 = vmatpush2.bf16.msra.mxu0 %v1681
  %2197 = vmatprep.subr.bf16.mxu0 %v1674
  %2198 = vmatpush2.bf16.msra.mxu0 %v1673
  %2199 = vmatprep.subr.bf16.mxu0 %v1666
  %2200 = vmatpush2.bf16.msra.mxu0 %v1665
  %2201 = vmatprep.subr.bf16.mxu0 %v1658
  %2202 = vmatpush2.bf16.msra.mxu0 %v1657
  %2203 = vmatprep.subr.bf16.mxu0 %v1650
  %2204 = vmatpush2.bf16.msra.mxu0 %v1649
  %2205 = vmatprep.subr.bf16.mxu0 %v1642
  %2206 = vmatpush2.bf16.msra.mxu0 %v1641
  %2207 = vmatprep.subr.bf16.mxu0 %v1634
  %2208 = vmatpush2.bf16.msra.mxu0 %v1633
  %2209 = vmatprep.mubr.bf16.mxu0 %v2053
  %2210 = vmatmul.mubr.bf16.gmra.mxu0 %v2052
  %v2211 = vpop.f32.mrf.mxu0
  %v2212 = vadd.f32 0.0, %v2211
  %v2213 = vpop.f32.mrf.mxu0
  %v2214 = vadd.f32 0.0, %v2213
  %v2215 = vpop.f32.mrf.mxu0
  %v2216 = vpop.f32.mrf.mxu0
  %2217 = vdwg.mxu0
  %v2226 = vrot.slane %v2089, 6
  %v2227 = vrot.slane %v2091, 6
  %v2228 = vrot.slane %v2130, 6
  %v2229 = vrot.slane %v2132, 6
  %v2230 = vrot.slane %v2171, 6
  %v2231 = vrot.slane %v2173, 6
  %v2232 = vrot.slane %v2212, 6
  %v2233 = vrot.slane %v2214, 6
  %v2242 = vadd.f32 %v886, %v2226
  %v2243 = vadd.f32 %v888, %v2227
  %v2244 = vadd.f32 %v929, %v2228
  %v2245 = vadd.f32 %v931, %v2229
  %v2246 = vadd.f32 %v972, %v2230
  %v2247 = vadd.f32 %v974, %v2231
  %v2248 = vadd.f32 %v1015, %v2232
  %v2249 = vadd.f32 %v1017, %v2233
  %v2250 = vxor.u32 %v2242, 2147483648
  %v2251 = vxor.u32 %v2243, 2147483648
  %v2252 = vmul.f32 %v2250, 1.442695
  %v2253 = vpow.pop %v2252
  %v2254 = vmul.f32 %v2251, 1.442695
  %v2255 = vpow.pop %v2254
  %v2256 = vadd.f32 %v2253, 1.0
  %v2257 = vadd.f32 %v2255, 1.0
  %v2258 = vrcp.pop %v2256
  %v2259 = vmul.f32 1.0, %v2258
  %v2260 = vrcp.pop %v2257
  %v2261 = vmul.f32 1.0, %v2260
  %v2262 = vxor.u32 %v2244, 2147483648
  %v2263 = vxor.u32 %v2245, 2147483648
  %v2264 = vmul.f32 %v2262, 1.442695
  %v2265 = vpow.pop %v2264
  %v2266 = vmul.f32 %v2263, 1.442695
  %v2267 = vpow.pop %v2266
  %v2268 = vadd.f32 %v2265, 1.0
  %v2269 = vadd.f32 %v2267, 1.0
  %v2270 = vrcp.pop %v2268
  %v2271 = vmul.f32 1.0, %v2270
  %v2272 = vrcp.pop %v2269
  %v2273 = vmul.f32 1.0, %v2272
  %v2274 = vtanh.pop %v2246
  %v2275 = vtanh.pop %v2247
  %v2276 = vxor.u32 %v2248, 2147483648
  %v2277 = vxor.u32 %v2249, 2147483648
  %v2278 = vmul.f32 %v2276, 1.442695
  %v2279 = vpow.pop %v2278
  %v2280 = vmul.f32 %v2277, 1.442695
  %v2281 = vpow.pop %v2280
  %v2282 = vadd.f32 %v2279, 1.0
  %v2283 = vadd.f32 %v2281, 1.0
  %v2284 = vrcp.pop %v2282
  %v2285 = vmul.f32 1.0, %v2284
  %v2286 = vrcp.pop %v2283
  %v2287 = vmul.f32 1.0, %v2286
  %v2290 = vrot.slane %v2044, 6
  %v2291 = vrot.slane %v2045, 6
  %v2294 = vmul.f32 %v2271, %v2290
  %v2295 = vmul.f32 %v2273, %v2291
  %v2296 = vmul.f32 %v2259, %v2274
  %v2297 = vmul.f32 %v2261, %v2275
  %v2298 = vadd.f32 %v2294, %v2296
  %v2299 = vadd.f32 %v2295, %v2297
  %v2300 = vtanh.pop %v2298
  %v2301 = vtanh.pop %v2299
  %v2302 = vmul.f32 %v2285, %v2300
  %v2303 = vmul.f32 %v2287, %v2301
  %2304 = vst [vmem:[#allocation2] sm:$0xc] %v2302
  %2305 = vst [vmem:[#allocation2 + $0x8] sm:$0xc] %v2303
  %v2306 = vpack.c.bf16 %v2302, %v2302
  %v2307 = vpack.c.bf16 %v2303, %v2303
  %v2310 = vrot.slane %v2306, 1
  %v2311 = vrot.slane %v2307, 1
  %2314 = vmatprep.subr.bf16.mxu0 %v1620
  %2315 = vmatpush1.bf16.msra.mxu0 %v1619
  %2316 = vmatprep.subr.bf16.mxu0 %v1612
  %2317 = vmatpush1.bf16.msra.mxu0 %v1611
  %2318 = vmatprep.subr.bf16.mxu0 %v1604
  %2319 = vmatpush1.bf16.msra.mxu0 %v1603
  %2320 = vmatprep.subr.bf16.mxu0 %v1596
  %2321 = vmatpush1.bf16.msra.mxu0 %v1595
  %2322 = vmatprep.subr.bf16.mxu0 %v1588
  %2323 = vmatpush1.bf16.msra.mxu0 %v1587
  %2324 = vmatprep.subr.bf16.mxu0 %v1580
  %2325 = vmatpush1.bf16.msra.mxu0 %v1579
  %2326 = vmatprep.subr.bf16.mxu0 %v1572
  %2327 = vmatpush1.bf16.msra.mxu0 %v1571
  %2328 = vmatprep.subr.bf16.mxu0 %v1564
  %2329 = vmatpush1.bf16.msra.mxu0 %v1563
  %2330 = vmatprep.subr.bf16.mxu0 %v1684
  %2331 = vmatpush2.bf16.msra.mxu0 %v1683
  %2332 = vmatprep.subr.bf16.mxu0 %v1676
  %2333 = vmatpush2.bf16.msra.mxu0 %v1675
  %2334 = vmatprep.subr.bf16.mxu0 %v1668
  %2335 = vmatpush2.bf16.msra.mxu0 %v1667
  %2336 = vmatprep.subr.bf16.mxu0 %v1660
  %2337 = vmatpush2.bf16.msra.mxu0 %v1659
  %2338 = vmatprep.subr.bf16.mxu0 %v1652
  %2339 = vmatpush2.bf16.msra.mxu0 %v1651
  %2340 = vmatprep.subr.bf16.mxu0 %v1644
  %2341 = vmatpush2.bf16.msra.mxu0 %v1643
  %2342 = vmatprep.subr.bf16.mxu0 %v1636
  %2343 = vmatpush2.bf16.msra.mxu0 %v1635
  %2344 = vmatprep.subr.bf16.mxu0 %v1628
  %2345 = vmatpush2.bf16.msra.mxu0 %v1627
  %2346 = vmatprep.mubr.bf16.mxu0 %v2311
  %2347 = vmatmul.mubr.bf16.gmra.mxu0 %v2310
  %v2348 = vpop.f32.mrf.mxu0
  %v2349 = vadd.f32 0.0, %v2348
  %v2350 = vpop.f32.mrf.mxu0
  %v2351 = vadd.f32 0.0, %v2350
  %v2352 = vpop.f32.mrf.mxu0
  %v2353 = vpop.f32.mrf.mxu0
  %2354 = vdwg.mxu0
  %2355 = vmatprep.subr.bf16.mxu0 %v1622
  %2356 = vmatpush1.bf16.msra.mxu0 %v1621
  %2357 = vmatprep.subr.bf16.mxu0 %v1614
  %2358 = vmatpush1.bf16.msra.mxu0 %v1613
  %2359 = vmatprep.subr.bf16.mxu0 %v1606
  %2360 = vmatpush1.bf16.msra.mxu0 %v1605
  %2361 = vmatprep.subr.bf16.mxu0 %v1598
  %2362 = vmatpush1.bf16.msra.mxu0 %v1597
  %2363 = vmatprep.subr.bf16.mxu0 %v1590
  %2364 = vmatpush1.bf16.msra.mxu0 %v1589
  %2365 = vmatprep.subr.bf16.mxu0 %v1582
  %2366 = vmatpush1.bf16.msra.mxu0 %v1581
  %2367 = vmatprep.subr.bf16.mxu0 %v1574
  %2368 = vmatpush1.bf16.msra.mxu0 %v1573
  %2369 = vmatprep.subr.bf16.mxu0 %v1566
  %2370 = vmatpush1.bf16.msra.mxu0 %v1565
  %2371 = vmatprep.subr.bf16.mxu0 %v1686
  %2372 = vmatpush2.bf16.msra.mxu0 %v1685
  %2373 = vmatprep.subr.bf16.mxu0 %v1678
  %2374 = vmatpush2.bf16.msra.mxu0 %v1677
  %2375 = vmatprep.subr.bf16.mxu0 %v1670
  %2376 = vmatpush2.bf16.msra.mxu0 %v1669
  %2377 = vmatprep.subr.bf16.mxu0 %v1662
  %2378 = vmatpush2.bf16.msra.mxu0 %v1661
  %2379 = vmatprep.subr.bf16.mxu0 %v1654
  %2380 = vmatpush2.bf16.msra.mxu0 %v1653
  %2381 = vmatprep.subr.bf16.mxu0 %v1646
  %2382 = vmatpush2.bf16.msra.mxu0 %v1645
  %2383 = vmatprep.subr.bf16.mxu0 %v1638
  %2384 = vmatpush2.bf16.msra.mxu0 %v1637
  %2385 = vmatprep.subr.bf16.mxu0 %v1630
  %2386 = vmatpush2.bf16.msra.mxu0 %v1629
  %2387 = vmatprep.mubr.bf16.mxu0 %v2311
  %2388 = vmatmul.mubr.bf16.gmra.mxu0 %v2310
  %v2389 = vpop.f32.mrf.mxu0
  %v2390 = vadd.f32 0.0, %v2389
  %v2391 = vpop.f32.mrf.mxu0
  %v2392 = vadd.f32 0.0, %v2391
  %v2393 = vpop.f32.mrf.mxu0
  %v2394 = vpop.f32.mrf.mxu0
  %2395 = vdwg.mxu0
  %2396 = vmatprep.subr.bf16.mxu0 %v1624
  %2397 = vmatpush1.bf16.msra.mxu0 %v1623
  %2398 = vmatprep.subr.bf16.mxu0 %v1616
  %2399 = vmatpush1.bf16.msra.mxu0 %v1615
  %2400 = vmatprep.subr.bf16.mxu0 %v1608
  %2401 = vmatpush1.bf16.msra.mxu0 %v1607
  %2402 = vmatprep.subr.bf16.mxu0 %v1600
  %2403 = vmatpush1.bf16.msra.mxu0 %v1599
  %2404 = vmatprep.subr.bf16.mxu0 %v1592
  %2405 = vmatpush1.bf16.msra.mxu0 %v1591
  %2406 = vmatprep.subr.bf16.mxu0 %v1584
  %2407 = vmatpush1.bf16.msra.mxu0 %v1583
  %2408 = vmatprep.subr.bf16.mxu0 %v1576
  %2409 = vmatpush1.bf16.msra.mxu0 %v1575
  %2410 = vmatprep.subr.bf16.mxu0 %v1568
  %2411 = vmatpush1.bf16.msra.mxu0 %v1567
  %2412 = vmatprep.subr.bf16.mxu0 %v1688
  %2413 = vmatpush2.bf16.msra.mxu0 %v1687
  %2414 = vmatprep.subr.bf16.mxu0 %v1680
  %2415 = vmatpush2.bf16.msra.mxu0 %v1679
  %2416 = vmatprep.subr.bf16.mxu0 %v1672
  %2417 = vmatpush2.bf16.msra.mxu0 %v1671
  %2418 = vmatprep.subr.bf16.mxu0 %v1664
  %2419 = vmatpush2.bf16.msra.mxu0 %v1663
  %2420 = vmatprep.subr.bf16.mxu0 %v1656
  %2421 = vmatpush2.bf16.msra.mxu0 %v1655
  %2422 = vmatprep.subr.bf16.mxu0 %v1648
  %2423 = vmatpush2.bf16.msra.mxu0 %v1647
  %2424 = vmatprep.subr.bf16.mxu0 %v1640
  %2425 = vmatpush2.bf16.msra.mxu0 %v1639
  %2426 = vmatprep.subr.bf16.mxu0 %v1632
  %2427 = vmatpush2.bf16.msra.mxu0 %v1631
  %2428 = vmatprep.mubr.bf16.mxu0 %v2311
  %2429 = vmatmul.mubr.bf16.gmra.mxu0 %v2310
  %v2430 = vpop.f32.mrf.mxu0
  %v2431 = vadd.f32 0.0, %v2430
  %v2432 = vpop.f32.mrf.mxu0
  %v2433 = vadd.f32 0.0, %v2432
  %v2434 = vpop.f32.mrf.mxu0
  %v2435 = vpop.f32.mrf.mxu0
  %2436 = vdwg.mxu0
  %2437 = vmatprep.subr.bf16.mxu0 %v1626
  %2438 = vmatpush1.bf16.msra.mxu0 %v1625
  %2439 = vmatprep.subr.bf16.mxu0 %v1618
  %2440 = vmatpush1.bf16.msra.mxu0 %v1617
  %2441 = vmatprep.subr.bf16.mxu0 %v1610
  %2442 = vmatpush1.bf16.msra.mxu0 %v1609
  %2443 = vmatprep.subr.bf16.mxu0 %v1602
  %2444 = vmatpush1.bf16.msra.mxu0 %v1601
  %2445 = vmatprep.subr.bf16.mxu0 %v1594
  %2446 = vmatpush1.bf16.msra.mxu0 %v1593
  %2447 = vmatprep.subr.bf16.mxu0 %v1586
  %2448 = vmatpush1.bf16.msra.mxu0 %v1585
  %2449 = vmatprep.subr.bf16.mxu0 %v1578
  %2450 = vmatpush1.bf16.msra.mxu0 %v1577
  %2451 = vmatprep.subr.bf16.mxu0 %v1570
  %2452 = vmatpush1.bf16.msra.mxu0 %v1569
  %2453 = vmatprep.subr.bf16.mxu0 %v1690
  %2454 = vmatpush2.bf16.msra.mxu0 %v1689
  %2455 = vmatprep.subr.bf16.mxu0 %v1682
  %2456 = vmatpush2.bf16.msra.mxu0 %v1681
  %2457 = vmatprep.subr.bf16.mxu0 %v1674
  %2458 = vmatpush2.bf16.msra.mxu0 %v1673
  %2459 = vmatprep.subr.bf16.mxu0 %v1666
  %2460 = vmatpush2.bf16.msra.mxu0 %v1665
  %2461 = vmatprep.subr.bf16.mxu0 %v1658
  %2462 = vmatpush2.bf16.msra.mxu0 %v1657
  %2463 = vmatprep.subr.bf16.mxu0 %v1650
  %2464 = vmatpush2.bf16.msra.mxu0 %v1649
  %2465 = vmatprep.subr.bf16.mxu0 %v1642
  %2466 = vmatpush2.bf16.msra.mxu0 %v1641
  %2467 = vmatprep.subr.bf16.mxu0 %v1634
  %2468 = vmatpush2.bf16.msra.mxu0 %v1633
  %2469 = vmatprep.mubr.bf16.mxu0 %v2311
  %2470 = vmatmul.mubr.bf16.gmra.mxu0 %v2310
  %v2471 = vpop.f32.mrf.mxu0
  %v2472 = vadd.f32 0.0, %v2471
  %v2473 = vpop.f32.mrf.mxu0
  %v2474 = vadd.f32 0.0, %v2473
  %v2475 = vpop.f32.mrf.mxu0
  %v2476 = vpop.f32.mrf.mxu0
  %2477 = vdwg.mxu0
  %v2486 = vrot.slane %v2349, 4
  %v2487 = vrot.slane %v2351, 4
  %v2488 = vrot.slane %v2390, 4
  %v2489 = vrot.slane %v2392, 4
  %v2490 = vrot.slane %v2431, 4
  %v2491 = vrot.slane %v2433, 4
  %v2492 = vrot.slane %v2472, 4
  %v2493 = vrot.slane %v2474, 4
  %v2502 = vadd.f32 %v886, %v2486
  %v2503 = vadd.f32 %v888, %v2487
  %v2504 = vadd.f32 %v929, %v2488
  %v2505 = vadd.f32 %v931, %v2489
  %v2506 = vadd.f32 %v972, %v2490
  %v2507 = vadd.f32 %v974, %v2491
  %v2508 = vadd.f32 %v1015, %v2492
  %v2509 = vadd.f32 %v1017, %v2493
  %v2510 = vxor.u32 %v2502, 2147483648
  %v2511 = vxor.u32 %v2503, 2147483648
  %v2512 = vmul.f32 %v2510, 1.442695
  %v2513 = vpow.pop %v2512
  %v2514 = vmul.f32 %v2511, 1.442695
  %v2515 = vpow.pop %v2514
  %v2516 = vadd.f32 %v2513, 1.0
  %v2517 = vadd.f32 %v2515, 1.0
  %v2518 = vrcp.pop %v2516
  %v2519 = vmul.f32 1.0, %v2518
  %v2520 = vrcp.pop %v2517
  %v2521 = vmul.f32 1.0, %v2520
  %v2522 = vxor.u32 %v2504, 2147483648
  %v2523 = vxor.u32 %v2505, 2147483648
  %v2524 = vmul.f32 %v2522, 1.442695
  %v2525 = vpow.pop %v2524
  %v2526 = vmul.f32 %v2523, 1.442695
  %v2527 = vpow.pop %v2526
  %v2528 = vadd.f32 %v2525, 1.0
  %v2529 = vadd.f32 %v2527, 1.0
  %v2530 = vrcp.pop %v2528
  %v2531 = vmul.f32 1.0, %v2530
  %v2532 = vrcp.pop %v2529
  %v2533 = vmul.f32 1.0, %v2532
  %v2534 = vtanh.pop %v2506
  %v2535 = vtanh.pop %v2507
  %v2536 = vxor.u32 %v2508, 2147483648
  %v2537 = vxor.u32 %v2509, 2147483648
  %v2538 = vmul.f32 %v2536, 1.442695
  %v2539 = vpow.pop %v2538
  %v2540 = vmul.f32 %v2537, 1.442695
  %v2541 = vpow.pop %v2540
  %v2542 = vadd.f32 %v2539, 1.0
  %v2543 = vadd.f32 %v2541, 1.0
  %v2544 = vrcp.pop %v2542
  %v2545 = vmul.f32 1.0, %v2544
  %v2546 = vrcp.pop %v2543
  %v2547 = vmul.f32 1.0, %v2546
  %v2550 = vrot.slane %v2298, 6
  %v2551 = vrot.slane %v2299, 6
  %v2554 = vmul.f32 %v2531, %v2550
  %v2555 = vmul.f32 %v2533, %v2551
  %v2556 = vmul.f32 %v2519, %v2534
  %v2557 = vmul.f32 %v2521, %v2535
  %v2558 = vadd.f32 %v2554, %v2556
  %v2559 = vadd.f32 %v2555, %v2557
  %v2560 = vtanh.pop %v2558
  %v2561 = vtanh.pop %v2559
  %v2562 = vmul.f32 %v2545, %v2560
  %v2563 = vmul.f32 %v2547, %v2561
  %2564 = vst [vmem:[#allocation2] sm:$0x30] %v2562
  %2565 = vst [vmem:[#allocation2 + $0x8] sm:$0x30] %v2563
  %v2566 = vpack.c.bf16 %v2562, %v2562
  %v2567 = vpack.c.bf16 %v2563, %v2563
  %v2570 = vrot.slane %v2566, 2
  %v2571 = vrot.slane %v2567, 2
  %2574 = vmatprep.subr.bf16.mxu0 %v1620
  %2575 = vmatpush1.bf16.msra.mxu0 %v1619
  %2576 = vmatprep.subr.bf16.mxu0 %v1612
  %2577 = vmatpush1.bf16.msra.mxu0 %v1611
  %2578 = vmatprep.subr.bf16.mxu0 %v1604
  %2579 = vmatpush1.bf16.msra.mxu0 %v1603
  %2580 = vmatprep.subr.bf16.mxu0 %v1596
  %2581 = vmatpush1.bf16.msra.mxu0 %v1595
  %2582 = vmatprep.subr.bf16.mxu0 %v1588
  %2583 = vmatpush1.bf16.msra.mxu0 %v1587
  %2584 = vmatprep.subr.bf16.mxu0 %v1580
  %2585 = vmatpush1.bf16.msra.mxu0 %v1579
  %2586 = vmatprep.subr.bf16.mxu0 %v1572
  %2587 = vmatpush1.bf16.msra.mxu0 %v1571
  %2588 = vmatprep.subr.bf16.mxu0 %v1564
  %2589 = vmatpush1.bf16.msra.mxu0 %v1563
  %2590 = vmatprep.subr.bf16.mxu0 %v1684
  %2591 = vmatpush2.bf16.msra.mxu0 %v1683
  %2592 = vmatprep.subr.bf16.mxu0 %v1676
  %2593 = vmatpush2.bf16.msra.mxu0 %v1675
  %2594 = vmatprep.subr.bf16.mxu0 %v1668
  %2595 = vmatpush2.bf16.msra.mxu0 %v1667
  %2596 = vmatprep.subr.bf16.mxu0 %v1660
  %2597 = vmatpush2.bf16.msra.mxu0 %v1659
  %2598 = vmatprep.subr.bf16.mxu0 %v1652
  %2599 = vmatpush2.bf16.msra.mxu0 %v1651
  %2600 = vmatprep.subr.bf16.mxu0 %v1644
  %2601 = vmatpush2.bf16.msra.mxu0 %v1643
  %2602 = vmatprep.subr.bf16.mxu0 %v1636
  %2603 = vmatpush2.bf16.msra.mxu0 %v1635
  %2604 = vmatprep.subr.bf16.mxu0 %v1628
  %2605 = vmatpush2.bf16.msra.mxu0 %v1627
  %2606 = vmatprep.mubr.bf16.mxu0 %v2571
  %2607 = vmatmul.mubr.bf16.gmra.mxu0 %v2570
  %v2608 = vpop.f32.mrf.mxu0
  %v2609 = vadd.f32 0.0, %v2608
  %v2610 = vpop.f32.mrf.mxu0
  %v2611 = vadd.f32 0.0, %v2610
  %v2612 = vpop.f32.mrf.mxu0
  %v2613 = vpop.f32.mrf.mxu0
  %2614 = vdwg.mxu0
  %2615 = vmatprep.subr.bf16.mxu0 %v1622
  %2616 = vmatpush1.bf16.msra.mxu0 %v1621
  %2617 = vmatprep.subr.bf16.mxu0 %v1614
  %2618 = vmatpush1.bf16.msra.mxu0 %v1613
  %2619 = vmatprep.subr.bf16.mxu0 %v1606
  %2620 = vmatpush1.bf16.msra.mxu0 %v1605
  %2621 = vmatprep.subr.bf16.mxu0 %v1598
  %2622 = vmatpush1.bf16.msra.mxu0 %v1597
  %2623 = vmatprep.subr.bf16.mxu0 %v1590
  %2624 = vmatpush1.bf16.msra.mxu0 %v1589
  %2625 = vmatprep.subr.bf16.mxu0 %v1582
  %2626 = vmatpush1.bf16.msra.mxu0 %v1581
  %2627 = vmatprep.subr.bf16.mxu0 %v1574
  %2628 = vmatpush1.bf16.msra.mxu0 %v1573
  %2629 = vmatprep.subr.bf16.mxu0 %v1566
  %2630 = vmatpush1.bf16.msra.mxu0 %v1565
  %2631 = vmatprep.subr.bf16.mxu0 %v1686
  %2632 = vmatpush2.bf16.msra.mxu0 %v1685
  %2633 = vmatprep.subr.bf16.mxu0 %v1678
  %2634 = vmatpush2.bf16.msra.mxu0 %v1677
  %2635 = vmatprep.subr.bf16.mxu0 %v1670
  %2636 = vmatpush2.bf16.msra.mxu0 %v1669
  %2637 = vmatprep.subr.bf16.mxu0 %v1662
  %2638 = vmatpush2.bf16.msra.mxu0 %v1661
  %2639 = vmatprep.subr.bf16.mxu0 %v1654
  %2640 = vmatpush2.bf16.msra.mxu0 %v1653
  %2641 = vmatprep.subr.bf16.mxu0 %v1646
  %2642 = vmatpush2.bf16.msra.mxu0 %v1645
  %2643 = vmatprep.subr.bf16.mxu0 %v1638
  %2644 = vmatpush2.bf16.msra.mxu0 %v1637
  %2645 = vmatprep.subr.bf16.mxu0 %v1630
  %2646 = vmatpush2.bf16.msra.mxu0 %v1629
  %2647 = vmatprep.mubr.bf16.mxu0 %v2571
  %2648 = vmatmul.mubr.bf16.gmra.mxu0 %v2570
  %v2649 = vpop.f32.mrf.mxu0
  %v2650 = vadd.f32 0.0, %v2649
  %v2651 = vpop.f32.mrf.mxu0
  %v2652 = vadd.f32 0.0, %v2651
  %v2653 = vpop.f32.mrf.mxu0
  %v2654 = vpop.f32.mrf.mxu0
  %2655 = vdwg.mxu0
  %2656 = vmatprep.subr.bf16.mxu0 %v1624
  %2657 = vmatpush1.bf16.msra.mxu0 %v1623
  %2658 = vmatprep.subr.bf16.mxu0 %v1616
  %2659 = vmatpush1.bf16.msra.mxu0 %v1615
  %2660 = vmatprep.subr.bf16.mxu0 %v1608
  %2661 = vmatpush1.bf16.msra.mxu0 %v1607
  %2662 = vmatprep.subr.bf16.mxu0 %v1600
  %2663 = vmatpush1.bf16.msra.mxu0 %v1599
  %2664 = vmatprep.subr.bf16.mxu0 %v1592
  %2665 = vmatpush1.bf16.msra.mxu0 %v1591
  %2666 = vmatprep.subr.bf16.mxu0 %v1584
  %2667 = vmatpush1.bf16.msra.mxu0 %v1583
  %2668 = vmatprep.subr.bf16.mxu0 %v1576
  %2669 = vmatpush1.bf16.msra.mxu0 %v1575
  %2670 = vmatprep.subr.bf16.mxu0 %v1568
  %2671 = vmatpush1.bf16.msra.mxu0 %v1567
  %2672 = vmatprep.subr.bf16.mxu0 %v1688
  %2673 = vmatpush2.bf16.msra.mxu0 %v1687
  %2674 = vmatprep.subr.bf16.mxu0 %v1680
  %2675 = vmatpush2.bf16.msra.mxu0 %v1679
  %2676 = vmatprep.subr.bf16.mxu0 %v1672
  %2677 = vmatpush2.bf16.msra.mxu0 %v1671
  %2678 = vmatprep.subr.bf16.mxu0 %v1664
  %2679 = vmatpush2.bf16.msra.mxu0 %v1663
  %2680 = vmatprep.subr.bf16.mxu0 %v1656
  %2681 = vmatpush2.bf16.msra.mxu0 %v1655
  %2682 = vmatprep.subr.bf16.mxu0 %v1648
  %2683 = vmatpush2.bf16.msra.mxu0 %v1647
  %2684 = vmatprep.subr.bf16.mxu0 %v1640
  %2685 = vmatpush2.bf16.msra.mxu0 %v1639
  %2686 = vmatprep.subr.bf16.mxu0 %v1632
  %2687 = vmatpush2.bf16.msra.mxu0 %v1631
  %2688 = vmatprep.mubr.bf16.mxu0 %v2571
  %2689 = vmatmul.mubr.bf16.gmra.mxu0 %v2570
  %v2690 = vpop.f32.mrf.mxu0
  %v2691 = vadd.f32 0.0, %v2690
  %v2692 = vpop.f32.mrf.mxu0
  %v2693 = vadd.f32 0.0, %v2692
  %v2694 = vpop.f32.mrf.mxu0
  %v2695 = vpop.f32.mrf.mxu0
  %2696 = vdwg.mxu0
  %2697 = vmatprep.subr.bf16.mxu0 %v1626
  %2698 = vmatpush1.bf16.msra.mxu0 %v1625
  %2699 = vmatprep.subr.bf16.mxu0 %v1618
  %2700 = vmatpush1.bf16.msra.mxu0 %v1617
  %2701 = vmatprep.subr.bf16.mxu0 %v1610
  %2702 = vmatpush1.bf16.msra.mxu0 %v1609
  %2703 = vmatprep.subr.bf16.mxu0 %v1602
  %2704 = vmatpush1.bf16.msra.mxu0 %v1601
  %2705 = vmatprep.subr.bf16.mxu0 %v1594
  %2706 = vmatpush1.bf16.msra.mxu0 %v1593
  %2707 = vmatprep.subr.bf16.mxu0 %v1586
  %2708 = vmatpush1.bf16.msra.mxu0 %v1585
  %2709 = vmatprep.subr.bf16.mxu0 %v1578
  %2710 = vmatpush1.bf16.msra.mxu0 %v1577
  %2711 = vmatprep.subr.bf16.mxu0 %v1570
  %2712 = vmatpush1.bf16.msra.mxu0 %v1569
  %2713 = vmatprep.subr.bf16.mxu0 %v1690
  %2714 = vmatpush2.bf16.msra.mxu0 %v1689
  %2715 = vmatprep.subr.bf16.mxu0 %v1682
  %2716 = vmatpush2.bf16.msra.mxu0 %v1681
  %2717 = vmatprep.subr.bf16.mxu0 %v1674
  %2718 = vmatpush2.bf16.msra.mxu0 %v1673
  %2719 = vmatprep.subr.bf16.mxu0 %v1666
  %2720 = vmatpush2.bf16.msra.mxu0 %v1665
  %2721 = vmatprep.subr.bf16.mxu0 %v1658
  %2722 = vmatpush2.bf16.msra.mxu0 %v1657
  %2723 = vmatprep.subr.bf16.mxu0 %v1650
  %2724 = vmatpush2.bf16.msra.mxu0 %v1649
  %2725 = vmatprep.subr.bf16.mxu0 %v1642
  %2726 = vmatpush2.bf16.msra.mxu0 %v1641
  %2727 = vmatprep.subr.bf16.mxu0 %v1634
  %2728 = vmatpush2.bf16.msra.mxu0 %v1633
  %2729 = vmatprep.mubr.bf16.mxu0 %v2571
  %2730 = vmatmul.mubr.bf16.gmra.mxu0 %v2570
  %v2731 = vpop.f32.mrf.mxu0
  %v2732 = vadd.f32 0.0, %v2731
  %v2733 = vpop.f32.mrf.mxu0
  %v2734 = vadd.f32 0.0, %v2733
  %v2735 = vpop.f32.mrf.mxu0
  %v2736 = vpop.f32.mrf.mxu0
  %2737 = vdwg.mxu0
  %v2746 = vrot.slane %v2609, 2
  %v2747 = vrot.slane %v2611, 2
  %v2748 = vrot.slane %v2650, 2
  %v2749 = vrot.slane %v2652, 2
  %v2750 = vrot.slane %v2691, 2
  %v2751 = vrot.slane %v2693, 2
  %v2752 = vrot.slane %v2732, 2
  %v2753 = vrot.slane %v2734, 2
  %v2762 = vadd.f32 %v886, %v2746
  %v2763 = vadd.f32 %v888, %v2747
  %v2764 = vadd.f32 %v929, %v2748
  %v2765 = vadd.f32 %v931, %v2749
  %v2766 = vadd.f32 %v972, %v2750
  %v2767 = vadd.f32 %v974, %v2751
  %v2768 = vadd.f32 %v1015, %v2752
  %v2769 = vadd.f32 %v1017, %v2753
  %v2770 = vxor.u32 %v2762, 2147483648
  %v2771 = vxor.u32 %v2763, 2147483648
  %v2772 = vmul.f32 %v2770, 1.442695
  %v2773 = vpow.pop %v2772
  %v2774 = vmul.f32 %v2771, 1.442695
  %v2775 = vpow.pop %v2774
  %v2776 = vadd.f32 %v2773, 1.0
  %v2777 = vadd.f32 %v2775, 1.0
  %v2778 = vrcp.pop %v2776
  %v2779 = vmul.f32 1.0, %v2778
  %v2780 = vrcp.pop %v2777
  %v2781 = vmul.f32 1.0, %v2780
  %v2782 = vxor.u32 %v2764, 2147483648
  %v2783 = vxor.u32 %v2765, 2147483648
  %v2784 = vmul.f32 %v2782, 1.442695
  %v2785 = vpow.pop %v2784
  %v2786 = vmul.f32 %v2783, 1.442695
  %v2787 = vpow.pop %v2786
  %v2788 = vadd.f32 %v2785, 1.0
  %v2789 = vadd.f32 %v2787, 1.0
  %v2790 = vrcp.pop %v2788
  %v2791 = vmul.f32 1.0, %v2790
  %v2792 = vrcp.pop %v2789
  %v2793 = vmul.f32 1.0, %v2792
  %v2794 = vtanh.pop %v2766
  %v2795 = vtanh.pop %v2767
  %v2796 = vxor.u32 %v2768, 2147483648
  %v2797 = vxor.u32 %v2769, 2147483648
  %v2798 = vmul.f32 %v2796, 1.442695
  %v2799 = vpow.pop %v2798
  %v2800 = vmul.f32 %v2797, 1.442695
  %v2801 = vpow.pop %v2800
  %v2802 = vadd.f32 %v2799, 1.0
  %v2803 = vadd.f32 %v2801, 1.0
  %v2804 = vrcp.pop %v2802
  %v2805 = vmul.f32 1.0, %v2804
  %v2806 = vrcp.pop %v2803
  %v2807 = vmul.f32 1.0, %v2806
  %v2810 = vrot.slane %v2558, 6
  %v2811 = vrot.slane %v2559, 6
  %v2814 = vmul.f32 %v2791, %v2810
  %v2815 = vmul.f32 %v2793, %v2811
  %v2816 = vmul.f32 %v2779, %v2794
  %v2817 = vmul.f32 %v2781, %v2795
  %v2818 = vadd.f32 %v2814, %v2816
  %v2819 = vadd.f32 %v2815, %v2817
  %v2820 = vtanh.pop %v2818
  %v2821 = vtanh.pop %v2819
  %v2822 = vmul.f32 %v2805, %v2820
  %v2823 = vmul.f32 %v2807, %v2821
  %2824 = vst [vmem:[#allocation2] sm:$0xc0] %v2822
  %2825 = vst [vmem:[#allocation2 + $0x8] sm:$0xc0] %v2823
  %v2826 = vpack.c.bf16 %v2822, %v2822
  %v2827 = vpack.c.bf16 %v2823, %v2823
  %v2830 = vrot.slane %v2826, 3
  %v2831 = vrot.slane %v2827, 3
  %2834 = vmatprep.subr.bf16.mxu0 %v1620
  %2835 = vmatpush1.bf16.msra.mxu0 %v1619
  %2836 = vmatprep.subr.bf16.mxu0 %v1612
  %2837 = vmatpush1.bf16.msra.mxu0 %v1611
  %2838 = vmatprep.subr.bf16.mxu0 %v1604
  %2839 = vmatpush1.bf16.msra.mxu0 %v1603
  %2840 = vmatprep.subr.bf16.mxu0 %v1596
  %2841 = vmatpush1.bf16.msra.mxu0 %v1595
  %2842 = vmatprep.subr.bf16.mxu0 %v1588
  %2843 = vmatpush1.bf16.msra.mxu0 %v1587
  %2844 = vmatprep.subr.bf16.mxu0 %v1580
  %2845 = vmatpush1.bf16.msra.mxu0 %v1579
  %2846 = vmatprep.subr.bf16.mxu0 %v1572
  %2847 = vmatpush1.bf16.msra.mxu0 %v1571
  %2848 = vmatprep.subr.bf16.mxu0 %v1564
  %2849 = vmatpush1.bf16.msra.mxu0 %v1563
  %2850 = vmatprep.subr.bf16.mxu0 %v1684
  %2851 = vmatpush2.bf16.msra.mxu0 %v1683
  %2852 = vmatprep.subr.bf16.mxu0 %v1676
  %2853 = vmatpush2.bf16.msra.mxu0 %v1675
  %2854 = vmatprep.subr.bf16.mxu0 %v1668
  %2855 = vmatpush2.bf16.msra.mxu0 %v1667
  %2856 = vmatprep.subr.bf16.mxu0 %v1660
  %2857 = vmatpush2.bf16.msra.mxu0 %v1659
  %2858 = vmatprep.subr.bf16.mxu0 %v1652
  %2859 = vmatpush2.bf16.msra.mxu0 %v1651
  %2860 = vmatprep.subr.bf16.mxu0 %v1644
  %2861 = vmatpush2.bf16.msra.mxu0 %v1643
  %2862 = vmatprep.subr.bf16.mxu0 %v1636
  %2863 = vmatpush2.bf16.msra.mxu0 %v1635
  %2864 = vmatprep.subr.bf16.mxu0 %v1628
  %2865 = vmatpush2.bf16.msra.mxu0 %v1627
  %2866 = vmatprep.mubr.bf16.mxu0 %v2831
  %2867 = vmatmul.mubr.bf16.gmra.mxu0 %v2830
  %v2868 = vpop.f32.mrf.mxu0
  %v2869 = vadd.f32 0.0, %v2868
  %v2870 = vpop.f32.mrf.mxu0
  %v2871 = vadd.f32 0.0, %v2870
  %v2872 = vpop.f32.mrf.mxu0
  %v2873 = vpop.f32.mrf.mxu0
  %2874 = vdwg.mxu0
  %2875 = vmatprep.subr.bf16.mxu0 %v1622
  %2876 = vmatpush1.bf16.msra.mxu0 %v1621
  %2877 = vmatprep.subr.bf16.mxu0 %v1614
  %2878 = vmatpush1.bf16.msra.mxu0 %v1613
  %2879 = vmatprep.subr.bf16.mxu0 %v1606
  %2880 = vmatpush1.bf16.msra.mxu0 %v1605
  %2881 = vmatprep.subr.bf16.mxu0 %v1598
  %2882 = vmatpush1.bf16.msra.mxu0 %v1597
  %2883 = vmatprep.subr.bf16.mxu0 %v1590
  %2884 = vmatpush1.bf16.msra.mxu0 %v1589
  %2885 = vmatprep.subr.bf16.mxu0 %v1582
  %2886 = vmatpush1.bf16.msra.mxu0 %v1581
  %2887 = vmatprep.subr.bf16.mxu0 %v1574
  %2888 = vmatpush1.bf16.msra.mxu0 %v1573
  %2889 = vmatprep.subr.bf16.mxu0 %v1566
  %2890 = vmatpush1.bf16.msra.mxu0 %v1565
  %2891 = vmatprep.subr.bf16.mxu0 %v1686
  %2892 = vmatpush2.bf16.msra.mxu0 %v1685
  %2893 = vmatprep.subr.bf16.mxu0 %v1678
  %2894 = vmatpush2.bf16.msra.mxu0 %v1677
  %2895 = vmatprep.subr.bf16.mxu0 %v1670
  %2896 = vmatpush2.bf16.msra.mxu0 %v1669
  %2897 = vmatprep.subr.bf16.mxu0 %v1662
  %2898 = vmatpush2.bf16.msra.mxu0 %v1661
  %2899 = vmatprep.subr.bf16.mxu0 %v1654
  %2900 = vmatpush2.bf16.msra.mxu0 %v1653
  %2901 = vmatprep.subr.bf16.mxu0 %v1646
  %2902 = vmatpush2.bf16.msra.mxu0 %v1645
  %2903 = vmatprep.subr.bf16.mxu0 %v1638
  %2904 = vmatpush2.bf16.msra.mxu0 %v1637
  %2905 = vmatprep.subr.bf16.mxu0 %v1630
  %2906 = vmatpush2.bf16.msra.mxu0 %v1629
  %2907 = vmatprep.mubr.bf16.mxu0 %v2831
  %2908 = vmatmul.mubr.bf16.gmra.mxu0 %v2830
  %v2909 = vpop.f32.mrf.mxu0
  %v2910 = vadd.f32 0.0, %v2909
  %v2911 = vpop.f32.mrf.mxu0
  %v2912 = vadd.f32 0.0, %v2911
  %v2913 = vpop.f32.mrf.mxu0
  %v2914 = vpop.f32.mrf.mxu0
  %2915 = vdwg.mxu0
  %2916 = vmatprep.subr.bf16.mxu0 %v1624
  %2917 = vmatpush1.bf16.msra.mxu0 %v1623
  %2918 = vmatprep.subr.bf16.mxu0 %v1616
  %2919 = vmatpush1.bf16.msra.mxu0 %v1615
  %2920 = vmatprep.subr.bf16.mxu0 %v1608
  %2921 = vmatpush1.bf16.msra.mxu0 %v1607
  %2922 = vmatprep.subr.bf16.mxu0 %v1600
  %2923 = vmatpush1.bf16.msra.mxu0 %v1599
  %2924 = vmatprep.subr.bf16.mxu0 %v1592
  %2925 = vmatpush1.bf16.msra.mxu0 %v1591
  %2926 = vmatprep.subr.bf16.mxu0 %v1584
  %2927 = vmatpush1.bf16.msra.mxu0 %v1583
  %2928 = vmatprep.subr.bf16.mxu0 %v1576
  %2929 = vmatpush1.bf16.msra.mxu0 %v1575
  %2930 = vmatprep.subr.bf16.mxu0 %v1568
  %2931 = vmatpush1.bf16.msra.mxu0 %v1567
  %2932 = vmatprep.subr.bf16.mxu0 %v1688
  %2933 = vmatpush2.bf16.msra.mxu0 %v1687
  %2934 = vmatprep.subr.bf16.mxu0 %v1680
  %2935 = vmatpush2.bf16.msra.mxu0 %v1679
  %2936 = vmatprep.subr.bf16.mxu0 %v1672
  %2937 = vmatpush2.bf16.msra.mxu0 %v1671
  %2938 = vmatprep.subr.bf16.mxu0 %v1664
  %2939 = vmatpush2.bf16.msra.mxu0 %v1663
  %2940 = vmatprep.subr.bf16.mxu0 %v1656
  %2941 = vmatpush2.bf16.msra.mxu0 %v1655
  %2942 = vmatprep.subr.bf16.mxu0 %v1648
  %2943 = vmatpush2.bf16.msra.mxu0 %v1647
  %2944 = vmatprep.subr.bf16.mxu0 %v1640
  %2945 = vmatpush2.bf16.msra.mxu0 %v1639
  %2946 = vmatprep.subr.bf16.mxu0 %v1632
  %2947 = vmatpush2.bf16.msra.mxu0 %v1631
  %2948 = vmatprep.mubr.bf16.mxu0 %v2831
  %2949 = vmatmul.mubr.bf16.gmra.mxu0 %v2830
  %v2950 = vpop.f32.mrf.mxu0
  %v2951 = vadd.f32 0.0, %v2950
  %v2952 = vpop.f32.mrf.mxu0
  %v2953 = vadd.f32 0.0, %v2952
  %v2954 = vpop.f32.mrf.mxu0
  %v2955 = vpop.f32.mrf.mxu0
  %2956 = vdwg.mxu0
  %2957 = vmatprep.subr.bf16.mxu0 %v1626
  %2958 = vmatpush1.bf16.msra.mxu0 %v1625
  %2959 = vmatprep.subr.bf16.mxu0 %v1618
  %2960 = vmatpush1.bf16.msra.mxu0 %v1617
  %2961 = vmatprep.subr.bf16.mxu0 %v1610
  %2962 = vmatpush1.bf16.msra.mxu0 %v1609
  %2963 = vmatprep.subr.bf16.mxu0 %v1602
  %2964 = vmatpush1.bf16.msra.mxu0 %v1601
  %2965 = vmatprep.subr.bf16.mxu0 %v1594
  %2966 = vmatpush1.bf16.msra.mxu0 %v1593
  %2967 = vmatprep.subr.bf16.mxu0 %v1586
  %2968 = vmatpush1.bf16.msra.mxu0 %v1585
  %2969 = vmatprep.subr.bf16.mxu0 %v1578
  %2970 = vmatpush1.bf16.msra.mxu0 %v1577
  %2971 = vmatprep.subr.bf16.mxu0 %v1570
  %2972 = vmatpush1.bf16.msra.mxu0 %v1569
  %2973 = vmatprep.subr.bf16.mxu0 %v1690
  %2974 = vmatpush2.bf16.msra.mxu0 %v1689
  %2975 = vmatprep.subr.bf16.mxu0 %v1682
  %2976 = vmatpush2.bf16.msra.mxu0 %v1681
  %2977 = vmatprep.subr.bf16.mxu0 %v1674
  %2978 = vmatpush2.bf16.msra.mxu0 %v1673
  %2979 = vmatprep.subr.bf16.mxu0 %v1666
  %2980 = vmatpush2.bf16.msra.mxu0 %v1665
  %2981 = vmatprep.subr.bf16.mxu0 %v1658
  %2982 = vmatpush2.bf16.msra.mxu0 %v1657
  %2983 = vmatprep.subr.bf16.mxu0 %v1650
  %2984 = vmatpush2.bf16.msra.mxu0 %v1649
  %2985 = vmatprep.subr.bf16.mxu0 %v1642
  %2986 = vmatpush2.bf16.msra.mxu0 %v1641
  %2987 = vmatprep.subr.bf16.mxu0 %v1634
  %2988 = vmatpush2.bf16.msra.mxu0 %v1633
  %2989 = vmatprep.mubr.bf16.mxu0 %v2831
  %2990 = vmatmul.mubr.bf16.gmra.mxu0 %v2830
  %v2991 = vpop.f32.mrf.mxu0
  %v2992 = vadd.f32 0.0, %v2991
  %v2993 = vpop.f32.mrf.mxu0
  %v2994 = vadd.f32 0.0, %v2993
  %v2995 = vpop.f32.mrf.mxu0
  %v2996 = vpop.f32.mrf.mxu0
  %2997 = vdwg.mxu0
  %v2998 = vadd.f32 %v890, %v2869
  %v2999 = vadd.f32 %v892, %v2871
  %v3000 = vadd.f32 %v933, %v2910
  %v3001 = vadd.f32 %v935, %v2912
  %v3002 = vadd.f32 %v976, %v2951
  %v3003 = vadd.f32 %v978, %v2953
  %v3004 = vadd.f32 %v1019, %v2992
  %v3005 = vadd.f32 %v1021, %v2994
  %v3006 = vxor.u32 %v2998, 2147483648
  %v3007 = vxor.u32 %v2999, 2147483648
  %v3008 = vmul.f32 %v3006, 1.442695
  %v3009 = vpow.pop %v3008
  %v3010 = vmul.f32 %v3007, 1.442695
  %v3011 = vpow.pop %v3010
  %v3012 = vadd.f32 %v3009, 1.0
  %v3013 = vadd.f32 %v3011, 1.0
  %v3014 = vrcp.pop %v3012
  %v3015 = vmul.f32 1.0, %v3014
  %v3016 = vrcp.pop %v3013
  %v3017 = vmul.f32 1.0, %v3016
  %v3018 = vxor.u32 %v3000, 2147483648
  %v3019 = vxor.u32 %v3001, 2147483648
  %v3020 = vmul.f32 %v3018, 1.442695
  %v3021 = vpow.pop %v3020
  %v3022 = vmul.f32 %v3019, 1.442695
  %v3023 = vpow.pop %v3022
  %v3024 = vadd.f32 %v3021, 1.0
  %v3025 = vadd.f32 %v3023, 1.0
  %v3026 = vrcp.pop %v3024
  %v3027 = vmul.f32 1.0, %v3026
  %v3028 = vrcp.pop %v3025
  %v3029 = vmul.f32 1.0, %v3028
  %v3030 = vtanh.pop %v3002
  %v3031 = vtanh.pop %v3003
  %v3032 = vxor.u32 %v3004, 2147483648
  %v3033 = vxor.u32 %v3005, 2147483648
  %v3034 = vmul.f32 %v3032, 1.442695
  %v3035 = vpow.pop %v3034
  %v3036 = vmul.f32 %v3033, 1.442695
  %v3037 = vpow.pop %v3036
  %v3038 = vadd.f32 %v3035, 1.0
  %v3039 = vadd.f32 %v3037, 1.0
  %v3040 = vrcp.pop %v3038
  %v3041 = vmul.f32 1.0, %v3040
  %v3042 = vrcp.pop %v3039
  %v3043 = vmul.f32 1.0, %v3042
  %v3046 = vrot.slane %v2818, 6
  %v3047 = vrot.slane %v2819, 6
  %v3050 = vmul.f32 %v3027, %v3046
  %v3051 = vmul.f32 %v3029, %v3047
  %v3052 = vmul.f32 %v3015, %v3030
  %v3053 = vmul.f32 %v3017, %v3031
  %v3054 = vadd.f32 %v3050, %v3052
  %v3055 = vadd.f32 %v3051, %v3053
  %v3056 = vtanh.pop %v3054
  %v3057 = vtanh.pop %v3055
  %v3058 = vmul.f32 %v3041, %v3056
  %v3059 = vmul.f32 %v3043, %v3057
  %3060 = vst [vmem:[#allocation2 + $0x10] sm:$0x3] %v3058
  %3061 = vst [vmem:[#allocation2 + $0x18] sm:$0x3] %v3059
  %v3062 = vpack.c.bf16 %v3058, %v3058
  %v3063 = vpack.c.bf16 %v3059, %v3059
  %3064 = vmatprep.subr.bf16.mxu0 %v1620
  %3065 = vmatpush1.bf16.msra.mxu0 %v1619
  %3066 = vmatprep.subr.bf16.mxu0 %v1612
  %3067 = vmatpush1.bf16.msra.mxu0 %v1611
  %3068 = vmatprep.subr.bf16.mxu0 %v1604
  %3069 = vmatpush1.bf16.msra.mxu0 %v1603
  %3070 = vmatprep.subr.bf16.mxu0 %v1596
  %3071 = vmatpush1.bf16.msra.mxu0 %v1595
  %3072 = vmatprep.subr.bf16.mxu0 %v1588
  %3073 = vmatpush1.bf16.msra.mxu0 %v1587
  %3074 = vmatprep.subr.bf16.mxu0 %v1580
  %3075 = vmatpush1.bf16.msra.mxu0 %v1579
  %3076 = vmatprep.subr.bf16.mxu0 %v1572
  %3077 = vmatpush1.bf16.msra.mxu0 %v1571
  %3078 = vmatprep.subr.bf16.mxu0 %v1564
  %3079 = vmatpush1.bf16.msra.mxu0 %v1563
  %3080 = vmatprep.subr.bf16.mxu0 %v1684
  %3081 = vmatpush2.bf16.msra.mxu0 %v1683
  %3082 = vmatprep.subr.bf16.mxu0 %v1676
  %3083 = vmatpush2.bf16.msra.mxu0 %v1675
  %3084 = vmatprep.subr.bf16.mxu0 %v1668
  %3085 = vmatpush2.bf16.msra.mxu0 %v1667
  %3086 = vmatprep.subr.bf16.mxu0 %v1660
  %3087 = vmatpush2.bf16.msra.mxu0 %v1659
  %3088 = vmatprep.subr.bf16.mxu0 %v1652
  %3089 = vmatpush2.bf16.msra.mxu0 %v1651
  %3090 = vmatprep.subr.bf16.mxu0 %v1644
  %3091 = vmatpush2.bf16.msra.mxu0 %v1643
  %3092 = vmatprep.subr.bf16.mxu0 %v1636
  %3093 = vmatpush2.bf16.msra.mxu0 %v1635
  %3094 = vmatprep.subr.bf16.mxu0 %v1628
  %3095 = vmatpush2.bf16.msra.mxu0 %v1627
  %3096 = vmatprep.mubr.bf16.mxu0 %v3063
  %3097 = vmatmul.mubr.bf16.gmra.mxu0 %v3062
  %v3098 = vpop.f32.mrf.mxu0
  %v3099 = vadd.f32 0.0, %v3098
  %v3100 = vpop.f32.mrf.mxu0
  %v3101 = vadd.f32 0.0, %v3100
  %v3102 = vpop.f32.mrf.mxu0
  %v3103 = vpop.f32.mrf.mxu0
  %3104 = vdwg.mxu0
  %3105 = vmatprep.subr.bf16.mxu0 %v1622
  %3106 = vmatpush1.bf16.msra.mxu0 %v1621
  %3107 = vmatprep.subr.bf16.mxu0 %v1614
  %3108 = vmatpush1.bf16.msra.mxu0 %v1613
  %3109 = vmatprep.subr.bf16.mxu0 %v1606
  %3110 = vmatpush1.bf16.msra.mxu0 %v1605
  %3111 = vmatprep.subr.bf16.mxu0 %v1598
  %3112 = vmatpush1.bf16.msra.mxu0 %v1597
  %3113 = vmatprep.subr.bf16.mxu0 %v1590
  %3114 = vmatpush1.bf16.msra.mxu0 %v1589
  %3115 = vmatprep.subr.bf16.mxu0 %v1582
  %3116 = vmatpush1.bf16.msra.mxu0 %v1581
  %3117 = vmatprep.subr.bf16.mxu0 %v1574
  %3118 = vmatpush1.bf16.msra.mxu0 %v1573
  %3119 = vmatprep.subr.bf16.mxu0 %v1566
  %3120 = vmatpush1.bf16.msra.mxu0 %v1565
  %3121 = vmatprep.subr.bf16.mxu0 %v1686
  %3122 = vmatpush2.bf16.msra.mxu0 %v1685
  %3123 = vmatprep.subr.bf16.mxu0 %v1678
  %3124 = vmatpush2.bf16.msra.mxu0 %v1677
  %3125 = vmatprep.subr.bf16.mxu0 %v1670
  %3126 = vmatpush2.bf16.msra.mxu0 %v1669
  %3127 = vmatprep.subr.bf16.mxu0 %v1662
  %3128 = vmatpush2.bf16.msra.mxu0 %v1661
  %3129 = vmatprep.subr.bf16.mxu0 %v1654
  %3130 = vmatpush2.bf16.msra.mxu0 %v1653
  %3131 = vmatprep.subr.bf16.mxu0 %v1646
  %3132 = vmatpush2.bf16.msra.mxu0 %v1645
  %3133 = vmatprep.subr.bf16.mxu0 %v1638
  %3134 = vmatpush2.bf16.msra.mxu0 %v1637
  %3135 = vmatprep.subr.bf16.mxu0 %v1630
  %3136 = vmatpush2.bf16.msra.mxu0 %v1629
  %3137 = vmatprep.mubr.bf16.mxu0 %v3063
  %3138 = vmatmul.mubr.bf16.gmra.mxu0 %v3062
  %v3139 = vpop.f32.mrf.mxu0
  %v3140 = vadd.f32 0.0, %v3139
  %v3141 = vpop.f32.mrf.mxu0
  %v3142 = vadd.f32 0.0, %v3141
  %v3143 = vpop.f32.mrf.mxu0
  %v3144 = vpop.f32.mrf.mxu0
  %3145 = vdwg.mxu0
  %3146 = vmatprep.subr.bf16.mxu0 %v1624
  %3147 = vmatpush1.bf16.msra.mxu0 %v1623
  %3148 = vmatprep.subr.bf16.mxu0 %v1616
  %3149 = vmatpush1.bf16.msra.mxu0 %v1615
  %3150 = vmatprep.subr.bf16.mxu0 %v1608
  %3151 = vmatpush1.bf16.msra.mxu0 %v1607
  %3152 = vmatprep.subr.bf16.mxu0 %v1600
  %3153 = vmatpush1.bf16.msra.mxu0 %v1599
  %3154 = vmatprep.subr.bf16.mxu0 %v1592
  %3155 = vmatpush1.bf16.msra.mxu0 %v1591
  %3156 = vmatprep.subr.bf16.mxu0 %v1584
  %3157 = vmatpush1.bf16.msra.mxu0 %v1583
  %3158 = vmatprep.subr.bf16.mxu0 %v1576
  %3159 = vmatpush1.bf16.msra.mxu0 %v1575
  %3160 = vmatprep.subr.bf16.mxu0 %v1568
  %3161 = vmatpush1.bf16.msra.mxu0 %v1567
  %3162 = vmatprep.subr.bf16.mxu0 %v1688
  %3163 = vmatpush2.bf16.msra.mxu0 %v1687
  %3164 = vmatprep.subr.bf16.mxu0 %v1680
  %3165 = vmatpush2.bf16.msra.mxu0 %v1679
  %3166 = vmatprep.subr.bf16.mxu0 %v1672
  %3167 = vmatpush2.bf16.msra.mxu0 %v1671
  %3168 = vmatprep.subr.bf16.mxu0 %v1664
  %3169 = vmatpush2.bf16.msra.mxu0 %v1663
  %3170 = vmatprep.subr.bf16.mxu0 %v1656
  %3171 = vmatpush2.bf16.msra.mxu0 %v1655
  %3172 = vmatprep.subr.bf16.mxu0 %v1648
  %3173 = vmatpush2.bf16.msra.mxu0 %v1647
  %3174 = vmatprep.subr.bf16.mxu0 %v1640
  %3175 = vmatpush2.bf16.msra.mxu0 %v1639
  %3176 = vmatprep.subr.bf16.mxu0 %v1632
  %3177 = vmatpush2.bf16.msra.mxu0 %v1631
  %3178 = vmatprep.mubr.bf16.mxu0 %v3063
  %3179 = vmatmul.mubr.bf16.gmra.mxu0 %v3062
  %v3180 = vpop.f32.mrf.mxu0
  %v3181 = vadd.f32 0.0, %v3180
  %v3182 = vpop.f32.mrf.mxu0
  %v3183 = vadd.f32 0.0, %v3182
  %v3184 = vpop.f32.mrf.mxu0
  %v3185 = vpop.f32.mrf.mxu0
  %3186 = vdwg.mxu0
  %3187 = vmatprep.subr.bf16.mxu0 %v1626
  %3188 = vmatpush1.bf16.msra.mxu0 %v1625
  %3189 = vmatprep.subr.bf16.mxu0 %v1618
  %3190 = vmatpush1.bf16.msra.mxu0 %v1617
  %3191 = vmatprep.subr.bf16.mxu0 %v1610
  %3192 = vmatpush1.bf16.msra.mxu0 %v1609
  %3193 = vmatprep.subr.bf16.mxu0 %v1602
  %3194 = vmatpush1.bf16.msra.mxu0 %v1601
  %3195 = vmatprep.subr.bf16.mxu0 %v1594
  %3196 = vmatpush1.bf16.msra.mxu0 %v1593
  %3197 = vmatprep.subr.bf16.mxu0 %v1586
  %3198 = vmatpush1.bf16.msra.mxu0 %v1585
  %3199 = vmatprep.subr.bf16.mxu0 %v1578
  %3200 = vmatpush1.bf16.msra.mxu0 %v1577
  %3201 = vmatprep.subr.bf16.mxu0 %v1570
  %3202 = vmatpush1.bf16.msra.mxu0 %v1569
  %3203 = vmatprep.subr.bf16.mxu0 %v1690
  %3204 = vmatpush2.bf16.msra.mxu0 %v1689
  %3205 = vmatprep.subr.bf16.mxu0 %v1682
  %3206 = vmatpush2.bf16.msra.mxu0 %v1681
  %3207 = vmatprep.subr.bf16.mxu0 %v1674
  %3208 = vmatpush2.bf16.msra.mxu0 %v1673
  %3209 = vmatprep.subr.bf16.mxu0 %v1666
  %3210 = vmatpush2.bf16.msra.mxu0 %v1665
  %3211 = vmatprep.subr.bf16.mxu0 %v1658
  %3212 = vmatpush2.bf16.msra.mxu0 %v1657
  %3213 = vmatprep.subr.bf16.mxu0 %v1650
  %3214 = vmatpush2.bf16.msra.mxu0 %v1649
  %3215 = vmatprep.subr.bf16.mxu0 %v1642
  %3216 = vmatpush2.bf16.msra.mxu0 %v1641
  %3217 = vmatprep.subr.bf16.mxu0 %v1634
  %3218 = vmatpush2.bf16.msra.mxu0 %v1633
  %3219 = vmatprep.mubr.bf16.mxu0 %v3063
  %3220 = vmatmul.mubr.bf16.gmra.mxu0 %v3062
  %v3221 = vpop.f32.mrf.mxu0
  %v3222 = vadd.f32 0.0, %v3221
  %v3223 = vpop.f32.mrf.mxu0
  %v3224 = vadd.f32 0.0, %v3223
  %v3225 = vpop.f32.mrf.mxu0
  %v3226 = vpop.f32.mrf.mxu0
  %3227 = vdwg.mxu0
  %v3236 = vrot.slane %v3099, 6
  %v3237 = vrot.slane %v3101, 6
  %v3238 = vrot.slane %v3140, 6
  %v3239 = vrot.slane %v3142, 6
  %v3240 = vrot.slane %v3181, 6
  %v3241 = vrot.slane %v3183, 6
  %v3242 = vrot.slane %v3222, 6
  %v3243 = vrot.slane %v3224, 6
  %v3252 = vadd.f32 %v890, %v3236
  %v3253 = vadd.f32 %v892, %v3237
  %v3254 = vadd.f32 %v933, %v3238
  %v3255 = vadd.f32 %v935, %v3239
  %v3256 = vadd.f32 %v976, %v3240
  %v3257 = vadd.f32 %v978, %v3241
  %v3258 = vadd.f32 %v1019, %v3242
  %v3259 = vadd.f32 %v1021, %v3243
  %v3260 = vxor.u32 %v3252, 2147483648
  %v3261 = vxor.u32 %v3253, 2147483648
  %v3262 = vmul.f32 %v3260, 1.442695
  %v3263 = vpow.pop %v3262
  %v3264 = vmul.f32 %v3261, 1.442695
  %v3265 = vpow.pop %v3264
  %v3266 = vadd.f32 %v3263, 1.0
  %v3267 = vadd.f32 %v3265, 1.0
  %v3268 = vrcp.pop %v3266
  %v3269 = vmul.f32 1.0, %v3268
  %v3270 = vrcp.pop %v3267
  %v3271 = vmul.f32 1.0, %v3270
  %v3272 = vxor.u32 %v3254, 2147483648
  %v3273 = vxor.u32 %v3255, 2147483648
  %v3274 = vmul.f32 %v3272, 1.442695
  %v3275 = vpow.pop %v3274
  %v3276 = vmul.f32 %v3273, 1.442695
  %v3277 = vpow.pop %v3276
  %v3278 = vadd.f32 %v3275, 1.0
  %v3279 = vadd.f32 %v3277, 1.0
  %v3280 = vrcp.pop %v3278
  %v3281 = vmul.f32 1.0, %v3280
  %v3282 = vrcp.pop %v3279
  %v3283 = vmul.f32 1.0, %v3282
  %v3284 = vtanh.pop %v3256
  %v3285 = vtanh.pop %v3257
  %v3286 = vxor.u32 %v3258, 2147483648
  %v3287 = vxor.u32 %v3259, 2147483648
  %v3288 = vmul.f32 %v3286, 1.442695
  %v3289 = vpow.pop %v3288
  %v3290 = vmul.f32 %v3287, 1.442695
  %v3291 = vpow.pop %v3290
  %v3292 = vadd.f32 %v3289, 1.0
  %v3293 = vadd.f32 %v3291, 1.0
  %v3294 = vrcp.pop %v3292
  %v3295 = vmul.f32 1.0, %v3294
  %v3296 = vrcp.pop %v3293
  %v3297 = vmul.f32 1.0, %v3296
  %v3300 = vrot.slane %v3054, 6
  %v3301 = vrot.slane %v3055, 6
  %v3304 = vmul.f32 %v3281, %v3300
  %v3305 = vmul.f32 %v3283, %v3301
  %v3306 = vmul.f32 %v3269, %v3284
  %v3307 = vmul.f32 %v3271, %v3285
  %v3308 = vadd.f32 %v3304, %v3306
  %v3309 = vadd.f32 %v3305, %v3307
  %v3310 = vtanh.pop %v3308
  %v3311 = vtanh.pop %v3309
  %v3312 = vmul.f32 %v3295, %v3310
  %v3313 = vmul.f32 %v3297, %v3311
  %3314 = vst [vmem:[#allocation2 + $0x10] sm:$0xc] %v3312
  %3315 = vst [vmem:[#allocation2 + $0x18] sm:$0xc] %v3313
  %v3316 = vpack.c.bf16 %v3312, %v3312
  %v3317 = vpack.c.bf16 %v3313, %v3313
  %v3320 = vrot.slane %v3316, 1
  %v3321 = vrot.slane %v3317, 1
  %3324 = vmatprep.subr.bf16.mxu0 %v1620
  %3325 = vmatpush1.bf16.msra.mxu0 %v1619
  %3326 = vmatprep.subr.bf16.mxu0 %v1612
  %3327 = vmatpush1.bf16.msra.mxu0 %v1611
  %3328 = vmatprep.subr.bf16.mxu0 %v1604
  %3329 = vmatpush1.bf16.msra.mxu0 %v1603
  %3330 = vmatprep.subr.bf16.mxu0 %v1596
  %3331 = vmatpush1.bf16.msra.mxu0 %v1595
  %3332 = vmatprep.subr.bf16.mxu0 %v1588
  %3333 = vmatpush1.bf16.msra.mxu0 %v1587
  %3334 = vmatprep.subr.bf16.mxu0 %v1580
  %3335 = vmatpush1.bf16.msra.mxu0 %v1579
  %3336 = vmatprep.subr.bf16.mxu0 %v1572
  %3337 = vmatpush1.bf16.msra.mxu0 %v1571
  %3338 = vmatprep.subr.bf16.mxu0 %v1564
  %3339 = vmatpush1.bf16.msra.mxu0 %v1563
  %3340 = vmatprep.subr.bf16.mxu0 %v1684
  %3341 = vmatpush2.bf16.msra.mxu0 %v1683
  %3342 = vmatprep.subr.bf16.mxu0 %v1676
  %3343 = vmatpush2.bf16.msra.mxu0 %v1675
  %3344 = vmatprep.subr.bf16.mxu0 %v1668
  %3345 = vmatpush2.bf16.msra.mxu0 %v1667
  %3346 = vmatprep.subr.bf16.mxu0 %v1660
  %3347 = vmatpush2.bf16.msra.mxu0 %v1659
  %3348 = vmatprep.subr.bf16.mxu0 %v1652
  %3349 = vmatpush2.bf16.msra.mxu0 %v1651
  %3350 = vmatprep.subr.bf16.mxu0 %v1644
  %3351 = vmatpush2.bf16.msra.mxu0 %v1643
  %3352 = vmatprep.subr.bf16.mxu0 %v1636
  %3353 = vmatpush2.bf16.msra.mxu0 %v1635
  %3354 = vmatprep.subr.bf16.mxu0 %v1628
  %3355 = vmatpush2.bf16.msra.mxu0 %v1627
  %3356 = vmatprep.mubr.bf16.mxu0 %v3321
  %3357 = vmatmul.mubr.bf16.gmra.mxu0 %v3320
  %v3358 = vpop.f32.mrf.mxu0
  %v3359 = vadd.f32 0.0, %v3358
  %v3360 = vpop.f32.mrf.mxu0
  %v3361 = vadd.f32 0.0, %v3360
  %v3362 = vpop.f32.mrf.mxu0
  %v3363 = vpop.f32.mrf.mxu0
  %3364 = vdwg.mxu0
  %3365 = vmatprep.subr.bf16.mxu0 %v1622
  %3366 = vmatpush1.bf16.msra.mxu0 %v1621
  %3367 = vmatprep.subr.bf16.mxu0 %v1614
  %3368 = vmatpush1.bf16.msra.mxu0 %v1613
  %3369 = vmatprep.subr.bf16.mxu0 %v1606
  %3370 = vmatpush1.bf16.msra.mxu0 %v1605
  %3371 = vmatprep.subr.bf16.mxu0 %v1598
  %3372 = vmatpush1.bf16.msra.mxu0 %v1597
  %3373 = vmatprep.subr.bf16.mxu0 %v1590
  %3374 = vmatpush1.bf16.msra.mxu0 %v1589
  %3375 = vmatprep.subr.bf16.mxu0 %v1582
  %3376 = vmatpush1.bf16.msra.mxu0 %v1581
  %3377 = vmatprep.subr.bf16.mxu0 %v1574
  %3378 = vmatpush1.bf16.msra.mxu0 %v1573
  %3379 = vmatprep.subr.bf16.mxu0 %v1566
  %3380 = vmatpush1.bf16.msra.mxu0 %v1565
  %3381 = vmatprep.subr.bf16.mxu0 %v1686
  %3382 = vmatpush2.bf16.msra.mxu0 %v1685
  %3383 = vmatprep.subr.bf16.mxu0 %v1678
  %3384 = vmatpush2.bf16.msra.mxu0 %v1677
  %3385 = vmatprep.subr.bf16.mxu0 %v1670
  %3386 = vmatpush2.bf16.msra.mxu0 %v1669
  %3387 = vmatprep.subr.bf16.mxu0 %v1662
  %3388 = vmatpush2.bf16.msra.mxu0 %v1661
  %3389 = vmatprep.subr.bf16.mxu0 %v1654
  %3390 = vmatpush2.bf16.msra.mxu0 %v1653
  %3391 = vmatprep.subr.bf16.mxu0 %v1646
  %3392 = vmatpush2.bf16.msra.mxu0 %v1645
  %3393 = vmatprep.subr.bf16.mxu0 %v1638
  %3394 = vmatpush2.bf16.msra.mxu0 %v1637
  %3395 = vmatprep.subr.bf16.mxu0 %v1630
  %3396 = vmatpush2.bf16.msra.mxu0 %v1629
  %3397 = vmatprep.mubr.bf16.mxu0 %v3321
  %3398 = vmatmul.mubr.bf16.gmra.mxu0 %v3320
  %v3399 = vpop.f32.mrf.mxu0
  %v3400 = vadd.f32 0.0, %v3399
  %v3401 = vpop.f32.mrf.mxu0
  %v3402 = vadd.f32 0.0, %v3401
  %v3403 = vpop.f32.mrf.mxu0
  %v3404 = vpop.f32.mrf.mxu0
  %3405 = vdwg.mxu0
  %3406 = vmatprep.subr.bf16.mxu0 %v1624
  %3407 = vmatpush1.bf16.msra.mxu0 %v1623
  %3408 = vmatprep.subr.bf16.mxu0 %v1616
  %3409 = vmatpush1.bf16.msra.mxu0 %v1615
  %3410 = vmatprep.subr.bf16.mxu0 %v1608
  %3411 = vmatpush1.bf16.msra.mxu0 %v1607
  %3412 = vmatprep.subr.bf16.mxu0 %v1600
  %3413 = vmatpush1.bf16.msra.mxu0 %v1599
  %3414 = vmatprep.subr.bf16.mxu0 %v1592
  %3415 = vmatpush1.bf16.msra.mxu0 %v1591
  %3416 = vmatprep.subr.bf16.mxu0 %v1584
  %3417 = vmatpush1.bf16.msra.mxu0 %v1583
  %3418 = vmatprep.subr.bf16.mxu0 %v1576
  %3419 = vmatpush1.bf16.msra.mxu0 %v1575
  %3420 = vmatprep.subr.bf16.mxu0 %v1568
  %3421 = vmatpush1.bf16.msra.mxu0 %v1567
  %3422 = vmatprep.subr.bf16.mxu0 %v1688
  %3423 = vmatpush2.bf16.msra.mxu0 %v1687
  %3424 = vmatprep.subr.bf16.mxu0 %v1680
  %3425 = vmatpush2.bf16.msra.mxu0 %v1679
  %3426 = vmatprep.subr.bf16.mxu0 %v1672
  %3427 = vmatpush2.bf16.msra.mxu0 %v1671
  %3428 = vmatprep.subr.bf16.mxu0 %v1664
  %3429 = vmatpush2.bf16.msra.mxu0 %v1663
  %3430 = vmatprep.subr.bf16.mxu0 %v1656
  %3431 = vmatpush2.bf16.msra.mxu0 %v1655
  %3432 = vmatprep.subr.bf16.mxu0 %v1648
  %3433 = vmatpush2.bf16.msra.mxu0 %v1647
  %3434 = vmatprep.subr.bf16.mxu0 %v1640
  %3435 = vmatpush2.bf16.msra.mxu0 %v1639
  %3436 = vmatprep.subr.bf16.mxu0 %v1632
  %3437 = vmatpush2.bf16.msra.mxu0 %v1631
  %3438 = vmatprep.mubr.bf16.mxu0 %v3321
  %3439 = vmatmul.mubr.bf16.gmra.mxu0 %v3320
  %v3440 = vpop.f32.mrf.mxu0
  %v3441 = vadd.f32 0.0, %v3440
  %v3442 = vpop.f32.mrf.mxu0
  %v3443 = vadd.f32 0.0, %v3442
  %v3444 = vpop.f32.mrf.mxu0
  %v3445 = vpop.f32.mrf.mxu0
  %3446 = vdwg.mxu0
  %3447 = vmatprep.subr.bf16.mxu0 %v1626
  %3448 = vmatpush1.bf16.msra.mxu0 %v1625
  %3449 = vmatprep.subr.bf16.mxu0 %v1618
  %3450 = vmatpush1.bf16.msra.mxu0 %v1617
  %3451 = vmatprep.subr.bf16.mxu0 %v1610
  %3452 = vmatpush1.bf16.msra.mxu0 %v1609
  %3453 = vmatprep.subr.bf16.mxu0 %v1602
  %3454 = vmatpush1.bf16.msra.mxu0 %v1601
  %3455 = vmatprep.subr.bf16.mxu0 %v1594
  %3456 = vmatpush1.bf16.msra.mxu0 %v1593
  %3457 = vmatprep.subr.bf16.mxu0 %v1586
  %3458 = vmatpush1.bf16.msra.mxu0 %v1585
  %3459 = vmatprep.subr.bf16.mxu0 %v1578
  %3460 = vmatpush1.bf16.msra.mxu0 %v1577
  %3461 = vmatprep.subr.bf16.mxu0 %v1570
  %3462 = vmatpush1.bf16.msra.mxu0 %v1569
  %3463 = vmatprep.subr.bf16.mxu0 %v1690
  %3464 = vmatpush2.bf16.msra.mxu0 %v1689
  %3465 = vmatprep.subr.bf16.mxu0 %v1682
  %3466 = vmatpush2.bf16.msra.mxu0 %v1681
  %3467 = vmatprep.subr.bf16.mxu0 %v1674
  %3468 = vmatpush2.bf16.msra.mxu0 %v1673
  %3469 = vmatprep.subr.bf16.mxu0 %v1666
  %3470 = vmatpush2.bf16.msra.mxu0 %v1665
  %3471 = vmatprep.subr.bf16.mxu0 %v1658
  %3472 = vmatpush2.bf16.msra.mxu0 %v1657
  %3473 = vmatprep.subr.bf16.mxu0 %v1650
  %3474 = vmatpush2.bf16.msra.mxu0 %v1649
  %3475 = vmatprep.subr.bf16.mxu0 %v1642
  %3476 = vmatpush2.bf16.msra.mxu0 %v1641
  %3477 = vmatprep.subr.bf16.mxu0 %v1634
  %3478 = vmatpush2.bf16.msra.mxu0 %v1633
  %3479 = vmatprep.mubr.bf16.mxu0 %v3321
  %3480 = vmatmul.mubr.bf16.gmra.mxu0 %v3320
  %v3481 = vpop.f32.mrf.mxu0
  %v3482 = vadd.f32 0.0, %v3481
  %v3483 = vpop.f32.mrf.mxu0
  %v3484 = vadd.f32 0.0, %v3483
  %v3485 = vpop.f32.mrf.mxu0
  %v3486 = vpop.f32.mrf.mxu0
  %3487 = vdwg.mxu0
  %v3496 = vrot.slane %v3359, 4
  %v3497 = vrot.slane %v3361, 4
  %v3498 = vrot.slane %v3400, 4
  %v3499 = vrot.slane %v3402, 4
  %v3500 = vrot.slane %v3441, 4
  %v3501 = vrot.slane %v3443, 4
  %v3502 = vrot.slane %v3482, 4
  %v3503 = vrot.slane %v3484, 4
  %v3512 = vadd.f32 %v890, %v3496
  %v3513 = vadd.f32 %v892, %v3497
  %v3514 = vadd.f32 %v933, %v3498
  %v3515 = vadd.f32 %v935, %v3499
  %v3516 = vadd.f32 %v976, %v3500
  %v3517 = vadd.f32 %v978, %v3501
  %v3518 = vadd.f32 %v1019, %v3502
  %v3519 = vadd.f32 %v1021, %v3503
  %v3520 = vxor.u32 %v3512, 2147483648
  %v3521 = vxor.u32 %v3513, 2147483648
  %v3522 = vmul.f32 %v3520, 1.442695
  %v3523 = vpow.pop %v3522
  %v3524 = vmul.f32 %v3521, 1.442695
  %v3525 = vpow.pop %v3524
  %v3526 = vadd.f32 %v3523, 1.0
  %v3527 = vadd.f32 %v3525, 1.0
  %v3528 = vrcp.pop %v3526
  %v3529 = vmul.f32 1.0, %v3528
  %v3530 = vrcp.pop %v3527
  %v3531 = vmul.f32 1.0, %v3530
  %v3532 = vxor.u32 %v3514, 2147483648
  %v3533 = vxor.u32 %v3515, 2147483648
  %v3534 = vmul.f32 %v3532, 1.442695
  %v3535 = vpow.pop %v3534
  %v3536 = vmul.f32 %v3533, 1.442695
  %v3537 = vpow.pop %v3536
  %v3538 = vadd.f32 %v3535, 1.0
  %v3539 = vadd.f32 %v3537, 1.0
  %v3540 = vrcp.pop %v3538
  %v3541 = vmul.f32 1.0, %v3540
  %v3542 = vrcp.pop %v3539
  %v3543 = vmul.f32 1.0, %v3542
  %v3544 = vtanh.pop %v3516
  %v3545 = vtanh.pop %v3517
  %v3546 = vxor.u32 %v3518, 2147483648
  %v3547 = vxor.u32 %v3519, 2147483648
  %v3548 = vmul.f32 %v3546, 1.442695
  %v3549 = vpow.pop %v3548
  %v3550 = vmul.f32 %v3547, 1.442695
  %v3551 = vpow.pop %v3550
  %v3552 = vadd.f32 %v3549, 1.0
  %v3553 = vadd.f32 %v3551, 1.0
  %v3554 = vrcp.pop %v3552
  %v3555 = vmul.f32 1.0, %v3554
  %v3556 = vrcp.pop %v3553
  %v3557 = vmul.f32 1.0, %v3556
  %v3560 = vrot.slane %v3308, 6
  %v3561 = vrot.slane %v3309, 6
  %v3564 = vmul.f32 %v3541, %v3560
  %v3565 = vmul.f32 %v3543, %v3561
  %v3566 = vmul.f32 %v3529, %v3544
  %v3567 = vmul.f32 %v3531, %v3545
  %v3568 = vadd.f32 %v3564, %v3566
  %v3569 = vadd.f32 %v3565, %v3567
  %v3570 = vtanh.pop %v3568
  %v3571 = vtanh.pop %v3569
  %v3572 = vmul.f32 %v3555, %v3570
  %v3573 = vmul.f32 %v3557, %v3571
  %3574 = vst [vmem:[#allocation2 + $0x10] sm:$0x30] %v3572
  %3575 = vst [vmem:[#allocation2 + $0x18] sm:$0x30] %v3573
  %v3576 = vpack.c.bf16 %v3572, %v3572
  %v3577 = vpack.c.bf16 %v3573, %v3573
  %v3580 = vrot.slane %v3576, 2
  %v3581 = vrot.slane %v3577, 2
  %3584 = vmatprep.subr.bf16.mxu0 %v1620
  %3585 = vmatpush1.bf16.msra.mxu0 %v1619
  %3586 = vmatprep.subr.bf16.mxu0 %v1612
  %3587 = vmatpush1.bf16.msra.mxu0 %v1611
  %3588 = vmatprep.subr.bf16.mxu0 %v1604
  %3589 = vmatpush1.bf16.msra.mxu0 %v1603
  %3590 = vmatprep.subr.bf16.mxu0 %v1596
  %3591 = vmatpush1.bf16.msra.mxu0 %v1595
  %3592 = vmatprep.subr.bf16.mxu0 %v1588
  %3593 = vmatpush1.bf16.msra.mxu0 %v1587
  %3594 = vmatprep.subr.bf16.mxu0 %v1580
  %3595 = vmatpush1.bf16.msra.mxu0 %v1579
  %3596 = vmatprep.subr.bf16.mxu0 %v1572
  %3597 = vmatpush1.bf16.msra.mxu0 %v1571
  %3598 = vmatprep.subr.bf16.mxu0 %v1564
  %3599 = vmatpush1.bf16.msra.mxu0 %v1563
  %3600 = vmatprep.subr.bf16.mxu0 %v1684
  %3601 = vmatpush2.bf16.msra.mxu0 %v1683
  %3602 = vmatprep.subr.bf16.mxu0 %v1676
  %3603 = vmatpush2.bf16.msra.mxu0 %v1675
  %3604 = vmatprep.subr.bf16.mxu0 %v1668
  %3605 = vmatpush2.bf16.msra.mxu0 %v1667
  %3606 = vmatprep.subr.bf16.mxu0 %v1660
  %3607 = vmatpush2.bf16.msra.mxu0 %v1659
  %3608 = vmatprep.subr.bf16.mxu0 %v1652
  %3609 = vmatpush2.bf16.msra.mxu0 %v1651
  %3610 = vmatprep.subr.bf16.mxu0 %v1644
  %3611 = vmatpush2.bf16.msra.mxu0 %v1643
  %3612 = vmatprep.subr.bf16.mxu0 %v1636
  %3613 = vmatpush2.bf16.msra.mxu0 %v1635
  %3614 = vmatprep.subr.bf16.mxu0 %v1628
  %3615 = vmatpush2.bf16.msra.mxu0 %v1627
  %3616 = vmatprep.mubr.bf16.mxu0 %v3581
  %3617 = vmatmul.mubr.bf16.gmra.mxu0 %v3580
  %v3618 = vpop.f32.mrf.mxu0
  %v3619 = vadd.f32 0.0, %v3618
  %v3620 = vpop.f32.mrf.mxu0
  %v3621 = vadd.f32 0.0, %v3620
  %v3622 = vpop.f32.mrf.mxu0
  %v3623 = vpop.f32.mrf.mxu0
  %3624 = vdwg.mxu0
  %3625 = vmatprep.subr.bf16.mxu0 %v1622
  %3626 = vmatpush1.bf16.msra.mxu0 %v1621
  %3627 = vmatprep.subr.bf16.mxu0 %v1614
  %3628 = vmatpush1.bf16.msra.mxu0 %v1613
  %3629 = vmatprep.subr.bf16.mxu0 %v1606
  %3630 = vmatpush1.bf16.msra.mxu0 %v1605
  %3631 = vmatprep.subr.bf16.mxu0 %v1598
  %3632 = vmatpush1.bf16.msra.mxu0 %v1597
  %3633 = vmatprep.subr.bf16.mxu0 %v1590
  %3634 = vmatpush1.bf16.msra.mxu0 %v1589
  %3635 = vmatprep.subr.bf16.mxu0 %v1582
  %3636 = vmatpush1.bf16.msra.mxu0 %v1581
  %3637 = vmatprep.subr.bf16.mxu0 %v1574
  %3638 = vmatpush1.bf16.msra.mxu0 %v1573
  %3639 = vmatprep.subr.bf16.mxu0 %v1566
  %3640 = vmatpush1.bf16.msra.mxu0 %v1565
  %3641 = vmatprep.subr.bf16.mxu0 %v1686
  %3642 = vmatpush2.bf16.msra.mxu0 %v1685
  %3643 = vmatprep.subr.bf16.mxu0 %v1678
  %3644 = vmatpush2.bf16.msra.mxu0 %v1677
  %3645 = vmatprep.subr.bf16.mxu0 %v1670
  %3646 = vmatpush2.bf16.msra.mxu0 %v1669
  %3647 = vmatprep.subr.bf16.mxu0 %v1662
  %3648 = vmatpush2.bf16.msra.mxu0 %v1661
  %3649 = vmatprep.subr.bf16.mxu0 %v1654
  %3650 = vmatpush2.bf16.msra.mxu0 %v1653
  %3651 = vmatprep.subr.bf16.mxu0 %v1646
  %3652 = vmatpush2.bf16.msra.mxu0 %v1645
  %3653 = vmatprep.subr.bf16.mxu0 %v1638
  %3654 = vmatpush2.bf16.msra.mxu0 %v1637
  %3655 = vmatprep.subr.bf16.mxu0 %v1630
  %3656 = vmatpush2.bf16.msra.mxu0 %v1629
  %3657 = vmatprep.mubr.bf16.mxu0 %v3581
  %3658 = vmatmul.mubr.bf16.gmra.mxu0 %v3580
  %v3659 = vpop.f32.mrf.mxu0
  %v3660 = vadd.f32 0.0, %v3659
  %v3661 = vpop.f32.mrf.mxu0
  %v3662 = vadd.f32 0.0, %v3661
  %v3663 = vpop.f32.mrf.mxu0
  %v3664 = vpop.f32.mrf.mxu0
  %3665 = vdwg.mxu0
  %3666 = vmatprep.subr.bf16.mxu0 %v1624
  %3667 = vmatpush1.bf16.msra.mxu0 %v1623
  %3668 = vmatprep.subr.bf16.mxu0 %v1616
  %3669 = vmatpush1.bf16.msra.mxu0 %v1615
  %3670 = vmatprep.subr.bf16.mxu0 %v1608
  %3671 = vmatpush1.bf16.msra.mxu0 %v1607
  %3672 = vmatprep.subr.bf16.mxu0 %v1600
  %3673 = vmatpush1.bf16.msra.mxu0 %v1599
  %3674 = vmatprep.subr.bf16.mxu0 %v1592
  %3675 = vmatpush1.bf16.msra.mxu0 %v1591
  %3676 = vmatprep.subr.bf16.mxu0 %v1584
  %3677 = vmatpush1.bf16.msra.mxu0 %v1583
  %3678 = vmatprep.subr.bf16.mxu0 %v1576
  %3679 = vmatpush1.bf16.msra.mxu0 %v1575
  %3680 = vmatprep.subr.bf16.mxu0 %v1568
  %3681 = vmatpush1.bf16.msra.mxu0 %v1567
  %3682 = vmatprep.subr.bf16.mxu0 %v1688
  %3683 = vmatpush2.bf16.msra.mxu0 %v1687
  %3684 = vmatprep.subr.bf16.mxu0 %v1680
  %3685 = vmatpush2.bf16.msra.mxu0 %v1679
  %3686 = vmatprep.subr.bf16.mxu0 %v1672
  %3687 = vmatpush2.bf16.msra.mxu0 %v1671
  %3688 = vmatprep.subr.bf16.mxu0 %v1664
  %3689 = vmatpush2.bf16.msra.mxu0 %v1663
  %3690 = vmatprep.subr.bf16.mxu0 %v1656
  %3691 = vmatpush2.bf16.msra.mxu0 %v1655
  %3692 = vmatprep.subr.bf16.mxu0 %v1648
  %3693 = vmatpush2.bf16.msra.mxu0 %v1647
  %3694 = vmatprep.subr.bf16.mxu0 %v1640
  %3695 = vmatpush2.bf16.msra.mxu0 %v1639
  %3696 = vmatprep.subr.bf16.mxu0 %v1632
  %3697 = vmatpush2.bf16.msra.mxu0 %v1631
  %3698 = vmatprep.mubr.bf16.mxu0 %v3581
  %3699 = vmatmul.mubr.bf16.gmra.mxu0 %v3580
  %v3700 = vpop.f32.mrf.mxu0
  %v3701 = vadd.f32 0.0, %v3700
  %v3702 = vpop.f32.mrf.mxu0
  %v3703 = vadd.f32 0.0, %v3702
  %v3704 = vpop.f32.mrf.mxu0
  %v3705 = vpop.f32.mrf.mxu0
  %3706 = vdwg.mxu0
  %3707 = vmatprep.subr.bf16.mxu0 %v1626
  %3708 = vmatpush1.bf16.msra.mxu0 %v1625
  %3709 = vmatprep.subr.bf16.mxu0 %v1618
  %3710 = vmatpush1.bf16.msra.mxu0 %v1617
  %3711 = vmatprep.subr.bf16.mxu0 %v1610
  %3712 = vmatpush1.bf16.msra.mxu0 %v1609
  %3713 = vmatprep.subr.bf16.mxu0 %v1602
  %3714 = vmatpush1.bf16.msra.mxu0 %v1601
  %3715 = vmatprep.subr.bf16.mxu0 %v1594
  %3716 = vmatpush1.bf16.msra.mxu0 %v1593
  %3717 = vmatprep.subr.bf16.mxu0 %v1586
  %3718 = vmatpush1.bf16.msra.mxu0 %v1585
  %3719 = vmatprep.subr.bf16.mxu0 %v1578
  %3720 = vmatpush1.bf16.msra.mxu0 %v1577
  %3721 = vmatprep.subr.bf16.mxu0 %v1570
  %3722 = vmatpush1.bf16.msra.mxu0 %v1569
  %3723 = vmatprep.subr.bf16.mxu0 %v1690
  %3724 = vmatpush2.bf16.msra.mxu0 %v1689
  %3725 = vmatprep.subr.bf16.mxu0 %v1682
  %3726 = vmatpush2.bf16.msra.mxu0 %v1681
  %3727 = vmatprep.subr.bf16.mxu0 %v1674
  %3728 = vmatpush2.bf16.msra.mxu0 %v1673
  %3729 = vmatprep.subr.bf16.mxu0 %v1666
  %3730 = vmatpush2.bf16.msra.mxu0 %v1665
  %3731 = vmatprep.subr.bf16.mxu0 %v1658
  %3732 = vmatpush2.bf16.msra.mxu0 %v1657
  %3733 = vmatprep.subr.bf16.mxu0 %v1650
  %3734 = vmatpush2.bf16.msra.mxu0 %v1649
  %3735 = vmatprep.subr.bf16.mxu0 %v1642
  %3736 = vmatpush2.bf16.msra.mxu0 %v1641
  %3737 = vmatprep.subr.bf16.mxu0 %v1634
  %3738 = vmatpush2.bf16.msra.mxu0 %v1633
  %3739 = vmatprep.mubr.bf16.mxu0 %v3581
  %3740 = vmatmul.mubr.bf16.gmra.mxu0 %v3580
  %v3741 = vpop.f32.mrf.mxu0
  %v3742 = vadd.f32 0.0, %v3741
  %v3743 = vpop.f32.mrf.mxu0
  %v3744 = vadd.f32 0.0, %v3743
  %v3745 = vpop.f32.mrf.mxu0
  %v3746 = vpop.f32.mrf.mxu0
  %3747 = vdwg.mxu0
  %v3756 = vrot.slane %v3619, 2
  %v3757 = vrot.slane %v3621, 2
  %v3758 = vrot.slane %v3660, 2
  %v3759 = vrot.slane %v3662, 2
  %v3760 = vrot.slane %v3701, 2
  %v3761 = vrot.slane %v3703, 2
  %v3762 = vrot.slane %v3742, 2
  %v3763 = vrot.slane %v3744, 2
  %v3772 = vadd.f32 %v890, %v3756
  %v3773 = vadd.f32 %v892, %v3757
  %v3774 = vadd.f32 %v933, %v3758
  %v3775 = vadd.f32 %v935, %v3759
  %v3776 = vadd.f32 %v976, %v3760
  %v3777 = vadd.f32 %v978, %v3761
  %v3778 = vadd.f32 %v1019, %v3762
  %v3779 = vadd.f32 %v1021, %v3763
  %v3780 = vxor.u32 %v3772, 2147483648
  %v3781 = vxor.u32 %v3773, 2147483648
  %v3782 = vmul.f32 %v3780, 1.442695
  %v3783 = vpow.pop %v3782
  %v3784 = vmul.f32 %v3781, 1.442695
  %v3785 = vpow.pop %v3784
  %v3786 = vadd.f32 %v3783, 1.0
  %v3787 = vadd.f32 %v3785, 1.0
  %v3788 = vrcp.pop %v3786
  %v3789 = vmul.f32 1.0, %v3788
  %v3790 = vrcp.pop %v3787
  %v3791 = vmul.f32 1.0, %v3790
  %v3792 = vxor.u32 %v3774, 2147483648
  %v3793 = vxor.u32 %v3775, 2147483648
  %v3794 = vmul.f32 %v3792, 1.442695
  %v3795 = vpow.pop %v3794
  %v3796 = vmul.f32 %v3793, 1.442695
  %v3797 = vpow.pop %v3796
  %v3798 = vadd.f32 %v3795, 1.0
  %v3799 = vadd.f32 %v3797, 1.0
  %v3800 = vrcp.pop %v3798
  %v3801 = vmul.f32 1.0, %v3800
  %v3802 = vrcp.pop %v3799
  %v3803 = vmul.f32 1.0, %v3802
  %v3804 = vtanh.pop %v3776
  %v3805 = vtanh.pop %v3777
  %v3806 = vxor.u32 %v3778, 2147483648
  %v3807 = vxor.u32 %v3779, 2147483648
  %v3808 = vmul.f32 %v3806, 1.442695
  %v3809 = vpow.pop %v3808
  %v3810 = vmul.f32 %v3807, 1.442695
  %v3811 = vpow.pop %v3810
  %v3812 = vadd.f32 %v3809, 1.0
  %v3813 = vadd.f32 %v3811, 1.0
  %v3814 = vrcp.pop %v3812
  %v3815 = vmul.f32 1.0, %v3814
  %v3816 = vrcp.pop %v3813
  %v3817 = vmul.f32 1.0, %v3816
  %v3820 = vrot.slane %v3568, 6
  %v3821 = vrot.slane %v3569, 6
  %v3824 = vmul.f32 %v3801, %v3820
  %v3825 = vmul.f32 %v3803, %v3821
  %v3826 = vmul.f32 %v3789, %v3804
  %v3827 = vmul.f32 %v3791, %v3805
  %v3828 = vadd.f32 %v3824, %v3826
  %v3829 = vadd.f32 %v3825, %v3827
  %v3830 = vtanh.pop %v3828
  %v3831 = vtanh.pop %v3829
  %v3832 = vmul.f32 %v3815, %v3830
  %v3833 = vmul.f32 %v3817, %v3831
  %3834 = vst [vmem:[#allocation2 + $0x10] sm:$0xc0] %v3832
  %3835 = vst [vmem:[#allocation2 + $0x18] sm:$0xc0] %v3833
  %v3836 = vld [vmem:[#allocation2] sm:$0xff]
  %v3837 = vld [vmem:[#allocation2 + $0x8] sm:$0xff]
  %v3838 = vld [vmem:[#allocation2 + $0x10] sm:$0xff]
  %v3839 = vld [vmem:[#allocation2 + $0x18] sm:$0xff]
  %v3840 = vpack.c.bf16 %v3838, %v3836
  %v3841 = vpack.c.bf16 %v3839, %v3837
  %v3842 = vld [vmem:[%s6] sm:$0xff]
  %v3843 = vld [vmem:[%s6 + $0x8] sm:$0xff]
  %v3844 = vld [vmem:[%s6 + $0x10] sm:$0xff]
  %v3845 = vld [vmem:[%s6 + $0x18] sm:$0xff]
  %v3846 = vld [vmem:[%s6 + $0x20] sm:$0xff]
  %v3847 = vld [vmem:[%s6 + $0x28] sm:$0xff]
  %v3848 = vld [vmem:[%s6 + $0x30] sm:$0xff]
  %v3849 = vld [vmem:[%s6 + $0x38] sm:$0xff]
  %v3850 = vld [vmem:[%s6 + $0x40] sm:$0xff]
  %v3851 = vld [vmem:[%s6 + $0x48] sm:$0xff]
  %v3852 = vld [vmem:[%s6 + $0x50] sm:$0xff]
  %v3853 = vld [vmem:[%s6 + $0x58] sm:$0xff]
  %v3854 = vld [vmem:[%s6 + $0x60] sm:$0xff]
  %v3855 = vld [vmem:[%s6 + $0x68] sm:$0xff]
  %v3856 = vld [vmem:[%s6 + $0x70] sm:$0xff]
  %v3857 = vld [vmem:[%s6 + $0x78] sm:$0xff]
  %v3858 = vld [vmem:[%s6 + $0x80] sm:$0xff]
  %v3859 = vld [vmem:[%s6 + $0x88] sm:$0xff]
  %v3860 = vld [vmem:[%s6 + $0x90] sm:$0xff]
  %v3861 = vld [vmem:[%s6 + $0x98] sm:$0xff]
  %v3862 = vld [vmem:[%s6 + $0xa0] sm:$0xff]
  %v3863 = vld [vmem:[%s6 + $0xa8] sm:$0xff]
  %v3864 = vld [vmem:[%s6 + $0xb0] sm:$0xff]
  %v3865 = vld [vmem:[%s6 + $0xb8] sm:$0xff]
  %v3866 = vld [vmem:[%s6 + $0xc0] sm:$0xff]
  %v3867 = vld [vmem:[%s6 + $0xc8] sm:$0xff]
  %v3868 = vld [vmem:[%s6 + $0xd0] sm:$0xff]
  %v3869 = vld [vmem:[%s6 + $0xd8] sm:$0xff]
  %v3870 = vld [vmem:[%s6 + $0xe0] sm:$0xff]
  %v3871 = vld [vmem:[%s6 + $0xe8] sm:$0xff]
  %v3872 = vld [vmem:[%s6 + $0xf0] sm:$0xff]
  %v3873 = vld [vmem:[%s6 + $0xf8] sm:$0xff]
  %v3874 = vld [vmem:[%s6 + $0x100] sm:$0xff]
  %v3875 = vld [vmem:[%s6 + $0x108] sm:$0xff]
  %v3876 = vld [vmem:[%s6 + $0x110] sm:$0xff]
  %v3877 = vld [vmem:[%s6 + $0x118] sm:$0xff]
  %v3878 = vld [vmem:[%s6 + $0x120] sm:$0xff]
  %v3879 = vld [vmem:[%s6 + $0x128] sm:$0xff]
  %v3880 = vld [vmem:[%s6 + $0x130] sm:$0xff]
  %v3881 = vld [vmem:[%s6 + $0x138] sm:$0xff]
  %v3882 = vld [vmem:[%s6 + $0x140] sm:$0xff]
  %v3883 = vld [vmem:[%s6 + $0x148] sm:$0xff]
  %v3884 = vld [vmem:[%s6 + $0x150] sm:$0xff]
  %v3885 = vld [vmem:[%s6 + $0x158] sm:$0xff]
  %v3886 = vld [vmem:[%s6 + $0x160] sm:$0xff]
  %v3887 = vld [vmem:[%s6 + $0x168] sm:$0xff]
  %v3888 = vld [vmem:[%s6 + $0x170] sm:$0xff]
  %v3889 = vld [vmem:[%s6 + $0x178] sm:$0xff]
  %v3890 = vld [vmem:[%s6 + $0x180] sm:$0xff]
  %v3891 = vld [vmem:[%s6 + $0x188] sm:$0xff]
  %v3892 = vld [vmem:[%s6 + $0x190] sm:$0xff]
  %v3893 = vld [vmem:[%s6 + $0x198] sm:$0xff]
  %v3894 = vld [vmem:[%s6 + $0x1a0] sm:$0xff]
  %v3895 = vld [vmem:[%s6 + $0x1a8] sm:$0xff]
  %v3896 = vld [vmem:[%s6 + $0x1b0] sm:$0xff]
  %v3897 = vld [vmem:[%s6 + $0x1b8] sm:$0xff]
  %v3898 = vld [vmem:[%s6 + $0x1c0] sm:$0xff]
  %v3899 = vld [vmem:[%s6 + $0x1c8] sm:$0xff]
  %v3900 = vld [vmem:[%s6 + $0x1d0] sm:$0xff]
  %v3901 = vld [vmem:[%s6 + $0x1d8] sm:$0xff]
  %v3902 = vld [vmem:[%s6 + $0x1e0] sm:$0xff]
  %v3903 = vld [vmem:[%s6 + $0x1e8] sm:$0xff]
  %v3904 = vld [vmem:[%s6 + $0x1f0] sm:$0xff]
  %v3905 = vld [vmem:[%s6 + $0x1f8] sm:$0xff]
  %v3906 = vld [vmem:[%s6 + $0x200] sm:$0xff]
  %v3907 = vld [vmem:[%s6 + $0x208] sm:$0xff]
  %v3908 = vld [vmem:[%s6 + $0x210] sm:$0xff]
  %v3909 = vld [vmem:[%s6 + $0x218] sm:$0xff]
  %v3910 = vld [vmem:[%s6 + $0x220] sm:$0xff]
  %v3911 = vld [vmem:[%s6 + $0x228] sm:$0xff]
  %v3912 = vld [vmem:[%s6 + $0x230] sm:$0xff]
  %v3913 = vld [vmem:[%s6 + $0x238] sm:$0xff]
  %v3914 = vld [vmem:[%s6 + $0x240] sm:$0xff]
  %v3915 = vld [vmem:[%s6 + $0x248] sm:$0xff]
  %v3916 = vld [vmem:[%s6 + $0x250] sm:$0xff]
  %v3917 = vld [vmem:[%s6 + $0x258] sm:$0xff]
  %v3918 = vld [vmem:[%s6 + $0x260] sm:$0xff]
  %v3919 = vld [vmem:[%s6 + $0x268] sm:$0xff]
  %v3920 = vld [vmem:[%s6 + $0x270] sm:$0xff]
  %v3921 = vld [vmem:[%s6 + $0x278] sm:$0xff]
  %v3922 = vld [vmem:[%s6 + $0x280] sm:$0xff]
  %v3923 = vld [vmem:[%s6 + $0x288] sm:$0xff]
  %v3924 = vld [vmem:[%s6 + $0x290] sm:$0xff]
  %v3925 = vld [vmem:[%s6 + $0x298] sm:$0xff]
  %v3926 = vld [vmem:[%s6 + $0x2a0] sm:$0xff]
  %v3927 = vld [vmem:[%s6 + $0x2a8] sm:$0xff]
  %v3928 = vld [vmem:[%s6 + $0x2b0] sm:$0xff]
  %v3929 = vld [vmem:[%s6 + $0x2b8] sm:$0xff]
  %v3930 = vld [vmem:[%s6 + $0x2c0] sm:$0xff]
  %v3931 = vld [vmem:[%s6 + $0x2c8] sm:$0xff]
  %v3932 = vld [vmem:[%s6 + $0x2d0] sm:$0xff]
  %v3933 = vld [vmem:[%s6 + $0x2d8] sm:$0xff]
  %v3934 = vld [vmem:[%s6 + $0x2e0] sm:$0xff]
  %v3935 = vld [vmem:[%s6 + $0x2e8] sm:$0xff]
  %v3936 = vld [vmem:[%s6 + $0x2f0] sm:$0xff]
  %v3937 = vld [vmem:[%s6 + $0x2f8] sm:$0xff]
  %v3938 = vld [vmem:[%s6 + $0x300] sm:$0xff]
  %v3939 = vld [vmem:[%s6 + $0x308] sm:$0xff]
  %v3940 = vld [vmem:[%s6 + $0x310] sm:$0xff]
  %v3941 = vld [vmem:[%s6 + $0x318] sm:$0xff]
  %v3942 = vld [vmem:[%s6 + $0x320] sm:$0xff]
  %v3943 = vld [vmem:[%s6 + $0x328] sm:$0xff]
  %v3944 = vld [vmem:[%s6 + $0x330] sm:$0xff]
  %v3945 = vld [vmem:[%s6 + $0x338] sm:$0xff]
  %v3946 = vld [vmem:[%s6 + $0x340] sm:$0xff]
  %v3947 = vld [vmem:[%s6 + $0x348] sm:$0xff]
  %v3948 = vld [vmem:[%s6 + $0x350] sm:$0xff]
  %v3949 = vld [vmem:[%s6 + $0x358] sm:$0xff]
  %v3950 = vld [vmem:[%s6 + $0x360] sm:$0xff]
  %v3951 = vld [vmem:[%s6 + $0x368] sm:$0xff]
  %v3952 = vld [vmem:[%s6 + $0x370] sm:$0xff]
  %v3953 = vld [vmem:[%s6 + $0x378] sm:$0xff]
  %v3954 = vld [vmem:[%s6 + $0x380] sm:$0xff]
  %v3955 = vld [vmem:[%s6 + $0x388] sm:$0xff]
  %v3956 = vld [vmem:[%s6 + $0x390] sm:$0xff]
  %v3957 = vld [vmem:[%s6 + $0x398] sm:$0xff]
  %v3958 = vld [vmem:[%s6 + $0x3a0] sm:$0xff]
  %v3959 = vld [vmem:[%s6 + $0x3a8] sm:$0xff]
  %v3960 = vld [vmem:[%s6 + $0x3b0] sm:$0xff]
  %v3961 = vld [vmem:[%s6 + $0x3b8] sm:$0xff]
  %v3962 = vld [vmem:[%s6 + $0x3c0] sm:$0xff]
  %v3963 = vld [vmem:[%s6 + $0x3c8] sm:$0xff]
  %v3964 = vld [vmem:[%s6 + $0x3d0] sm:$0xff]
  %v3965 = vld [vmem:[%s6 + $0x3d8] sm:$0xff]
  %v3966 = vld [vmem:[%s6 + $0x3e0] sm:$0xff]
  %v3967 = vld [vmem:[%s6 + $0x3e8] sm:$0xff]
  %v3968 = vld [vmem:[%s6 + $0x3f0] sm:$0xff]
  %v3969 = vld [vmem:[%s6 + $0x3f8] sm:$0xff]
  %v3970 = vld [vmem:[%s7] sm:$0xff]
  %v3972 = vlaneseq
  %v3973 = vshrl.u32 %v3972, 7
  %v3974 = vsub.s32 0, %v3973
  %v3975 = vrot.slane %v3970, %v3974
  %v3976 = vlaneseq
  %v3977 = vshrl.u32 %v3976, 7
  %v3978 = vsub.s32 1, %v3977
  %v3979 = vrot.slane %v3970, %v3978
  %v3980 = vlaneseq
  %v3981 = vshrl.u32 %v3980, 7
  %v3982 = vsub.s32 2, %v3981
  %v3983 = vrot.slane %v3970, %v3982
  %v3984 = vlaneseq
  %v3985 = vshrl.u32 %v3984, 7
  %v3986 = vsub.s32 3, %v3985
  %v3987 = vrot.slane %v3970, %v3986
  %v3988 = vlaneseq
  %v3989 = vshrl.u32 %v3988, 7
  %v3990 = vsub.s32 4, %v3989
  %v3991 = vrot.slane %v3970, %v3990
  %v3992 = vlaneseq
  %v3993 = vshrl.u32 %v3992, 7
  %v3994 = vsub.s32 5, %v3993
  %v3995 = vrot.slane %v3970, %v3994
  %v3996 = vlaneseq
  %v3997 = vshrl.u32 %v3996, 7
  %v3998 = vsub.s32 6, %v3997
  %v3999 = vrot.slane %v3970, %v3998
  %v4000 = vlaneseq
  %v4001 = vshrl.u32 %v4000, 7
  %v4002 = vsub.s32 7, %v4001
  %v4003 = vrot.slane %v3970, %v4002
  %v4140 = vunpack.c.l.b16 %v3842
  %v4141 = vunpack.c.h.b16 %v3842
  %v4142 = vunpack.c.l.b16 %v3843
  %v4143 = vunpack.c.h.b16 %v3843
  %v4144 = vunpack.c.l.b16 %v3844
  %v4145 = vunpack.c.h.b16 %v3844
  %v4146 = vunpack.c.l.b16 %v3845
  %v4147 = vunpack.c.h.b16 %v3845
  %v4148 = vunpack.c.l.b16 %v3846
  %v4149 = vunpack.c.h.b16 %v3846
  %v4150 = vunpack.c.l.b16 %v3847
  %v4151 = vunpack.c.h.b16 %v3847
  %v4152 = vunpack.c.l.b16 %v3848
  %v4153 = vunpack.c.h.b16 %v3848
  %v4154 = vunpack.c.l.b16 %v3849
  %v4155 = vunpack.c.h.b16 %v3849
  %v4156 = vunpack.c.l.b16 %v3850
  %v4157 = vunpack.c.h.b16 %v3850
  %v4158 = vunpack.c.l.b16 %v3851
  %v4159 = vunpack.c.h.b16 %v3851
  %v4160 = vunpack.c.l.b16 %v3852
  %v4161 = vunpack.c.h.b16 %v3852
  %v4162 = vunpack.c.l.b16 %v3853
  %v4163 = vunpack.c.h.b16 %v3853
  %v4164 = vunpack.c.l.b16 %v3854
  %v4165 = vunpack.c.h.b16 %v3854
  %v4166 = vunpack.c.l.b16 %v3855
  %v4167 = vunpack.c.h.b16 %v3855
  %v4168 = vunpack.c.l.b16 %v3856
  %v4169 = vunpack.c.h.b16 %v3856
  %v4170 = vunpack.c.l.b16 %v3857
  %v4171 = vunpack.c.h.b16 %v3857
  %v4172 = vunpack.c.l.b16 %v3858
  %v4173 = vunpack.c.h.b16 %v3858
  %v4174 = vunpack.c.l.b16 %v3859
  %v4175 = vunpack.c.h.b16 %v3859
  %v4176 = vunpack.c.l.b16 %v3860
  %v4177 = vunpack.c.h.b16 %v3860
  %v4178 = vunpack.c.l.b16 %v3861
  %v4179 = vunpack.c.h.b16 %v3861
  %v4180 = vunpack.c.l.b16 %v3862
  %v4181 = vunpack.c.h.b16 %v3862
  %v4182 = vunpack.c.l.b16 %v3863
  %v4183 = vunpack.c.h.b16 %v3863
  %v4184 = vunpack.c.l.b16 %v3864
  %v4185 = vunpack.c.h.b16 %v3864
  %v4186 = vunpack.c.l.b16 %v3865
  %v4187 = vunpack.c.h.b16 %v3865
  %v4188 = vunpack.c.l.b16 %v3866
  %v4189 = vunpack.c.h.b16 %v3866
  %v4190 = vunpack.c.l.b16 %v3867
  %v4191 = vunpack.c.h.b16 %v3867
  %v4192 = vunpack.c.l.b16 %v3868
  %v4193 = vunpack.c.h.b16 %v3868
  %v4194 = vunpack.c.l.b16 %v3869
  %v4195 = vunpack.c.h.b16 %v3869
  %v4196 = vunpack.c.l.b16 %v3870
  %v4197 = vunpack.c.h.b16 %v3870
  %v4198 = vunpack.c.l.b16 %v3871
  %v4199 = vunpack.c.h.b16 %v3871
  %v4200 = vunpack.c.l.b16 %v3872
  %v4201 = vunpack.c.h.b16 %v3872
  %v4202 = vunpack.c.l.b16 %v3873
  %v4203 = vunpack.c.h.b16 %v3873
  %v4204 = vunpack.c.l.b16 %v3874
  %v4205 = vunpack.c.h.b16 %v3874
  %v4206 = vunpack.c.l.b16 %v3875
  %v4207 = vunpack.c.h.b16 %v3875
  %v4208 = vunpack.c.l.b16 %v3876
  %v4209 = vunpack.c.h.b16 %v3876
  %v4210 = vunpack.c.l.b16 %v3877
  %v4211 = vunpack.c.h.b16 %v3877
  %v4212 = vunpack.c.l.b16 %v3878
  %v4213 = vunpack.c.h.b16 %v3878
  %v4214 = vunpack.c.l.b16 %v3879
  %v4215 = vunpack.c.h.b16 %v3879
  %v4216 = vunpack.c.l.b16 %v3880
  %v4217 = vunpack.c.h.b16 %v3880
  %v4218 = vunpack.c.l.b16 %v3881
  %v4219 = vunpack.c.h.b16 %v3881
  %v4220 = vunpack.c.l.b16 %v3882
  %v4221 = vunpack.c.h.b16 %v3882
  %v4222 = vunpack.c.l.b16 %v3883
  %v4223 = vunpack.c.h.b16 %v3883
  %v4224 = vunpack.c.l.b16 %v3884
  %v4225 = vunpack.c.h.b16 %v3884
  %v4226 = vunpack.c.l.b16 %v3885
  %v4227 = vunpack.c.h.b16 %v3885
  %v4228 = vunpack.c.l.b16 %v3886
  %v4229 = vunpack.c.h.b16 %v3886
  %v4230 = vunpack.c.l.b16 %v3887
  %v4231 = vunpack.c.h.b16 %v3887
  %v4232 = vunpack.c.l.b16 %v3888
  %v4233 = vunpack.c.h.b16 %v3888
  %v4234 = vunpack.c.l.b16 %v3889
  %v4235 = vunpack.c.h.b16 %v3889
  %v4236 = vunpack.c.l.b16 %v3890
  %v4237 = vunpack.c.h.b16 %v3890
  %v4238 = vunpack.c.l.b16 %v3891
  %v4239 = vunpack.c.h.b16 %v3891
  %v4240 = vunpack.c.l.b16 %v3892
  %v4241 = vunpack.c.h.b16 %v3892
  %v4242 = vunpack.c.l.b16 %v3893
  %v4243 = vunpack.c.h.b16 %v3893
  %v4244 = vunpack.c.l.b16 %v3894
  %v4245 = vunpack.c.h.b16 %v3894
  %v4246 = vunpack.c.l.b16 %v3895
  %v4247 = vunpack.c.h.b16 %v3895
  %v4248 = vunpack.c.l.b16 %v3896
  %v4249 = vunpack.c.h.b16 %v3896
  %v4250 = vunpack.c.l.b16 %v3897
  %v4251 = vunpack.c.h.b16 %v3897
  %v4252 = vunpack.c.l.b16 %v3898
  %v4253 = vunpack.c.h.b16 %v3898
  %v4254 = vunpack.c.l.b16 %v3899
  %v4255 = vunpack.c.h.b16 %v3899
  %v4256 = vunpack.c.l.b16 %v3900
  %v4257 = vunpack.c.h.b16 %v3900
  %v4258 = vunpack.c.l.b16 %v3901
  %v4259 = vunpack.c.h.b16 %v3901
  %v4260 = vunpack.c.l.b16 %v3902
  %v4261 = vunpack.c.h.b16 %v3902
  %v4262 = vunpack.c.l.b16 %v3903
  %v4263 = vunpack.c.h.b16 %v3903
  %v4264 = vunpack.c.l.b16 %v3904
  %v4265 = vunpack.c.h.b16 %v3904
  %v4266 = vunpack.c.l.b16 %v3905
  %v4267 = vunpack.c.h.b16 %v3905
  %v4268 = vunpack.c.l.b16 %v3906
  %v4269 = vunpack.c.h.b16 %v3906
  %v4270 = vunpack.c.l.b16 %v3907
  %v4271 = vunpack.c.h.b16 %v3907
  %v4272 = vunpack.c.l.b16 %v3908
  %v4273 = vunpack.c.h.b16 %v3908
  %v4274 = vunpack.c.l.b16 %v3909
  %v4275 = vunpack.c.h.b16 %v3909
  %v4276 = vunpack.c.l.b16 %v3910
  %v4277 = vunpack.c.h.b16 %v3910
  %v4278 = vunpack.c.l.b16 %v3911
  %v4279 = vunpack.c.h.b16 %v3911
  %v4280 = vunpack.c.l.b16 %v3912
  %v4281 = vunpack.c.h.b16 %v3912
  %v4282 = vunpack.c.l.b16 %v3913
  %v4283 = vunpack.c.h.b16 %v3913
  %v4284 = vunpack.c.l.b16 %v3914
  %v4285 = vunpack.c.h.b16 %v3914
  %v4286 = vunpack.c.l.b16 %v3915
  %v4287 = vunpack.c.h.b16 %v3915
  %v4288 = vunpack.c.l.b16 %v3916
  %v4289 = vunpack.c.h.b16 %v3916
  %v4290 = vunpack.c.l.b16 %v3917
  %v4291 = vunpack.c.h.b16 %v3917
  %v4292 = vunpack.c.l.b16 %v3918
  %v4293 = vunpack.c.h.b16 %v3918
  %v4294 = vunpack.c.l.b16 %v3919
  %v4295 = vunpack.c.h.b16 %v3919
  %v4296 = vunpack.c.l.b16 %v3920
  %v4297 = vunpack.c.h.b16 %v3920
  %v4298 = vunpack.c.l.b16 %v3921
  %v4299 = vunpack.c.h.b16 %v3921
  %v4300 = vunpack.c.l.b16 %v3922
  %v4301 = vunpack.c.h.b16 %v3922
  %v4302 = vunpack.c.l.b16 %v3923
  %v4303 = vunpack.c.h.b16 %v3923
  %v4304 = vunpack.c.l.b16 %v3924
  %v4305 = vunpack.c.h.b16 %v3924
  %v4306 = vunpack.c.l.b16 %v3925
  %v4307 = vunpack.c.h.b16 %v3925
  %v4308 = vunpack.c.l.b16 %v3926
  %v4309 = vunpack.c.h.b16 %v3926
  %v4310 = vunpack.c.l.b16 %v3927
  %v4311 = vunpack.c.h.b16 %v3927
  %v4312 = vunpack.c.l.b16 %v3928
  %v4313 = vunpack.c.h.b16 %v3928
  %v4314 = vunpack.c.l.b16 %v3929
  %v4315 = vunpack.c.h.b16 %v3929
  %v4316 = vunpack.c.l.b16 %v3930
  %v4317 = vunpack.c.h.b16 %v3930
  %v4318 = vunpack.c.l.b16 %v3931
  %v4319 = vunpack.c.h.b16 %v3931
  %v4320 = vunpack.c.l.b16 %v3932
  %v4321 = vunpack.c.h.b16 %v3932
  %v4322 = vunpack.c.l.b16 %v3933
  %v4323 = vunpack.c.h.b16 %v3933
  %v4324 = vunpack.c.l.b16 %v3934
  %v4325 = vunpack.c.h.b16 %v3934
  %v4326 = vunpack.c.l.b16 %v3935
  %v4327 = vunpack.c.h.b16 %v3935
  %v4328 = vunpack.c.l.b16 %v3936
  %v4329 = vunpack.c.h.b16 %v3936
  %v4330 = vunpack.c.l.b16 %v3937
  %v4331 = vunpack.c.h.b16 %v3937
  %v4332 = vunpack.c.l.b16 %v3938
  %v4333 = vunpack.c.h.b16 %v3938
  %v4334 = vunpack.c.l.b16 %v3939
  %v4335 = vunpack.c.h.b16 %v3939
  %v4336 = vunpack.c.l.b16 %v3940
  %v4337 = vunpack.c.h.b16 %v3940
  %v4338 = vunpack.c.l.b16 %v3941
  %v4339 = vunpack.c.h.b16 %v3941
  %v4340 = vunpack.c.l.b16 %v3942
  %v4341 = vunpack.c.h.b16 %v3942
  %v4342 = vunpack.c.l.b16 %v3943
  %v4343 = vunpack.c.h.b16 %v3943
  %v4344 = vunpack.c.l.b16 %v3944
  %v4345 = vunpack.c.h.b16 %v3944
  %v4346 = vunpack.c.l.b16 %v3945
  %v4347 = vunpack.c.h.b16 %v3945
  %v4348 = vunpack.c.l.b16 %v3946
  %v4349 = vunpack.c.h.b16 %v3946
  %v4350 = vunpack.c.l.b16 %v3947
  %v4351 = vunpack.c.h.b16 %v3947
  %v4352 = vunpack.c.l.b16 %v3948
  %v4353 = vunpack.c.h.b16 %v3948
  %v4354 = vunpack.c.l.b16 %v3949
  %v4355 = vunpack.c.h.b16 %v3949
  %v4356 = vunpack.c.l.b16 %v3950
  %v4357 = vunpack.c.h.b16 %v3950
  %v4358 = vunpack.c.l.b16 %v3951
  %v4359 = vunpack.c.h.b16 %v3951
  %v4360 = vunpack.c.l.b16 %v3952
  %v4361 = vunpack.c.h.b16 %v3952
  %v4362 = vunpack.c.l.b16 %v3953
  %v4363 = vunpack.c.h.b16 %v3953
  %v4364 = vunpack.c.l.b16 %v3954
  %v4365 = vunpack.c.h.b16 %v3954
  %v4366 = vunpack.c.l.b16 %v3955
  %v4367 = vunpack.c.h.b16 %v3955
  %v4368 = vunpack.c.l.b16 %v3956
  %v4369 = vunpack.c.h.b16 %v3956
  %v4370 = vunpack.c.l.b16 %v3957
  %v4371 = vunpack.c.h.b16 %v3957
  %v4372 = vunpack.c.l.b16 %v3958
  %v4373 = vunpack.c.h.b16 %v3958
  %v4374 = vunpack.c.l.b16 %v3959
  %v4375 = vunpack.c.h.b16 %v3959
  %v4376 = vunpack.c.l.b16 %v3960
  %v4377 = vunpack.c.h.b16 %v3960
  %v4378 = vunpack.c.l.b16 %v3961
  %v4379 = vunpack.c.h.b16 %v3961
  %v4380 = vunpack.c.l.b16 %v3962
  %v4381 = vunpack.c.h.b16 %v3962
  %v4382 = vunpack.c.l.b16 %v3963
  %v4383 = vunpack.c.h.b16 %v3963
  %v4384 = vunpack.c.l.b16 %v3964
  %v4385 = vunpack.c.h.b16 %v3964
  %v4386 = vunpack.c.l.b16 %v3965
  %v4387 = vunpack.c.h.b16 %v3965
  %v4388 = vunpack.c.l.b16 %v3966
  %v4389 = vunpack.c.h.b16 %v3966
  %v4390 = vunpack.c.l.b16 %v3967
  %v4391 = vunpack.c.h.b16 %v3967
  %v4392 = vunpack.c.l.b16 %v3968
  %v4393 = vunpack.c.h.b16 %v3968
  %v4394 = vunpack.c.l.b16 %v3969
  %v4395 = vunpack.c.h.b16 %v3969
  %v4396 = vpack.c.b16 %v4148, %v4140
  %v4397 = vpack.c.b16 %v4149, %v4141
  %v4398 = vpack.c.b16 %v4150, %v4142
  %v4399 = vpack.c.b16 %v4151, %v4143
  %v4400 = vpack.c.b16 %v4152, %v4144
  %v4401 = vpack.c.b16 %v4153, %v4145
  %v4402 = vpack.c.b16 %v4154, %v4146
  %v4403 = vpack.c.b16 %v4155, %v4147
  %v4404 = vpack.c.b16 %v4164, %v4156
  %v4405 = vpack.c.b16 %v4165, %v4157
  %v4406 = vpack.c.b16 %v4166, %v4158
  %v4407 = vpack.c.b16 %v4167, %v4159
  %v4408 = vpack.c.b16 %v4168, %v4160
  %v4409 = vpack.c.b16 %v4169, %v4161
  %v4410 = vpack.c.b16 %v4170, %v4162
  %v4411 = vpack.c.b16 %v4171, %v4163
  %v4412 = vpack.c.b16 %v4180, %v4172
  %v4413 = vpack.c.b16 %v4181, %v4173
  %v4414 = vpack.c.b16 %v4182, %v4174
  %v4415 = vpack.c.b16 %v4183, %v4175
  %v4416 = vpack.c.b16 %v4184, %v4176
  %v4417 = vpack.c.b16 %v4185, %v4177
  %v4418 = vpack.c.b16 %v4186, %v4178
  %v4419 = vpack.c.b16 %v4187, %v4179
  %v4420 = vpack.c.b16 %v4196, %v4188
  %v4421 = vpack.c.b16 %v4197, %v4189
  %v4422 = vpack.c.b16 %v4198, %v4190
  %v4423 = vpack.c.b16 %v4199, %v4191
  %v4424 = vpack.c.b16 %v4200, %v4192
  %v4425 = vpack.c.b16 %v4201, %v4193
  %v4426 = vpack.c.b16 %v4202, %v4194
  %v4427 = vpack.c.b16 %v4203, %v4195
  %v4428 = vpack.c.b16 %v4212, %v4204
  %v4429 = vpack.c.b16 %v4213, %v4205
  %v4430 = vpack.c.b16 %v4214, %v4206
  %v4431 = vpack.c.b16 %v4215, %v4207
  %v4432 = vpack.c.b16 %v4216, %v4208
  %v4433 = vpack.c.b16 %v4217, %v4209
  %v4434 = vpack.c.b16 %v4218, %v4210
  %v4435 = vpack.c.b16 %v4219, %v4211
  %v4436 = vpack.c.b16 %v4228, %v4220
  %v4437 = vpack.c.b16 %v4229, %v4221
  %v4438 = vpack.c.b16 %v4230, %v4222
  %v4439 = vpack.c.b16 %v4231, %v4223
  %v4440 = vpack.c.b16 %v4232, %v4224
  %v4441 = vpack.c.b16 %v4233, %v4225
  %v4442 = vpack.c.b16 %v4234, %v4226
  %v4443 = vpack.c.b16 %v4235, %v4227
  %v4444 = vpack.c.b16 %v4244, %v4236
  %v4445 = vpack.c.b16 %v4245, %v4237
  %v4446 = vpack.c.b16 %v4246, %v4238
  %v4447 = vpack.c.b16 %v4247, %v4239
  %v4448 = vpack.c.b16 %v4248, %v4240
  %v4449 = vpack.c.b16 %v4249, %v4241
  %v4450 = vpack.c.b16 %v4250, %v4242
  %v4451 = vpack.c.b16 %v4251, %v4243
  %v4452 = vpack.c.b16 %v4260, %v4252
  %v4453 = vpack.c.b16 %v4261, %v4253
  %v4454 = vpack.c.b16 %v4262, %v4254
  %v4455 = vpack.c.b16 %v4263, %v4255
  %v4456 = vpack.c.b16 %v4264, %v4256
  %v4457 = vpack.c.b16 %v4265, %v4257
  %v4458 = vpack.c.b16 %v4266, %v4258
  %v4459 = vpack.c.b16 %v4267, %v4259
  %v4460 = vpack.c.b16 %v4276, %v4268
  %v4461 = vpack.c.b16 %v4277, %v4269
  %v4462 = vpack.c.b16 %v4278, %v4270
  %v4463 = vpack.c.b16 %v4279, %v4271
  %v4464 = vpack.c.b16 %v4280, %v4272
  %v4465 = vpack.c.b16 %v4281, %v4273
  %v4466 = vpack.c.b16 %v4282, %v4274
  %v4467 = vpack.c.b16 %v4283, %v4275
  %v4468 = vpack.c.b16 %v4292, %v4284
  %v4469 = vpack.c.b16 %v4293, %v4285
  %v4470 = vpack.c.b16 %v4294, %v4286
  %v4471 = vpack.c.b16 %v4295, %v4287
  %v4472 = vpack.c.b16 %v4296, %v4288
  %v4473 = vpack.c.b16 %v4297, %v4289
  %v4474 = vpack.c.b16 %v4298, %v4290
  %v4475 = vpack.c.b16 %v4299, %v4291
  %v4476 = vpack.c.b16 %v4308, %v4300
  %v4477 = vpack.c.b16 %v4309, %v4301
  %v4478 = vpack.c.b16 %v4310, %v4302
  %v4479 = vpack.c.b16 %v4311, %v4303
  %v4480 = vpack.c.b16 %v4312, %v4304
  %v4481 = vpack.c.b16 %v4313, %v4305
  %v4482 = vpack.c.b16 %v4314, %v4306
  %v4483 = vpack.c.b16 %v4315, %v4307
  %v4484 = vpack.c.b16 %v4324, %v4316
  %v4485 = vpack.c.b16 %v4325, %v4317
  %v4486 = vpack.c.b16 %v4326, %v4318
  %v4487 = vpack.c.b16 %v4327, %v4319
  %v4488 = vpack.c.b16 %v4328, %v4320
  %v4489 = vpack.c.b16 %v4329, %v4321
  %v4490 = vpack.c.b16 %v4330, %v4322
  %v4491 = vpack.c.b16 %v4331, %v4323
  %v4492 = vpack.c.b16 %v4340, %v4332
  %v4493 = vpack.c.b16 %v4341, %v4333
  %v4494 = vpack.c.b16 %v4342, %v4334
  %v4495 = vpack.c.b16 %v4343, %v4335
  %v4496 = vpack.c.b16 %v4344, %v4336
  %v4497 = vpack.c.b16 %v4345, %v4337
  %v4498 = vpack.c.b16 %v4346, %v4338
  %v4499 = vpack.c.b16 %v4347, %v4339
  %v4500 = vpack.c.b16 %v4356, %v4348
  %v4501 = vpack.c.b16 %v4357, %v4349
  %v4502 = vpack.c.b16 %v4358, %v4350
  %v4503 = vpack.c.b16 %v4359, %v4351
  %v4504 = vpack.c.b16 %v4360, %v4352
  %v4505 = vpack.c.b16 %v4361, %v4353
  %v4506 = vpack.c.b16 %v4362, %v4354
  %v4507 = vpack.c.b16 %v4363, %v4355
  %v4508 = vpack.c.b16 %v4372, %v4364
  %v4509 = vpack.c.b16 %v4373, %v4365
  %v4510 = vpack.c.b16 %v4374, %v4366
  %v4511 = vpack.c.b16 %v4375, %v4367
  %v4512 = vpack.c.b16 %v4376, %v4368
  %v4513 = vpack.c.b16 %v4377, %v4369
  %v4514 = vpack.c.b16 %v4378, %v4370
  %v4515 = vpack.c.b16 %v4379, %v4371
  %v4516 = vpack.c.b16 %v4388, %v4380
  %v4517 = vpack.c.b16 %v4389, %v4381
  %v4518 = vpack.c.b16 %v4390, %v4382
  %v4519 = vpack.c.b16 %v4391, %v4383
  %v4520 = vpack.c.b16 %v4392, %v4384
  %v4521 = vpack.c.b16 %v4393, %v4385
  %v4522 = vpack.c.b16 %v4394, %v4386
  %v4523 = vpack.c.b16 %v4395, %v4387
  %4652 = vmatprep.subr.bf16.mxu0 %v4453
  %4653 = vmatpush1.bf16.msra.mxu0 %v4452
  %4654 = vmatprep.subr.bf16.mxu0 %v4445
  %4655 = vmatpush1.bf16.msra.mxu0 %v4444
  %4656 = vmatprep.subr.bf16.mxu0 %v4437
  %4657 = vmatpush1.bf16.msra.mxu0 %v4436
  %4658 = vmatprep.subr.bf16.mxu0 %v4429
  %4659 = vmatpush1.bf16.msra.mxu0 %v4428
  %4660 = vmatprep.subr.bf16.mxu0 %v4421
  %4661 = vmatpush1.bf16.msra.mxu0 %v4420
  %4662 = vmatprep.subr.bf16.mxu0 %v4413
  %4663 = vmatpush1.bf16.msra.mxu0 %v4412
  %4664 = vmatprep.subr.bf16.mxu0 %v4405
  %4665 = vmatpush1.bf16.msra.mxu0 %v4404
  %4666 = vmatprep.subr.bf16.mxu0 %v4397
  %4667 = vmatpush1.bf16.msra.mxu0 %v4396
  %4668 = vmatprep.subr.bf16.mxu0 %v4517
  %4669 = vmatpush2.bf16.msra.mxu0 %v4516
  %4670 = vmatprep.subr.bf16.mxu0 %v4509
  %4671 = vmatpush2.bf16.msra.mxu0 %v4508
  %4672 = vmatprep.subr.bf16.mxu0 %v4501
  %4673 = vmatpush2.bf16.msra.mxu0 %v4500
  %4674 = vmatprep.subr.bf16.mxu0 %v4493
  %4675 = vmatpush2.bf16.msra.mxu0 %v4492
  %4676 = vmatprep.subr.bf16.mxu0 %v4485
  %4677 = vmatpush2.bf16.msra.mxu0 %v4484
  %4678 = vmatprep.subr.bf16.mxu0 %v4477
  %4679 = vmatpush2.bf16.msra.mxu0 %v4476
  %4680 = vmatprep.subr.bf16.mxu0 %v4469
  %4681 = vmatpush2.bf16.msra.mxu0 %v4468
  %4682 = vmatprep.subr.bf16.mxu0 %v4461
  %4683 = vmatpush2.bf16.msra.mxu0 %v4460
  %4684 = vmatprep.mubr.bf16.mxu0 %v3841
  %4685 = vmatmul.mubr.bf16.gmra.mxu0 %v3840
  %v4686 = vpop.f32.mrf.mxu0
  %v4687 = vadd.f32 %v3975, %v4686
  %v4688 = vpop.f32.mrf.mxu0
  %v4689 = vadd.f32 %v3979, %v4688
  %v4690 = vpop.f32.mrf.mxu0
  %v4691 = vadd.f32 %v3975, %v4690
  %v4692 = vpop.f32.mrf.mxu0
  %v4693 = vadd.f32 %v3979, %v4692
  %4694 = vdwg.mxu0
  %4695 = vmatprep.subr.bf16.mxu0 %v4455
  %4696 = vmatpush1.bf16.msra.mxu0 %v4454
  %4697 = vmatprep.subr.bf16.mxu0 %v4447
  %4698 = vmatpush1.bf16.msra.mxu0 %v4446
  %4699 = vmatprep.subr.bf16.mxu0 %v4439
  %4700 = vmatpush1.bf16.msra.mxu0 %v4438
  %4701 = vmatprep.subr.bf16.mxu0 %v4431
  %4702 = vmatpush1.bf16.msra.mxu0 %v4430
  %4703 = vmatprep.subr.bf16.mxu0 %v4423
  %4704 = vmatpush1.bf16.msra.mxu0 %v4422
  %4705 = vmatprep.subr.bf16.mxu0 %v4415
  %4706 = vmatpush1.bf16.msra.mxu0 %v4414
  %4707 = vmatprep.subr.bf16.mxu0 %v4407
  %4708 = vmatpush1.bf16.msra.mxu0 %v4406
  %4709 = vmatprep.subr.bf16.mxu0 %v4399
  %4710 = vmatpush1.bf16.msra.mxu0 %v4398
  %4711 = vmatprep.subr.bf16.mxu0 %v4519
  %4712 = vmatpush2.bf16.msra.mxu0 %v4518
  %4713 = vmatprep.subr.bf16.mxu0 %v4511
  %4714 = vmatpush2.bf16.msra.mxu0 %v4510
  %4715 = vmatprep.subr.bf16.mxu0 %v4503
  %4716 = vmatpush2.bf16.msra.mxu0 %v4502
  %4717 = vmatprep.subr.bf16.mxu0 %v4495
  %4718 = vmatpush2.bf16.msra.mxu0 %v4494
  %4719 = vmatprep.subr.bf16.mxu0 %v4487
  %4720 = vmatpush2.bf16.msra.mxu0 %v4486
  %4721 = vmatprep.subr.bf16.mxu0 %v4479
  %4722 = vmatpush2.bf16.msra.mxu0 %v4478
  %4723 = vmatprep.subr.bf16.mxu0 %v4471
  %4724 = vmatpush2.bf16.msra.mxu0 %v4470
  %4725 = vmatprep.subr.bf16.mxu0 %v4463
  %4726 = vmatpush2.bf16.msra.mxu0 %v4462
  %4727 = vmatprep.mubr.bf16.mxu0 %v3841
  %4728 = vmatmul.mubr.bf16.gmra.mxu0 %v3840
  %v4729 = vpop.f32.mrf.mxu0
  %v4730 = vadd.f32 %v3983, %v4729
  %v4731 = vpop.f32.mrf.mxu0
  %v4732 = vadd.f32 %v3987, %v4731
  %v4733 = vpop.f32.mrf.mxu0
  %v4734 = vadd.f32 %v3983, %v4733
  %v4735 = vpop.f32.mrf.mxu0
  %v4736 = vadd.f32 %v3987, %v4735
  %4737 = vdwg.mxu0
  %4738 = vmatprep.subr.bf16.mxu0 %v4457
  %4739 = vmatpush1.bf16.msra.mxu0 %v4456
  %4740 = vmatprep.subr.bf16.mxu0 %v4449
  %4741 = vmatpush1.bf16.msra.mxu0 %v4448
  %4742 = vmatprep.subr.bf16.mxu0 %v4441
  %4743 = vmatpush1.bf16.msra.mxu0 %v4440
  %4744 = vmatprep.subr.bf16.mxu0 %v4433
  %4745 = vmatpush1.bf16.msra.mxu0 %v4432
  %4746 = vmatprep.subr.bf16.mxu0 %v4425
  %4747 = vmatpush1.bf16.msra.mxu0 %v4424
  %4748 = vmatprep.subr.bf16.mxu0 %v4417
  %4749 = vmatpush1.bf16.msra.mxu0 %v4416
  %4750 = vmatprep.subr.bf16.mxu0 %v4409
  %4751 = vmatpush1.bf16.msra.mxu0 %v4408
  %4752 = vmatprep.subr.bf16.mxu0 %v4401
  %4753 = vmatpush1.bf16.msra.mxu0 %v4400
  %4754 = vmatprep.subr.bf16.mxu0 %v4521
  %4755 = vmatpush2.bf16.msra.mxu0 %v4520
  %4756 = vmatprep.subr.bf16.mxu0 %v4513
  %4757 = vmatpush2.bf16.msra.mxu0 %v4512
  %4758 = vmatprep.subr.bf16.mxu0 %v4505
  %4759 = vmatpush2.bf16.msra.mxu0 %v4504
  %4760 = vmatprep.subr.bf16.mxu0 %v4497
  %4761 = vmatpush2.bf16.msra.mxu0 %v4496
  %4762 = vmatprep.subr.bf16.mxu0 %v4489
  %4763 = vmatpush2.bf16.msra.mxu0 %v4488
  %4764 = vmatprep.subr.bf16.mxu0 %v4481
  %4765 = vmatpush2.bf16.msra.mxu0 %v4480
  %4766 = vmatprep.subr.bf16.mxu0 %v4473
  %4767 = vmatpush2.bf16.msra.mxu0 %v4472
  %4768 = vmatprep.subr.bf16.mxu0 %v4465
  %4769 = vmatpush2.bf16.msra.mxu0 %v4464
  %4770 = vmatprep.mubr.bf16.mxu0 %v3841
  %4771 = vmatmul.mubr.bf16.gmra.mxu0 %v3840
  %v4772 = vpop.f32.mrf.mxu0
  %v4773 = vadd.f32 %v3991, %v4772
  %v4774 = vpop.f32.mrf.mxu0
  %v4775 = vadd.f32 %v3995, %v4774
  %v4776 = vpop.f32.mrf.mxu0
  %v4777 = vadd.f32 %v3991, %v4776
  %v4778 = vpop.f32.mrf.mxu0
  %v4779 = vadd.f32 %v3995, %v4778
  %4780 = vdwg.mxu0
  %4781 = vmatprep.subr.bf16.mxu0 %v4459
  %4782 = vmatpush1.bf16.msra.mxu0 %v4458
  %4783 = vmatprep.subr.bf16.mxu0 %v4451
  %4784 = vmatpush1.bf16.msra.mxu0 %v4450
  %4785 = vmatprep.subr.bf16.mxu0 %v4443
  %4786 = vmatpush1.bf16.msra.mxu0 %v4442
  %4787 = vmatprep.subr.bf16.mxu0 %v4435
  %4788 = vmatpush1.bf16.msra.mxu0 %v4434
  %4789 = vmatprep.subr.bf16.mxu0 %v4427
  %4790 = vmatpush1.bf16.msra.mxu0 %v4426
  %4791 = vmatprep.subr.bf16.mxu0 %v4419
  %4792 = vmatpush1.bf16.msra.mxu0 %v4418
  %4793 = vmatprep.subr.bf16.mxu0 %v4411
  %4794 = vmatpush1.bf16.msra.mxu0 %v4410
  %4795 = vmatprep.subr.bf16.mxu0 %v4403
  %4796 = vmatpush1.bf16.msra.mxu0 %v4402
  %4797 = vmatprep.subr.bf16.mxu0 %v4523
  %4798 = vmatpush2.bf16.msra.mxu0 %v4522
  %4799 = vmatprep.subr.bf16.mxu0 %v4515
  %4800 = vmatpush2.bf16.msra.mxu0 %v4514
  %4801 = vmatprep.subr.bf16.mxu0 %v4507
  %4802 = vmatpush2.bf16.msra.mxu0 %v4506
  %4803 = vmatprep.subr.bf16.mxu0 %v4499
  %4804 = vmatpush2.bf16.msra.mxu0 %v4498
  %4805 = vmatprep.subr.bf16.mxu0 %v4491
  %4806 = vmatpush2.bf16.msra.mxu0 %v4490
  %4807 = vmatprep.subr.bf16.mxu0 %v4483
  %4808 = vmatpush2.bf16.msra.mxu0 %v4482
  %4809 = vmatprep.subr.bf16.mxu0 %v4475
  %4810 = vmatpush2.bf16.msra.mxu0 %v4474
  %4811 = vmatprep.subr.bf16.mxu0 %v4467
  %4812 = vmatpush2.bf16.msra.mxu0 %v4466
  %4813 = vmatprep.mubr.bf16.mxu0 %v3841
  %4814 = vmatmul.mubr.bf16.gmra.mxu0 %v3840
  %v4815 = vpop.f32.mrf.mxu0
  %v4816 = vadd.f32 %v3999, %v4815
  %v4817 = vpop.f32.mrf.mxu0
  %v4818 = vadd.f32 %v4003, %v4817
  %v4819 = vpop.f32.mrf.mxu0
  %v4820 = vadd.f32 %v3999, %v4819
  %v4821 = vpop.f32.mrf.mxu0
  %v4822 = vadd.f32 %v4003, %v4821
  %4823 = vdwg.mxu0
  %4824 = vst [vmem:[%s8] sm:$0xff] %v4687
  %4825 = vst [vmem:[%s8 + $0x8] sm:$0xff] %v4689
  %4826 = vst [vmem:[%s8 + $0x10] sm:$0xff] %v4730
  %4827 = vst [vmem:[%s8 + $0x18] sm:$0xff] %v4732
  %4828 = vst [vmem:[%s8 + $0x20] sm:$0xff] %v4773
  %4829 = vst [vmem:[%s8 + $0x28] sm:$0xff] %v4775
  %4830 = vst [vmem:[%s8 + $0x30] sm:$0xff] %v4816
  %4831 = vst [vmem:[%s8 + $0x38] sm:$0xff] %v4818
  %4832 = vst [vmem:[%s8 + $0x40] sm:$0xff] %v4691
  %4833 = vst [vmem:[%s8 + $0x48] sm:$0xff] %v4693
  %4834 = vst [vmem:[%s8 + $0x50] sm:$0xff] %v4734
  %4835 = vst [vmem:[%s8 + $0x58] sm:$0xff] %v4736
  %4836 = vst [vmem:[%s8 + $0x60] sm:$0xff] %v4777
  %4837 = vst [vmem:[%s8 + $0x68] sm:$0xff] %v4779
  %4838 = vst [vmem:[%s8 + $0x70] sm:$0xff] %v4820
  %4839 = vst [vmem:[%s8 + $0x78] sm:$0xff] %v4822
  // Predicated region
  $region34: #{seq2seq_forward.3} parent=0 // pred_check
    _
  $region35: #{seq2seq_forward.3} parent=0 // pred_check_branch
    %4841 = sbr.rel (0) target = $region37
  $region36: #{seq2seq_forward.3} parent=0 // pred_region
    _
  $region37: #{seq2seq_forward.3} parent=0 // pred_fallthru
    _
  // Predicated region
  $region38: #{seq2seq_forward.3} parent=0 // pred_check
    _
  $region39: #{seq2seq_forward.3} parent=0 // pred_check_branch
    %4843 = sbr.rel (0) target = $region41
  $region40: #{seq2seq_forward.3} parent=0 // pred_region
    _
  $region41: #{seq2seq_forward.3} parent=0 // pred_fallthru
    _

</llo_original>
